<compile_context>
chip_gen: v7x
topology: tpu7x:2x2x1
jax: 0.10.0
libtpu: 0.0.40
codegen_flags: <defaults>
</compile_context>

<pallas_src>
import functools
import math

import jax
import jax.numpy as jnp
from jax import lax
from jax.experimental import pallas as pl
from jax.experimental.pallas import tpu as pltpu


_INV_SQRT2 = 0.7071067811865476
_VMEM_LIMIT = 32 * 1024 * 1024   # explicit, safe on v5e/v6e/v7x


def _gelu_exact(y):
    # Exact (erf) GELU, matching torch.nn.functional.gelu default.
    return 0.5 * y * (1.0 + lax.erf(y * _INV_SQRT2))


def _pick_tile(n, max_tile, align=128):
    """Largest tile <= max_tile. If more than one grid step is needed, keep the
    step count even so v7x's two TensorCores get balanced work."""
    if n <= max_tile:
        return n
    steps = (n + max_tile - 1) // max_tile
    if steps % 2:
        steps += 1
    tile = (n + steps - 1) // steps
    tile = ((tile + align - 1) // align) * align
    return min(tile, max_tile)


def _cparams():
    return pltpu.CompilerParams(
        dimension_semantics=("parallel",),
        vmem_limit_bytes=_VMEM_LIMIT)


# -----------------------------------------------------------------------------
# Kernel 1: fc0 — reads channel-last (row, ci) blocks, writes channel-major
# (co, row) blocks (lane-dense stores).  Contraction of the last dims is the
# standard "q @ k^T" dot_general pattern.
# -----------------------------------------------------------------------------
def _fc0_kernel(x_ref, wt_ref, b_ref, o_ref):
    y = lax.dot_general(
        wt_ref[...], x_ref[...],
        dimension_numbers=(((1,), (1,)), ((), ())),
        preferred_element_type=jnp.float32)
    o_ref[...] = (y + b_ref[...]).astype(o_ref.dtype)


def fc0_pointwise(x_cl, wt, b2, *, max_tile=2048):
    """x_cl: (n, ci) channel-last.  wt: (co, ci).  b2: (co, 1).
    Returns (co, n) channel-major."""
    n, ci = x_cl.shape
    co = wt.shape[0]
    tile = _pick_tile(n, max_tile)
    return pl.pallas_call(
        _fc0_kernel,
        out_shape=jax.ShapeDtypeStruct((co, n), jnp.float32),
        grid=(pl.cdiv(n, tile),),
        in_specs=[
            pl.BlockSpec((tile, ci), lambda i: (i, 0)),
            pl.BlockSpec((co, ci), lambda i: (0, 0)),
            pl.BlockSpec((co, 1), lambda i: (0, 0)),
        ],
        out_specs=pl.BlockSpec((co, tile), lambda i: (0, i)),
        compiler_params=_cparams(),
    )(x_cl, wt, b2)


# -----------------------------------------------------------------------------
# Kernel 2: fused spectral-skip + 1x1 Conv3d + bias + (optional) exact GELU,
# channel-major, lane-dense (co, row_tile) output blocks.
# -----------------------------------------------------------------------------
def _conv_skip_kernel(x_ref, skip_ref, wt_ref, b_ref, o_ref, *, act):
    y = jnp.dot(wt_ref[...], x_ref[...], preferred_element_type=jnp.float32)
    y = y + b_ref[...] + skip_ref[...]
    if act:
        y = _gelu_exact(y)
    o_ref[...] = y.astype(o_ref.dtype)


def conv_skip_gelu(x_cm, skip_cm, wt, b2, *, act, max_tile=2048):
    """x_cm: (ci, ...) channel-major. skip_cm: (co, ...).
    Returns (co, ...) = [gelu](skip + Wt @ x + b).  The ragged last block is
    handled by Pallas partial-block masking (no activation padding)."""
    ci = x_cm.shape[0]
    lead = x_cm.shape[1:]
    co = wt.shape[0]
    n = 1
    for d in lead:
        n *= d
    xf = x_cm.reshape(ci, n)
    sf = skip_cm.reshape(co, n)
    tile = _pick_tile(n, max_tile)
    out = pl.pallas_call(
        functools.partial(_conv_skip_kernel, act=act),
        out_shape=jax.ShapeDtypeStruct((co, n), jnp.float32),
        grid=(pl.cdiv(n, tile),),
        in_specs=[
            pl.BlockSpec((ci, tile), lambda i: (0, i)),
            pl.BlockSpec((co, tile), lambda i: (0, i)),
            pl.BlockSpec((co, ci), lambda i: (0, 0)),
            pl.BlockSpec((co, 1), lambda i: (0, 0)),
        ],
        out_specs=pl.BlockSpec((co, tile), lambda i: (0, i)),
        compiler_params=_cparams(),
    )(xf, sf, wt, b2)
    return out.reshape((co,) + lead)


# -----------------------------------------------------------------------------
# Kernel 3: fused fc1 (+GELU) + fc2 — intermediate activation stays in VMEM.
# -----------------------------------------------------------------------------
def _fc12_kernel(x_ref, w1t_ref, b1_ref, w2t_ref, b2_ref, o_ref):
    h = jnp.dot(w1t_ref[...], x_ref[...], preferred_element_type=jnp.float32)
    h = _gelu_exact(h + b1_ref[...])
    y = jnp.dot(w2t_ref[...], h, preferred_element_type=jnp.float32)
    o_ref[...] = (y + b2_ref[...]).astype(o_ref.dtype)


def fc12_fused(x_cm, w1t, b1, w2t, b2, *, max_tile=2048):
    """x_cm: (ci, n) channel-major.  Returns (co, n) = fc2(gelu(fc1(x)))."""
    ci, n = x_cm.shape
    c1 = w1t.shape[0]
    co = w2t.shape[0]
    tile = _pick_tile(n, max_tile)
    return pl.pallas_call(
        _fc12_kernel,
        out_shape=jax.ShapeDtypeStruct((co, n), jnp.float32),
        grid=(pl.cdiv(n, tile),),
        in_specs=[
            pl.BlockSpec((ci, tile), lambda i: (0, i)),
            pl.BlockSpec((c1, ci), lambda i: (0, 0)),
            pl.BlockSpec((c1, 1), lambda i: (0, 0)),
            pl.BlockSpec((co, c1), lambda i: (0, 0)),
            pl.BlockSpec((co, 1), lambda i: (0, 0)),
        ],
        out_specs=pl.BlockSpec((co, tile), lambda i: (0, i)),
        compiler_params=_cparams(),
    )(x_cm, w1t, b1, w2t, b2)


# -----------------------------------------------------------------------------
# Kernel 4: per-mode complex channel mixing on the VPU (modes in lanes).
#   x_modes : (b, 2ci, Mc)   rows = [Re(x_i) | Im(x_i)], Mc = 4*m1*m2*m3 lanes
#   w_block : (2ci, 2co, Mc) real 2x2-block weights [[wr, wi], [-wi, wr]]
#   out     : (b, 2co, Mc)   rows = [Re(out_o) | Im(out_o)]
# The channel contraction is an unrolled FMA over the 2ci rows: no per-mode
# MXU weight reloads, no M=2 sublane padding, lane-dense stores.
# -----------------------------------------------------------------------------
def _spectral_mix_kernel(x_ref, w_ref, o_ref):
    two_ci = w_ref.shape[0]
    acc = jnp.zeros(o_ref.shape, jnp.float32)           # (1, 2co, Mc)
    for i in range(two_ci):                              # static unroll (2*width)
        xi = x_ref[:, i:i + 1, :]                        # (1, 1, Mc)
        acc = acc + w_ref[i:i + 1] * xi                  # broadcast over 2co rows
    o_ref[...] = acc


def spectral_mode_mix(x_modes, w_block):
    b, two_ci, mc = x_modes.shape
    two_co = w_block.shape[1]
    return pl.pallas_call(
        _spectral_mix_kernel,
        out_shape=jax.ShapeDtypeStruct((b, two_co, mc), jnp.float32),
        grid=(b,),
        in_specs=[
            pl.BlockSpec((1, two_ci, mc), lambda i: (i, 0, 0)),
            pl.BlockSpec((two_ci, two_co, mc), lambda i: (0, 0, 0)),
        ],
        out_specs=pl.BlockSpec((1, two_co, mc), lambda i: (i, 0, 0)),
        compiler_params=_cparams(),
    )(x_modes, w_block)


# -----------------------------------------------------------------------------
# SpectralConv3d (FFT in XLA; the 4 corners are mixed in a single Pallas call)
# -----------------------------------------------------------------------------
def spectral_conv3d(x_cm, w_block, m1, m2, m3):
    """x_cm: (ci, b, X, Y, T) f32 channel-major.
    w_block: (2ci, 2co, 4*m1*m2*m3) precomputed real 2x2-block weights.
    Returns (co, b, X, Y, T) f32."""
    ci, b, X, Y, T = x_cm.shape
    co = w_block.shape[1] // 2
    tr = T // 2 + 1
    mc = 4 * m1 * m2 * m3

    # TODO(synk): 3D FFT has no Pallas primitive; stays in XLA.
    x_ft = jnp.fft.rfftn(x_cm, axes=(2, 3, 4))           # (ci, b, X, Y, tr) c64

    # Corner gather with no transpose of complex data (stack after batch axis).
    corners = jnp.stack(
        [
            x_ft[:, :, :m1, :m2, :m3],
            x_ft[:, :, X - m1:, :m2, :m3],
            x_ft[:, :, :m1, Y - m2:, :m3],
            x_ft[:, :, X - m1:, Y - m2:, :m3],
        ],
        axis=2,
    ).reshape(ci, b, mc)
    x_modes = jnp.concatenate(
        [jnp.real(corners), jnp.imag(corners)], axis=0)  # (2ci, b, mc) f32
    x_modes = jnp.transpose(x_modes, (1, 0, 2))          # (b, 2ci, mc)  (tiny)

    mixed = spectral_mode_mix(x_modes, w_block)          # (b, 2co, mc)

    out_c = mixed[:, :co, :] + 1j * mixed[:, co:, :]     # (b, co, mc) c64
    out_c = out_c.reshape(b, co, 4, m1, m2, m3)
    out_c = jnp.transpose(out_c, (1, 0, 2, 3, 4, 5))     # (co, b, 4, m1, m2, m3)

    cz = jnp.complex64
    if X >= 2 * m1 and Y >= 2 * m2 and tr >= m3:
        # Assemble out_ft with concatenations (one pass) instead of four
        # dynamic-update-slices into a zeros tensor.
        zx = jnp.zeros((co, b, X - 2 * m1, m2, m3), cz)
        y_lo = jnp.concatenate([out_c[:, :, 0], zx, out_c[:, :, 1]], axis=2)
        y_hi = jnp.concatenate([out_c[:, :, 2], zx, out_c[:, :, 3]], axis=2)
        zy = jnp.zeros((co, b, X, Y - 2 * m2, m3), cz)
        xy = jnp.concatenate([y_lo, zy, y_hi], axis=3)   # (co, b, X, Y, m3)
        zt = jnp.zeros((co, b, X, Y, tr - m3), cz)
        out_ft = jnp.concatenate([xy, zt], axis=4)       # (co, b, X, Y, tr)
    else:  # fallback for tiny grids / overlapping corners (torch semantics)
        out_ft = jnp.zeros((co, b, X, Y, tr), cz)
        out_ft = out_ft.at[:, :, :m1, :m2, :m3].set(out_c[:, :, 0])
        out_ft = out_ft.at[:, :, X - m1:, :m2, :m3].set(out_c[:, :, 1])
        out_ft = out_ft.at[:, :, :m1, Y - m2:, :m3].set(out_c[:, :, 2])
        out_ft = out_ft.at[:, :, X - m1:, Y - m2:, :m3].set(out_c[:, :, 3])

    x_out = jnp.fft.irfftn(out_ft, s=(X, Y, T), axes=(2, 3, 4))
    return x_out.astype(jnp.float32)


# -----------------------------------------------------------------------------
# FNO3d forward (channel-major inside; channel-last at the API boundary)
# -----------------------------------------------------------------------------
def fno3d_forward(x, prep, *, m1, m2, m3):
    """x: (b, X, Y, T, width) channel-last, as in the PyTorch module."""
    b, X, Y, T, width = x.shape
    n0 = b * X * Y * T

    # fc0: reads channel-last directly, writes channel-major (no XLA transpose)
    xc = fc0_pointwise(x.reshape(n0, width), *prep["fc0"])    # (width, n0)
    xc = xc.reshape(width, b, X, Y, T)
    # F.pad([0,1,0,1,0,1]) on NCDHW == pad X/Y/T each by (0, 1).
    xc = jnp.pad(xc, ((0, 0), (0, 0), (0, 1), (0, 1), (0, 1)))

    for layer in range(4):
        skip = spectral_conv3d(xc, prep[f"spec{layer}"], m1, m2, m3)
        wt, bw = prep[f"w{layer}"]
        # fused: gelu(spectral + 1x1conv(x) + bias); last layer without gelu.
        xc = conv_skip_gelu(xc, skip, wt, bw, act=(layer < 3))

    xc = xc[:, :, :-1, :-1, :-1]

    # fc1 (+GELU) + fc2 fused: the intermediate never round-trips HBM.
    w1t, b1 = prep["fc1"]
    w2t, b2 = prep["fc2"]
    out = fc12_fused(xc.reshape(width, -1), w1t, b1, w2t, b2)  # (width, n0)
    out = out.reshape(width, b, X, Y, T)
    # TODO(synk): final channel-last permute kept in XLA (avoids an in-kernel
    #             trans_a matmul / wide transpose for lowering robustness).
    return jnp.transpose(out, (1, 2, 3, 4, 0))


# -----------------------------------------------------------------------------
# Parameter init (shapes follow the PyTorch module) + one-time preprocessing.
# -----------------------------------------------------------------------------
def init_params(key, width, m1, m2, m3):
    class _KeyGen:
        def __init__(self, k):
            self._k = k

        def __call__(self):
            self._k, sub = jax.random.split(self._k)
            return sub

    kg = _KeyGen(key)

    def linear(ci, co):
        bound = 1.0 / math.sqrt(ci)
        W = jax.random.uniform(kg(), (ci, co), jnp.float32, -bound, bound)
        b = jax.random.uniform(kg(), (co,), jnp.float32, -bound, bound)
        return W, b

    def spectral_weight(ci, co):
        scale = 1.0 / (ci * co)
        wr = scale * jax.random.uniform(kg(), (ci, co, m1, m2, m3), jnp.float32)
        wi = scale * jax.random.uniform(kg(), (ci, co, m1, m2, m3), jnp.float32)
        return (wr + 1j * wi).astype(jnp.complex64)

    params = {}
    params["fc0"] = linear(width, width)
    params["fc1"] = linear(width, width)
    params["fc2"] = linear(width, width)
    for layer in range(4):
        params[f"w{layer}"] = linear(width, width)   # 1x1 Conv3d -> (Ci,Co)+bias
        params[f"conv{layer}"] = tuple(spectral_weight(width, width) for _ in range(4))
    return params


def preprocess_params(params, m1, m2, m3):
    """One-time (hoisted) weight layout work: transposed pointwise weights and
    the per-layer real 2x2-block spectral weights with modes in the last dim."""
    prep = {}
    for name in ("fc0", "fc1", "fc2", "w0", "w1", "w2", "w3"):
        W, b = params[name]
        prep[name] = (jnp.asarray(W.T, jnp.float32),
                      jnp.asarray(b, jnp.float32).reshape(-1, 1))
    mc3 = m1 * m2 * m3
    for layer in range(4):
        blocks = []
        for w in params[f"conv{layer}"]:
            ci, co = w.shape[0], w.shape[1]
            wm = w.reshape(ci, co, mc3)
            wr = jnp.real(wm).astype(jnp.float32)
            wi = jnp.imag(wm).astype(jnp.float32)
            top = jnp.concatenate([wr, wi], axis=1)        # (ci, 2co, mc3)
            bot = jnp.concatenate([-wi, wr], axis=1)       # (ci, 2co, mc3)
            blocks.append(jnp.concatenate([top, bot], axis=0))   # (2ci, 2co, mc3)
        prep[f"spec{layer}"] = jnp.concatenate(blocks, axis=2)   # (2ci, 2co, 4*mc3)
    return prep


# -----------------------------------------------------------------------------
# Pure-JAX reference (mirrors the PyTorch forward) for a correctness check.
# -----------------------------------------------------------------------------
def _reference_forward(x, params, *, m1, m2, m3):
    def spectral_ref(h, weights):
        bsz, _, X, Y, T = h.shape
        co = weights[0].shape[1]
        tr = T // 2 + 1
        x_ft = jnp.fft.rfftn(h, axes=(2, 3, 4))
        mul = lambda inp, w: jnp.einsum("bixyz,ioxyz->boxyz", inp, w)
        out_ft = jnp.zeros((bsz, co, X, Y, tr), jnp.complex64)
        out_ft = out_ft.at[:, :, :m1, :m2, :m3].set(mul(x_ft[:, :, :m1, :m2, :m3], weights[0]))
        out_ft = out_ft.at[:, :, X - m1:, :m2, :m3].set(mul(x_ft[:, :, X - m1:, :m2, :m3], weights[1]))
        out_ft = out_ft.at[:, :, :m1, Y - m2:, :m3].set(mul(x_ft[:, :, :m1, Y - m2:, :m3], weights[2]))
        out_ft = out_ft.at[:, :, X - m1:, Y - m2:, :m3].set(mul(x_ft[:, :, X - m1:, Y - m2:, :m3], weights[3]))
        return jnp.fft.irfftn(out_ft, s=(X, Y, T), axes=(2, 3, 4))

    gelu = lambda v: jax.nn.gelu(v, approximate=False)
    W0, b0 = params["fc0"]
    h = x @ W0 + b0
    h = jnp.transpose(h, (0, 4, 1, 2, 3))
    h = jnp.pad(h, ((0, 0), (0, 0), (0, 1), (0, 1), (0, 1)))
    for layer in range(4):
        x1 = spectral_ref(h, params[f"conv{layer}"])
        Ww, bw = params[f"w{layer}"]
        x2 = jnp.einsum("bixyz,io->boxyz", h, Ww) + bw[None, :, None, None, None]
        h = x1 + x2
        if layer < 3:
            h = gelu(h)
    h = h[..., :-1, :-1, :-1]
    h = jnp.transpose(h, (0, 2, 3, 4, 1))
    W1, b1 = params["fc1"]
    h = gelu(h @ W1 + b1)
    W2, b2 = params["fc2"]
    return h @ W2 + b2


if __name__ == "__main__":
    key = jax.random.PRNGKey(0)
    k_x, k_p = jax.random.split(key)

    batch, sx, sy, st, width = 2, 8, 8, 8, 32
    modes1, modes2, modes3 = 4, 4, 3

    x = jax.random.normal(k_x, (batch, sx, sy, st, width), jnp.float32)
    params = init_params(k_p, width, modes1, modes2, modes3)
    prep = preprocess_params(params, modes1, modes2, modes3)

    fwd = jax.jit(functools.partial(fno3d_forward, m1=modes1, m2=modes2, m3=modes3))
    out = fwd(x, prep)
    jax.block_until_ready(out)

    assert out.shape == (batch, sx, sy, st, width), out.shape
    assert out.dtype == jnp.float32
    assert bool(jnp.all(jnp.isfinite(out)))

    ref_fn = jax.jit(functools.partial(_reference_forward, m1=modes1, m2=modes2, m3=modes3))
    ref = ref_fn(x, params)
    jax.block_until_ready(ref)
    err = float(jnp.max(jnp.abs(out - ref)))
    scale = float(jnp.max(jnp.abs(ref))) + 1e-6
    assert err / scale < 5e-3, (err, scale)

    print("KERNEL_OK")
</pallas_src>

<mosaic_0001>
module attributes {stable_mosaic.version = 11 : i64} {
  func.func @_fc0_kernel(%arg0: i32, %arg1: memref<1024x32xf32, #tpu.memory_space<vmem>>, %arg2: memref<32x32xf32, #tpu.memory_space<vmem>>, %arg3: memref<32x1xf32, #tpu.memory_space<vmem>>, %arg4: memref<32x1024xf32, #tpu.memory_space<vmem>>) attributes {dimension_semantics = [#tpu.dimension_semantics<parallel>], iteration_bounds = array<i64: 1>, scalar_prefetch = 0 : i64, scratch_operands = 0 : i64, tpu.core_type = #tpu.core_type<tc>, window_params = [{transform_indices = @transform_0, window_bounds = array<i64: 1024, 32>}, {pipeline_mode = #tpu.pipeline_mode<synchronous>, transform_indices = @transform_1, window_bounds = array<i64: 32, 32>}, {pipeline_mode = #tpu.pipeline_mode<synchronous>, transform_indices = @transform_2, window_bounds = array<i64: 32, 1>}, {transform_indices = @transform_3, window_bounds = array<i64: 32, 1024>}]} {
    %c0 = arith.constant 0 : index
    %c0_0 = arith.constant 0 : index
    %0 = vector.load %arg2[%c0, %c0_0] : memref<32x32xf32, #tpu.memory_space<vmem>>, vector<32x32xf32>
    %c0_1 = arith.constant 0 : index
    %c0_2 = arith.constant 0 : index
    %1 = vector.load %arg1[%c0_1, %c0_2] : memref<1024x32xf32, #tpu.memory_space<vmem>>, vector<1024x32xf32>
    %cst = arith.constant dense<0.000000e+00> : vector<32x1024xf32>
    %2 = tpu.matmul %0, %1, %cst {dimension_numbers = #tpu.dot_dimension_numbers<[1], [1], [0], [0], [0, 0, 1, 0], [], []>} : vector<32x32xf32>, vector<1024x32xf32>, vector<32x1024xf32> -> vector<32x1024xf32>
    %c0_3 = arith.constant 0 : index
    %c0_4 = arith.constant 0 : index
    %3 = vector.load %arg3[%c0_3, %c0_4] : memref<32x1xf32, #tpu.memory_space<vmem>>, vector<32x1xf32>
    %4 = vector.broadcast %3 : vector<32x1xf32> to vector<32x1024xf32>
    %5 = arith.addf %2, %4 : vector<32x1024xf32>
    %c0_5 = arith.constant 0 : index
    %c0_6 = arith.constant 0 : index
    %6 = vector.load %arg4[%c0_5, %c0_6] : memref<32x1024xf32, #tpu.memory_space<vmem>>, vector<32x1024xf32>
    tpu.vector_store %arg4[%c0_5, %c0_6], %5 {strides = array<i32>} : memref<32x1024xf32, #tpu.memory_space<vmem>>, vector<32x1024xf32>,
    return
  }
  func.func @transform_0(%arg0: i32) -> (i32, i32) {
    %c0_i32 = arith.constant 0 : i32
    %c0_i32_0 = arith.constant 0 : i32
    return %arg0, %c0_i32 : i32, i32
  }
  func.func @transform_1(%arg0: i32) -> (i32, i32) {
    %c0_i32 = arith.constant 0 : i32
    %c0_i32_0 = arith.constant 0 : i32
    %c0_i32_1 = arith.constant 0 : i32
    return %c0_i32, %c0_i32_0 : i32, i32
  }
  func.func @transform_2(%arg0: i32) -> (i32, i32) {
    %c0_i32 = arith.constant 0 : i32
    %c0_i32_0 = arith.constant 0 : i32
    %c0_i32_1 = arith.constant 0 : i32
    return %c0_i32, %c0_i32_0 : i32, i32
  }
  func.func @transform_3(%arg0: i32) -> (i32, i32) {
    %c0_i32 = arith.constant 0 : i32
    %c0_i32_0 = arith.constant 0 : i32
    return %c0_i32, %arg0 : i32, i32
  }
}

module attributes {stable_mosaic.version = 11 : i64} {
  func.func @_spectral_mix_kernel(%arg0: i32, %arg1: memref<1x64x192xf32, #tpu.memory_space<vmem>>, %arg2: memref<64x64x192xf32, #tpu.memory_space<vmem>>, %arg3: memref<1x64x192xf32, #tpu.memory_space<vmem>>) attributes {dimension_semantics = [#tpu.dimension_semantics<parallel>], iteration_bounds = array<i64: 2>, scalar_prefetch = 0 : i64, scratch_operands = 0 : i64, tpu.core_type = #tpu.core_type<tc>, window_params = [{transform_indices = @transform_0, window_bounds = array<i64: 1, 64, 192>}, {pipeline_mode = #tpu.pipeline_mode<synchronous>, transform_indices = @transform_1, window_bounds = array<i64: 64, 64, 192>}, {transform_indices = @transform_2, window_bounds = array<i64: 1, 64, 192>}]} {
    %cst = arith.constant 0.000000e+00 : f32
    %0 = vector.broadcast %cst : f32 to vector<1x64x192xf32>
    %c0 = arith.constant 0 : index
    %c0_0 = arith.constant 0 : index
    %c0_1 = arith.constant 0 : index
    %1 = vector.load %arg1[%c0, %c0_0, %c0_1] : memref<1x64x192xf32, #tpu.memory_space<vmem>>, vector<1x1x192xf32>
    %c0_2 = arith.constant 0 : index
    %c0_3 = arith.constant 0 : index
    %c0_4 = arith.constant 0 : index
    %2 = vector.load %arg2[%c0_2, %c0_3, %c0_4] : memref<64x64x192xf32, #tpu.memory_space<vmem>>, vector<1x64x192xf32>
    %3 = vector.broadcast %1 : vector<1x1x192xf32> to vector<1x64x192xf32>
    %4 = arith.mulf %2, %3 : vector<1x64x192xf32>
    %5 = arith.addf %0, %4 : vector<1x64x192xf32>
    %c0_5 = arith.constant 0 : index
    %c1 = arith.constant 1 : index
    %c0_6 = arith.constant 0 : index
    %6 = vector.load %arg1[%c0_5, %c1, %c0_6] : memref<1x64x192xf32, #tpu.memory_space<vmem>>, vector<1x1x192xf32>
    %c1_7 = arith.constant 1 : index
    %c0_8 = arith.constant 0 : index
    %c0_9 = arith.constant 0 : index
    %7 = vector.load %arg2[%c1_7, %c0_8, %c0_9] : memref<64x64x192xf32, #tpu.memory_space<vmem>>, vector<1x64x192xf32>
    %8 = vector.broadcast %6 : vector<1x1x192xf32> to vector<1x64x192xf32>
    %9 = arith.mulf %7, %8 : vector<1x64x192xf32>
    %10 = arith.addf %5, %9 : vector<1x64x192xf32>
    %c0_10 = arith.constant 0 : index
    %c2 = arith.constant 2 : index
    %c0_11 = arith.constant 0 : index
    %11 = vector.load %arg1[%c0_10, %c2, %c0_11] : memref<1x64x192xf32, #tpu.memory_space<vmem>>, vector<1x1x192xf32>
    %c2_12 = arith.constant 2 : index
    %c0_13 = arith.constant 0 : index
    %c0_14 = arith.constant 0 : index
    %12 = vector.load %arg2[%c2_12, %c0_13, %c0_14] : memref<64x64x192xf32, #tpu.memory_space<vmem>>, vector<1x64x192xf32>
    %13 = vector.broadcast %11 : vector<1x1x192xf32> to vector<1x64x192xf32>
    %14 = arith.mulf %12, %13 : vector<1x64x192xf32>
    %15 = arith.addf %10, %14 : vector<1x64x192xf32>
    %c0_15 = arith.constant 0 : index
    %c3 = arith.constant 3 : index
    %c0_16 = arith.constant 0 : index
    %16 = vector.load %arg1[%c0_15, %c3, %c0_16] : memref<1x64x192xf32, #tpu.memory_space<vmem>>, vector<1x1x192xf32>
    %c3_17 = arith.constant 3 : index
    %c0_18 = arith.constant 0 : index
    %c0_19 = arith.constant 0 : index
    %17 = vector.load %arg2[%c3_17, %c0_18, %c0_19] : memref<64x64x192xf32, #tpu.memory_space<vmem>>, vector<1x64x192xf32>
    %18 = vector.broadcast %16 : vector<1x1x192xf32> to vector<1x64x192xf32>
    %19 = arith.mulf %17, %18 : vector<1x64x192xf32>
    %20 = arith.addf %15, %19 : vector<1x64x192xf32>
    %c0_20 = arith.constant 0 : index
    %c4 = arith.constant 4 : index
    %c0_21 = arith.constant 0 : index
    %21 = vector.load %arg1[%c0_20, %c4, %c0_21] : memref<1x64x192xf32, #tpu.memory_space<vmem>>, vector<1x1x192xf32>
    %c4_22 = arith.constant 4 : index
    %c0_23 = arith.constant 0 : index
    %c0_24 = arith.constant 0 : index
    %22 = vector.load %arg2[%c4_22, %c0_23, %c0_24] : memref<64x64x192xf32, #tpu.memory_space<vmem>>, vector<1x64x192xf32>
    %23 = vector.broadcast %21 : vector<1x1x192xf32> to vector<1x64x192xf32>
    %24 = arith.mulf %22, %23 : vector<1x64x192xf32>
    %25 = arith.addf %20, %24 : vector<1x64x192xf32>
    %c0_25 = arith.constant 0 : index
    %c5 = arith.constant 5 : index
    %c0_26 = arith.constant 0 : index
    %26 = vector.load %arg1[%c0_25, %c5, %c0_26] : memref<1x64x192xf32, #tpu.memory_space<vmem>>, vector<1x1x192xf32>
    %c5_27 = arith.constant 5 : index
    %c0_28 = arith.constant 0 : index
    %c0_29 = arith.constant 0 : index
    %27 = vector.load %arg2[%c5_27, %c0_28, %c0_29] : memref<64x64x192xf32, #tpu.memory_space<vmem>>, vector<1x64x192xf32>
    %28 = vector.broadcast %26 : vector<1x1x192xf32> to vector<1x64x192xf32>
    %29 = arith.mulf %27, %28 : vector<1x64x192xf32>
    %30 = arith.addf %25, %29 : vector<1x64x192xf32>
    %c0_30 = arith.constant 0 : index
    %c6 = arith.constant 6 : index
    %c0_31 = arith.constant 0 : index
    %31 = vector.load %arg1[%c0_30, %c6, %c0_31] : memref<1x64x192xf32, #tpu.memory_space<vmem>>, vector<1x1x192xf32>
    %c6_32 = arith.constant 6 : index
    %c0_33 = arith.constant 0 : index
    %c0_34 = arith.constant 0 : index
    %32 = vector.load %arg2[%c6_32, %c0_33, %c0_34] : memref<64x64x192xf32, #tpu.memory_space<vmem>>, vector<1x64x192xf32>
    %33 = vector.broadcast %31 : vector<1x1x192xf32> to vector<1x64x192xf32>
    %34 = arith.mulf %32, %33 : vector<1x64x192xf32>
    %35 = arith.addf %30, %34 : vector<1x64x192xf32>
    %c0_35 = arith.constant 0 : index
    %c7 = arith.constant 7 : index
    %c0_36 = arith.constant 0 : index
    %36 = vector.load %arg1[%c0_35, %c7, %c0_36] : memref<1x64x192xf32, #tpu.memory_space<vmem>>, vector<1x1x192xf32>
    %c7_37 = arith.constant 7 : index
    %c0_38 = arith.constant 0 : index
    %c0_39 = arith.constant 0 : index
    %37 = vector.load %arg2[%c7_37, %c0_38, %c0_39] : memref<64x64x192xf32, #tpu.memory_space<vmem>>, vector<1x64x192xf32>
    %38 = vector.broadcast %36 : vector<1x1x192xf32> to vector<1x64x192xf32>
    %39 = arith.mulf %37, %38 : vector<1x64x192xf32>
    %40 = arith.addf %35, %39 : vector<1x64x192xf32>
    %c0_40 = arith.constant 0 : index
    %c8 = arith.constant 8 : index
    %c0_41 = arith.constant 0 : index
    %41 = vector.load %arg1[%c0_40, %c8, %c0_41] : memref<1x64x192xf32, #tpu.memory_space<vmem>>, vector<1x1x192xf32>
    %c8_42 = arith.constant 8 : index
    %c0_43 = arith.constant 0 : index
    %c0_44 = arith.constant 0 : index
    %42 = vector.load %arg2[%c8_42, %c0_43, %c0_44] : memref<64x64x192xf32, #tpu.memory_space<vmem>>, vector<1x64x192xf32>
    %43 = vector.broadcast %41 : vector<1x1x192xf32> to vector<1x64x192xf32>
    %44 = arith.mulf %42, %43 : vector<1x64x192xf32>
    %45 = arith.addf %40, %44 : vector<1x64x192xf32>
    %c0_45 = arith.constant 0 : index
    %c9 = arith.constant 9 : index
    %c0_46 = arith.constant 0 : index
    %46 = vector.load %arg1[%c0_45, %c9, %c0_46] : memref<1x64x192xf32, #tpu.memory_space<vmem>>, vector<1x1x192xf32>
    %c9_47 = arith.constant 9 : index
    %c0_48 = arith.constant 0 : index
    %c0_49 = arith.constant 0 : index
    %47 = vector.load %arg2[%c9_47, %c0_48, %c0_49] : memref<64x64x192xf32, #tpu.memory_space<vmem>>, vector<1x64x192xf32>
    %48 = vector.broadcast %46 : vector<1x1x192xf32> to vector<1x64x192xf32>
    %49 = arith.mulf %47, %48 : vector<1x64x192xf32>
    %50 = arith.addf %45, %49 : vector<1x64x192xf32>
    %c0_50 = arith.constant 0 : index
    %c10 = arith.constant 10 : index
    %c0_51 = arith.constant 0 : index
    %51 = vector.load %arg1[%c0_50, %c10, %c0_51] : memref<1x64x192xf32, #tpu.memory_space<vmem>>, vector<1x1x192xf32>
    %c10_52 = arith.constant 10 : index
    %c0_53 = arith.constant 0 : index
    %c0_54 = arith.constant 0 : index
    %52 = vector.load %arg2[%c10_52, %c0_53, %c0_54] : memref<64x64x192xf32, #tpu.memory_space<vmem>>, vector<1x64x192xf32>
    %53 = vector.broadcast %51 : vector<1x1x192xf32> to vector<1x64x192xf32>
    %54 = arith.mulf %52, %53 : vector<1x64x192xf32>
    %55 = arith.addf %50, %54 : vector<1x64x192xf32>
    %c0_55 = arith.constant 0 : index
    %c11 = arith.constant 11 : index
    %c0_56 = arith.constant 0 : index
    %56 = vector.load %arg1[%c0_55, %c11, %c0_56] : memref<1x64x192xf32, #tpu.memory_space<vmem>>, vector<1x1x192xf32>
    %c11_57 = arith.constant 11 : index
    %c0_58 = arith.constant 0 : index
    %c0_59 = arith.constant 0 : index
    %57 = vector.load %arg2[%c11_57, %c0_58, %c0_59] : memref<64x64x192xf32, #tpu.memory_space<vmem>>, vector<1x64x192xf32>
    %58 = vector.broadcast %56 : vector<1x1x192xf32> to vector<1x64x192xf32>
    %59 = arith.mulf %57, %58 : vector<1x64x192xf32>
    %60 = arith.addf %55, %59 : vector<1x64x192xf32>
    %c0_60 = arith.constant 0 : index
    %c12 = arith.constant 12 : index
    %c0_61 = arith.constant 0 : index
    %61 = vector.load %arg1[%c0_60, %c12, %c0_61] : memref<1x64x192xf32, #tpu.memory_space<vmem>>, vector<1x1x192xf32>
    %c12_62 = arith.constant 12 : index
    %c0_63 = arith.constant 0 : index
    %c0_64 = arith.constant 0 : index
    %62 = vector.load %arg2[%c12_62, %c0_63, %c0_64] : memref<64x64x192xf32, #tpu.memory_space<vmem>>, vector<1x64x192xf32>
    %63 = vector.broadcast %61 : vector<1x1x192xf32> to vector<1x64x192xf32>
    %64 = arith.mulf %62, %63 : vector<1x64x192xf32>
    %65 = arith.addf %60, %64 : vector<1x64x192xf32>
    %c0_65 = arith.constant 0 : index
    %c13 = arith.constant 13 : index
    %c0_66 = arith.constant 0 : index
    %66 = vector.load %arg1[%c0_65, %c13, %c0_66] : memref<1x64x192xf32, #tpu.memory_space<vmem>>, vector<1x1x192xf32>
    %c13_67 = arith.constant 13 : index
    %c0_68 = arith.constant 0 : index
    %c0_69 = arith.constant 0 : index
    %67 = vector.load %arg2[%c13_67, %c0_68, %c0_69] : memref<64x64x192xf32, #tpu.memory_space<vmem>>, vector<1x64x192xf32>
    %68 = vector.broadcast %66 : vector<1x1x192xf32> to vector<1x64x192xf32>
    %69 = arith.mulf %67, %68 : vector<1x64x192xf32>
    %70 = arith.addf %65, %69 : vector<1x64x192xf32>
    %c0_70 = arith.constant 0 : index
    %c14 = arith.constant 14 : index
    %c0_71 = arith.constant 0 : index
    %71 = vector.load %arg1[%c0_70, %c14, %c0_71] : memref<1x64x192xf32, #tpu.memory_space<vmem>>, vector<1x1x192xf32>
    %c14_72 = arith.constant 14 : index
    %c0_73 = arith.constant 0 : index
    %c0_74 = arith.constant 0 : index
    %72 = vector.load %arg2[%c14_72, %c0_73, %c0_74] : memref<64x64x192xf32, #tpu.memory_space<vmem>>, vector<1x64x192xf32>
    %73 = vector.broadcast %71 : vector<1x1x192xf32> to vector<1x64x192xf32>
    %74 = arith.mulf %72, %73 : vector<1x64x192xf32>
    %75 = arith.addf %70, %74 : vector<1x64x192xf32>
    %c0_75 = arith.constant 0 : index
    %c15 = arith.constant 15 : index
    %c0_76 = arith.constant 0 : index
    %76 = vector.load %arg1[%c0_75, %c15, %c0_76] : memref<1x64x192xf32, #tpu.memory_space<vmem>>, vector<1x1x192xf32>
    %c15_77 = arith.constant 15 : index
    %c0_78 = arith.constant 0 : index
    %c0_79 = arith.constant 0 : index
    %77 = vector.load %arg2[%c15_77, %c0_78, %c0_79] : memref<64x64x192xf32, #tpu.memory_space<vmem>>, vector<1x64x192xf32>
    %78 = vector.broadcast %76 : vector<1x1x192xf32> to vector<1x64x192xf32>
    %79 = arith.mulf %77, %78 : vector<1x64x192xf32>
    %80 = arith.addf %75, %79 : vector<1x64x192xf32>
    %c0_80 = arith.constant 0 : index
    %c16 = arith.constant 16 : index
    %c0_81 = arith.constant 0 : index
    %81 = vector.load %arg1[%c0_80, %c16, %c0_81] : memref<1x64x192xf32, #tpu.memory_space<vmem>>, vector<1x1x192xf32>
    %c16_82 = arith.constant 16 : index
    %c0_83 = arith.constant 0 : index
    %c0_84 = arith.constant 0 : index
    %82 = vector.load %arg2[%c16_82, %c0_83, %c0_84] : memref<64x64x192xf32, #tpu.memory_space<vmem>>, vector<1x64x192xf32>
    %83 = vector.broadcast %81 : vector<1x1x192xf32> to vector<1x64x192xf32>
    %84 = arith.mulf %82, %83 : vector<1x64x192xf32>
    %85 = arith.addf %80, %84 : vector<1x64x192xf32>
    %c0_85 = arith.constant 0 : index
    %c17 = arith.constant 17 : index
    %c0_86 = arith.constant 0 : index
    %86 = vector.load %arg1[%c0_85, %c17, %c0_86] : memref<1x64x192xf32, #tpu.memory_space<vmem>>, vector<1x1x192xf32>
    %c17_87 = arith.constant 17 : index
    %c0_88 = arith.constant 0 : index
    %c0_89 = arith.constant 0 : index
    %87 = vector.load %arg2[%c17_87, %c0_88, %c0_89] : memref<64x64x192xf32, #tpu.memory_space<vmem>>, vector<1x64x192xf32>
    %88 = vector.broadcast %86 : vector<1x1x192xf32> to vector<1x64x192xf32>
    %89 = arith.mulf %87, %88 : vector<1x64x192xf32>
    %90 = arith.addf %85, %89 : vector<1x64x192xf32>
    %c0_90 = arith.constant 0 : index
    %c18 = arith.constant 18 : index
    %c0_91 = arith.constant 0 : index
    %91 = vector.load %arg1[%c0_90, %c18, %c0_91] : memref<1x64x192xf32, #tpu.memory_space<vmem>>, vector<1x1x192xf32>
    %c18_92 = arith.constant 18 : index
    %c0_93 = arith.constant 0 : index
    %c0_94 = arith.constant 0 : index
    %92 = vector.load %arg2[%c18_92, %c0_93, %c0_94] : memref<64x64x192xf32, #tpu.memory_space<vmem>>, vector<1x64x192xf32>
    %93 = vector.broadcast %91 : vector<1x1x192xf32> to vector<1x64x192xf32>
    %94 = arith.mulf %92, %93 : vector<1x64x192xf32>
    %95 = arith.addf %90, %94 : vector<1x64x192xf32>
    %c0_95 = arith.constant 0 : index
    %c19 = arith.constant 19 : index
    %c0_96 = arith.constant 0 : index
    %96 = vector.load %arg1[%c0_95, %c19, %c0_96] : memref<1x64x192xf32, #tpu.memory_space<vmem>>, vector<1x1x192xf32>
    %c19_97 = arith.constant 19 : index
    %c0_98 = arith.constant 0 : index
    %c0_99 = arith.constant 0 : index
    %97 = vector.load %arg2[%c19_97, %c0_98, %c0_99] : memref<64x64x192xf32, #tpu.memory_space<vmem>>, vector<1x64x192xf32>
    %98 = vector.broadcast %96 : vector<1x1x192xf32> to vector<1x64x192xf32>
    %99 = arith.mulf %97, %98 : vector<1x64x192xf32>
    %100 = arith.addf %95, %99 : vector<1x64x192xf32>
    %c0_100 = arith.constant 0 : index
    %c20 = arith.constant 20 : index
    %c0_101 = arith.constant 0 : index
    %101 = vector.load %arg1[%c0_100, %c20, %c0_101] : memref<1x64x192xf32, #tpu.memory_space<vmem>>, vector<1x1x192xf32>
    %c20_102 = arith.constant 20 : index
    %c0_103 = arith.constant 0 : index
    %c0_104 = arith.constant 0 : index
    %102 = vector.load %arg2[%c20_102, %c0_103, %c0_104] : memref<64x64x192xf32, #tpu.memory_space<vmem>>, vector<1x64x192xf32>
    %103 = vector.broadcast %101 : vector<1x1x192xf32> to vector<1x64x192xf32>
    %104 = arith.mulf %102, %103 : vector<1x64x192xf32>
    %105 = arith.addf %100, %104 : vector<1x64x192xf32>
    %c0_105 = arith.constant 0 : index
    %c21 = arith.constant 21 : index
    %c0_106 = arith.constant 0 : index
    %106 = vector.load %arg1[%c0_105, %c21, %c0_106] : memref<1x64x192xf32, #tpu.memory_space<vmem>>, vector<1x1x192xf32>
    %c21_107 = arith.constant 21 : index
    %c0_108 = arith.constant 0 : index
    %c0_109 = arith.constant 0 : index
    %107 = vector.load %arg2[%c21_107, %c0_108, %c0_109] : memref<64x64x192xf32, #tpu.memory_space<vmem>>, vector<1x64x192xf32>
    %108 = vector.broadcast %106 : vector<1x1x192xf32> to vector<1x64x192xf32>
    %109 = arith.mulf %107, %108 : vector<1x64x192xf32>
    %110 = arith.addf %105, %109 : vector<1x64x192xf32>
    %c0_110 = arith.constant 0 : index
    %c22 = arith.constant 22 : index
    %c0_111 = arith.constant 0 : index
    %111 = vector.load %arg1[%c0_110, %c22, %c0_111] : memref<1x64x192xf32, #tpu.memory_space<vmem>>, vector<1x1x192xf32>
    %c22_112 = arith.constant 22 : index
    %c0_113 = arith.constant 0 : index
    %c0_114 = arith.constant 0 : index
    %112 = vector.load %arg2[%c22_112, %c0_113, %c0_114] : memref<64x64x192xf32, #tpu.memory_space<vmem>>, vector<1x64x192xf32>
    %113 = vector.broadcast %111 : vector<1x1x192xf32> to vector<1x64x192xf32>
    %114 = arith.mulf %112, %113 : vector<1x64x192xf32>
    %115 = arith.addf %110, %114 : vector<1x64x192xf32>
    %c0_115 = arith.constant 0 : index
    %c23 = arith.constant 23 : index
    %c0_116 = arith.constant 0 : index
    %116 = vector.load %arg1[%c0_115, %c23, %c0_116] : memref<1x64x192xf32, #tpu.memory_space<vmem>>, vector<1x1x192xf32>
    %c23_117 = arith.constant 23 : index
    %c0_118 = arith.constant 0 : index
    %c0_119 = arith.constant 0 : index
    %117 = vector.load %arg2[%c23_117, %c0_118, %c0_119] : memref<64x64x192xf32, #tpu.memory_space<vmem>>, vector<1x64x192xf32>
    %118 = vector.broadcast %116 : vector<1x1x192xf32> to vector<1x64x192xf32>
    %119 = arith.mulf %117, %118 : vector<1x64x192xf32>
    %120 = arith.addf %115, %119 : vector<1x64x192xf32>
    %c0_120 = arith.constant 0 : index
    %c24 = arith.constant 24 : index
    %c0_121 = arith.constant 0 : index
    %121 = vector.load %arg1[%c0_120, %c24, %c0_121] : memref<1x64x192xf32, #tpu.memory_space<vmem>>, vector<1x1x192xf32>
    %c24_122 = arith.constant 24 : index
    %c0_123 = arith.constant 0 : index
    %c0_124 = arith.constant 0 : index
    %122 = vector.load %arg2[%c24_122, %c0_123, %c0_124] : memref<64x64x192xf32, #tpu.memory_space<vmem>>, vector<1x64x192xf32>
    %123 = vector.broadcast %121 : vector<1x1x192xf32> to vector<1x64x192xf32>
    %124 = arith.mulf %122, %123 : vector<1x64x192xf32>
    %125 = arith.addf %120, %124 : vector<1x64x192xf32>
    %c0_125 = arith.constant 0 : index
    %c25 = arith.constant 25 : index
    %c0_126 = arith.constant 0 : index
    %126 = vector.load %arg1[%c0_125, %c25, %c0_126] : memref<1x64x192xf32, #tpu.memory_space<vmem>>, vector<1x1x192xf32>
    %c25_127 = arith.constant 25 : index
    %c0_128 = arith.constant 0 : index
    %c0_129 = arith.constant 0 : index
    %127 = vector.load %arg2[%c25_127, %c0_128, %c0_129] : memref<64x64x192xf32, #tpu.memory_space<vmem>>, vector<1x64x192xf32>
    %128 = vector.broadcast %126 : vector<1x1x192xf32> to vector<1x64x192xf32>
    %129 = arith.mulf %127, %128 : vector<1x64x192xf32>
    %130 = arith.addf %125, %129 : vector<1x64x192xf32>
    %c0_130 = arith.constant 0 : index
    %c26 = arith.constant 26 : index
    %c0_131 = arith.constant 0 : index
    %131 = vector.load %arg1[%c0_130, %c26, %c0_131] : memref<1x64x192xf32, #tpu.memory_space<vmem>>, vector<1x1x192xf32>
    %c26_132 = arith.constant 26 : index
    %c0_133 = arith.constant 0 : index
    %c0_134 = arith.constant 0 : index
    %132 = vector.load %arg2[%c26_132, %c0_133, %c0_134] : memref<64x64x192xf32, #tpu.memory_space<vmem>>, vector<1x64x192xf32>
    %133 = vector.broadcast %131 : vector<1x1x192xf32> to vector<1x64x192xf32>
    %134 = arith.mulf %132, %133 : vector<1x64x192xf32>
    %135 = arith.addf %130, %134 : vector<1x64x192xf32>
    %c0_135 = arith.constant 0 : index
    %c27 = arith.constant 27 : index
    %c0_136 = arith.constant 0 : index
    %136 = vector.load %arg1[%c0_135, %c27, %c0_136] : memref<1x64x192xf32, #tpu.memory_space<vmem>>, vector<1x1x192xf32>
    %c27_137 = arith.constant 27 : index
    %c0_138 = arith.constant 0 : index
    %c0_139 = arith.constant 0 : index
    %137 = vector.load %arg2[%c27_137, %c0_138, %c0_139] : memref<64x64x192xf32, #tpu.memory_space<vmem>>, vector<1x64x192xf32>
    %138 = vector.broadcast %136 : vector<1x1x192xf32> to vector<1x64x192xf32>
    %139 = arith.mulf %137, %138 : vector<1x64x192xf32>
    %140 = arith.addf %135, %139 : vector<1x64x192xf32>
    %c0_140 = arith.constant 0 : index
    %c28 = arith.constant 28 : index
    %c0_141 = arith.constant 0 : index
    %141 = vector.load %arg1[%c0_140, %c28, %c0_141] : memref<1x64x192xf32, #tpu.memory_space<vmem>>, vector<1x1x192xf32>
    %c28_142 = arith.constant 28 : index
    %c0_143 = arith.constant 0 : index
    %c0_144 = arith.constant 0 : index
    %142 = vector.load %arg2[%c28_142, %c0_143, %c0_144] : memref<64x64x192xf32, #tpu.memory_space<vmem>>, vector<1x64x192xf32>
    %143 = vector.broadcast %141 : vector<1x1x192xf32> to vector<1x64x192xf32>
    %144 = arith.mulf %142, %143 : vector<1x64x192xf32>
    %145 = arith.addf %140, %144 : vector<1x64x192xf32>
    %c0_145 = arith.constant 0 : index
    %c29 = arith.constant 29 : index
    %c0_146 = arith.constant 0 : index
    %146 = vector.load %arg1[%c0_145, %c29, %c0_146] : memref<1x64x192xf32, #tpu.memory_space<vmem>>, vector<1x1x192xf32>
    %c29_147 = arith.constant 29 : index
    %c0_148 = arith.constant 0 : index
    %c0_149 = arith.constant 0 : index
    %147 = vector.load %arg2[%c29_147, %c0_148, %c0_149] : memref<64x64x192xf32, #tpu.memory_space<vmem>>, vector<1x64x192xf32>
    %148 = vector.broadcast %146 : vector<1x1x192xf32> to vector<1x64x192xf32>
    %149 = arith.mulf %147, %148 : vector<1x64x192xf32>
    %150 = arith.addf %145, %149 : vector<1x64x192xf32>
    %c0_150 = arith.constant 0 : index
    %c30 = arith.constant 30 : index
    %c0_151 = arith.constant 0 : index
    %151 = vector.load %arg1[%c0_150, %c30, %c0_151] : memref<1x64x192xf32, #tpu.memory_space<vmem>>, vector<1x1x192xf32>
    %c30_152 = arith.constant 30 : index
    %c0_153 = arith.constant 0 : index
    %c0_154 = arith.constant 0 : index
    %152 = vector.load %arg2[%c30_152, %c0_153, %c0_154] : memref<64x64x192xf32, #tpu.memory_space<vmem>>, vector<1x64x192xf32>
    %153 = vector.broadcast %151 : vector<1x1x192xf32> to vector<1x64x192xf32>
    %154 = arith.mulf %152, %153 : vector<1x64x192xf32>
    %155 = arith.addf %150, %154 : vector<1x64x192xf32>
    %c0_155 = arith.constant 0 : index
    %c31 = arith.constant 31 : index
    %c0_156 = arith.constant 0 : index
    %156 = vector.load %arg1[%c0_155, %c31, %c0_156] : memref<1x64x192xf32, #tpu.memory_space<vmem>>, vector<1x1x192xf32>
    %c31_157 = arith.constant 31 : index
    %c0_158 = arith.constant 0 : index
    %c0_159 = arith.constant 0 : index
    %157 = vector.load %arg2[%c31_157, %c0_158, %c0_159] : memref<64x64x192xf32, #tpu.memory_space<vmem>>, vector<1x64x192xf32>
    %158 = vector.broadcast %156 : vector<1x1x192xf32> to vector<1x64x192xf32>
    %159 = arith.mulf %157, %158 : vector<1x64x192xf32>
    %160 = arith.addf %155, %159 : vector<1x64x192xf32>
    %c0_160 = arith.constant 0 : index
    %c32 = arith.constant 32 : index
    %c0_161 = arith.constant 0 : index
    %161 = vector.load %arg1[%c0_160, %c32, %c0_161] : memref<1x64x192xf32, #tpu.memory_space<vmem>>, vector<1x1x192xf32>
    %c32_162 = arith.constant 32 : index
    %c0_163 = arith.constant 0 : index
    %c0_164 = arith.constant 0 : index
    %162 = vector.load %arg2[%c32_162, %c0_163, %c0_164] : memref<64x64x192xf32, #tpu.memory_space<vmem>>, vector<1x64x192xf32>
    %163 = vector.broadcast %161 : vector<1x1x192xf32> to vector<1x64x192xf32>
    %164 = arith.mulf %162, %163 : vector<1x64x192xf32>
    %165 = arith.addf %160, %164 : vector<1x64x192xf32>
    %c0_165 = arith.constant 0 : index
    %c33 = arith.constant 33 : index
    %c0_166 = arith.constant 0 : index
    %166 = vector.load %arg1[%c0_165, %c33, %c0_166] : memref<1x64x192xf32, #tpu.memory_space<vmem>>, vector<1x1x192xf32>
    %c33_167 = arith.constant 33 : index
    %c0_168 = arith.constant 0 : index
    %c0_169 = arith.constant 0 : index
    %167 = vector.load %arg2[%c33_167, %c0_168, %c0_169] : memref<64x64x192xf32, #tpu.memory_space<vmem>>, vector<1x64x192xf32>
    %168 = vector.broadcast %166 : vector<1x1x192xf32> to vector<1x64x192xf32>
    %169 = arith.mulf %167, %168 : vector<1x64x192xf32>
    %170 = arith.addf %165, %169 : vector<1x64x192xf32>
    %c0_170 = arith.constant 0 : index
    %c34 = arith.constant 34 : index
    %c0_171 = arith.constant 0 : index
    %171 = vector.load %arg1[%c0_170, %c34, %c0_171] : memref<1x64x192xf32, #tpu.memory_space<vmem>>, vector<1x1x192xf32>
    %c34_172 = arith.constant 34 : index
    %c0_173 = arith.constant 0 : index
    %c0_174 = arith.constant 0 : index
    %172 = vector.load %arg2[%c34_172, %c0_173, %c0_174] : memref<64x64x192xf32, #tpu.memory_space<vmem>>, vector<1x64x192xf32>
    %173 = vector.broadcast %171 : vector<1x1x192xf32> to vector<1x64x192xf32>
    %174 = arith.mulf %172, %173 : vector<1x64x192xf32>
    %175 = arith.addf %170, %174 : vector<1x64x192xf32>
    %c0_175 = arith.constant 0 : index
    %c35 = arith.constant 35 : index
    %c0_176 = arith.constant 0 : index
    %176 = vector.load %arg1[%c0_175, %c35, %c0_176] : memref<1x64x192xf32, #tpu.memory_space<vmem>>, vector<1x1x192xf32>
    %c35_177 = arith.constant 35 : index
    %c0_178 = arith.constant 0 : index
    %c0_179 = arith.constant 0 : index
    %177 = vector.load %arg2[%c35_177, %c0_178, %c0_179] : memref<64x64x192xf32, #tpu.memory_space<vmem>>, vector<1x64x192xf32>
    %178 = vector.broadcast %176 : vector<1x1x192xf32> to vector<1x64x192xf32>
    %179 = arith.mulf %177, %178 : vector<1x64x192xf32>
    %180 = arith.addf %175, %179 : vector<1x64x192xf32>
    %c0_180 = arith.constant 0 : index
    %c36 = arith.constant 36 : index
    %c0_181 = arith.constant 0 : index
    %181 = vector.load %arg1[%c0_180, %c36, %c0_181] : memref<1x64x192xf32, #tpu.memory_space<vmem>>, vector<1x1x192xf32>
    %c36_182 = arith.constant 36 : index
    %c0_183 = arith.constant 0 : index
    %c0_184 = arith.constant 0 : index
    %182 = vector.load %arg2[%c36_182, %c0_183, %c0_184] : memref<64x64x192xf32, #tpu.memory_space<vmem>>, vector<1x64x192xf32>
    %183 = vector.broadcast %181 : vector<1x1x192xf32> to vector<1x64x192xf32>
    %184 = arith.mulf %182, %183 : vector<1x64x192xf32>
    %185 = arith.addf %180, %184 : vector<1x64x192xf32>
    %c0_185 = arith.constant 0 : index
    %c37 = arith.constant 37 : index
    %c0_186 = arith.constant 0 : index
    %186 = vector.load %arg1[%c0_185, %c37, %c0_186] : memref<1x64x192xf32, #tpu.memory_space<vmem>>, vector<1x1x192xf32>
    %c37_187 = arith.constant 37 : index
    %c0_188 = arith.constant 0 : index
    %c0_189 = arith.constant 0 : index
    %187 = vector.load %arg2[%c37_187, %c0_188, %c0_189] : memref<64x64x192xf32, #tpu.memory_space<vmem>>, vector<1x64x192xf32>
    %188 = vector.broadcast %186 : vector<1x1x192xf32> to vector<1x64x192xf32>
    %189 = arith.mulf %187, %188 : vector<1x64x192xf32>
    %190 = arith.addf %185, %189 : vector<1x64x192xf32>
    %c0_190 = arith.constant 0 : index
    %c38 = arith.constant 38 : index
    %c0_191 = arith.constant 0 : index
    %191 = vector.load %arg1[%c0_190, %c38, %c0_191] : memref<1x64x192xf32, #tpu.memory_space<vmem>>, vector<1x1x192xf32>
    %c38_192 = arith.constant 38 : index
    %c0_193 = arith.constant 0 : index
    %c0_194 = arith.constant 0 : index
    %192 = vector.load %arg2[%c38_192, %c0_193, %c0_194] : memref<64x64x192xf32, #tpu.memory_space<vmem>>, vector<1x64x192xf32>
    %193 = vector.broadcast %191 : vector<1x1x192xf32> to vector<1x64x192xf32>
    %194 = arith.mulf %192, %193 : vector<1x64x192xf32>
    %195 = arith.addf %190, %194 : vector<1x64x192xf32>
    %c0_195 = arith.constant 0 : index
    %c39 = arith.constant 39 : index
    %c0_196 = arith.constant 0 : index
    %196 = vector.load %arg1[%c0_195, %c39, %c0_196] : memref<1x64x192xf32, #tpu.memory_space<vmem>>, vector<1x1x192xf32>
    %c39_197 = arith.constant 39 : index
    %c0_198 = arith.constant 0 : index
    %c0_199 = arith.constant 0 : index
    %197 = vector.load %arg2[%c39_197, %c0_198, %c0_199] : memref<64x64x192xf32, #tpu.memory_space<vmem>>, vector<1x64x192xf32>
    %198 = vector.broadcast %196 : vector<1x1x192xf32> to vector<1x64x192xf32>
    %199 = arith.mulf %197, %198 : vector<1x64x192xf32>
    %200 = arith.addf %195, %199 : vector<1x64x192xf32>
    %c0_200 = arith.constant 0 : index
    %c40 = arith.constant 40 : index
    %c0_201 = arith.constant 0 : index
    %201 = vector.load %arg1[%c0_200, %c40, %c0_201] : memref<1x64x192xf32, #tpu.memory_space<vmem>>, vector<1x1x192xf32>
    %c40_202 = arith.constant 40 : index
    %c0_203 = arith.constant 0 : index
    %c0_204 = arith.constant 0 : index
    %202 = vector.load %arg2[%c40_202, %c0_203, %c0_204] : memref<64x64x192xf32, #tpu.memory_space<vmem>>, vector<1x64x192xf32>
    %203 = vector.broadcast %201 : vector<1x1x192xf32> to vector<1x64x192xf32>
    %204 = arith.mulf %202, %203 : vector<1x64x192xf32>
    %205 = arith.addf %200, %204 : vector<1x64x192xf32>
    %c0_205 = arith.constant 0 : index
    %c41 = arith.constant 41 : index
    %c0_206 = arith.constant 0 : index
    %206 = vector.load %arg1[%c0_205, %c41, %c0_206] : memref<1x64x192xf32, #tpu.memory_space<vmem>>, vector<1x1x192xf32>
    %c41_207 = arith.constant 41 : index
    %c0_208 = arith.constant 0 : index
    %c0_209 = arith.constant 0 : index
    %207 = vector.load %arg2[%c41_207, %c0_208, %c0_209] : memref<64x64x192xf32, #tpu.memory_space<vmem>>, vector<1x64x192xf32>
    %208 = vector.broadcast %206 : vector<1x1x192xf32> to vector<1x64x192xf32>
    %209 = arith.mulf %207, %208 : vector<1x64x192xf32>
    %210 = arith.addf %205, %209 : vector<1x64x192xf32>
    %c0_210 = arith.constant 0 : index
    %c42 = arith.constant 42 : index
    %c0_211 = arith.constant 0 : index
    %211 = vector.load %arg1[%c0_210, %c42, %c0_211] : memref<1x64x192xf32, #tpu.memory_space<vmem>>, vector<1x1x192xf32>
    %c42_212 = arith.constant 42 : index
    %c0_213 = arith.constant 0 : index
    %c0_214 = arith.constant 0 : index
    %212 = vector.load %arg2[%c42_212, %c0_213, %c0_214] : memref<64x64x192xf32, #tpu.memory_space<vmem>>, vector<1x64x192xf32>
    %213 = vector.broadcast %211 : vector<1x1x192xf32> to vector<1x64x192xf32>
    %214 = arith.mulf %212, %213 : vector<1x64x192xf32>
    %215 = arith.addf %210, %214 : vector<1x64x192xf32>
    %c0_215 = arith.constant 0 : index
    %c43 = arith.constant 43 : index
    %c0_216 = arith.constant 0 : index
    %216 = vector.load %arg1[%c0_215, %c43, %c0_216] : memref<1x64x192xf32, #tpu.memory_space<vmem>>, vector<1x1x192xf32>
    %c43_217 = arith.constant 43 : index
    %c0_218 = arith.constant 0 : index
    %c0_219 = arith.constant 0 : index
    %217 = vector.load %arg2[%c43_217, %c0_218, %c0_219] : memref<64x64x192xf32, #tpu.memory_space<vmem>>, vector<1x64x192xf32>
    %218 = vector.broadcast %216 : vector<1x1x192xf32> to vector<1x64x192xf32>
    %219 = arith.mulf %217, %218 : vector<1x64x192xf32>
    %220 = arith.addf %215, %219 : vector<1x64x192xf32>
    %c0_220 = arith.constant 0 : index
    %c44 = arith.constant 44 : index
    %c0_221 = arith.constant 0 : index
    %221 = vector.load %arg1[%c0_220, %c44, %c0_221] : memref<1x64x192xf32, #tpu.memory_space<vmem>>, vector<1x1x192xf32>
    %c44_222 = arith.constant 44 : index
    %c0_223 = arith.constant 0 : index
    %c0_224 = arith.constant 0 : index
    %222 = vector.load %arg2[%c44_222, %c0_223, %c0_224] : memref<64x64x192xf32, #tpu.memory_space<vmem>>, vector<1x64x192xf32>
    %223 = vector.broadcast %221 : vector<1x1x192xf32> to vector<1x64x192xf32>
    %224 = arith.mulf %222, %223 : vector<1x64x192xf32>
    %225 = arith.addf %220, %224 : vector<1x64x192xf32>
    %c0_225 = arith.constant 0 : index
    %c45 = arith.constant 45 : index
    %c0_226 = arith.constant 0 : index
    %226 = vector.load %arg1[%c0_225, %c45, %c0_226] : memref<1x64x192xf32, #tpu.memory_space<vmem>>, vector<1x1x192xf32>
    %c45_227 = arith.constant 45 : index
    %c0_228 = arith.constant 0 : index
    %c0_229 = arith.constant 0 : index
    %227 = vector.load %arg2[%c45_227, %c0_228, %c0_229] : memref<64x64x192xf32, #tpu.memory_space<vmem>>, vector<1x64x192xf32>
    %228 = vector.broadcast %226 : vector<1x1x192xf32> to vector<1x64x192xf32>
    %229 = arith.mulf %227, %228 : vector<1x64x192xf32>
    %230 = arith.addf %225, %229 : vector<1x64x192xf32>
    %c0_230 = arith.constant 0 : index
    %c46 = arith.constant 46 : index
    %c0_231 = arith.constant 0 : index
    %231 = vector.load %arg1[%c0_230, %c46, %c0_231] : memref<1x64x192xf32, #tpu.memory_space<vmem>>, vector<1x1x192xf32>
    %c46_232 = arith.constant 46 : index
    %c0_233 = arith.constant 0 : index
    %c0_234 = arith.constant 0 : index
    %232 = vector.load %arg2[%c46_232, %c0_233, %c0_234] : memref<64x64x192xf32, #tpu.memory_space<vmem>>, vector<1x64x192xf32>
    %233 = vector.broadcast %231 : vector<1x1x192xf32> to vector<1x64x192xf32>
    %234 = arith.mulf %232, %233 : vector<1x64x192xf32>
    %235 = arith.addf %230, %234 : vector<1x64x192xf32>
    %c0_235 = arith.constant 0 : index
    %c47 = arith.constant 47 : index
    %c0_236 = arith.constant 0 : index
    %236 = vector.load %arg1[%c0_235, %c47, %c0_236] : memref<1x64x192xf32, #tpu.memory_space<vmem>>, vector<1x1x192xf32>
    %c47_237 = arith.constant 47 : index
    %c0_238 = arith.constant 0 : index
    %c0_239 = arith.constant 0 : index
    %237 = vector.load %arg2[%c47_237, %c0_238, %c0_239] : memref<64x64x192xf32, #tpu.memory_space<vmem>>, vector<1x64x192xf32>
    %238 = vector.broadcast %236 : vector<1x1x192xf32> to vector<1x64x192xf32>
    %239 = arith.mulf %237, %238 : vector<1x64x192xf32>
    %240 = arith.addf %235, %239 : vector<1x64x192xf32>
    %c0_240 = arith.constant 0 : index
    %c48 = arith.constant 48 : index
    %c0_241 = arith.constant 0 : index
    %241 = vector.load %arg1[%c0_240, %c48, %c0_241] : memref<1x64x192xf32, #tpu.memory_space<vmem>>, vector<1x1x192xf32>
    %c48_242 = arith.constant 48 : index
    %c0_243 = arith.constant 0 : index
    %c0_244 = arith.constant 0 : index
    %242 = vector.load %arg2[%c48_242, %c0_243, %c0_244] : memref<64x64x192xf32, #tpu.memory_space<vmem>>, vector<1x64x192xf32>
    %243 = vector.broadcast %241 : vector<1x1x192xf32> to vector<1x64x192xf32>
    %244 = arith.mulf %242, %243 : vector<1x64x192xf32>
    %245 = arith.addf %240, %244 : vector<1x64x192xf32>
    %c0_245 = arith.constant 0 : index
    %c49 = arith.constant 49 : index
    %c0_246 = arith.constant 0 : index
    %246 = vector.load %arg1[%c0_245, %c49, %c0_246] : memref<1x64x192xf32, #tpu.memory_space<vmem>>, vector<1x1x192xf32>
    %c49_247 = arith.constant 49 : index
    %c0_248 = arith.constant 0 : index
    %c0_249 = arith.constant 0 : index
    %247 = vector.load %arg2[%c49_247, %c0_248, %c0_249] : memref<64x64x192xf32, #tpu.memory_space<vmem>>, vector<1x64x192xf32>
    %248 = vector.broadcast %246 : vector<1x1x192xf32> to vector<1x64x192xf32>
    %249 = arith.mulf %247, %248 : vector<1x64x192xf32>
    %250 = arith.addf %245, %249 : vector<1x64x192xf32>
    %c0_250 = arith.constant 0 : index
    %c50 = arith.constant 50 : index
    %c0_251 = arith.constant 0 : index
    %251 = vector.load %arg1[%c0_250, %c50, %c0_251] : memref<1x64x192xf32, #tpu.memory_space<vmem>>, vector<1x1x192xf32>
    %c50_252 = arith.constant 50 : index
    %c0_253 = arith.constant 0 : index
    %c0_254 = arith.constant 0 : index
    %252 = vector.load %arg2[%c50_252, %c0_253, %c0_254] : memref<64x64x192xf32, #tpu.memory_space<vmem>>, vector<1x64x192xf32>
    %253 = vector.broadcast %251 : vector<1x1x192xf32> to vector<1x64x192xf32>
    %254 = arith.mulf %252, %253 : vector<1x64x192xf32>
    %255 = arith.addf %250, %254 : vector<1x64x192xf32>
    %c0_255 = arith.constant 0 : index
    %c51 = arith.constant 51 : index
    %c0_256 = arith.constant 0 : index
    %256 = vector.load %arg1[%c0_255, %c51, %c0_256] : memref<1x64x192xf32, #tpu.memory_space<vmem>>, vector<1x1x192xf32>
    %c51_257 = arith.constant 51 : index
    %c0_258 = arith.constant 0 : index
    %c0_259 = arith.constant 0 : index
    %257 = vector.load %arg2[%c51_257, %c0_258, %c0_259] : memref<64x64x192xf32, #tpu.memory_space<vmem>>, vector<1x64x192xf32>
    %258 = vector.broadcast %256 : vector<1x1x192xf32> to vector<1x64x192xf32>
    %259 = arith.mulf %257, %258 : vector<1x64x192xf32>
    %260 = arith.addf %255, %259 : vector<1x64x192xf32>
    %c0_260 = arith.constant 0 : index
    %c52 = arith.constant 52 : index
    %c0_261 = arith.constant 0 : index
    %261 = vector.load %arg1[%c0_260, %c52, %c0_261] : memref<1x64x192xf32, #tpu.memory_space<vmem>>, vector<1x1x192xf32>
    %c52_262 = arith.constant 52 : index
    %c0_263 = arith.constant 0 : index
    %c0_264 = arith.constant 0 : index
    %262 = vector.load %arg2[%c52_262, %c0_263, %c0_264] : memref<64x64x192xf32, #tpu.memory_space<vmem>>, vector<1x64x192xf32>
    %263 = vector.broadcast %261 : vector<1x1x192xf32> to vector<1x64x192xf32>
    %264 = arith.mulf %262, %263 : vector<1x64x192xf32>
    %265 = arith.addf %260, %264 : vector<1x64x192xf32>
    %c0_265 = arith.constant 0 : index
    %c53 = arith.constant 53 : index
    %c0_266 = arith.constant 0 : index
    %266 = vector.load %arg1[%c0_265, %c53, %c0_266] : memref<1x64x192xf32, #tpu.memory_space<vmem>>, vector<1x1x192xf32>
    %c53_267 = arith.constant 53 : index
    %c0_268 = arith.constant 0 : index
    %c0_269 = arith.constant 0 : index
    %267 = vector.load %arg2[%c53_267, %c0_268, %c0_269] : memref<64x64x192xf32, #tpu.memory_space<vmem>>, vector<1x64x192xf32>
    %268 = vector.broadcast %266 : vector<1x1x192xf32> to vector<1x64x192xf32>
    %269 = arith.mulf %267, %268 : vector<1x64x192xf32>
    %270 = arith.addf %265, %269 : vector<1x64x192xf32>
    %c0_270 = arith.constant 0 : index
    %c54 = arith.constant 54 : index
    %c0_271 = arith.constant 0 : index
    %271 = vector.load %arg1[%c0_270, %c54, %c0_271] : memref<1x64x192xf32, #tpu.memory_space<vmem>>, vector<1x1x192xf32>
    %c54_272 = arith.constant 54 : index
    %c0_273 = arith.constant 0 : index
    %c0_274 = arith.constant 0 : index
    %272 = vector.load %arg2[%c54_272, %c0_273, %c0_274] : memref<64x64x192xf32, #tpu.memory_space<vmem>>, vector<1x64x192xf32>
    %273 = vector.broadcast %271 : vector<1x1x192xf32> to vector<1x64x192xf32>
    %274 = arith.mulf %272, %273 : vector<1x64x192xf32>
    %275 = arith.addf %270, %274 : vector<1x64x192xf32>
    %c0_275 = arith.constant 0 : index
    %c55 = arith.constant 55 : index
    %c0_276 = arith.constant 0 : index
    %276 = vector.load %arg1[%c0_275, %c55, %c0_276] : memref<1x64x192xf32, #tpu.memory_space<vmem>>, vector<1x1x192xf32>
    %c55_277 = arith.constant 55 : index
    %c0_278 = arith.constant 0 : index
    %c0_279 = arith.constant 0 : index
    %277 = vector.load %arg2[%c55_277, %c0_278, %c0_279] : memref<64x64x192xf32, #tpu.memory_space<vmem>>, vector<1x64x192xf32>
    %278 = vector.broadcast %276 : vector<1x1x192xf32> to vector<1x64x192xf32>
    %279 = arith.mulf %277, %278 : vector<1x64x192xf32>
    %280 = arith.addf %275, %279 : vector<1x64x192xf32>
    %c0_280 = arith.constant 0 : index
    %c56 = arith.constant 56 : index
    %c0_281 = arith.constant 0 : index
    %281 = vector.load %arg1[%c0_280, %c56, %c0_281] : memref<1x64x192xf32, #tpu.memory_space<vmem>>, vector<1x1x192xf32>
    %c56_282 = arith.constant 56 : index
    %c0_283 = arith.constant 0 : index
    %c0_284 = arith.constant 0 : index
    %282 = vector.load %arg2[%c56_282, %c0_283, %c0_284] : memref<64x64x192xf32, #tpu.memory_space<vmem>>, vector<1x64x192xf32>
    %283 = vector.broadcast %281 : vector<1x1x192xf32> to vector<1x64x192xf32>
    %284 = arith.mulf %282, %283 : vector<1x64x192xf32>
    %285 = arith.addf %280, %284 : vector<1x64x192xf32>
    %c0_285 = arith.constant 0 : index
    %c57 = arith.constant 57 : index
    %c0_286 = arith.constant 0 : index
    %286 = vector.load %arg1[%c0_285, %c57, %c0_286] : memref<1x64x192xf32, #tpu.memory_space<vmem>>, vector<1x1x192xf32>
    %c57_287 = arith.constant 57 : index
    %c0_288 = arith.constant 0 : index
    %c0_289 = arith.constant 0 : index
    %287 = vector.load %arg2[%c57_287, %c0_288, %c0_289] : memref<64x64x192xf32, #tpu.memory_space<vmem>>, vector<1x64x192xf32>
    %288 = vector.broadcast %286 : vector<1x1x192xf32> to vector<1x64x192xf32>
    %289 = arith.mulf %287, %288 : vector<1x64x192xf32>
    %290 = arith.addf %285, %289 : vector<1x64x192xf32>
    %c0_290 = arith.constant 0 : index
    %c58 = arith.constant 58 : index
    %c0_291 = arith.constant 0 : index
    %291 = vector.load %arg1[%c0_290, %c58, %c0_291] : memref<1x64x192xf32, #tpu.memory_space<vmem>>, vector<1x1x192xf32>
    %c58_292 = arith.constant 58 : index
    %c0_293 = arith.constant 0 : index
    %c0_294 = arith.constant 0 : index
    %292 = vector.load %arg2[%c58_292, %c0_293, %c0_294] : memref<64x64x192xf32, #tpu.memory_space<vmem>>, vector<1x64x192xf32>
    %293 = vector.broadcast %291 : vector<1x1x192xf32> to vector<1x64x192xf32>
    %294 = arith.mulf %292, %293 : vector<1x64x192xf32>
    %295 = arith.addf %290, %294 : vector<1x64x192xf32>
    %c0_295 = arith.constant 0 : index
    %c59 = arith.constant 59 : index
    %c0_296 = arith.constant 0 : index
    %296 = vector.load %arg1[%c0_295, %c59, %c0_296] : memref<1x64x192xf32, #tpu.memory_space<vmem>>, vector<1x1x192xf32>
    %c59_297 = arith.constant 59 : index
    %c0_298 = arith.constant 0 : index
    %c0_299 = arith.constant 0 : index
    %297 = vector.load %arg2[%c59_297, %c0_298, %c0_299] : memref<64x64x192xf32, #tpu.memory_space<vmem>>, vector<1x64x192xf32>
    %298 = vector.broadcast %296 : vector<1x1x192xf32> to vector<1x64x192xf32>
    %299 = arith.mulf %297, %298 : vector<1x64x192xf32>
    %300 = arith.addf %295, %299 : vector<1x64x192xf32>
    %c0_300 = arith.constant 0 : index
    %c60 = arith.constant 60 : index
    %c0_301 = arith.constant 0 : index
    %301 = vector.load %arg1[%c0_300, %c60, %c0_301] : memref<1x64x192xf32, #tpu.memory_space<vmem>>, vector<1x1x192xf32>
    %c60_302 = arith.constant 60 : index
    %c0_303 = arith.constant 0 : index
    %c0_304 = arith.constant 0 : index
    %302 = vector.load %arg2[%c60_302, %c0_303, %c0_304] : memref<64x64x192xf32, #tpu.memory_space<vmem>>, vector<1x64x192xf32>
    %303 = vector.broadcast %301 : vector<1x1x192xf32> to vector<1x64x192xf32>
    %304 = arith.mulf %302, %303 : vector<1x64x192xf32>
    %305 = arith.addf %300, %304 : vector<1x64x192xf32>
    %c0_305 = arith.constant 0 : index
    %c61 = arith.constant 61 : index
    %c0_306 = arith.constant 0 : index
    %306 = vector.load %arg1[%c0_305, %c61, %c0_306] : memref<1x64x192xf32, #tpu.memory_space<vmem>>, vector<1x1x192xf32>
    %c61_307 = arith.constant 61 : index
    %c0_308 = arith.constant 0 : index
    %c0_309 = arith.constant 0 : index
    %307 = vector.load %arg2[%c61_307, %c0_308, %c0_309] : memref<64x64x192xf32, #tpu.memory_space<vmem>>, vector<1x64x192xf32>
    %308 = vector.broadcast %306 : vector<1x1x192xf32> to vector<1x64x192xf32>
    %309 = arith.mulf %307, %308 : vector<1x64x192xf32>
    %310 = arith.addf %305, %309 : vector<1x64x192xf32>
    %c0_310 = arith.constant 0 : index
    %c62 = arith.constant 62 : index
    %c0_311 = arith.constant 0 : index
    %311 = vector.load %arg1[%c0_310, %c62, %c0_311] : memref<1x64x192xf32, #tpu.memory_space<vmem>>, vector<1x1x192xf32>
    %c62_312 = arith.constant 62 : index
    %c0_313 = arith.constant 0 : index
    %c0_314 = arith.constant 0 : index
    %312 = vector.load %arg2[%c62_312, %c0_313, %c0_314] : memref<64x64x192xf32, #tpu.memory_space<vmem>>, vector<1x64x192xf32>
    %313 = vector.broadcast %311 : vector<1x1x192xf32> to vector<1x64x192xf32>
    %314 = arith.mulf %312, %313 : vector<1x64x192xf32>
    %315 = arith.addf %310, %314 : vector<1x64x192xf32>
    %c0_315 = arith.constant 0 : index
    %c63 = arith.constant 63 : index
    %c0_316 = arith.constant 0 : index
    %316 = vector.load %arg1[%c0_315, %c63, %c0_316] : memref<1x64x192xf32, #tpu.memory_space<vmem>>, vector<1x1x192xf32>
    %c63_317 = arith.constant 63 : index
    %c0_318 = arith.constant 0 : index
    %c0_319 = arith.constant 0 : index
    %317 = vector.load %arg2[%c63_317, %c0_318, %c0_319] : memref<64x64x192xf32, #tpu.memory_space<vmem>>, vector<1x64x192xf32>
    %318 = vector.broadcast %316 : vector<1x1x192xf32> to vector<1x64x192xf32>
    %319 = arith.mulf %317, %318 : vector<1x64x192xf32>
    %320 = arith.addf %315, %319 : vector<1x64x192xf32>
    %c0_320 = arith.constant 0 : index
    %c0_321 = arith.constant 0 : index
    %c0_322 = arith.constant 0 : index
    %321 = vector.load %arg3[%c0_320, %c0_321, %c0_322] : memref<1x64x192xf32, #tpu.memory_space<vmem>>, vector<1x64x192xf32>
    tpu.vector_store %arg3[%c0_320, %c0_321, %c0_322], %320 {strides = array<i32>} : memref<1x64x192xf32, #tpu.memory_space<vmem>>, vector<1x64x192xf32>,
    return
  }
  func.func @transform_0(%arg0: i32) -> (i32, i32, i32) {
    %c0_i32 = arith.constant 0 : i32
    %c0_i32_0 = arith.constant 0 : i32
    %c0_i32_1 = arith.constant 0 : i32
    return %arg0, %c0_i32, %c0_i32_0 : i32, i32, i32
  }
  func.func @transform_1(%arg0: i32) -> (i32, i32, i32) {
    %c0_i32 = arith.constant 0 : i32
    %c0_i32_0 = arith.constant 0 : i32
    %c0_i32_1 = arith.constant 0 : i32
    %c0_i32_2 = arith.constant 0 : i32
    return %c0_i32, %c0_i32_0, %c0_i32_1 : i32, i32, i32
  }
  func.func @transform_2(%arg0: i32) -> (i32, i32, i32) {
    %c0_i32 = arith.constant 0 : i32
    %c0_i32_0 = arith.constant 0 : i32
    %c0_i32_1 = arith.constant 0 : i32
    return %arg0, %c0_i32, %c0_i32_0 : i32, i32, i32
  }
}

module attributes {stable_mosaic.version = 11 : i64} {
  func.func @_conv_skip_kernel(%arg0: i32, %arg1: memref<32x1458xf32, #tpu.memory_space<vmem>>, %arg2: memref<32x1458xf32, #tpu.memory_space<vmem>>, %arg3: memref<32x32xf32, #tpu.memory_space<vmem>>, %arg4: memref<32x1xf32, #tpu.memory_space<vmem>>, %arg5: memref<32x1458xf32, #tpu.memory_space<vmem>>) attributes {dimension_semantics = [#tpu.dimension_semantics<parallel>], iteration_bounds = array<i64: 1>, scalar_prefetch = 0 : i64, scratch_operands = 0 : i64, tpu.core_type = #tpu.core_type<tc>, window_params = [{transform_indices = @transform_0, window_bounds = array<i64: 32, 1458>}, {transform_indices = @transform_1, window_bounds = array<i64: 32, 1458>}, {pipeline_mode = #tpu.pipeline_mode<synchronous>, transform_indices = @transform_2, window_bounds = array<i64: 32, 32>}, {pipeline_mode = #tpu.pipeline_mode<synchronous>, transform_indices = @transform_3, window_bounds = array<i64: 32, 1>}, {transform_indices = @transform_4, window_bounds = array<i64: 32, 1458>}]} {
    %c0 = arith.constant 0 : index
    %c0_0 = arith.constant 0 : index
    %0 = vector.load %arg3[%c0, %c0_0] : memref<32x32xf32, #tpu.memory_space<vmem>>, vector<32x32xf32>
    %c0_1 = arith.constant 0 : index
    %c0_2 = arith.constant 0 : index
    %1 = vector.load %arg1[%c0_1, %c0_2] : memref<32x1458xf32, #tpu.memory_space<vmem>>, vector<32x1458xf32>
    %cst = arith.constant dense<0.000000e+00> : vector<32x1458xf32>
    %2 = tpu.matmul %0, %1, %cst {dimension_numbers = #tpu.dot_dimension_numbers<[1], [0], [0], [1], [0, 0, 1, 1], [], []>} : vector<32x32xf32>, vector<32x1458xf32>, vector<32x1458xf32> -> vector<32x1458xf32>
    %c0_3 = arith.constant 0 : index
    %c0_4 = arith.constant 0 : index
    %3 = vector.load %arg4[%c0_3, %c0_4] : memref<32x1xf32, #tpu.memory_space<vmem>>, vector<32x1xf32>
    %4 = vector.broadcast %3 : vector<32x1xf32> to vector<32x1458xf32>
    %5 = arith.addf %2, %4 : vector<32x1458xf32>
    %c0_5 = arith.constant 0 : index
    %c0_6 = arith.constant 0 : index
    %6 = vector.load %arg2[%c0_5, %c0_6] : memref<32x1458xf32, #tpu.memory_space<vmem>>, vector<32x1458xf32>
    %7 = arith.addf %5, %6 : vector<32x1458xf32>
    %cst_7 = arith.constant 5.000000e-01 : f32
    %8 = vector.broadcast %cst_7 : f32 to vector<32x1458xf32>
    %9 = arith.mulf %8, %7 : vector<32x1458xf32>
    %cst_8 = arith.constant 0.707106769 : f32
    %10 = vector.broadcast %cst_8 : f32 to vector<32x1458xf32>
    %11 = arith.mulf %7, %10 : vector<32x1458xf32>
    %12 = math.erf %11 : vector<32x1458xf32>
    %cst_9 = arith.constant 1.000000e+00 : f32
    %13 = vector.broadcast %cst_9 : f32 to vector<32x1458xf32>
    %14 = arith.addf %13, %12 : vector<32x1458xf32>
    %15 = arith.mulf %9, %14 : vector<32x1458xf32>
    %c0_10 = arith.constant 0 : index
    %c0_11 = arith.constant 0 : index
    %16 = vector.load %arg5[%c0_10, %c0_11] : memref<32x1458xf32, #tpu.memory_space<vmem>>, vector<32x1458xf32>
    tpu.vector_store %arg5[%c0_10, %c0_11], %15 {strides = array<i32>} : memref<32x1458xf32, #tpu.memory_space<vmem>>, vector<32x1458xf32>,
    return
  }
  func.func @transform_0(%arg0: i32) -> (i32, i32) {
    %c0_i32 = arith.constant 0 : i32
    %c0_i32_0 = arith.constant 0 : i32
    return %c0_i32, %arg0 : i32, i32
  }
  func.func @transform_1(%arg0: i32) -> (i32, i32) {
    %c0_i32 = arith.constant 0 : i32
    %c0_i32_0 = arith.constant 0 : i32
    return %c0_i32, %arg0 : i32, i32
  }
  func.func @transform_2(%arg0: i32) -> (i32, i32) {
    %c0_i32 = arith.constant 0 : i32
    %c0_i32_0 = arith.constant 0 : i32
    %c0_i32_1 = arith.constant 0 : i32
    return %c0_i32, %c0_i32_0 : i32, i32
  }
  func.func @transform_3(%arg0: i32) -> (i32, i32) {
    %c0_i32 = arith.constant 0 : i32
    %c0_i32_0 = arith.constant 0 : i32
    %c0_i32_1 = arith.constant 0 : i32
    return %c0_i32, %c0_i32_0 : i32, i32
  }
  func.func @transform_4(%arg0: i32) -> (i32, i32) {
    %c0_i32 = arith.constant 0 : i32
    %c0_i32_0 = arith.constant 0 : i32
    return %c0_i32, %arg0 : i32, i32
  }
}

module attributes {stable_mosaic.version = 11 : i64} {
  func.func @_conv_skip_kernel(%arg0: i32, %arg1: memref<32x1458xf32, #tpu.memory_space<vmem>>, %arg2: memref<32x1458xf32, #tpu.memory_space<vmem>>, %arg3: memref<32x32xf32, #tpu.memory_space<vmem>>, %arg4: memref<32x1xf32, #tpu.memory_space<vmem>>, %arg5: memref<32x1458xf32, #tpu.memory_space<vmem>>) attributes {dimension_semantics = [#tpu.dimension_semantics<parallel>], iteration_bounds = array<i64: 1>, scalar_prefetch = 0 : i64, scratch_operands = 0 : i64, tpu.core_type = #tpu.core_type<tc>, window_params = [{transform_indices = @transform_0, window_bounds = array<i64: 32, 1458>}, {transform_indices = @transform_1, window_bounds = array<i64: 32, 1458>}, {pipeline_mode = #tpu.pipeline_mode<synchronous>, transform_indices = @transform_2, window_bounds = array<i64: 32, 32>}, {pipeline_mode = #tpu.pipeline_mode<synchronous>, transform_indices = @transform_3, window_bounds = array<i64: 32, 1>}, {transform_indices = @transform_4, window_bounds = array<i64: 32, 1458>}]} {
    %c0 = arith.constant 0 : index
    %c0_0 = arith.constant 0 : index
    %0 = vector.load %arg3[%c0, %c0_0] : memref<32x32xf32, #tpu.memory_space<vmem>>, vector<32x32xf32>
    %c0_1 = arith.constant 0 : index
    %c0_2 = arith.constant 0 : index
    %1 = vector.load %arg1[%c0_1, %c0_2] : memref<32x1458xf32, #tpu.memory_space<vmem>>, vector<32x1458xf32>
    %cst = arith.constant dense<0.000000e+00> : vector<32x1458xf32>
    %2 = tpu.matmul %0, %1, %cst {dimension_numbers = #tpu.dot_dimension_numbers<[1], [0], [0], [1], [0, 0, 1, 1], [], []>} : vector<32x32xf32>, vector<32x1458xf32>, vector<32x1458xf32> -> vector<32x1458xf32>
    %c0_3 = arith.constant 0 : index
    %c0_4 = arith.constant 0 : index
    %3 = vector.load %arg4[%c0_3, %c0_4] : memref<32x1xf32, #tpu.memory_space<vmem>>, vector<32x1xf32>
    %4 = vector.broadcast %3 : vector<32x1xf32> to vector<32x1458xf32>
    %5 = arith.addf %2, %4 : vector<32x1458xf32>
    %c0_5 = arith.constant 0 : index
    %c0_6 = arith.constant 0 : index
    %6 = vector.load %arg2[%c0_5, %c0_6] : memref<32x1458xf32, #tpu.memory_space<vmem>>, vector<32x1458xf32>
    %7 = arith.addf %5, %6 : vector<32x1458xf32>
    %c0_7 = arith.constant 0 : index
    %c0_8 = arith.constant 0 : index
    %8 = vector.load %arg5[%c0_7, %c0_8] : memref<32x1458xf32, #tpu.memory_space<vmem>>, vector<32x1458xf32>
    tpu.vector_store %arg5[%c0_7, %c0_8], %7 {strides = array<i32>} : memref<32x1458xf32, #tpu.memory_space<vmem>>, vector<32x1458xf32>,
    return
  }
  func.func @transform_0(%arg0: i32) -> (i32, i32) {
    %c0_i32 = arith.constant 0 : i32
    %c0_i32_0 = arith.constant 0 : i32
    return %c0_i32, %arg0 : i32, i32
  }
  func.func @transform_1(%arg0: i32) -> (i32, i32) {
    %c0_i32 = arith.constant 0 : i32
    %c0_i32_0 = arith.constant 0 : i32
    return %c0_i32, %arg0 : i32, i32
  }
  func.func @transform_2(%arg0: i32) -> (i32, i32) {
    %c0_i32 = arith.constant 0 : i32
    %c0_i32_0 = arith.constant 0 : i32
    %c0_i32_1 = arith.constant 0 : i32
    return %c0_i32, %c0_i32_0 : i32, i32
  }
  func.func @transform_3(%arg0: i32) -> (i32, i32) {
    %c0_i32 = arith.constant 0 : i32
    %c0_i32_0 = arith.constant 0 : i32
    %c0_i32_1 = arith.constant 0 : i32
    return %c0_i32, %c0_i32_0 : i32, i32
  }
  func.func @transform_4(%arg0: i32) -> (i32, i32) {
    %c0_i32 = arith.constant 0 : i32
    %c0_i32_0 = arith.constant 0 : i32
    return %c0_i32, %arg0 : i32, i32
  }
}

module attributes {stable_mosaic.version = 11 : i64} {
  func.func @_fc12_kernel(%arg0: i32, %arg1: memref<32x1024xf32, #tpu.memory_space<vmem>>, %arg2: memref<32x32xf32, #tpu.memory_space<vmem>>, %arg3: memref<32x1xf32, #tpu.memory_space<vmem>>, %arg4: memref<32x32xf32, #tpu.memory_space<vmem>>, %arg5: memref<32x1xf32, #tpu.memory_space<vmem>>, %arg6: memref<32x1024xf32, #tpu.memory_space<vmem>>) attributes {dimension_semantics = [#tpu.dimension_semantics<parallel>], iteration_bounds = array<i64: 1>, scalar_prefetch = 0 : i64, scratch_operands = 0 : i64, tpu.core_type = #tpu.core_type<tc>, window_params = [{transform_indices = @transform_0, window_bounds = array<i64: 32, 1024>}, {pipeline_mode = #tpu.pipeline_mode<synchronous>, transform_indices = @transform_1, window_bounds = array<i64: 32, 32>}, {pipeline_mode = #tpu.pipeline_mode<synchronous>, transform_indices = @transform_2, window_bounds = array<i64: 32, 1>}, {pipeline_mode = #tpu.pipeline_mode<synchronous>, transform_indices = @transform_3, window_bounds = array<i64: 32, 32>}, {pipeline_mode = #tpu.pipeline_mode<synchronous>, transform_indices = @transform_4, window_bounds = array<i64: 32, 1>}, {transform_indices = @transform_5, window_bounds = array<i64: 32, 1024>}]} {
    %c0 = arith.constant 0 : index
    %c0_0 = arith.constant 0 : index
    %0 = vector.load %arg2[%c0, %c0_0] : memref<32x32xf32, #tpu.memory_space<vmem>>, vector<32x32xf32>
    %c0_1 = arith.constant 0 : index
    %c0_2 = arith.constant 0 : index
    %1 = vector.load %arg1[%c0_1, %c0_2] : memref<32x1024xf32, #tpu.memory_space<vmem>>, vector<32x1024xf32>
    %cst = arith.constant dense<0.000000e+00> : vector<32x1024xf32>
    %2 = tpu.matmul %0, %1, %cst {dimension_numbers = #tpu.dot_dimension_numbers<[1], [0], [0], [1], [0, 0, 1, 1], [], []>} : vector<32x32xf32>, vector<32x1024xf32>, vector<32x1024xf32> -> vector<32x1024xf32>
    %c0_3 = arith.constant 0 : index
    %c0_4 = arith.constant 0 : index
    %3 = vector.load %arg3[%c0_3, %c0_4] : memref<32x1xf32, #tpu.memory_space<vmem>>, vector<32x1xf32>
    %4 = vector.broadcast %3 : vector<32x1xf32> to vector<32x1024xf32>
    %5 = arith.addf %2, %4 : vector<32x1024xf32>
    %cst_5 = arith.constant 5.000000e-01 : f32
    %6 = vector.broadcast %cst_5 : f32 to vector<32x1024xf32>
    %7 = arith.mulf %6, %5 : vector<32x1024xf32>
    %cst_6 = arith.constant 0.707106769 : f32
    %8 = vector.broadcast %cst_6 : f32 to vector<32x1024xf32>
    %9 = arith.mulf %5, %8 : vector<32x1024xf32>
    %10 = math.erf %9 : vector<32x1024xf32>
    %cst_7 = arith.constant 1.000000e+00 : f32
    %11 = vector.broadcast %cst_7 : f32 to vector<32x1024xf32>
    %12 = arith.addf %11, %10 : vector<32x1024xf32>
    %13 = arith.mulf %7, %12 : vector<32x1024xf32>
    %c0_8 = arith.constant 0 : index
    %c0_9 = arith.constant 0 : index
    %14 = vector.load %arg4[%c0_8, %c0_9] : memref<32x32xf32, #tpu.memory_space<vmem>>, vector<32x32xf32>
    %cst_10 = arith.constant dense<0.000000e+00> : vector<32x1024xf32>
    %15 = tpu.matmul %14, %13, %cst_10 {dimension_numbers = #tpu.dot_dimension_numbers<[1], [0], [0], [1], [0, 0, 1, 1], [], []>} : vector<32x32xf32>, vector<32x1024xf32>, vector<32x1024xf32> -> vector<32x1024xf32>
    %c0_11 = arith.constant 0 : index
    %c0_12 = arith.constant 0 : index
    %16 = vector.load %arg5[%c0_11, %c0_12] : memref<32x1xf32, #tpu.memory_space<vmem>>, vector<32x1xf32>
    %17 = vector.broadcast %16 : vector<32x1xf32> to vector<32x1024xf32>
    %18 = arith.addf %15, %17 : vector<32x1024xf32>
    %c0_13 = arith.constant 0 : index
    %c0_14 = arith.constant 0 : index
    %19 = vector.load %arg6[%c0_13, %c0_14] : memref<32x1024xf32, #tpu.memory_space<vmem>>, vector<32x1024xf32>
    tpu.vector_store %arg6[%c0_13, %c0_14], %18 {strides = array<i32>} : memref<32x1024xf32, #tpu.memory_space<vmem>>, vector<32x1024xf32>,
    return
  }
  func.func @transform_0(%arg0: i32) -> (i32, i32) {
    %c0_i32 = arith.constant 0 : i32
    %c0_i32_0 = arith.constant 0 : i32
    return %c0_i32, %arg0 : i32, i32
  }
  func.func @transform_1(%arg0: i32) -> (i32, i32) {
    %c0_i32 = arith.constant 0 : i32
    %c0_i32_0 = arith.constant 0 : i32
    %c0_i32_1 = arith.constant 0 : i32
    return %c0_i32, %c0_i32_0 : i32, i32
  }
  func.func @transform_2(%arg0: i32) -> (i32, i32) {
    %c0_i32 = arith.constant 0 : i32
    %c0_i32_0 = arith.constant 0 : i32
    %c0_i32_1 = arith.constant 0 : i32
    return %c0_i32, %c0_i32_0 : i32, i32
  }
  func.func @transform_3(%arg0: i32) -> (i32, i32) {
    %c0_i32 = arith.constant 0 : i32
    %c0_i32_0 = arith.constant 0 : i32
    %c0_i32_1 = arith.constant 0 : i32
    return %c0_i32, %c0_i32_0 : i32, i32
  }
  func.func @transform_4(%arg0: i32) -> (i32, i32) {
    %c0_i32 = arith.constant 0 : i32
    %c0_i32_0 = arith.constant 0 : i32
    %c0_i32_1 = arith.constant 0 : i32
    return %c0_i32, %c0_i32_0 : i32, i32
  }
  func.func @transform_5(%arg0: i32) -> (i32, i32) {
    %c0_i32 = arith.constant 0 : i32
    %c0_i32_0 = arith.constant 0 : i32
    return %c0_i32, %arg0 : i32, i32
  }
}

</mosaic_0001>

<llo_original>
// kernel: fno3d_forward.10
$region0: #{fno3d_forward.10}
  #allocation0 [shape = 'u32[]', space=smem, size = 0x4, offset = 0x4, fixed_abs, tag = 'smem constant byte address 0x4 - core index']
  #allocation1 [shape = 'u32[144,128]{1,0:T(1,128)}', space=vmem, size = 0x12000, scoped, tag = 'internal scratch']
  %s0 = inlined_call_operand.hbm [shape: f32[1024,32], index: 0, kind: input, shape index: {}]
  %s1 = inlined_call_operand.hbm [shape: f32[32,32], index: 1, kind: input, shape index: {}]
  %s2 = inlined_call_operand.vmem [shape: f32[32,1], index: 2, kind: input, shape index: {}]
  %s3 = inlined_call_operand.vmem [shape: f32[32,1024], index: 3, kind: output, shape index: {}]
  %s4 = sld [smem:[#allocation0]]
  $region30: #{fno3d_forward.10} parent=0
    _
  %s6 = ssub.s32 1, %s4
  %s7 = scalar_select 0, %s6, %s4
  $region1: #{fno3d_forward.10} parent=0
    #allocation2 [shape = 'u8[524288]{0}', space=vmem, size = 0x80000, scoped, tag = 'input window, operand 0, single buffered']
    #allocation3 [shape = 's32[1]{0}', space=sflag, size = 0x4, scoped, tag = 'scoped memory for fno3d_forward.10']
    #allocation4 [shape = 'u8[16384]{0}', space=vmem, size = 0x4000, scoped, tag = 'input window, operand 1, single buffered']
    #allocation5 [shape = 's32[1]{0}', space=sflag, size = 0x4, scoped, tag = 'scoped memory for fno3d_forward.10']
    %8 = vsyncpa [#allocation3], 0
    %9 = vsyncpa [#allocation5], 0
    // Predicated region
    $region2: #{fno3d_forward.10} parent=1 // pred_check
      _
    $region3: #{fno3d_forward.10} parent=1 // pred_check_branch
      %11 = sbr.rel (0) target = $region5
    $region4: #{fno3d_forward.10} parent=1 // pred_region
      %s13 = ssub.s32 16384, 16384
      %14 = vsyncadd [#allocation3], %s13
      %s15 = sshll.u32 [#allocation2], 4
      %s16 = int_to_ptr.vmem [resolvable:$true] %s15
      %21 = dma.hbm_to_vmem [thread:$0]  %s0, 16384, %s16, [#allocation3], 128, 128, 8
    $region5: #{fno3d_forward.10} parent=1 // pred_fallthru
      _
    // Predicated region
    $region6: #{fno3d_forward.10} parent=1 // pred_check
      _
    $region7: #{fno3d_forward.10} parent=1 // pred_check_branch
      %23 = sbr.rel (0) target = $region9
    $region8: #{fno3d_forward.10} parent=1 // pred_region
      %s25 = ssub.s32 512, 512
      %26 = vsyncadd [#allocation5], %s25
      %s27 = sshll.u32 [#allocation4], 4
      %s28 = int_to_ptr.vmem [resolvable:$true] %s27
      %33 = dma.hbm_to_vmem [thread:$0]  %s1, 512, %s28, [#allocation5], 128, 128, 8
    $region9: #{fno3d_forward.10} parent=1 // pred_fallthru
      _
    // Predicated region
    $region10: #{fno3d_forward.10} parent=1 // pred_check
      _
    $region11: #{fno3d_forward.10} parent=1 // pred_check_branch
      %35 = sbr.rel (0) target = $region13
    $region12: #{fno3d_forward.10} parent=1 // pred_region
      _
    $region13: #{fno3d_forward.10} parent=1 // pred_fallthru
      _
    // Predicated region
    $region14: #{fno3d_forward.10} parent=1 // pred_check
      _
    $region15: #{fno3d_forward.10} parent=1 // pred_check_branch
      %37 = sbr.rel (0) target = $region17
    $region16: #{fno3d_forward.10} parent=1 // pred_region
      %38 = dma.done [#allocation3], 16384
    $region17: #{fno3d_forward.10} parent=1 // pred_fallthru
      _
    // Predicated region
    $region18: #{fno3d_forward.10} parent=1 // pred_check
      _
    $region19: #{fno3d_forward.10} parent=1 // pred_check_branch
      %40 = sbr.rel (0) target = $region21
    $region20: #{fno3d_forward.10} parent=1 // pred_region
      %41 = dma.done [#allocation5], 512
    $region21: #{fno3d_forward.10} parent=1 // pred_fallthru
      _
    %v42 = vld [vmem:[#allocation4] sm:$0xff]
    %v43 = vld [vmem:[#allocation4 + $0x8] sm:$0xff]
    %v44 = vld [vmem:[#allocation4 + $0x10] sm:$0xff]
    %v45 = vld [vmem:[#allocation4 + $0x18] sm:$0xff]
    %v46 = vld [vmem:[#allocation2] sm:$0xff]
    %v47 = vld [vmem:[#allocation2 + $0x8] sm:$0xff]
    %v48 = vld [vmem:[#allocation2 + $0x10] sm:$0xff]
    %v49 = vld [vmem:[#allocation2 + $0x18] sm:$0xff]
    %v50 = vld [vmem:[#allocation2 + $0x20] sm:$0xff]
    %v51 = vld [vmem:[#allocation2 + $0x28] sm:$0xff]
    %v52 = vld [vmem:[#allocation2 + $0x30] sm:$0xff]
    %v53 = vld [vmem:[#allocation2 + $0x38] sm:$0xff]
    %v54 = vld [vmem:[#allocation2 + $0x40] sm:$0xff]
    %v55 = vld [vmem:[#allocation2 + $0x48] sm:$0xff]
    %v56 = vld [vmem:[#allocation2 + $0x50] sm:$0xff]
    %v57 = vld [vmem:[#allocation2 + $0x58] sm:$0xff]
    %v58 = vld [vmem:[#allocation2 + $0x60] sm:$0xff]
    %v59 = vld [vmem:[#allocation2 + $0x68] sm:$0xff]
    %v60 = vld [vmem:[#allocation2 + $0x70] sm:$0xff]
    %v61 = vld [vmem:[#allocation2 + $0x78] sm:$0xff]
    %v62 = vld [vmem:[#allocation2 + $0x80] sm:$0xff]
    %v63 = vld [vmem:[#allocation2 + $0x88] sm:$0xff]
    %v64 = vld [vmem:[#allocation2 + $0x90] sm:$0xff]
    %v65 = vld [vmem:[#allocation2 + $0x98] sm:$0xff]
    %v66 = vld [vmem:[#allocation2 + $0xa0] sm:$0xff]
    %v67 = vld [vmem:[#allocation2 + $0xa8] sm:$0xff]
    %v68 = vld [vmem:[#allocation2 + $0xb0] sm:$0xff]
    %v69 = vld [vmem:[#allocation2 + $0xb8] sm:$0xff]
    %v70 = vld [vmem:[#allocation2 + $0xc0] sm:$0xff]
    %v71 = vld [vmem:[#allocation2 + $0xc8] sm:$0xff]
    %v72 = vld [vmem:[#allocation2 + $0xd0] sm:$0xff]
    %v73 = vld [vmem:[#allocation2 + $0xd8] sm:$0xff]
    %v74 = vld [vmem:[#allocation2 + $0xe0] sm:$0xff]
    %v75 = vld [vmem:[#allocation2 + $0xe8] sm:$0xff]
    %v76 = vld [vmem:[#allocation2 + $0xf0] sm:$0xff]
    %v77 = vld [vmem:[#allocation2 + $0xf8] sm:$0xff]
    %v78 = vld [vmem:[#allocation2 + $0x100] sm:$0xff]
    %v79 = vld [vmem:[#allocation2 + $0x108] sm:$0xff]
    %v80 = vld [vmem:[#allocation2 + $0x110] sm:$0xff]
    %v81 = vld [vmem:[#allocation2 + $0x118] sm:$0xff]
    %v82 = vld [vmem:[#allocation2 + $0x120] sm:$0xff]
    %v83 = vld [vmem:[#allocation2 + $0x128] sm:$0xff]
    %v84 = vld [vmem:[#allocation2 + $0x130] sm:$0xff]
    %v85 = vld [vmem:[#allocation2 + $0x138] sm:$0xff]
    %v86 = vld [vmem:[#allocation2 + $0x140] sm:$0xff]
    %v87 = vld [vmem:[#allocation2 + $0x148] sm:$0xff]
    %v88 = vld [vmem:[#allocation2 + $0x150] sm:$0xff]
    %v89 = vld [vmem:[#allocation2 + $0x158] sm:$0xff]
    %v90 = vld [vmem:[#allocation2 + $0x160] sm:$0xff]
    %v91 = vld [vmem:[#allocation2 + $0x168] sm:$0xff]
    %v92 = vld [vmem:[#allocation2 + $0x170] sm:$0xff]
    %v93 = vld [vmem:[#allocation2 + $0x178] sm:$0xff]
    %v94 = vld [vmem:[#allocation2 + $0x180] sm:$0xff]
    %v95 = vld [vmem:[#allocation2 + $0x188] sm:$0xff]
    %v96 = vld [vmem:[#allocation2 + $0x190] sm:$0xff]
    %v97 = vld [vmem:[#allocation2 + $0x198] sm:$0xff]
    %v98 = vld [vmem:[#allocation2 + $0x1a0] sm:$0xff]
    %v99 = vld [vmem:[#allocation2 + $0x1a8] sm:$0xff]
    %v100 = vld [vmem:[#allocation2 + $0x1b0] sm:$0xff]
    %v101 = vld [vmem:[#allocation2 + $0x1b8] sm:$0xff]
    %v102 = vld [vmem:[#allocation2 + $0x1c0] sm:$0xff]
    %v103 = vld [vmem:[#allocation2 + $0x1c8] sm:$0xff]
    %v104 = vld [vmem:[#allocation2 + $0x1d0] sm:$0xff]
    %v105 = vld [vmem:[#allocation2 + $0x1d8] sm:$0xff]
    %v106 = vld [vmem:[#allocation2 + $0x1e0] sm:$0xff]
    %v107 = vld [vmem:[#allocation2 + $0x1e8] sm:$0xff]
    %v108 = vld [vmem:[#allocation2 + $0x1f0] sm:$0xff]
    %v109 = vld [vmem:[#allocation2 + $0x1f8] sm:$0xff]
    %v110 = vld [vmem:[#allocation2 + $0x200] sm:$0xff]
    %v111 = vld [vmem:[#allocation2 + $0x208] sm:$0xff]
    %v112 = vld [vmem:[#allocation2 + $0x210] sm:$0xff]
    %v113 = vld [vmem:[#allocation2 + $0x218] sm:$0xff]
    %v114 = vld [vmem:[#allocation2 + $0x220] sm:$0xff]
    %v115 = vld [vmem:[#allocation2 + $0x228] sm:$0xff]
    %v116 = vld [vmem:[#allocation2 + $0x230] sm:$0xff]
    %v117 = vld [vmem:[#allocation2 + $0x238] sm:$0xff]
    %v118 = vld [vmem:[#allocation2 + $0x240] sm:$0xff]
    %v119 = vld [vmem:[#allocation2 + $0x248] sm:$0xff]
    %v120 = vld [vmem:[#allocation2 + $0x250] sm:$0xff]
    %v121 = vld [vmem:[#allocation2 + $0x258] sm:$0xff]
    %v122 = vld [vmem:[#allocation2 + $0x260] sm:$0xff]
    %v123 = vld [vmem:[#allocation2 + $0x268] sm:$0xff]
    %v124 = vld [vmem:[#allocation2 + $0x270] sm:$0xff]
    %v125 = vld [vmem:[#allocation2 + $0x278] sm:$0xff]
    %v126 = vld [vmem:[#allocation2 + $0x280] sm:$0xff]
    %v127 = vld [vmem:[#allocation2 + $0x288] sm:$0xff]
    %v128 = vld [vmem:[#allocation2 + $0x290] sm:$0xff]
    %v129 = vld [vmem:[#allocation2 + $0x298] sm:$0xff]
    %v130 = vld [vmem:[#allocation2 + $0x2a0] sm:$0xff]
    %v131 = vld [vmem:[#allocation2 + $0x2a8] sm:$0xff]
    %v132 = vld [vmem:[#allocation2 + $0x2b0] sm:$0xff]
    %v133 = vld [vmem:[#allocation2 + $0x2b8] sm:$0xff]
    %v134 = vld [vmem:[#allocation2 + $0x2c0] sm:$0xff]
    %v135 = vld [vmem:[#allocation2 + $0x2c8] sm:$0xff]
    %v136 = vld [vmem:[#allocation2 + $0x2d0] sm:$0xff]
    %v137 = vld [vmem:[#allocation2 + $0x2d8] sm:$0xff]
    %v138 = vld [vmem:[#allocation2 + $0x2e0] sm:$0xff]
    %v139 = vld [vmem:[#allocation2 + $0x2e8] sm:$0xff]
    %v140 = vld [vmem:[#allocation2 + $0x2f0] sm:$0xff]
    %v141 = vld [vmem:[#allocation2 + $0x2f8] sm:$0xff]
    %v142 = vld [vmem:[#allocation2 + $0x300] sm:$0xff]
    %v143 = vld [vmem:[#allocation2 + $0x308] sm:$0xff]
    %v144 = vld [vmem:[#allocation2 + $0x310] sm:$0xff]
    %v145 = vld [vmem:[#allocation2 + $0x318] sm:$0xff]
    %v146 = vld [vmem:[#allocation2 + $0x320] sm:$0xff]
    %v147 = vld [vmem:[#allocation2 + $0x328] sm:$0xff]
    %v148 = vld [vmem:[#allocation2 + $0x330] sm:$0xff]
    %v149 = vld [vmem:[#allocation2 + $0x338] sm:$0xff]
    %v150 = vld [vmem:[#allocation2 + $0x340] sm:$0xff]
    %v151 = vld [vmem:[#allocation2 + $0x348] sm:$0xff]
    %v152 = vld [vmem:[#allocation2 + $0x350] sm:$0xff]
    %v153 = vld [vmem:[#allocation2 + $0x358] sm:$0xff]
    %v154 = vld [vmem:[#allocation2 + $0x360] sm:$0xff]
    %v155 = vld [vmem:[#allocation2 + $0x368] sm:$0xff]
    %v156 = vld [vmem:[#allocation2 + $0x370] sm:$0xff]
    %v157 = vld [vmem:[#allocation2 + $0x378] sm:$0xff]
    %v158 = vld [vmem:[#allocation2 + $0x380] sm:$0xff]
    %v159 = vld [vmem:[#allocation2 + $0x388] sm:$0xff]
    %v160 = vld [vmem:[#allocation2 + $0x390] sm:$0xff]
    %v161 = vld [vmem:[#allocation2 + $0x398] sm:$0xff]
    %v162 = vld [vmem:[#allocation2 + $0x3a0] sm:$0xff]
    %v163 = vld [vmem:[#allocation2 + $0x3a8] sm:$0xff]
    %v164 = vld [vmem:[#allocation2 + $0x3b0] sm:$0xff]
    %v165 = vld [vmem:[#allocation2 + $0x3b8] sm:$0xff]
    %v166 = vld [vmem:[#allocation2 + $0x3c0] sm:$0xff]
    %v167 = vld [vmem:[#allocation2 + $0x3c8] sm:$0xff]
    %v168 = vld [vmem:[#allocation2 + $0x3d0] sm:$0xff]
    %v169 = vld [vmem:[#allocation2 + $0x3d8] sm:$0xff]
    %v170 = vld [vmem:[#allocation2 + $0x3e0] sm:$0xff]
    %v171 = vld [vmem:[#allocation2 + $0x3e8] sm:$0xff]
    %v172 = vld [vmem:[#allocation2 + $0x3f0] sm:$0xff]
    %v173 = vld [vmem:[#allocation2 + $0x3f8] sm:$0xff]
    %v174 = vld [vmem:[%s2] sm:$0xff]
    %v175 = vld [vmem:[%s2 + $0x8] sm:$0xff]
    %v176 = vld [vmem:[%s2 + $0x10] sm:$0xff]
    %v177 = vld [vmem:[%s2 + $0x18] sm:$0xff]
    %179 = vset.pattern.permute.xlu0 0
    %180 = vperm.xlu0 %179, %v174
    %v181 = vpop.permute.xlu0 %180
    %184 = vset.pattern.permute.xlu0 0
    %185 = vperm.xlu0 %184, %v175
    %v186 = vpop.permute.xlu0 %185
    %189 = vset.pattern.permute.xlu0 0
    %190 = vperm.xlu0 %189, %v176
    %v191 = vpop.permute.xlu0 %190
    %194 = vset.pattern.permute.xlu0 0
    %195 = vperm.xlu0 %194, %v177
    %v196 = vpop.permute.xlu0 %195
    %vm198 = vcmask 261120
    %v200 = vsel %vm198, %v42, 0
    %v203 = vsel %vm198, %v43, 0
    %v206 = vsel %vm198, %v44, 0
    %v209 = vsel %vm198, %v45, 0
    %v212 = vsel %vm198, %v46, 0
    %v215 = vsel %vm198, %v47, 0
    %v218 = vsel %vm198, %v48, 0
    %v221 = vsel %vm198, %v49, 0
    %v224 = vsel %vm198, %v50, 0
    %v227 = vsel %vm198, %v51, 0
    %v230 = vsel %vm198, %v52, 0
    %v233 = vsel %vm198, %v53, 0
    %v236 = vsel %vm198, %v54, 0
    %v239 = vsel %vm198, %v55, 0
    %v242 = vsel %vm198, %v56, 0
    %v245 = vsel %vm198, %v57, 0
    %v248 = vsel %vm198, %v58, 0
    %v251 = vsel %vm198, %v59, 0
    %v254 = vsel %vm198, %v60, 0
    %v257 = vsel %vm198, %v61, 0
    %v260 = vsel %vm198, %v62, 0
    %v263 = vsel %vm198, %v63, 0
    %v266 = vsel %vm198, %v64, 0
    %v269 = vsel %vm198, %v65, 0
    %v272 = vsel %vm198, %v66, 0
    %v275 = vsel %vm198, %v67, 0
    %v278 = vsel %vm198, %v68, 0
    %v281 = vsel %vm198, %v69, 0
    %v284 = vsel %vm198, %v70, 0
    %v287 = vsel %vm198, %v71, 0
    %v290 = vsel %vm198, %v72, 0
    %v293 = vsel %vm198, %v73, 0
    %v296 = vsel %vm198, %v74, 0
    %v299 = vsel %vm198, %v75, 0
    %v302 = vsel %vm198, %v76, 0
    %v305 = vsel %vm198, %v77, 0
    %v308 = vsel %vm198, %v78, 0
    %v311 = vsel %vm198, %v79, 0
    %v314 = vsel %vm198, %v80, 0
    %v317 = vsel %vm198, %v81, 0
    %v320 = vsel %vm198, %v82, 0
    %v323 = vsel %vm198, %v83, 0
    %v326 = vsel %vm198, %v84, 0
    %v329 = vsel %vm198, %v85, 0
    %v332 = vsel %vm198, %v86, 0
    %v335 = vsel %vm198, %v87, 0
    %v338 = vsel %vm198, %v88, 0
    %v341 = vsel %vm198, %v89, 0
    %v344 = vsel %vm198, %v90, 0
    %v347 = vsel %vm198, %v91, 0
    %v350 = vsel %vm198, %v92, 0
    %v353 = vsel %vm198, %v93, 0
    %v356 = vsel %vm198, %v94, 0
    %v359 = vsel %vm198, %v95, 0
    %v362 = vsel %vm198, %v96, 0
    %v365 = vsel %vm198, %v97, 0
    %v368 = vsel %vm198, %v98, 0
    %v371 = vsel %vm198, %v99, 0
    %v374 = vsel %vm198, %v100, 0
    %v377 = vsel %vm198, %v101, 0
    %v380 = vsel %vm198, %v102, 0
    %v383 = vsel %vm198, %v103, 0
    %v386 = vsel %vm198, %v104, 0
    %v389 = vsel %vm198, %v105, 0
    %v392 = vsel %vm198, %v106, 0
    %v395 = vsel %vm198, %v107, 0
    %v398 = vsel %vm198, %v108, 0
    %v401 = vsel %vm198, %v109, 0
    %v404 = vsel %vm198, %v110, 0
    %v407 = vsel %vm198, %v111, 0
    %v410 = vsel %vm198, %v112, 0
    %v413 = vsel %vm198, %v113, 0
    %v416 = vsel %vm198, %v114, 0
    %v419 = vsel %vm198, %v115, 0
    %v422 = vsel %vm198, %v116, 0
    %v425 = vsel %vm198, %v117, 0
    %v428 = vsel %vm198, %v118, 0
    %v431 = vsel %vm198, %v119, 0
    %v434 = vsel %vm198, %v120, 0
    %v437 = vsel %vm198, %v121, 0
    %v440 = vsel %vm198, %v122, 0
    %v443 = vsel %vm198, %v123, 0
    %v446 = vsel %vm198, %v124, 0
    %v449 = vsel %vm198, %v125, 0
    %v452 = vsel %vm198, %v126, 0
    %v455 = vsel %vm198, %v127, 0
    %v458 = vsel %vm198, %v128, 0
    %v461 = vsel %vm198, %v129, 0
    %v464 = vsel %vm198, %v130, 0
    %v467 = vsel %vm198, %v131, 0
    %v470 = vsel %vm198, %v132, 0
    %v473 = vsel %vm198, %v133, 0
    %v476 = vsel %vm198, %v134, 0
    %v479 = vsel %vm198, %v135, 0
    %v482 = vsel %vm198, %v136, 0
    %v485 = vsel %vm198, %v137, 0
    %v488 = vsel %vm198, %v138, 0
    %v491 = vsel %vm198, %v139, 0
    %v494 = vsel %vm198, %v140, 0
    %v497 = vsel %vm198, %v141, 0
    %v500 = vsel %vm198, %v142, 0
    %v503 = vsel %vm198, %v143, 0
    %v506 = vsel %vm198, %v144, 0
    %v509 = vsel %vm198, %v145, 0
    %v512 = vsel %vm198, %v146, 0
    %v515 = vsel %vm198, %v147, 0
    %v518 = vsel %vm198, %v148, 0
    %v521 = vsel %vm198, %v149, 0
    %v524 = vsel %vm198, %v150, 0
    %v527 = vsel %vm198, %v151, 0
    %v530 = vsel %vm198, %v152, 0
    %v533 = vsel %vm198, %v153, 0
    %v536 = vsel %vm198, %v154, 0
    %v539 = vsel %vm198, %v155, 0
    %v542 = vsel %vm198, %v156, 0
    %v545 = vsel %vm198, %v157, 0
    %v548 = vsel %vm198, %v158, 0
    %v551 = vsel %vm198, %v159, 0
    %v554 = vsel %vm198, %v160, 0
    %v557 = vsel %vm198, %v161, 0
    %v560 = vsel %vm198, %v162, 0
    %v563 = vsel %vm198, %v163, 0
    %v566 = vsel %vm198, %v164, 0
    %v569 = vsel %vm198, %v165, 0
    %v572 = vsel %vm198, %v166, 0
    %v575 = vsel %vm198, %v167, 0
    %v578 = vsel %vm198, %v168, 0
    %v581 = vsel %vm198, %v169, 0
    %v584 = vsel %vm198, %v170, 0
    %v587 = vsel %vm198, %v171, 0
    %v590 = vsel %vm198, %v172, 0
    %v593 = vsel %vm198, %v173, 0
    %595 = vmatprep.subr.mxu0 0.0
    %596 = vmatpush1.xpose.msra.mxu0 %v212
    %597 = vmatprep.subr.mxu0 0.0
    %598 = vmatpush1.xpose.msra.mxu0 %v215
    %599 = vmatprep.subr.mxu0 0.0
    %600 = vmatpush1.xpose.msra.mxu0 %v218
    %601 = vmatprep.subr.mxu0 0.0
    %602 = vmatpush1.xpose.msra.mxu0 %v221
    %603 = vmatprep.subr.mxu0 0.0
    %604 = vmatpush1.xpose.msra.mxu0 %v224
    %605 = vmatprep.subr.mxu0 0.0
    %606 = vmatpush1.xpose.msra.mxu0 %v227
    %607 = vmatprep.subr.mxu0 0.0
    %608 = vmatpush1.xpose.msra.mxu0 %v230
    %609 = vmatprep.subr.mxu0 0.0
    %610 = vmatpush1.xpose.msra.mxu0 %v233
    %611 = vmatprep.subr.mxu0 0.0
    %612 = vmatpush1.xpose.msra.mxu0 %v236
    %613 = vmatprep.subr.mxu0 0.0
    %614 = vmatpush1.xpose.msra.mxu0 %v239
    %615 = vmatprep.subr.mxu0 0.0
    %616 = vmatpush1.xpose.msra.mxu0 %v242
    %617 = vmatprep.subr.mxu0 0.0
    %618 = vmatpush1.xpose.msra.mxu0 %v245
    %619 = vmatprep.subr.mxu0 0.0
    %620 = vmatpush1.xpose.msra.mxu0 %v248
    %621 = vmatprep.subr.mxu0 0.0
    %622 = vmatpush1.xpose.msra.mxu0 %v251
    %623 = vmatprep.subr.mxu0 0.0
    %624 = vmatpush1.xpose.msra.mxu0 %v254
    %625 = vmatprep.subr.mxu0 0.0
    %626 = vmatpush1.xpose.msra.mxu0 %v257
    %627 = vmatprep.subr.mxu0 0.0
    %628 = vmatpush1.xpose.msra.mxu0 %v260
    %629 = vmatprep.subr.mxu0 0.0
    %630 = vmatpush1.xpose.msra.mxu0 %v263
    %631 = vmatprep.subr.mxu0 0.0
    %632 = vmatpush1.xpose.msra.mxu0 %v266
    %633 = vmatprep.subr.mxu0 0.0
    %634 = vmatpush1.xpose.msra.mxu0 %v269
    %635 = vmatprep.subr.mxu0 0.0
    %636 = vmatpush1.xpose.msra.mxu0 %v272
    %637 = vmatprep.subr.mxu0 0.0
    %638 = vmatpush1.xpose.msra.mxu0 %v275
    %639 = vmatprep.subr.mxu0 0.0
    %640 = vmatpush1.xpose.msra.mxu0 %v278
    %641 = vmatprep.subr.mxu0 0.0
    %642 = vmatpush1.xpose.msra.mxu0 %v281
    %643 = vmatprep.subr.mxu0 0.0
    %644 = vmatpush1.xpose.msra.mxu0 %v284
    %645 = vmatprep.subr.mxu0 0.0
    %646 = vmatpush1.xpose.msra.mxu0 %v287
    %647 = vmatprep.subr.mxu0 0.0
    %648 = vmatpush1.xpose.msra.mxu0 %v290
    %649 = vmatprep.subr.mxu0 0.0
    %650 = vmatpush1.xpose.msra.mxu0 %v293
    %651 = vmatprep.subr.mxu0 0.0
    %652 = vmatpush1.xpose.msra.mxu0 %v296
    %653 = vmatprep.subr.mxu0 0.0
    %654 = vmatpush1.xpose.msra.mxu0 %v299
    %655 = vmatprep.subr.mxu0 0.0
    %656 = vmatpush1.xpose.msra.mxu0 %v302
    %657 = vmatprep.subr.mxu0 0.0
    %658 = vmatpush1.xpose.msra.mxu0 %v305
    %659 = vmatprep.mubr.f32.mxu0 0.0
    %660 = vmatmul.mubr.f32.gmra.mrb[0].mxu0 %v200
    %v661 = vpop.f32.mrb[0].mxu0
    %v662 = vadd.f32 %v181, %v661
    %v663 = vpop.f32.mrb[0].mxu0
    %v664 = vadd.f32 %v181, %v663
    %665 = vmatprep.mubr.f32.mxu0 0.0
    %666 = vmatmul.mubr.f32.gmra.mrb[0].mxu0 %v203
    %v667 = vpop.f32.mrb[0].mxu0
    %v668 = vadd.f32 %v186, %v667
    %v669 = vpop.f32.mrb[0].mxu0
    %v670 = vadd.f32 %v186, %v669
    %671 = vmatprep.mubr.f32.mxu0 0.0
    %672 = vmatmul.mubr.f32.gmra.mrb[0].mxu0 %v206
    %v673 = vpop.f32.mrb[0].mxu0
    %v674 = vadd.f32 %v191, %v673
    %v675 = vpop.f32.mrb[0].mxu0
    %v676 = vadd.f32 %v191, %v675
    %677 = vmatprep.mubr.f32.mxu0 0.0
    %678 = vmatmul.mubr.f32.gmra.mrb[0].mxu0 %v209
    %v679 = vpop.f32.mrb[0].mxu0
    %v680 = vadd.f32 %v196, %v679
    %v681 = vpop.f32.mrb[0].mxu0
    %v682 = vadd.f32 %v196, %v681
    %683 = vdwg.mxu0
    %684 = vmatprep.subr.mxu0 0.0
    %685 = vmatpush1.xpose.msra.mxu0 %v308
    %686 = vmatprep.subr.mxu0 0.0
    %687 = vmatpush1.xpose.msra.mxu0 %v311
    %688 = vmatprep.subr.mxu0 0.0
    %689 = vmatpush1.xpose.msra.mxu0 %v314
    %690 = vmatprep.subr.mxu0 0.0
    %691 = vmatpush1.xpose.msra.mxu0 %v317
    %692 = vmatprep.subr.mxu0 0.0
    %693 = vmatpush1.xpose.msra.mxu0 %v320
    %694 = vmatprep.subr.mxu0 0.0
    %695 = vmatpush1.xpose.msra.mxu0 %v323
    %696 = vmatprep.subr.mxu0 0.0
    %697 = vmatpush1.xpose.msra.mxu0 %v326
    %698 = vmatprep.subr.mxu0 0.0
    %699 = vmatpush1.xpose.msra.mxu0 %v329
    %700 = vmatprep.subr.mxu0 0.0
    %701 = vmatpush1.xpose.msra.mxu0 %v332
    %702 = vmatprep.subr.mxu0 0.0
    %703 = vmatpush1.xpose.msra.mxu0 %v335
    %704 = vmatprep.subr.mxu0 0.0
    %705 = vmatpush1.xpose.msra.mxu0 %v338
    %706 = vmatprep.subr.mxu0 0.0
    %707 = vmatpush1.xpose.msra.mxu0 %v341
    %708 = vmatprep.subr.mxu0 0.0
    %709 = vmatpush1.xpose.msra.mxu0 %v344
    %710 = vmatprep.subr.mxu0 0.0
    %711 = vmatpush1.xpose.msra.mxu0 %v347
    %712 = vmatprep.subr.mxu0 0.0
    %713 = vmatpush1.xpose.msra.mxu0 %v350
    %714 = vmatprep.subr.mxu0 0.0
    %715 = vmatpush1.xpose.msra.mxu0 %v353
    %716 = vmatprep.subr.mxu0 0.0
    %717 = vmatpush1.xpose.msra.mxu0 %v356
    %718 = vmatprep.subr.mxu0 0.0
    %719 = vmatpush1.xpose.msra.mxu0 %v359
    %720 = vmatprep.subr.mxu0 0.0
    %721 = vmatpush1.xpose.msra.mxu0 %v362
    %722 = vmatprep.subr.mxu0 0.0
    %723 = vmatpush1.xpose.msra.mxu0 %v365
    %724 = vmatprep.subr.mxu0 0.0
    %725 = vmatpush1.xpose.msra.mxu0 %v368
    %726 = vmatprep.subr.mxu0 0.0
    %727 = vmatpush1.xpose.msra.mxu0 %v371
    %728 = vmatprep.subr.mxu0 0.0
    %729 = vmatpush1.xpose.msra.mxu0 %v374
    %730 = vmatprep.subr.mxu0 0.0
    %731 = vmatpush1.xpose.msra.mxu0 %v377
    %732 = vmatprep.subr.mxu0 0.0
    %733 = vmatpush1.xpose.msra.mxu0 %v380
    %734 = vmatprep.subr.mxu0 0.0
    %735 = vmatpush1.xpose.msra.mxu0 %v383
    %736 = vmatprep.subr.mxu0 0.0
    %737 = vmatpush1.xpose.msra.mxu0 %v386
    %738 = vmatprep.subr.mxu0 0.0
    %739 = vmatpush1.xpose.msra.mxu0 %v389
    %740 = vmatprep.subr.mxu0 0.0
    %741 = vmatpush1.xpose.msra.mxu0 %v392
    %742 = vmatprep.subr.mxu0 0.0
    %743 = vmatpush1.xpose.msra.mxu0 %v395
    %744 = vmatprep.subr.mxu0 0.0
    %745 = vmatpush1.xpose.msra.mxu0 %v398
    %746 = vmatprep.subr.mxu0 0.0
    %747 = vmatpush1.xpose.msra.mxu0 %v401
    %748 = vmatprep.mubr.f32.mxu0 0.0
    %749 = vmatmul.mubr.f32.gmra.mrb[0].mxu0 %v200
    %v750 = vpop.f32.mrb[0].mxu0
    %v751 = vadd.f32 %v181, %v750
    %v752 = vpop.f32.mrb[0].mxu0
    %v753 = vadd.f32 %v181, %v752
    %754 = vmatprep.mubr.f32.mxu0 0.0
    %755 = vmatmul.mubr.f32.gmra.mrb[0].mxu0 %v203
    %v756 = vpop.f32.mrb[0].mxu0
    %v757 = vadd.f32 %v186, %v756
    %v758 = vpop.f32.mrb[0].mxu0
    %v759 = vadd.f32 %v186, %v758
    %760 = vmatprep.mubr.f32.mxu0 0.0
    %761 = vmatmul.mubr.f32.gmra.mrb[0].mxu0 %v206
    %v762 = vpop.f32.mrb[0].mxu0
    %v763 = vadd.f32 %v191, %v762
    %v764 = vpop.f32.mrb[0].mxu0
    %v765 = vadd.f32 %v191, %v764
    %766 = vmatprep.mubr.f32.mxu0 0.0
    %767 = vmatmul.mubr.f32.gmra.mrb[0].mxu0 %v209
    %v768 = vpop.f32.mrb[0].mxu0
    %v769 = vadd.f32 %v196, %v768
    %v770 = vpop.f32.mrb[0].mxu0
    %v771 = vadd.f32 %v196, %v770
    %772 = vdwg.mxu0
    %773 = vmatprep.subr.mxu0 0.0
    %774 = vmatpush1.xpose.msra.mxu0 %v404
    %775 = vmatprep.subr.mxu0 0.0
    %776 = vmatpush1.xpose.msra.mxu0 %v407
    %777 = vmatprep.subr.mxu0 0.0
    %778 = vmatpush1.xpose.msra.mxu0 %v410
    %779 = vmatprep.subr.mxu0 0.0
    %780 = vmatpush1.xpose.msra.mxu0 %v413
    %781 = vmatprep.subr.mxu0 0.0
    %782 = vmatpush1.xpose.msra.mxu0 %v416
    %783 = vmatprep.subr.mxu0 0.0
    %784 = vmatpush1.xpose.msra.mxu0 %v419
    %785 = vmatprep.subr.mxu0 0.0
    %786 = vmatpush1.xpose.msra.mxu0 %v422
    %787 = vmatprep.subr.mxu0 0.0
    %788 = vmatpush1.xpose.msra.mxu0 %v425
    %789 = vmatprep.subr.mxu0 0.0
    %790 = vmatpush1.xpose.msra.mxu0 %v428
    %791 = vmatprep.subr.mxu0 0.0
    %792 = vmatpush1.xpose.msra.mxu0 %v431
    %793 = vmatprep.subr.mxu0 0.0
    %794 = vmatpush1.xpose.msra.mxu0 %v434
    %795 = vmatprep.subr.mxu0 0.0
    %796 = vmatpush1.xpose.msra.mxu0 %v437
    %797 = vmatprep.subr.mxu0 0.0
    %798 = vmatpush1.xpose.msra.mxu0 %v440
    %799 = vmatprep.subr.mxu0 0.0
    %800 = vmatpush1.xpose.msra.mxu0 %v443
    %801 = vmatprep.subr.mxu0 0.0
    %802 = vmatpush1.xpose.msra.mxu0 %v446
    %803 = vmatprep.subr.mxu0 0.0
    %804 = vmatpush1.xpose.msra.mxu0 %v449
    %805 = vmatprep.subr.mxu0 0.0
    %806 = vmatpush1.xpose.msra.mxu0 %v452
    %807 = vmatprep.subr.mxu0 0.0
    %808 = vmatpush1.xpose.msra.mxu0 %v455
    %809 = vmatprep.subr.mxu0 0.0
    %810 = vmatpush1.xpose.msra.mxu0 %v458
    %811 = vmatprep.subr.mxu0 0.0
    %812 = vmatpush1.xpose.msra.mxu0 %v461
    %813 = vmatprep.subr.mxu0 0.0
    %814 = vmatpush1.xpose.msra.mxu0 %v464
    %815 = vmatprep.subr.mxu0 0.0
    %816 = vmatpush1.xpose.msra.mxu0 %v467
    %817 = vmatprep.subr.mxu0 0.0
    %818 = vmatpush1.xpose.msra.mxu0 %v470
    %819 = vmatprep.subr.mxu0 0.0
    %820 = vmatpush1.xpose.msra.mxu0 %v473
    %821 = vmatprep.subr.mxu0 0.0
    %822 = vmatpush1.xpose.msra.mxu0 %v476
    %823 = vmatprep.subr.mxu0 0.0
    %824 = vmatpush1.xpose.msra.mxu0 %v479
    %825 = vmatprep.subr.mxu0 0.0
    %826 = vmatpush1.xpose.msra.mxu0 %v482
    %827 = vmatprep.subr.mxu0 0.0
    %828 = vmatpush1.xpose.msra.mxu0 %v485
    %829 = vmatprep.subr.mxu0 0.0
    %830 = vmatpush1.xpose.msra.mxu0 %v488
    %831 = vmatprep.subr.mxu0 0.0
    %832 = vmatpush1.xpose.msra.mxu0 %v491
    %833 = vmatprep.subr.mxu0 0.0
    %834 = vmatpush1.xpose.msra.mxu0 %v494
    %835 = vmatprep.subr.mxu0 0.0
    %836 = vmatpush1.xpose.msra.mxu0 %v497
    %837 = vmatprep.mubr.f32.mxu0 0.0
    %838 = vmatmul.mubr.f32.gmra.mrb[0].mxu0 %v200
    %v839 = vpop.f32.mrb[0].mxu0
    %v840 = vadd.f32 %v181, %v839
    %v841 = vpop.f32.mrb[0].mxu0
    %v842 = vadd.f32 %v181, %v841
    %843 = vmatprep.mubr.f32.mxu0 0.0
    %844 = vmatmul.mubr.f32.gmra.mrb[0].mxu0 %v203
    %v845 = vpop.f32.mrb[0].mxu0
    %v846 = vadd.f32 %v186, %v845
    %v847 = vpop.f32.mrb[0].mxu0
    %v848 = vadd.f32 %v186, %v847
    %849 = vmatprep.mubr.f32.mxu0 0.0
    %850 = vmatmul.mubr.f32.gmra.mrb[0].mxu0 %v206
    %v851 = vpop.f32.mrb[0].mxu0
    %v852 = vadd.f32 %v191, %v851
    %v853 = vpop.f32.mrb[0].mxu0
    %v854 = vadd.f32 %v191, %v853
    %855 = vmatprep.mubr.f32.mxu0 0.0
    %856 = vmatmul.mubr.f32.gmra.mrb[0].mxu0 %v209
    %v857 = vpop.f32.mrb[0].mxu0
    %v858 = vadd.f32 %v196, %v857
    %v859 = vpop.f32.mrb[0].mxu0
    %v860 = vadd.f32 %v196, %v859
    %861 = vdwg.mxu0
    %862 = vmatprep.subr.mxu0 0.0
    %863 = vmatpush1.xpose.msra.mxu0 %v500
    %864 = vmatprep.subr.mxu0 0.0
    %865 = vmatpush1.xpose.msra.mxu0 %v503
    %866 = vmatprep.subr.mxu0 0.0
    %867 = vmatpush1.xpose.msra.mxu0 %v506
    %868 = vmatprep.subr.mxu0 0.0
    %869 = vmatpush1.xpose.msra.mxu0 %v509
    %870 = vmatprep.subr.mxu0 0.0
    %871 = vmatpush1.xpose.msra.mxu0 %v512
    %872 = vmatprep.subr.mxu0 0.0
    %873 = vmatpush1.xpose.msra.mxu0 %v515
    %874 = vmatprep.subr.mxu0 0.0
    %875 = vmatpush1.xpose.msra.mxu0 %v518
    %876 = vmatprep.subr.mxu0 0.0
    %877 = vmatpush1.xpose.msra.mxu0 %v521
    %878 = vmatprep.subr.mxu0 0.0
    %879 = vmatpush1.xpose.msra.mxu0 %v524
    %880 = vmatprep.subr.mxu0 0.0
    %881 = vmatpush1.xpose.msra.mxu0 %v527
    %882 = vmatprep.subr.mxu0 0.0
    %883 = vmatpush1.xpose.msra.mxu0 %v530
    %884 = vmatprep.subr.mxu0 0.0
    %885 = vmatpush1.xpose.msra.mxu0 %v533
    %886 = vmatprep.subr.mxu0 0.0
    %887 = vmatpush1.xpose.msra.mxu0 %v536
    %888 = vmatprep.subr.mxu0 0.0
    %889 = vmatpush1.xpose.msra.mxu0 %v539
    %890 = vmatprep.subr.mxu0 0.0
    %891 = vmatpush1.xpose.msra.mxu0 %v542
    %892 = vmatprep.subr.mxu0 0.0
    %893 = vmatpush1.xpose.msra.mxu0 %v545
    %894 = vmatprep.subr.mxu0 0.0
    %895 = vmatpush1.xpose.msra.mxu0 %v548
    %896 = vmatprep.subr.mxu0 0.0
    %897 = vmatpush1.xpose.msra.mxu0 %v551
    %898 = vmatprep.subr.mxu0 0.0
    %899 = vmatpush1.xpose.msra.mxu0 %v554
    %900 = vmatprep.subr.mxu0 0.0
    %901 = vmatpush1.xpose.msra.mxu0 %v557
    %902 = vmatprep.subr.mxu0 0.0
    %903 = vmatpush1.xpose.msra.mxu0 %v560
    %904 = vmatprep.subr.mxu0 0.0
    %905 = vmatpush1.xpose.msra.mxu0 %v563
    %906 = vmatprep.subr.mxu0 0.0
    %907 = vmatpush1.xpose.msra.mxu0 %v566
    %908 = vmatprep.subr.mxu0 0.0
    %909 = vmatpush1.xpose.msra.mxu0 %v569
    %910 = vmatprep.subr.mxu0 0.0
    %911 = vmatpush1.xpose.msra.mxu0 %v572
    %912 = vmatprep.subr.mxu0 0.0
    %913 = vmatpush1.xpose.msra.mxu0 %v575
    %914 = vmatprep.subr.mxu0 0.0
    %915 = vmatpush1.xpose.msra.mxu0 %v578
    %916 = vmatprep.subr.mxu0 0.0
    %917 = vmatpush1.xpose.msra.mxu0 %v581
    %918 = vmatprep.subr.mxu0 0.0
    %919 = vmatpush1.xpose.msra.mxu0 %v584
    %920 = vmatprep.subr.mxu0 0.0
    %921 = vmatpush1.xpose.msra.mxu0 %v587
    %922 = vmatprep.subr.mxu0 0.0
    %923 = vmatpush1.xpose.msra.mxu0 %v590
    %924 = vmatprep.subr.mxu0 0.0
    %925 = vmatpush1.xpose.msra.mxu0 %v593
    %926 = vmatprep.mubr.f32.mxu0 0.0
    %927 = vmatmul.mubr.f32.gmra.mrb[0].mxu0 %v200
    %v928 = vpop.f32.mrb[0].mxu0
    %v929 = vadd.f32 %v181, %v928
    %v930 = vpop.f32.mrb[0].mxu0
    %v931 = vadd.f32 %v181, %v930
    %932 = vmatprep.mubr.f32.mxu0 0.0
    %933 = vmatmul.mubr.f32.gmra.mrb[0].mxu0 %v203
    %v934 = vpop.f32.mrb[0].mxu0
    %v935 = vadd.f32 %v186, %v934
    %v936 = vpop.f32.mrb[0].mxu0
    %v937 = vadd.f32 %v186, %v936
    %938 = vmatprep.mubr.f32.mxu0 0.0
    %939 = vmatmul.mubr.f32.gmra.mrb[0].mxu0 %v206
    %v940 = vpop.f32.mrb[0].mxu0
    %v941 = vadd.f32 %v191, %v940
    %v942 = vpop.f32.mrb[0].mxu0
    %v943 = vadd.f32 %v191, %v942
    %944 = vmatprep.mubr.f32.mxu0 0.0
    %945 = vmatmul.mubr.f32.gmra.mrb[0].mxu0 %v209
    %v946 = vpop.f32.mrb[0].mxu0
    %v947 = vadd.f32 %v196, %v946
    %v948 = vpop.f32.mrb[0].mxu0
    %v949 = vadd.f32 %v196, %v948
    %950 = vdwg.mxu0
    %951 = vst [vmem:[%s3] sm:$0xff] %v662
    %952 = vst [vmem:[%s3 + $0x8] sm:$0xff] %v664
    %953 = vst [vmem:[%s3 + $0x10] sm:$0xff] %v751
    %954 = vst [vmem:[%s3 + $0x18] sm:$0xff] %v753
    %955 = vst [vmem:[%s3 + $0x20] sm:$0xff] %v840
    %956 = vst [vmem:[%s3 + $0x28] sm:$0xff] %v842
    %957 = vst [vmem:[%s3 + $0x30] sm:$0xff] %v929
    %958 = vst [vmem:[%s3 + $0x38] sm:$0xff] %v931
    %959 = vst [vmem:[%s3 + $0x40] sm:$0xff] %v668
    %960 = vst [vmem:[%s3 + $0x48] sm:$0xff] %v670
    %961 = vst [vmem:[%s3 + $0x50] sm:$0xff] %v757
    %962 = vst [vmem:[%s3 + $0x58] sm:$0xff] %v759
    %963 = vst [vmem:[%s3 + $0x60] sm:$0xff] %v846
    %964 = vst [vmem:[%s3 + $0x68] sm:$0xff] %v848
    %965 = vst [vmem:[%s3 + $0x70] sm:$0xff] %v935
    %966 = vst [vmem:[%s3 + $0x78] sm:$0xff] %v937
    %967 = vst [vmem:[%s3 + $0x80] sm:$0xff] %v674
    %968 = vst [vmem:[%s3 + $0x88] sm:$0xff] %v676
    %969 = vst [vmem:[%s3 + $0x90] sm:$0xff] %v763
    %970 = vst [vmem:[%s3 + $0x98] sm:$0xff] %v765
    %971 = vst [vmem:[%s3 + $0xa0] sm:$0xff] %v852
    %972 = vst [vmem:[%s3 + $0xa8] sm:$0xff] %v854
    %973 = vst [vmem:[%s3 + $0xb0] sm:$0xff] %v941
    %974 = vst [vmem:[%s3 + $0xb8] sm:$0xff] %v943
    %975 = vst [vmem:[%s3 + $0xc0] sm:$0xff] %v680
    %976 = vst [vmem:[%s3 + $0xc8] sm:$0xff] %v682
    %977 = vst [vmem:[%s3 + $0xd0] sm:$0xff] %v769
    %978 = vst [vmem:[%s3 + $0xd8] sm:$0xff] %v771
    %979 = vst [vmem:[%s3 + $0xe0] sm:$0xff] %v858
    %980 = vst [vmem:[%s3 + $0xe8] sm:$0xff] %v860
    %981 = vst [vmem:[%s3 + $0xf0] sm:$0xff] %v947
    %982 = vst [vmem:[%s3 + $0xf8] sm:$0xff] %v949
    // Predicated region
    $region22: #{fno3d_forward.10} parent=1 // pred_check
      _
    $region23: #{fno3d_forward.10} parent=1 // pred_check_branch
      %984 = sbr.rel (0) target = $region25
    $region24: #{fno3d_forward.10} parent=1 // pred_region
      _
    $region25: #{fno3d_forward.10} parent=1 // pred_fallthru
      _
    // Predicated region
    $region26: #{fno3d_forward.10} parent=1 // pred_check
      _
    $region27: #{fno3d_forward.10} parent=1 // pred_check_branch
      %986 = sbr.rel (0) target = $region29
    $region28: #{fno3d_forward.10} parent=1 // pred_region
      _
    $region29: #{fno3d_forward.10} parent=1 // pred_fallthru
      _
    %987 = vsyncpa [#allocation3], 1
    %988 = vsyncpa [#allocation5], 1

// kernel: fno3d_forward.11
$region0: #{fno3d_forward.11}
  #allocation0 [shape = 'u32[]', space=smem, size = 0x4, offset = 0x4, fixed_abs, tag = 'smem constant byte address 0x4 - core index']
  #allocation1 [shape = 'u32[144,128]{1,0:T(1,128)}', space=vmem, size = 0x12000, scoped, tag = 'internal scratch']
  %s0 = inlined_call_operand.vmem [shape: f32[2,64,192], index: 0, kind: input, shape index: {}]
  %s1 = inlined_call_operand.vmem [shape: f32[64,64,192], index: 1, kind: input, shape index: {}]
  %s2 = inlined_call_operand.vmem [shape: f32[2,64,192], index: 2, kind: output, shape index: {}]
  %s3 = sld [smem:[#allocation0]]
  $region41: #{fno3d_forward.11} parent=0
    _
  %s5 = ssub.s32 1, %s3
  %s6 = scalar_select 0, %s5, %s3
  loop: start=0, step=1, limit=4
  $region2: #{fno3d_forward.11} parent=0 // loop_pre_header
    _
  $region3: #{fno3d_forward.11} parent=0 // loop_header
    %s8 = sphi 0, %s12
    %p9 = scmp.ge.s32.totalorder %s8, 4
    %s18 = sphi 0, %s20
    %s21 = sphi 0, %s18
    %s22 = sphi 0, %s21
    %s38 = sphi 0, %s22
    %s42 = sphi 0, %s42
    %s44 = sphi 0, %s42
    %s45 = sphi 0, %s44
    %s59 = sphi 0, %s45
    %s65 = sphi 0, %s67
    %s68 = sphi 0, %s65
    %s69 = sphi 0, %s68
    %s85 = sphi 0, %s69
  $region4: #{fno3d_forward.11} parent=0 // loop_header_branch
    %11 = sbr.rel (%p9) target = $region8
  $region5: #{fno3d_forward.11} parent=0 // loop_body
    %s13 = ssub.s32 %s8, 1
    %s14 = ssub.s32 %s8, 2
    %s15 = sadd.s32 %s8, 1
    %s16 = ssub.s32 %s8, %s15
    %p17 = scmp.eq.s32.totalorder %s16, 0
    %s19 = sadd.s32 %s18, 1
    %s20 = scalar_select %p17, %s18, %s19
    %p23 = pneg %p17
    %p24 = scmp.eq.s32.totalorder %s8, 1
    %p25 = por %p23, %p24
    %p26 = scmp.ne.s32.totalorder %s18, %s21
    %p27 = scmp.eq.s32.totalorder %s8, 0
    %p28 = por %p26, %p27
    %p29 = scmp.ne.s32.totalorder %s18, %s21
    %p30 = scmp.eq.s32.totalorder %s13, 1
    %p31 = por %p29, %p30
    %p32 = scmp.ne.s32.totalorder %s21, %s22
    %p33 = scmp.eq.s32.totalorder %s13, 0
    %p34 = por %p32, %p33
    %p35 = scmp.ne.s32.totalorder %s21, %s22
    %p36 = scmp.eq.s32.totalorder %s14, 1
    %p37 = por %p35, %p36
    %p39 = scmp.ne.s32.totalorder %s22, %s38
    %p40 = scmp.eq.s32.totalorder %s14, 0
    %p41 = por %p39, %p40
    %s43 = sadd.s32 %s42, 1
    %p46 = scmp.eq.s32.totalorder %s8, 1
    %p47 = scmp.ne.s32.totalorder %s42, %s44
    %p48 = scmp.eq.s32.totalorder %s8, 0
    %p49 = por %p47, %p48
    %p50 = scmp.ne.s32.totalorder %s42, %s44
    %p51 = scmp.eq.s32.totalorder %s13, 1
    %p52 = por %p50, %p51
    %p53 = scmp.ne.s32.totalorder %s44, %s45
    %p54 = scmp.eq.s32.totalorder %s13, 0
    %p55 = por %p53, %p54
    %p56 = scmp.ne.s32.totalorder %s44, %s45
    %p57 = scmp.eq.s32.totalorder %s14, 1
    %p58 = por %p56, %p57
    %p60 = scmp.ne.s32.totalorder %s45, %s59
    %p61 = scmp.eq.s32.totalorder %s14, 0
    %p62 = por %p60, %p61
    %s63 = ssub.s32 %s8, %s15
    %p64 = scmp.eq.s32.totalorder %s63, 0
    %s66 = sadd.s32 %s65, 1
    %s67 = scalar_select %p64, %s65, %s66
    %p70 = pneg %p64
    %p71 = scmp.eq.s32.totalorder %s8, 1
    %p72 = por %p70, %p71
    %p73 = scmp.ne.s32.totalorder %s65, %s68
    %p74 = scmp.eq.s32.totalorder %s8, 0
    %p75 = por %p73, %p74
    %p76 = scmp.ne.s32.totalorder %s65, %s68
    %p77 = scmp.eq.s32.totalorder %s13, 1
    %p78 = por %p76, %p77
    %p79 = scmp.ne.s32.totalorder %s68, %s69
    %p80 = scmp.eq.s32.totalorder %s13, 0
    %p81 = por %p79, %p80
    %p82 = scmp.ne.s32.totalorder %s68, %s69
    %p83 = scmp.eq.s32.totalorder %s14, 1
    %p84 = por %p82, %p83
    %p86 = scmp.ne.s32.totalorder %s69, %s85
    %p87 = scmp.eq.s32.totalorder %s14, 0
    %p88 = por %p86, %p87
    %p89 = scmp.le.s32.totalorder 1, %s8
    %p90 = scmp.lt.s32.totalorder %s8, 3
    %p91 = pnand %p89, %p90
    %p92 = pneg %p91
    // Predicated region
    $region9: #{fno3d_forward.11} parent=5 // pred_check
      _
    $region10: #{fno3d_forward.11} parent=5 // pred_check_branch
      %94 = sbr.rel (%p91) target = $region12
    $region11: #{fno3d_forward.11} parent=5 // pred_region
      %s95 = ssub.s32 %s8, 1
      // Predicated region
      $region13: #{fno3d_forward.11} parent=11 // pred_check
        %p96 = pneg %p55
      $region14: #{fno3d_forward.11} parent=11 // pred_check_branch
        %98 = sbr.rel (%p96) target = $region16
      $region15: #{fno3d_forward.11} parent=11 // pred_region
        _
      $region16: #{fno3d_forward.11} parent=11 // pred_fallthru
        _
    $region12: #{fno3d_forward.11} parent=5 // pred_fallthru
      _
    %p99 = scmp.lt.s32.totalorder %s8, 2
    // Predicated region
    $region17: #{fno3d_forward.11} parent=5 // pred_check
      %p100 = pneg %p99
    $region18: #{fno3d_forward.11} parent=5 // pred_check_branch
      %102 = sbr.rel (%p100) target = $region20
    $region19: #{fno3d_forward.11} parent=5 // pred_region
      // Predicated region
      $region21: #{fno3d_forward.11} parent=19 // pred_check
        %p103 = pneg %p28
      $region22: #{fno3d_forward.11} parent=19 // pred_check_branch
        %105 = sbr.rel (%p103) target = $region24
      $region23: #{fno3d_forward.11} parent=19 // pred_region
        %p106 = scmp.lt.s32.totalorder %s8, 1
        %s107 = scalar_select %p106, %s8, 1
        %s108 = smul.addr %s107, 16
        %s109 = smul.addr %s108, 8
        %s110 = scalar_lea.vmem %s0, %s109
      $region24: #{fno3d_forward.11} parent=19 // pred_fallthru
        _
    $region20: #{fno3d_forward.11} parent=5 // pred_fallthru
      _
    %p111 = scmp.le.s32.totalorder 1, %s8
    %p112 = scmp.lt.s32.totalorder %s8, 3
    %p113 = pnand %p111, %p112
    %p114 = pneg %p113
    // Predicated region
    $region25: #{fno3d_forward.11} parent=5 // pred_check
      _
    $region26: #{fno3d_forward.11} parent=5 // pred_check_branch
      %116 = sbr.rel (%p113) target = $region28
    $region27: #{fno3d_forward.11} parent=5 // pred_region
      %s117 = ssub.s32 %s8, 1
      %p118 = scmp.lt.s32.totalorder %s13, 1
      %s119 = scalar_select %p118, %s13, 1
      %s120 = smul.addr %s119, 16
      %s121 = smul.addr %s120, 8
      %s122 = scalar_lea.vmem %s0, %s121
      %p123 = pneg %p34
      %p124 = pneg %p31
      %p125 = pneg %p55
      %p126 = pneg %p52
      %p127 = pneg %p81
      %p128 = pneg %p78
      %p129 = scmp.lt.s32.totalorder %s13, 1
      %s130 = scalar_select %p129, %s13, 1
      %s131 = smul.addr %s130, 16
      %s132 = smul.addr %s131, 8
      %s133 = scalar_lea.vmem %s2, %s132
      %p134 = scmp.lt.s32.totalorder %s13, 1
      %s135 = scalar_select %p134, %s13, 1
      %s136 = smul.addr %s135, 16
      %s137 = smul.addr %s136, 8
      %s138 = scalar_lea.vmem %s0, %s137
      %p139 = scmp.lt.s32.totalorder %s13, 1
      %s140 = scalar_select %p139, %s13, 1
      %s141 = smul.addr %s140, 16
      %s142 = smul.addr %s141, 8
      %s143 = scalar_lea.vmem %s2, %s142
      %v144 = vld [vmem:[%s138] ss:$8 sm:$0x3]
      %v145 = vld [vmem:[%s1] sm:$0xff]
      %v146 = vld [vmem:[%s1 + $0x8] sm:$0xff]
      %v147 = vld [vmem:[%s1 + $0x10] sm:$0xff]
      %v148 = vld [vmem:[%s1 + $0x18] sm:$0xff]
      %v149 = vld [vmem:[%s1 + $0x20] sm:$0xff]
      %v150 = vld [vmem:[%s1 + $0x28] sm:$0xff]
      %v151 = vld [vmem:[%s1 + $0x30] sm:$0xff]
      %v152 = vld [vmem:[%s1 + $0x38] sm:$0xff]
      %v153 = vld [vmem:[%s1 + $0x40] sm:$0xff]
      %v154 = vld [vmem:[%s1 + $0x48] sm:$0xff]
      %v155 = vld [vmem:[%s1 + $0x50] sm:$0xff]
      %v156 = vld [vmem:[%s1 + $0x58] sm:$0xff]
      %v157 = vld [vmem:[%s1 + $0x60] sm:$0xff]
      %v158 = vld [vmem:[%s1 + $0x68] sm:$0xff]
      %v159 = vld [vmem:[%s1 + $0x70] sm:$0xff]
      %v160 = vld [vmem:[%s1 + $0x78] sm:$0xff]
      %v162 = vlaneseq
      %v163 = vshrl.u32 %v162, 7
      %v164 = vsub.s32 0, %v163
      %v165 = vrot.slane %v144, %v164
      %v166 = vlaneseq
      %v167 = vshrl.u32 %v166, 7
      %v168 = vsub.s32 1, %v167
      %v169 = vrot.slane %v144, %v168
      %v172 = vmul.f32 %v145, %v165
      %v173 = vmul.f32 %v146, %v169
      %v174 = vmul.f32 %v147, %v165
      %v175 = vmul.f32 %v148, %v169
      %v176 = vmul.f32 %v149, %v165
      %v177 = vmul.f32 %v150, %v169
      %v178 = vmul.f32 %v151, %v165
      %v179 = vmul.f32 %v152, %v169
      %v180 = vmul.f32 %v153, %v165
      %v181 = vmul.f32 %v154, %v169
      %v182 = vmul.f32 %v155, %v165
      %v183 = vmul.f32 %v156, %v169
      %v184 = vmul.f32 %v157, %v165
      %v185 = vmul.f32 %v158, %v169
      %v186 = vmul.f32 %v159, %v165
      %v187 = vmul.f32 %v160, %v169
      %v188 = vadd.f32 %v172, 0.0
      %v189 = vadd.f32 %v173, 0.0
      %v190 = vadd.f32 %v174, 0.0
      %v191 = vadd.f32 %v175, 0.0
      %v192 = vadd.f32 %v176, 0.0
      %v193 = vadd.f32 %v177, 0.0
      %v194 = vadd.f32 %v178, 0.0
      %v195 = vadd.f32 %v179, 0.0
      %v196 = vadd.f32 %v180, 0.0
      %v197 = vadd.f32 %v181, 0.0
      %v198 = vadd.f32 %v182, 0.0
      %v199 = vadd.f32 %v183, 0.0
      %v200 = vadd.f32 %v184, 0.0
      %v201 = vadd.f32 %v185, 0.0
      %v202 = vadd.f32 %v186, 0.0
      %v203 = vadd.f32 %v187, 0.0
      %s204 = scalar_lea.vmem %s138, 1
      %v205 = vld [vmem:[%s204] ss:$8 sm:$0x3]
      %s206 = scalar_lea.vmem %s1, 128
      %v207 = vld [vmem:[%s206] sm:$0xff]
      %v208 = vld [vmem:[%s206 + $0x8] sm:$0xff]
      %v209 = vld [vmem:[%s206 + $0x10] sm:$0xff]
      %v210 = vld [vmem:[%s206 + $0x18] sm:$0xff]
      %v211 = vld [vmem:[%s206 + $0x20] sm:$0xff]
      %v212 = vld [vmem:[%s206 + $0x28] sm:$0xff]
      %v213 = vld [vmem:[%s206 + $0x30] sm:$0xff]
      %v214 = vld [vmem:[%s206 + $0x38] sm:$0xff]
      %v215 = vld [vmem:[%s206 + $0x40] sm:$0xff]
      %v216 = vld [vmem:[%s206 + $0x48] sm:$0xff]
      %v217 = vld [vmem:[%s206 + $0x50] sm:$0xff]
      %v218 = vld [vmem:[%s206 + $0x58] sm:$0xff]
      %v219 = vld [vmem:[%s206 + $0x60] sm:$0xff]
      %v220 = vld [vmem:[%s206 + $0x68] sm:$0xff]
      %v221 = vld [vmem:[%s206 + $0x70] sm:$0xff]
      %v222 = vld [vmem:[%s206 + $0x78] sm:$0xff]
      %v224 = vlaneseq
      %v225 = vshrl.u32 %v224, 7
      %v226 = vsub.s32 0, %v225
      %v227 = vrot.slane %v205, %v226
      %v228 = vlaneseq
      %v229 = vshrl.u32 %v228, 7
      %v230 = vsub.s32 1, %v229
      %v231 = vrot.slane %v205, %v230
      %v234 = vmul.f32 %v207, %v227
      %v235 = vmul.f32 %v208, %v231
      %v236 = vmul.f32 %v209, %v227
      %v237 = vmul.f32 %v210, %v231
      %v238 = vmul.f32 %v211, %v227
      %v239 = vmul.f32 %v212, %v231
      %v240 = vmul.f32 %v213, %v227
      %v241 = vmul.f32 %v214, %v231
      %v242 = vmul.f32 %v215, %v227
      %v243 = vmul.f32 %v216, %v231
      %v244 = vmul.f32 %v217, %v227
      %v245 = vmul.f32 %v218, %v231
      %v246 = vmul.f32 %v219, %v227
      %v247 = vmul.f32 %v220, %v231
      %v248 = vmul.f32 %v221, %v227
      %v249 = vmul.f32 %v222, %v231
      %v250 = vadd.f32 %v188, %v234
      %v251 = vadd.f32 %v189, %v235
      %v252 = vadd.f32 %v190, %v236
      %v253 = vadd.f32 %v191, %v237
      %v254 = vadd.f32 %v192, %v238
      %v255 = vadd.f32 %v193, %v239
      %v256 = vadd.f32 %v194, %v240
      %v257 = vadd.f32 %v195, %v241
      %v258 = vadd.f32 %v196, %v242
      %v259 = vadd.f32 %v197, %v243
      %v260 = vadd.f32 %v198, %v244
      %v261 = vadd.f32 %v199, %v245
      %v262 = vadd.f32 %v200, %v246
      %v263 = vadd.f32 %v201, %v247
      %v264 = vadd.f32 %v202, %v248
      %v265 = vadd.f32 %v203, %v249
      %s266 = scalar_lea.vmem %s138, 2
      %v267 = vld [vmem:[%s266] ss:$8 sm:$0x3]
      %s268 = scalar_lea.vmem %s1, 256
      %v269 = vld [vmem:[%s268] sm:$0xff]
      %v270 = vld [vmem:[%s268 + $0x8] sm:$0xff]
      %v271 = vld [vmem:[%s268 + $0x10] sm:$0xff]
      %v272 = vld [vmem:[%s268 + $0x18] sm:$0xff]
      %v273 = vld [vmem:[%s268 + $0x20] sm:$0xff]
      %v274 = vld [vmem:[%s268 + $0x28] sm:$0xff]
      %v275 = vld [vmem:[%s268 + $0x30] sm:$0xff]
      %v276 = vld [vmem:[%s268 + $0x38] sm:$0xff]
      %v277 = vld [vmem:[%s268 + $0x40] sm:$0xff]
      %v278 = vld [vmem:[%s268 + $0x48] sm:$0xff]
      %v279 = vld [vmem:[%s268 + $0x50] sm:$0xff]
      %v280 = vld [vmem:[%s268 + $0x58] sm:$0xff]
      %v281 = vld [vmem:[%s268 + $0x60] sm:$0xff]
      %v282 = vld [vmem:[%s268 + $0x68] sm:$0xff]
      %v283 = vld [vmem:[%s268 + $0x70] sm:$0xff]
      %v284 = vld [vmem:[%s268 + $0x78] sm:$0xff]
      %v286 = vlaneseq
      %v287 = vshrl.u32 %v286, 7
      %v288 = vsub.s32 0, %v287
      %v289 = vrot.slane %v267, %v288
      %v290 = vlaneseq
      %v291 = vshrl.u32 %v290, 7
      %v292 = vsub.s32 1, %v291
      %v293 = vrot.slane %v267, %v292
      %v296 = vmul.f32 %v269, %v289
      %v297 = vmul.f32 %v270, %v293
      %v298 = vmul.f32 %v271, %v289
      %v299 = vmul.f32 %v272, %v293
      %v300 = vmul.f32 %v273, %v289
      %v301 = vmul.f32 %v274, %v293
      %v302 = vmul.f32 %v275, %v289
      %v303 = vmul.f32 %v276, %v293
      %v304 = vmul.f32 %v277, %v289
      %v305 = vmul.f32 %v278, %v293
      %v306 = vmul.f32 %v279, %v289
      %v307 = vmul.f32 %v280, %v293
      %v308 = vmul.f32 %v281, %v289
      %v309 = vmul.f32 %v282, %v293
      %v310 = vmul.f32 %v283, %v289
      %v311 = vmul.f32 %v284, %v293
      %v312 = vadd.f32 %v250, %v296
      %v313 = vadd.f32 %v251, %v297
      %v314 = vadd.f32 %v252, %v298
      %v315 = vadd.f32 %v253, %v299
      %v316 = vadd.f32 %v254, %v300
      %v317 = vadd.f32 %v255, %v301
      %v318 = vadd.f32 %v256, %v302
      %v319 = vadd.f32 %v257, %v303
      %v320 = vadd.f32 %v258, %v304
      %v321 = vadd.f32 %v259, %v305
      %v322 = vadd.f32 %v260, %v306
      %v323 = vadd.f32 %v261, %v307
      %v324 = vadd.f32 %v262, %v308
      %v325 = vadd.f32 %v263, %v309
      %v326 = vadd.f32 %v264, %v310
      %v327 = vadd.f32 %v265, %v311
      %s328 = scalar_lea.vmem %s138, 3
      %v329 = vld [vmem:[%s328] ss:$8 sm:$0x3]
      %s330 = scalar_lea.vmem %s1, 384
      %v331 = vld [vmem:[%s330] sm:$0xff]
      %v332 = vld [vmem:[%s330 + $0x8] sm:$0xff]
      %v333 = vld [vmem:[%s330 + $0x10] sm:$0xff]
      %v334 = vld [vmem:[%s330 + $0x18] sm:$0xff]
      %v335 = vld [vmem:[%s330 + $0x20] sm:$0xff]
      %v336 = vld [vmem:[%s330 + $0x28] sm:$0xff]
      %v337 = vld [vmem:[%s330 + $0x30] sm:$0xff]
      %v338 = vld [vmem:[%s330 + $0x38] sm:$0xff]
      %v339 = vld [vmem:[%s330 + $0x40] sm:$0xff]
      %v340 = vld [vmem:[%s330 + $0x48] sm:$0xff]
      %v341 = vld [vmem:[%s330 + $0x50] sm:$0xff]
      %v342 = vld [vmem:[%s330 + $0x58] sm:$0xff]
      %v343 = vld [vmem:[%s330 + $0x60] sm:$0xff]
      %v344 = vld [vmem:[%s330 + $0x68] sm:$0xff]
      %v345 = vld [vmem:[%s330 + $0x70] sm:$0xff]
      %v346 = vld [vmem:[%s330 + $0x78] sm:$0xff]
      %v348 = vlaneseq
      %v349 = vshrl.u32 %v348, 7
      %v350 = vsub.s32 0, %v349
      %v351 = vrot.slane %v329, %v350
      %v352 = vlaneseq
      %v353 = vshrl.u32 %v352, 7
      %v354 = vsub.s32 1, %v353
      %v355 = vrot.slane %v329, %v354
      %v358 = vmul.f32 %v331, %v351
      %v359 = vmul.f32 %v332, %v355
      %v360 = vmul.f32 %v333, %v351
      %v361 = vmul.f32 %v334, %v355
      %v362 = vmul.f32 %v335, %v351
      %v363 = vmul.f32 %v336, %v355
      %v364 = vmul.f32 %v337, %v351
      %v365 = vmul.f32 %v338, %v355
      %v366 = vmul.f32 %v339, %v351
      %v367 = vmul.f32 %v340, %v355
      %v368 = vmul.f32 %v341, %v351
      %v369 = vmul.f32 %v342, %v355
      %v370 = vmul.f32 %v343, %v351
      %v371 = vmul.f32 %v344, %v355
      %v372 = vmul.f32 %v345, %v351
      %v373 = vmul.f32 %v346, %v355
      %v374 = vadd.f32 %v312, %v358
      %v375 = vadd.f32 %v313, %v359
      %v376 = vadd.f32 %v314, %v360
      %v377 = vadd.f32 %v315, %v361
      %v378 = vadd.f32 %v316, %v362
      %v379 = vadd.f32 %v317, %v363
      %v380 = vadd.f32 %v318, %v364
      %v381 = vadd.f32 %v319, %v365
      %v382 = vadd.f32 %v320, %v366
      %v383 = vadd.f32 %v321, %v367
      %v384 = vadd.f32 %v322, %v368
      %v385 = vadd.f32 %v323, %v369
      %v386 = vadd.f32 %v324, %v370
      %v387 = vadd.f32 %v325, %v371
      %v388 = vadd.f32 %v326, %v372
      %v389 = vadd.f32 %v327, %v373
      %s390 = scalar_lea.vmem %s138, 4
      %v391 = vld [vmem:[%s390] ss:$8 sm:$0x3]
      %s392 = scalar_lea.vmem %s1, 512
      %v393 = vld [vmem:[%s392] sm:$0xff]
      %v394 = vld [vmem:[%s392 + $0x8] sm:$0xff]
      %v395 = vld [vmem:[%s392 + $0x10] sm:$0xff]
      %v396 = vld [vmem:[%s392 + $0x18] sm:$0xff]
      %v397 = vld [vmem:[%s392 + $0x20] sm:$0xff]
      %v398 = vld [vmem:[%s392 + $0x28] sm:$0xff]
      %v399 = vld [vmem:[%s392 + $0x30] sm:$0xff]
      %v400 = vld [vmem:[%s392 + $0x38] sm:$0xff]
      %v401 = vld [vmem:[%s392 + $0x40] sm:$0xff]
      %v402 = vld [vmem:[%s392 + $0x48] sm:$0xff]
      %v403 = vld [vmem:[%s392 + $0x50] sm:$0xff]
      %v404 = vld [vmem:[%s392 + $0x58] sm:$0xff]
      %v405 = vld [vmem:[%s392 + $0x60] sm:$0xff]
      %v406 = vld [vmem:[%s392 + $0x68] sm:$0xff]
      %v407 = vld [vmem:[%s392 + $0x70] sm:$0xff]
      %v408 = vld [vmem:[%s392 + $0x78] sm:$0xff]
      %v410 = vlaneseq
      %v411 = vshrl.u32 %v410, 7
      %v412 = vsub.s32 0, %v411
      %v413 = vrot.slane %v391, %v412
      %v414 = vlaneseq
      %v415 = vshrl.u32 %v414, 7
      %v416 = vsub.s32 1, %v415
      %v417 = vrot.slane %v391, %v416
      %v420 = vmul.f32 %v393, %v413
      %v421 = vmul.f32 %v394, %v417
      %v422 = vmul.f32 %v395, %v413
      %v423 = vmul.f32 %v396, %v417
      %v424 = vmul.f32 %v397, %v413
      %v425 = vmul.f32 %v398, %v417
      %v426 = vmul.f32 %v399, %v413
      %v427 = vmul.f32 %v400, %v417
      %v428 = vmul.f32 %v401, %v413
      %v429 = vmul.f32 %v402, %v417
      %v430 = vmul.f32 %v403, %v413
      %v431 = vmul.f32 %v404, %v417
      %v432 = vmul.f32 %v405, %v413
      %v433 = vmul.f32 %v406, %v417
      %v434 = vmul.f32 %v407, %v413
      %v435 = vmul.f32 %v408, %v417
      %v436 = vadd.f32 %v374, %v420
      %v437 = vadd.f32 %v375, %v421
      %v438 = vadd.f32 %v376, %v422
      %v439 = vadd.f32 %v377, %v423
      %v440 = vadd.f32 %v378, %v424
      %v441 = vadd.f32 %v379, %v425
      %v442 = vadd.f32 %v380, %v426
      %v443 = vadd.f32 %v381, %v427
      %v444 = vadd.f32 %v382, %v428
      %v445 = vadd.f32 %v383, %v429
      %v446 = vadd.f32 %v384, %v430
      %v447 = vadd.f32 %v385, %v431
      %v448 = vadd.f32 %v386, %v432
      %v449 = vadd.f32 %v387, %v433
      %v450 = vadd.f32 %v388, %v434
      %v451 = vadd.f32 %v389, %v435
      %s452 = scalar_lea.vmem %s138, 5
      %v453 = vld [vmem:[%s452] ss:$8 sm:$0x3]
      %s454 = scalar_lea.vmem %s1, 640
      %v455 = vld [vmem:[%s454] sm:$0xff]
      %v456 = vld [vmem:[%s454 + $0x8] sm:$0xff]
      %v457 = vld [vmem:[%s454 + $0x10] sm:$0xff]
      %v458 = vld [vmem:[%s454 + $0x18] sm:$0xff]
      %v459 = vld [vmem:[%s454 + $0x20] sm:$0xff]
      %v460 = vld [vmem:[%s454 + $0x28] sm:$0xff]
      %v461 = vld [vmem:[%s454 + $0x30] sm:$0xff]
      %v462 = vld [vmem:[%s454 + $0x38] sm:$0xff]
      %v463 = vld [vmem:[%s454 + $0x40] sm:$0xff]
      %v464 = vld [vmem:[%s454 + $0x48] sm:$0xff]
      %v465 = vld [vmem:[%s454 + $0x50] sm:$0xff]
      %v466 = vld [vmem:[%s454 + $0x58] sm:$0xff]
      %v467 = vld [vmem:[%s454 + $0x60] sm:$0xff]
      %v468 = vld [vmem:[%s454 + $0x68] sm:$0xff]
      %v469 = vld [vmem:[%s454 + $0x70] sm:$0xff]
      %v470 = vld [vmem:[%s454 + $0x78] sm:$0xff]
      %v472 = vlaneseq
      %v473 = vshrl.u32 %v472, 7
      %v474 = vsub.s32 0, %v473
      %v475 = vrot.slane %v453, %v474
      %v476 = vlaneseq
      %v477 = vshrl.u32 %v476, 7
      %v478 = vsub.s32 1, %v477
      %v479 = vrot.slane %v453, %v478
      %v482 = vmul.f32 %v455, %v475
      %v483 = vmul.f32 %v456, %v479
      %v484 = vmul.f32 %v457, %v475
      %v485 = vmul.f32 %v458, %v479
      %v486 = vmul.f32 %v459, %v475
      %v487 = vmul.f32 %v460, %v479
      %v488 = vmul.f32 %v461, %v475
      %v489 = vmul.f32 %v462, %v479
      %v490 = vmul.f32 %v463, %v475
      %v491 = vmul.f32 %v464, %v479
      %v492 = vmul.f32 %v465, %v475
      %v493 = vmul.f32 %v466, %v479
      %v494 = vmul.f32 %v467, %v475
      %v495 = vmul.f32 %v468, %v479
      %v496 = vmul.f32 %v469, %v475
      %v497 = vmul.f32 %v470, %v479
      %v498 = vadd.f32 %v436, %v482
      %v499 = vadd.f32 %v437, %v483
      %v500 = vadd.f32 %v438, %v484
      %v501 = vadd.f32 %v439, %v485
      %v502 = vadd.f32 %v440, %v486
      %v503 = vadd.f32 %v441, %v487
      %v504 = vadd.f32 %v442, %v488
      %v505 = vadd.f32 %v443, %v489
      %v506 = vadd.f32 %v444, %v490
      %v507 = vadd.f32 %v445, %v491
      %v508 = vadd.f32 %v446, %v492
      %v509 = vadd.f32 %v447, %v493
      %v510 = vadd.f32 %v448, %v494
      %v511 = vadd.f32 %v449, %v495
      %v512 = vadd.f32 %v450, %v496
      %v513 = vadd.f32 %v451, %v497
      %s514 = scalar_lea.vmem %s138, 6
      %v515 = vld [vmem:[%s514] ss:$8 sm:$0x3]
      %s516 = scalar_lea.vmem %s1, 768
      %v517 = vld [vmem:[%s516] sm:$0xff]
      %v518 = vld [vmem:[%s516 + $0x8] sm:$0xff]
      %v519 = vld [vmem:[%s516 + $0x10] sm:$0xff]
      %v520 = vld [vmem:[%s516 + $0x18] sm:$0xff]
      %v521 = vld [vmem:[%s516 + $0x20] sm:$0xff]
      %v522 = vld [vmem:[%s516 + $0x28] sm:$0xff]
      %v523 = vld [vmem:[%s516 + $0x30] sm:$0xff]
      %v524 = vld [vmem:[%s516 + $0x38] sm:$0xff]
      %v525 = vld [vmem:[%s516 + $0x40] sm:$0xff]
      %v526 = vld [vmem:[%s516 + $0x48] sm:$0xff]
      %v527 = vld [vmem:[%s516 + $0x50] sm:$0xff]
      %v528 = vld [vmem:[%s516 + $0x58] sm:$0xff]
      %v529 = vld [vmem:[%s516 + $0x60] sm:$0xff]
      %v530 = vld [vmem:[%s516 + $0x68] sm:$0xff]
      %v531 = vld [vmem:[%s516 + $0x70] sm:$0xff]
      %v532 = vld [vmem:[%s516 + $0x78] sm:$0xff]
      %v534 = vlaneseq
      %v535 = vshrl.u32 %v534, 7
      %v536 = vsub.s32 0, %v535
      %v537 = vrot.slane %v515, %v536
      %v538 = vlaneseq
      %v539 = vshrl.u32 %v538, 7
      %v540 = vsub.s32 1, %v539
      %v541 = vrot.slane %v515, %v540
      %v544 = vmul.f32 %v517, %v537
      %v545 = vmul.f32 %v518, %v541
      %v546 = vmul.f32 %v519, %v537
      %v547 = vmul.f32 %v520, %v541
      %v548 = vmul.f32 %v521, %v537
      %v549 = vmul.f32 %v522, %v541
      %v550 = vmul.f32 %v523, %v537
      %v551 = vmul.f32 %v524, %v541
      %v552 = vmul.f32 %v525, %v537
      %v553 = vmul.f32 %v526, %v541
      %v554 = vmul.f32 %v527, %v537
      %v555 = vmul.f32 %v528, %v541
      %v556 = vmul.f32 %v529, %v537
      %v557 = vmul.f32 %v530, %v541
      %v558 = vmul.f32 %v531, %v537
      %v559 = vmul.f32 %v532, %v541
      %v560 = vadd.f32 %v498, %v544
      %v561 = vadd.f32 %v499, %v545
      %v562 = vadd.f32 %v500, %v546
      %v563 = vadd.f32 %v501, %v547
      %v564 = vadd.f32 %v502, %v548
      %v565 = vadd.f32 %v503, %v549
      %v566 = vadd.f32 %v504, %v550
      %v567 = vadd.f32 %v505, %v551
      %v568 = vadd.f32 %v506, %v552
      %v569 = vadd.f32 %v507, %v553
      %v570 = vadd.f32 %v508, %v554
      %v571 = vadd.f32 %v509, %v555
      %v572 = vadd.f32 %v510, %v556
      %v573 = vadd.f32 %v511, %v557
      %v574 = vadd.f32 %v512, %v558
      %v575 = vadd.f32 %v513, %v559
      %s576 = scalar_lea.vmem %s138, 7
      %v577 = vld [vmem:[%s576] ss:$8 sm:$0x3]
      %s578 = scalar_lea.vmem %s1, 896
      %v579 = vld [vmem:[%s578] sm:$0xff]
      %v580 = vld [vmem:[%s578 + $0x8] sm:$0xff]
      %v581 = vld [vmem:[%s578 + $0x10] sm:$0xff]
      %v582 = vld [vmem:[%s578 + $0x18] sm:$0xff]
      %v583 = vld [vmem:[%s578 + $0x20] sm:$0xff]
      %v584 = vld [vmem:[%s578 + $0x28] sm:$0xff]
      %v585 = vld [vmem:[%s578 + $0x30] sm:$0xff]
      %v586 = vld [vmem:[%s578 + $0x38] sm:$0xff]
      %v587 = vld [vmem:[%s578 + $0x40] sm:$0xff]
      %v588 = vld [vmem:[%s578 + $0x48] sm:$0xff]
      %v589 = vld [vmem:[%s578 + $0x50] sm:$0xff]
      %v590 = vld [vmem:[%s578 + $0x58] sm:$0xff]
      %v591 = vld [vmem:[%s578 + $0x60] sm:$0xff]
      %v592 = vld [vmem:[%s578 + $0x68] sm:$0xff]
      %v593 = vld [vmem:[%s578 + $0x70] sm:$0xff]
      %v594 = vld [vmem:[%s578 + $0x78] sm:$0xff]
      %v596 = vlaneseq
      %v597 = vshrl.u32 %v596, 7
      %v598 = vsub.s32 0, %v597
      %v599 = vrot.slane %v577, %v598
      %v600 = vlaneseq
      %v601 = vshrl.u32 %v600, 7
      %v602 = vsub.s32 1, %v601
      %v603 = vrot.slane %v577, %v602
      %v606 = vmul.f32 %v579, %v599
      %v607 = vmul.f32 %v580, %v603
      %v608 = vmul.f32 %v581, %v599
      %v609 = vmul.f32 %v582, %v603
      %v610 = vmul.f32 %v583, %v599
      %v611 = vmul.f32 %v584, %v603
      %v612 = vmul.f32 %v585, %v599
      %v613 = vmul.f32 %v586, %v603
      %v614 = vmul.f32 %v587, %v599
      %v615 = vmul.f32 %v588, %v603
      %v616 = vmul.f32 %v589, %v599
      %v617 = vmul.f32 %v590, %v603
      %v618 = vmul.f32 %v591, %v599
      %v619 = vmul.f32 %v592, %v603
      %v620 = vmul.f32 %v593, %v599
      %v621 = vmul.f32 %v594, %v603
      %v622 = vadd.f32 %v560, %v606
      %v623 = vadd.f32 %v561, %v607
      %v624 = vadd.f32 %v562, %v608
      %v625 = vadd.f32 %v563, %v609
      %v626 = vadd.f32 %v564, %v610
      %v627 = vadd.f32 %v565, %v611
      %v628 = vadd.f32 %v566, %v612
      %v629 = vadd.f32 %v567, %v613
      %v630 = vadd.f32 %v568, %v614
      %v631 = vadd.f32 %v569, %v615
      %v632 = vadd.f32 %v570, %v616
      %v633 = vadd.f32 %v571, %v617
      %v634 = vadd.f32 %v572, %v618
      %v635 = vadd.f32 %v573, %v619
      %v636 = vadd.f32 %v574, %v620
      %v637 = vadd.f32 %v575, %v621
      %s638 = scalar_lea.vmem %s138, 16
      %v639 = vld [vmem:[%s638] ss:$8 sm:$0x3]
      %s640 = scalar_lea.vmem %s1, 1024
      %v641 = vld [vmem:[%s640] sm:$0xff]
      %v642 = vld [vmem:[%s640 + $0x8] sm:$0xff]
      %v643 = vld [vmem:[%s640 + $0x10] sm:$0xff]
      %v644 = vld [vmem:[%s640 + $0x18] sm:$0xff]
      %v645 = vld [vmem:[%s640 + $0x20] sm:$0xff]
      %v646 = vld [vmem:[%s640 + $0x28] sm:$0xff]
      %v647 = vld [vmem:[%s640 + $0x30] sm:$0xff]
      %v648 = vld [vmem:[%s640 + $0x38] sm:$0xff]
      %v649 = vld [vmem:[%s640 + $0x40] sm:$0xff]
      %v650 = vld [vmem:[%s640 + $0x48] sm:$0xff]
      %v651 = vld [vmem:[%s640 + $0x50] sm:$0xff]
      %v652 = vld [vmem:[%s640 + $0x58] sm:$0xff]
      %v653 = vld [vmem:[%s640 + $0x60] sm:$0xff]
      %v654 = vld [vmem:[%s640 + $0x68] sm:$0xff]
      %v655 = vld [vmem:[%s640 + $0x70] sm:$0xff]
      %v656 = vld [vmem:[%s640 + $0x78] sm:$0xff]
      %v658 = vlaneseq
      %v659 = vshrl.u32 %v658, 7
      %v660 = vsub.s32 0, %v659
      %v661 = vrot.slane %v639, %v660
      %v662 = vlaneseq
      %v663 = vshrl.u32 %v662, 7
      %v664 = vsub.s32 1, %v663
      %v665 = vrot.slane %v639, %v664
      %v668 = vmul.f32 %v641, %v661
      %v669 = vmul.f32 %v642, %v665
      %v670 = vmul.f32 %v643, %v661
      %v671 = vmul.f32 %v644, %v665
      %v672 = vmul.f32 %v645, %v661
      %v673 = vmul.f32 %v646, %v665
      %v674 = vmul.f32 %v647, %v661
      %v675 = vmul.f32 %v648, %v665
      %v676 = vmul.f32 %v649, %v661
      %v677 = vmul.f32 %v650, %v665
      %v678 = vmul.f32 %v651, %v661
      %v679 = vmul.f32 %v652, %v665
      %v680 = vmul.f32 %v653, %v661
      %v681 = vmul.f32 %v654, %v665
      %v682 = vmul.f32 %v655, %v661
      %v683 = vmul.f32 %v656, %v665
      %v684 = vadd.f32 %v622, %v668
      %v685 = vadd.f32 %v623, %v669
      %v686 = vadd.f32 %v624, %v670
      %v687 = vadd.f32 %v625, %v671
      %v688 = vadd.f32 %v626, %v672
      %v689 = vadd.f32 %v627, %v673
      %v690 = vadd.f32 %v628, %v674
      %v691 = vadd.f32 %v629, %v675
      %v692 = vadd.f32 %v630, %v676
      %v693 = vadd.f32 %v631, %v677
      %v694 = vadd.f32 %v632, %v678
      %v695 = vadd.f32 %v633, %v679
      %v696 = vadd.f32 %v634, %v680
      %v697 = vadd.f32 %v635, %v681
      %v698 = vadd.f32 %v636, %v682
      %v699 = vadd.f32 %v637, %v683
      %s700 = scalar_lea.vmem %s138, 17
      %v701 = vld [vmem:[%s700] ss:$8 sm:$0x3]
      %s702 = scalar_lea.vmem %s1, 1152
      %v703 = vld [vmem:[%s702] sm:$0xff]
      %v704 = vld [vmem:[%s702 + $0x8] sm:$0xff]
      %v705 = vld [vmem:[%s702 + $0x10] sm:$0xff]
      %v706 = vld [vmem:[%s702 + $0x18] sm:$0xff]
      %v707 = vld [vmem:[%s702 + $0x20] sm:$0xff]
      %v708 = vld [vmem:[%s702 + $0x28] sm:$0xff]
      %v709 = vld [vmem:[%s702 + $0x30] sm:$0xff]
      %v710 = vld [vmem:[%s702 + $0x38] sm:$0xff]
      %v711 = vld [vmem:[%s702 + $0x40] sm:$0xff]
      %v712 = vld [vmem:[%s702 + $0x48] sm:$0xff]
      %v713 = vld [vmem:[%s702 + $0x50] sm:$0xff]
      %v714 = vld [vmem:[%s702 + $0x58] sm:$0xff]
      %v715 = vld [vmem:[%s702 + $0x60] sm:$0xff]
      %v716 = vld [vmem:[%s702 + $0x68] sm:$0xff]
      %v717 = vld [vmem:[%s702 + $0x70] sm:$0xff]
      %v718 = vld [vmem:[%s702 + $0x78] sm:$0xff]
      %v720 = vlaneseq
      %v721 = vshrl.u32 %v720, 7
      %v722 = vsub.s32 0, %v721
      %v723 = vrot.slane %v701, %v722
      %v724 = vlaneseq
      %v725 = vshrl.u32 %v724, 7
      %v726 = vsub.s32 1, %v725
      %v727 = vrot.slane %v701, %v726
      %v730 = vmul.f32 %v703, %v723
      %v731 = vmul.f32 %v704, %v727
      %v732 = vmul.f32 %v705, %v723
      %v733 = vmul.f32 %v706, %v727
      %v734 = vmul.f32 %v707, %v723
      %v735 = vmul.f32 %v708, %v727
      %v736 = vmul.f32 %v709, %v723
      %v737 = vmul.f32 %v710, %v727
      %v738 = vmul.f32 %v711, %v723
      %v739 = vmul.f32 %v712, %v727
      %v740 = vmul.f32 %v713, %v723
      %v741 = vmul.f32 %v714, %v727
      %v742 = vmul.f32 %v715, %v723
      %v743 = vmul.f32 %v716, %v727
      %v744 = vmul.f32 %v717, %v723
      %v745 = vmul.f32 %v718, %v727
      %v746 = vadd.f32 %v684, %v730
      %v747 = vadd.f32 %v685, %v731
      %v748 = vadd.f32 %v686, %v732
      %v749 = vadd.f32 %v687, %v733
      %v750 = vadd.f32 %v688, %v734
      %v751 = vadd.f32 %v689, %v735
      %v752 = vadd.f32 %v690, %v736
      %v753 = vadd.f32 %v691, %v737
      %v754 = vadd.f32 %v692, %v738
      %v755 = vadd.f32 %v693, %v739
      %v756 = vadd.f32 %v694, %v740
      %v757 = vadd.f32 %v695, %v741
      %v758 = vadd.f32 %v696, %v742
      %v759 = vadd.f32 %v697, %v743
      %v760 = vadd.f32 %v698, %v744
      %v761 = vadd.f32 %v699, %v745
      %s762 = scalar_lea.vmem %s138, 18
      %v763 = vld [vmem:[%s762] ss:$8 sm:$0x3]
      %s764 = scalar_lea.vmem %s1, 1280
      %v765 = vld [vmem:[%s764] sm:$0xff]
      %v766 = vld [vmem:[%s764 + $0x8] sm:$0xff]
      %v767 = vld [vmem:[%s764 + $0x10] sm:$0xff]
      %v768 = vld [vmem:[%s764 + $0x18] sm:$0xff]
      %v769 = vld [vmem:[%s764 + $0x20] sm:$0xff]
      %v770 = vld [vmem:[%s764 + $0x28] sm:$0xff]
      %v771 = vld [vmem:[%s764 + $0x30] sm:$0xff]
      %v772 = vld [vmem:[%s764 + $0x38] sm:$0xff]
      %v773 = vld [vmem:[%s764 + $0x40] sm:$0xff]
      %v774 = vld [vmem:[%s764 + $0x48] sm:$0xff]
      %v775 = vld [vmem:[%s764 + $0x50] sm:$0xff]
      %v776 = vld [vmem:[%s764 + $0x58] sm:$0xff]
      %v777 = vld [vmem:[%s764 + $0x60] sm:$0xff]
      %v778 = vld [vmem:[%s764 + $0x68] sm:$0xff]
      %v779 = vld [vmem:[%s764 + $0x70] sm:$0xff]
      %v780 = vld [vmem:[%s764 + $0x78] sm:$0xff]
      %v782 = vlaneseq
      %v783 = vshrl.u32 %v782, 7
      %v784 = vsub.s32 0, %v783
      %v785 = vrot.slane %v763, %v784
      %v786 = vlaneseq
      %v787 = vshrl.u32 %v786, 7
      %v788 = vsub.s32 1, %v787
      %v789 = vrot.slane %v763, %v788
      %v792 = vmul.f32 %v765, %v785
      %v793 = vmul.f32 %v766, %v789
      %v794 = vmul.f32 %v767, %v785
      %v795 = vmul.f32 %v768, %v789
      %v796 = vmul.f32 %v769, %v785
      %v797 = vmul.f32 %v770, %v789
      %v798 = vmul.f32 %v771, %v785
      %v799 = vmul.f32 %v772, %v789
      %v800 = vmul.f32 %v773, %v785
      %v801 = vmul.f32 %v774, %v789
      %v802 = vmul.f32 %v775, %v785
      %v803 = vmul.f32 %v776, %v789
      %v804 = vmul.f32 %v777, %v785
      %v805 = vmul.f32 %v778, %v789
      %v806 = vmul.f32 %v779, %v785
      %v807 = vmul.f32 %v780, %v789
      %v808 = vadd.f32 %v746, %v792
      %v809 = vadd.f32 %v747, %v793
      %v810 = vadd.f32 %v748, %v794
      %v811 = vadd.f32 %v749, %v795
      %v812 = vadd.f32 %v750, %v796
      %v813 = vadd.f32 %v751, %v797
      %v814 = vadd.f32 %v752, %v798
      %v815 = vadd.f32 %v753, %v799
      %v816 = vadd.f32 %v754, %v800
      %v817 = vadd.f32 %v755, %v801
      %v818 = vadd.f32 %v756, %v802
      %v819 = vadd.f32 %v757, %v803
      %v820 = vadd.f32 %v758, %v804
      %v821 = vadd.f32 %v759, %v805
      %v822 = vadd.f32 %v760, %v806
      %v823 = vadd.f32 %v761, %v807
      %s824 = scalar_lea.vmem %s138, 19
      %v825 = vld [vmem:[%s824] ss:$8 sm:$0x3]
      %s826 = scalar_lea.vmem %s1, 1408
      %v827 = vld [vmem:[%s826] sm:$0xff]
      %v828 = vld [vmem:[%s826 + $0x8] sm:$0xff]
      %v829 = vld [vmem:[%s826 + $0x10] sm:$0xff]
      %v830 = vld [vmem:[%s826 + $0x18] sm:$0xff]
      %v831 = vld [vmem:[%s826 + $0x20] sm:$0xff]
      %v832 = vld [vmem:[%s826 + $0x28] sm:$0xff]
      %v833 = vld [vmem:[%s826 + $0x30] sm:$0xff]
      %v834 = vld [vmem:[%s826 + $0x38] sm:$0xff]
      %v835 = vld [vmem:[%s826 + $0x40] sm:$0xff]
      %v836 = vld [vmem:[%s826 + $0x48] sm:$0xff]
      %v837 = vld [vmem:[%s826 + $0x50] sm:$0xff]
      %v838 = vld [vmem:[%s826 + $0x58] sm:$0xff]
      %v839 = vld [vmem:[%s826 + $0x60] sm:$0xff]
      %v840 = vld [vmem:[%s826 + $0x68] sm:$0xff]
      %v841 = vld [vmem:[%s826 + $0x70] sm:$0xff]
      %v842 = vld [vmem:[%s826 + $0x78] sm:$0xff]
      %v844 = vlaneseq
      %v845 = vshrl.u32 %v844, 7
      %v846 = vsub.s32 0, %v845
      %v847 = vrot.slane %v825, %v846
      %v848 = vlaneseq
      %v849 = vshrl.u32 %v848, 7
      %v850 = vsub.s32 1, %v849
      %v851 = vrot.slane %v825, %v850
      %v854 = vmul.f32 %v827, %v847
      %v855 = vmul.f32 %v828, %v851
      %v856 = vmul.f32 %v829, %v847
      %v857 = vmul.f32 %v830, %v851
      %v858 = vmul.f32 %v831, %v847
      %v859 = vmul.f32 %v832, %v851
      %v860 = vmul.f32 %v833, %v847
      %v861 = vmul.f32 %v834, %v851
      %v862 = vmul.f32 %v835, %v847
      %v863 = vmul.f32 %v836, %v851
      %v864 = vmul.f32 %v837, %v847
      %v865 = vmul.f32 %v838, %v851
      %v866 = vmul.f32 %v839, %v847
      %v867 = vmul.f32 %v840, %v851
      %v868 = vmul.f32 %v841, %v847
      %v869 = vmul.f32 %v842, %v851
      %v870 = vadd.f32 %v808, %v854
      %v871 = vadd.f32 %v809, %v855
      %v872 = vadd.f32 %v810, %v856
      %v873 = vadd.f32 %v811, %v857
      %v874 = vadd.f32 %v812, %v858
      %v875 = vadd.f32 %v813, %v859
      %v876 = vadd.f32 %v814, %v860
      %v877 = vadd.f32 %v815, %v861
      %v878 = vadd.f32 %v816, %v862
      %v879 = vadd.f32 %v817, %v863
      %v880 = vadd.f32 %v818, %v864
      %v881 = vadd.f32 %v819, %v865
      %v882 = vadd.f32 %v820, %v866
      %v883 = vadd.f32 %v821, %v867
      %v884 = vadd.f32 %v822, %v868
      %v885 = vadd.f32 %v823, %v869
      %s886 = scalar_lea.vmem %s138, 20
      %v887 = vld [vmem:[%s886] ss:$8 sm:$0x3]
      %s888 = scalar_lea.vmem %s1, 1536
      %v889 = vld [vmem:[%s888] sm:$0xff]
      %v890 = vld [vmem:[%s888 + $0x8] sm:$0xff]
      %v891 = vld [vmem:[%s888 + $0x10] sm:$0xff]
      %v892 = vld [vmem:[%s888 + $0x18] sm:$0xff]
      %v893 = vld [vmem:[%s888 + $0x20] sm:$0xff]
      %v894 = vld [vmem:[%s888 + $0x28] sm:$0xff]
      %v895 = vld [vmem:[%s888 + $0x30] sm:$0xff]
      %v896 = vld [vmem:[%s888 + $0x38] sm:$0xff]
      %v897 = vld [vmem:[%s888 + $0x40] sm:$0xff]
      %v898 = vld [vmem:[%s888 + $0x48] sm:$0xff]
      %v899 = vld [vmem:[%s888 + $0x50] sm:$0xff]
      %v900 = vld [vmem:[%s888 + $0x58] sm:$0xff]
      %v901 = vld [vmem:[%s888 + $0x60] sm:$0xff]
      %v902 = vld [vmem:[%s888 + $0x68] sm:$0xff]
      %v903 = vld [vmem:[%s888 + $0x70] sm:$0xff]
      %v904 = vld [vmem:[%s888 + $0x78] sm:$0xff]
      %v906 = vlaneseq
      %v907 = vshrl.u32 %v906, 7
      %v908 = vsub.s32 0, %v907
      %v909 = vrot.slane %v887, %v908
      %v910 = vlaneseq
      %v911 = vshrl.u32 %v910, 7
      %v912 = vsub.s32 1, %v911
      %v913 = vrot.slane %v887, %v912
      %v916 = vmul.f32 %v889, %v909
      %v917 = vmul.f32 %v890, %v913
      %v918 = vmul.f32 %v891, %v909
      %v919 = vmul.f32 %v892, %v913
      %v920 = vmul.f32 %v893, %v909
      %v921 = vmul.f32 %v894, %v913
      %v922 = vmul.f32 %v895, %v909
      %v923 = vmul.f32 %v896, %v913
      %v924 = vmul.f32 %v897, %v909
      %v925 = vmul.f32 %v898, %v913
      %v926 = vmul.f32 %v899, %v909
      %v927 = vmul.f32 %v900, %v913
      %v928 = vmul.f32 %v901, %v909
      %v929 = vmul.f32 %v902, %v913
      %v930 = vmul.f32 %v903, %v909
      %v931 = vmul.f32 %v904, %v913
      %v932 = vadd.f32 %v870, %v916
      %v933 = vadd.f32 %v871, %v917
      %v934 = vadd.f32 %v872, %v918
      %v935 = vadd.f32 %v873, %v919
      %v936 = vadd.f32 %v874, %v920
      %v937 = vadd.f32 %v875, %v921
      %v938 = vadd.f32 %v876, %v922
      %v939 = vadd.f32 %v877, %v923
      %v940 = vadd.f32 %v878, %v924
      %v941 = vadd.f32 %v879, %v925
      %v942 = vadd.f32 %v880, %v926
      %v943 = vadd.f32 %v881, %v927
      %v944 = vadd.f32 %v882, %v928
      %v945 = vadd.f32 %v883, %v929
      %v946 = vadd.f32 %v884, %v930
      %v947 = vadd.f32 %v885, %v931
      %s948 = scalar_lea.vmem %s138, 21
      %v949 = vld [vmem:[%s948] ss:$8 sm:$0x3]
      %s950 = scalar_lea.vmem %s1, 1664
      %v951 = vld [vmem:[%s950] sm:$0xff]
      %v952 = vld [vmem:[%s950 + $0x8] sm:$0xff]
      %v953 = vld [vmem:[%s950 + $0x10] sm:$0xff]
      %v954 = vld [vmem:[%s950 + $0x18] sm:$0xff]
      %v955 = vld [vmem:[%s950 + $0x20] sm:$0xff]
      %v956 = vld [vmem:[%s950 + $0x28] sm:$0xff]
      %v957 = vld [vmem:[%s950 + $0x30] sm:$0xff]
      %v958 = vld [vmem:[%s950 + $0x38] sm:$0xff]
      %v959 = vld [vmem:[%s950 + $0x40] sm:$0xff]
      %v960 = vld [vmem:[%s950 + $0x48] sm:$0xff]
      %v961 = vld [vmem:[%s950 + $0x50] sm:$0xff]
      %v962 = vld [vmem:[%s950 + $0x58] sm:$0xff]
      %v963 = vld [vmem:[%s950 + $0x60] sm:$0xff]
      %v964 = vld [vmem:[%s950 + $0x68] sm:$0xff]
      %v965 = vld [vmem:[%s950 + $0x70] sm:$0xff]
      %v966 = vld [vmem:[%s950 + $0x78] sm:$0xff]
      %v968 = vlaneseq
      %v969 = vshrl.u32 %v968, 7
      %v970 = vsub.s32 0, %v969
      %v971 = vrot.slane %v949, %v970
      %v972 = vlaneseq
      %v973 = vshrl.u32 %v972, 7
      %v974 = vsub.s32 1, %v973
      %v975 = vrot.slane %v949, %v974
      %v978 = vmul.f32 %v951, %v971
      %v979 = vmul.f32 %v952, %v975
      %v980 = vmul.f32 %v953, %v971
      %v981 = vmul.f32 %v954, %v975
      %v982 = vmul.f32 %v955, %v971
      %v983 = vmul.f32 %v956, %v975
      %v984 = vmul.f32 %v957, %v971
      %v985 = vmul.f32 %v958, %v975
      %v986 = vmul.f32 %v959, %v971
      %v987 = vmul.f32 %v960, %v975
      %v988 = vmul.f32 %v961, %v971
      %v989 = vmul.f32 %v962, %v975
      %v990 = vmul.f32 %v963, %v971
      %v991 = vmul.f32 %v964, %v975
      %v992 = vmul.f32 %v965, %v971
      %v993 = vmul.f32 %v966, %v975
      %v994 = vadd.f32 %v932, %v978
      %v995 = vadd.f32 %v933, %v979
      %v996 = vadd.f32 %v934, %v980
      %v997 = vadd.f32 %v935, %v981
      %v998 = vadd.f32 %v936, %v982
      %v999 = vadd.f32 %v937, %v983
      %v1000 = vadd.f32 %v938, %v984
      %v1001 = vadd.f32 %v939, %v985
      %v1002 = vadd.f32 %v940, %v986
      %v1003 = vadd.f32 %v941, %v987
      %v1004 = vadd.f32 %v942, %v988
      %v1005 = vadd.f32 %v943, %v989
      %v1006 = vadd.f32 %v944, %v990
      %v1007 = vadd.f32 %v945, %v991
      %v1008 = vadd.f32 %v946, %v992
      %v1009 = vadd.f32 %v947, %v993
      %s1010 = scalar_lea.vmem %s138, 22
      %v1011 = vld [vmem:[%s1010] ss:$8 sm:$0x3]
      %s1012 = scalar_lea.vmem %s1, 1792
      %v1013 = vld [vmem:[%s1012] sm:$0xff]
      %v1014 = vld [vmem:[%s1012 + $0x8] sm:$0xff]
      %v1015 = vld [vmem:[%s1012 + $0x10] sm:$0xff]
      %v1016 = vld [vmem:[%s1012 + $0x18] sm:$0xff]
      %v1017 = vld [vmem:[%s1012 + $0x20] sm:$0xff]
      %v1018 = vld [vmem:[%s1012 + $0x28] sm:$0xff]
      %v1019 = vld [vmem:[%s1012 + $0x30] sm:$0xff]
      %v1020 = vld [vmem:[%s1012 + $0x38] sm:$0xff]
      %v1021 = vld [vmem:[%s1012 + $0x40] sm:$0xff]
      %v1022 = vld [vmem:[%s1012 + $0x48] sm:$0xff]
      %v1023 = vld [vmem:[%s1012 + $0x50] sm:$0xff]
      %v1024 = vld [vmem:[%s1012 + $0x58] sm:$0xff]
      %v1025 = vld [vmem:[%s1012 + $0x60] sm:$0xff]
      %v1026 = vld [vmem:[%s1012 + $0x68] sm:$0xff]
      %v1027 = vld [vmem:[%s1012 + $0x70] sm:$0xff]
      %v1028 = vld [vmem:[%s1012 + $0x78] sm:$0xff]
      %v1030 = vlaneseq
      %v1031 = vshrl.u32 %v1030, 7
      %v1032 = vsub.s32 0, %v1031
      %v1033 = vrot.slane %v1011, %v1032
      %v1034 = vlaneseq
      %v1035 = vshrl.u32 %v1034, 7
      %v1036 = vsub.s32 1, %v1035
      %v1037 = vrot.slane %v1011, %v1036
      %v1040 = vmul.f32 %v1013, %v1033
      %v1041 = vmul.f32 %v1014, %v1037
      %v1042 = vmul.f32 %v1015, %v1033
      %v1043 = vmul.f32 %v1016, %v1037
      %v1044 = vmul.f32 %v1017, %v1033
      %v1045 = vmul.f32 %v1018, %v1037
      %v1046 = vmul.f32 %v1019, %v1033
      %v1047 = vmul.f32 %v1020, %v1037
      %v1048 = vmul.f32 %v1021, %v1033
      %v1049 = vmul.f32 %v1022, %v1037
      %v1050 = vmul.f32 %v1023, %v1033
      %v1051 = vmul.f32 %v1024, %v1037
      %v1052 = vmul.f32 %v1025, %v1033
      %v1053 = vmul.f32 %v1026, %v1037
      %v1054 = vmul.f32 %v1027, %v1033
      %v1055 = vmul.f32 %v1028, %v1037
      %v1056 = vadd.f32 %v994, %v1040
      %v1057 = vadd.f32 %v995, %v1041
      %v1058 = vadd.f32 %v996, %v1042
      %v1059 = vadd.f32 %v997, %v1043
      %v1060 = vadd.f32 %v998, %v1044
      %v1061 = vadd.f32 %v999, %v1045
      %v1062 = vadd.f32 %v1000, %v1046
      %v1063 = vadd.f32 %v1001, %v1047
      %v1064 = vadd.f32 %v1002, %v1048
      %v1065 = vadd.f32 %v1003, %v1049
      %v1066 = vadd.f32 %v1004, %v1050
      %v1067 = vadd.f32 %v1005, %v1051
      %v1068 = vadd.f32 %v1006, %v1052
      %v1069 = vadd.f32 %v1007, %v1053
      %v1070 = vadd.f32 %v1008, %v1054
      %v1071 = vadd.f32 %v1009, %v1055
      %s1072 = scalar_lea.vmem %s138, 23
      %v1073 = vld [vmem:[%s1072] ss:$8 sm:$0x3]
      %s1074 = scalar_lea.vmem %s1, 1920
      %v1075 = vld [vmem:[%s1074] sm:$0xff]
      %v1076 = vld [vmem:[%s1074 + $0x8] sm:$0xff]
      %v1077 = vld [vmem:[%s1074 + $0x10] sm:$0xff]
      %v1078 = vld [vmem:[%s1074 + $0x18] sm:$0xff]
      %v1079 = vld [vmem:[%s1074 + $0x20] sm:$0xff]
      %v1080 = vld [vmem:[%s1074 + $0x28] sm:$0xff]
      %v1081 = vld [vmem:[%s1074 + $0x30] sm:$0xff]
      %v1082 = vld [vmem:[%s1074 + $0x38] sm:$0xff]
      %v1083 = vld [vmem:[%s1074 + $0x40] sm:$0xff]
      %v1084 = vld [vmem:[%s1074 + $0x48] sm:$0xff]
      %v1085 = vld [vmem:[%s1074 + $0x50] sm:$0xff]
      %v1086 = vld [vmem:[%s1074 + $0x58] sm:$0xff]
      %v1087 = vld [vmem:[%s1074 + $0x60] sm:$0xff]
      %v1088 = vld [vmem:[%s1074 + $0x68] sm:$0xff]
      %v1089 = vld [vmem:[%s1074 + $0x70] sm:$0xff]
      %v1090 = vld [vmem:[%s1074 + $0x78] sm:$0xff]
      %v1092 = vlaneseq
      %v1093 = vshrl.u32 %v1092, 7
      %v1094 = vsub.s32 0, %v1093
      %v1095 = vrot.slane %v1073, %v1094
      %v1096 = vlaneseq
      %v1097 = vshrl.u32 %v1096, 7
      %v1098 = vsub.s32 1, %v1097
      %v1099 = vrot.slane %v1073, %v1098
      %v1102 = vmul.f32 %v1075, %v1095
      %v1103 = vmul.f32 %v1076, %v1099
      %v1104 = vmul.f32 %v1077, %v1095
      %v1105 = vmul.f32 %v1078, %v1099
      %v1106 = vmul.f32 %v1079, %v1095
      %v1107 = vmul.f32 %v1080, %v1099
      %v1108 = vmul.f32 %v1081, %v1095
      %v1109 = vmul.f32 %v1082, %v1099
      %v1110 = vmul.f32 %v1083, %v1095
      %v1111 = vmul.f32 %v1084, %v1099
      %v1112 = vmul.f32 %v1085, %v1095
      %v1113 = vmul.f32 %v1086, %v1099
      %v1114 = vmul.f32 %v1087, %v1095
      %v1115 = vmul.f32 %v1088, %v1099
      %v1116 = vmul.f32 %v1089, %v1095
      %v1117 = vmul.f32 %v1090, %v1099
      %v1118 = vadd.f32 %v1056, %v1102
      %v1119 = vadd.f32 %v1057, %v1103
      %v1120 = vadd.f32 %v1058, %v1104
      %v1121 = vadd.f32 %v1059, %v1105
      %v1122 = vadd.f32 %v1060, %v1106
      %v1123 = vadd.f32 %v1061, %v1107
      %v1124 = vadd.f32 %v1062, %v1108
      %v1125 = vadd.f32 %v1063, %v1109
      %v1126 = vadd.f32 %v1064, %v1110
      %v1127 = vadd.f32 %v1065, %v1111
      %v1128 = vadd.f32 %v1066, %v1112
      %v1129 = vadd.f32 %v1067, %v1113
      %v1130 = vadd.f32 %v1068, %v1114
      %v1131 = vadd.f32 %v1069, %v1115
      %v1132 = vadd.f32 %v1070, %v1116
      %v1133 = vadd.f32 %v1071, %v1117
      %s1134 = scalar_lea.vmem %s138, 32
      %v1135 = vld [vmem:[%s1134] ss:$8 sm:$0x3]
      %s1136 = scalar_lea.vmem %s1, 2048
      %v1137 = vld [vmem:[%s1136] sm:$0xff]
      %v1138 = vld [vmem:[%s1136 + $0x8] sm:$0xff]
      %v1139 = vld [vmem:[%s1136 + $0x10] sm:$0xff]
      %v1140 = vld [vmem:[%s1136 + $0x18] sm:$0xff]
      %v1141 = vld [vmem:[%s1136 + $0x20] sm:$0xff]
      %v1142 = vld [vmem:[%s1136 + $0x28] sm:$0xff]
      %v1143 = vld [vmem:[%s1136 + $0x30] sm:$0xff]
      %v1144 = vld [vmem:[%s1136 + $0x38] sm:$0xff]
      %v1145 = vld [vmem:[%s1136 + $0x40] sm:$0xff]
      %v1146 = vld [vmem:[%s1136 + $0x48] sm:$0xff]
      %v1147 = vld [vmem:[%s1136 + $0x50] sm:$0xff]
      %v1148 = vld [vmem:[%s1136 + $0x58] sm:$0xff]
      %v1149 = vld [vmem:[%s1136 + $0x60] sm:$0xff]
      %v1150 = vld [vmem:[%s1136 + $0x68] sm:$0xff]
      %v1151 = vld [vmem:[%s1136 + $0x70] sm:$0xff]
      %v1152 = vld [vmem:[%s1136 + $0x78] sm:$0xff]
      %v1154 = vlaneseq
      %v1155 = vshrl.u32 %v1154, 7
      %v1156 = vsub.s32 0, %v1155
      %v1157 = vrot.slane %v1135, %v1156
      %v1158 = vlaneseq
      %v1159 = vshrl.u32 %v1158, 7
      %v1160 = vsub.s32 1, %v1159
      %v1161 = vrot.slane %v1135, %v1160
      %v1164 = vmul.f32 %v1137, %v1157
      %v1165 = vmul.f32 %v1138, %v1161
      %v1166 = vmul.f32 %v1139, %v1157
      %v1167 = vmul.f32 %v1140, %v1161
      %v1168 = vmul.f32 %v1141, %v1157
      %v1169 = vmul.f32 %v1142, %v1161
      %v1170 = vmul.f32 %v1143, %v1157
      %v1171 = vmul.f32 %v1144, %v1161
      %v1172 = vmul.f32 %v1145, %v1157
      %v1173 = vmul.f32 %v1146, %v1161
      %v1174 = vmul.f32 %v1147, %v1157
      %v1175 = vmul.f32 %v1148, %v1161
      %v1176 = vmul.f32 %v1149, %v1157
      %v1177 = vmul.f32 %v1150, %v1161
      %v1178 = vmul.f32 %v1151, %v1157
      %v1179 = vmul.f32 %v1152, %v1161
      %v1180 = vadd.f32 %v1118, %v1164
      %v1181 = vadd.f32 %v1119, %v1165
      %v1182 = vadd.f32 %v1120, %v1166
      %v1183 = vadd.f32 %v1121, %v1167
      %v1184 = vadd.f32 %v1122, %v1168
      %v1185 = vadd.f32 %v1123, %v1169
      %v1186 = vadd.f32 %v1124, %v1170
      %v1187 = vadd.f32 %v1125, %v1171
      %v1188 = vadd.f32 %v1126, %v1172
      %v1189 = vadd.f32 %v1127, %v1173
      %v1190 = vadd.f32 %v1128, %v1174
      %v1191 = vadd.f32 %v1129, %v1175
      %v1192 = vadd.f32 %v1130, %v1176
      %v1193 = vadd.f32 %v1131, %v1177
      %v1194 = vadd.f32 %v1132, %v1178
      %v1195 = vadd.f32 %v1133, %v1179
      %s1196 = scalar_lea.vmem %s138, 33
      %v1197 = vld [vmem:[%s1196] ss:$8 sm:$0x3]
      %s1198 = scalar_lea.vmem %s1, 2176
      %v1199 = vld [vmem:[%s1198] sm:$0xff]
      %v1200 = vld [vmem:[%s1198 + $0x8] sm:$0xff]
      %v1201 = vld [vmem:[%s1198 + $0x10] sm:$0xff]
      %v1202 = vld [vmem:[%s1198 + $0x18] sm:$0xff]
      %v1203 = vld [vmem:[%s1198 + $0x20] sm:$0xff]
      %v1204 = vld [vmem:[%s1198 + $0x28] sm:$0xff]
      %v1205 = vld [vmem:[%s1198 + $0x30] sm:$0xff]
      %v1206 = vld [vmem:[%s1198 + $0x38] sm:$0xff]
      %v1207 = vld [vmem:[%s1198 + $0x40] sm:$0xff]
      %v1208 = vld [vmem:[%s1198 + $0x48] sm:$0xff]
      %v1209 = vld [vmem:[%s1198 + $0x50] sm:$0xff]
      %v1210 = vld [vmem:[%s1198 + $0x58] sm:$0xff]
      %v1211 = vld [vmem:[%s1198 + $0x60] sm:$0xff]
      %v1212 = vld [vmem:[%s1198 + $0x68] sm:$0xff]
      %v1213 = vld [vmem:[%s1198 + $0x70] sm:$0xff]
      %v1214 = vld [vmem:[%s1198 + $0x78] sm:$0xff]
      %v1216 = vlaneseq
      %v1217 = vshrl.u32 %v1216, 7
      %v1218 = vsub.s32 0, %v1217
      %v1219 = vrot.slane %v1197, %v1218
      %v1220 = vlaneseq
      %v1221 = vshrl.u32 %v1220, 7
      %v1222 = vsub.s32 1, %v1221
      %v1223 = vrot.slane %v1197, %v1222
      %v1226 = vmul.f32 %v1199, %v1219
      %v1227 = vmul.f32 %v1200, %v1223
      %v1228 = vmul.f32 %v1201, %v1219
      %v1229 = vmul.f32 %v1202, %v1223
      %v1230 = vmul.f32 %v1203, %v1219
      %v1231 = vmul.f32 %v1204, %v1223
      %v1232 = vmul.f32 %v1205, %v1219
      %v1233 = vmul.f32 %v1206, %v1223
      %v1234 = vmul.f32 %v1207, %v1219
      %v1235 = vmul.f32 %v1208, %v1223
      %v1236 = vmul.f32 %v1209, %v1219
      %v1237 = vmul.f32 %v1210, %v1223
      %v1238 = vmul.f32 %v1211, %v1219
      %v1239 = vmul.f32 %v1212, %v1223
      %v1240 = vmul.f32 %v1213, %v1219
      %v1241 = vmul.f32 %v1214, %v1223
      %v1242 = vadd.f32 %v1180, %v1226
      %v1243 = vadd.f32 %v1181, %v1227
      %v1244 = vadd.f32 %v1182, %v1228
      %v1245 = vadd.f32 %v1183, %v1229
      %v1246 = vadd.f32 %v1184, %v1230
      %v1247 = vadd.f32 %v1185, %v1231
      %v1248 = vadd.f32 %v1186, %v1232
      %v1249 = vadd.f32 %v1187, %v1233
      %v1250 = vadd.f32 %v1188, %v1234
      %v1251 = vadd.f32 %v1189, %v1235
      %v1252 = vadd.f32 %v1190, %v1236
      %v1253 = vadd.f32 %v1191, %v1237
      %v1254 = vadd.f32 %v1192, %v1238
      %v1255 = vadd.f32 %v1193, %v1239
      %v1256 = vadd.f32 %v1194, %v1240
      %v1257 = vadd.f32 %v1195, %v1241
      %s1258 = scalar_lea.vmem %s138, 34
      %v1259 = vld [vmem:[%s1258] ss:$8 sm:$0x3]
      %s1260 = scalar_lea.vmem %s1, 2304
      %v1261 = vld [vmem:[%s1260] sm:$0xff]
      %v1262 = vld [vmem:[%s1260 + $0x8] sm:$0xff]
      %v1263 = vld [vmem:[%s1260 + $0x10] sm:$0xff]
      %v1264 = vld [vmem:[%s1260 + $0x18] sm:$0xff]
      %v1265 = vld [vmem:[%s1260 + $0x20] sm:$0xff]
      %v1266 = vld [vmem:[%s1260 + $0x28] sm:$0xff]
      %v1267 = vld [vmem:[%s1260 + $0x30] sm:$0xff]
      %v1268 = vld [vmem:[%s1260 + $0x38] sm:$0xff]
      %v1269 = vld [vmem:[%s1260 + $0x40] sm:$0xff]
      %v1270 = vld [vmem:[%s1260 + $0x48] sm:$0xff]
      %v1271 = vld [vmem:[%s1260 + $0x50] sm:$0xff]
      %v1272 = vld [vmem:[%s1260 + $0x58] sm:$0xff]
      %v1273 = vld [vmem:[%s1260 + $0x60] sm:$0xff]
      %v1274 = vld [vmem:[%s1260 + $0x68] sm:$0xff]
      %v1275 = vld [vmem:[%s1260 + $0x70] sm:$0xff]
      %v1276 = vld [vmem:[%s1260 + $0x78] sm:$0xff]
      %v1278 = vlaneseq
      %v1279 = vshrl.u32 %v1278, 7
      %v1280 = vsub.s32 0, %v1279
      %v1281 = vrot.slane %v1259, %v1280
      %v1282 = vlaneseq
      %v1283 = vshrl.u32 %v1282, 7
      %v1284 = vsub.s32 1, %v1283
      %v1285 = vrot.slane %v1259, %v1284
      %v1288 = vmul.f32 %v1261, %v1281
      %v1289 = vmul.f32 %v1262, %v1285
      %v1290 = vmul.f32 %v1263, %v1281
      %v1291 = vmul.f32 %v1264, %v1285
      %v1292 = vmul.f32 %v1265, %v1281
      %v1293 = vmul.f32 %v1266, %v1285
      %v1294 = vmul.f32 %v1267, %v1281
      %v1295 = vmul.f32 %v1268, %v1285
      %v1296 = vmul.f32 %v1269, %v1281
      %v1297 = vmul.f32 %v1270, %v1285
      %v1298 = vmul.f32 %v1271, %v1281
      %v1299 = vmul.f32 %v1272, %v1285
      %v1300 = vmul.f32 %v1273, %v1281
      %v1301 = vmul.f32 %v1274, %v1285
      %v1302 = vmul.f32 %v1275, %v1281
      %v1303 = vmul.f32 %v1276, %v1285
      %v1304 = vadd.f32 %v1242, %v1288
      %v1305 = vadd.f32 %v1243, %v1289
      %v1306 = vadd.f32 %v1244, %v1290
      %v1307 = vadd.f32 %v1245, %v1291
      %v1308 = vadd.f32 %v1246, %v1292
      %v1309 = vadd.f32 %v1247, %v1293
      %v1310 = vadd.f32 %v1248, %v1294
      %v1311 = vadd.f32 %v1249, %v1295
      %v1312 = vadd.f32 %v1250, %v1296
      %v1313 = vadd.f32 %v1251, %v1297
      %v1314 = vadd.f32 %v1252, %v1298
      %v1315 = vadd.f32 %v1253, %v1299
      %v1316 = vadd.f32 %v1254, %v1300
      %v1317 = vadd.f32 %v1255, %v1301
      %v1318 = vadd.f32 %v1256, %v1302
      %v1319 = vadd.f32 %v1257, %v1303
      %s1320 = scalar_lea.vmem %s138, 35
      %v1321 = vld [vmem:[%s1320] ss:$8 sm:$0x3]
      %s1322 = scalar_lea.vmem %s1, 2432
      %v1323 = vld [vmem:[%s1322] sm:$0xff]
      %v1324 = vld [vmem:[%s1322 + $0x8] sm:$0xff]
      %v1325 = vld [vmem:[%s1322 + $0x10] sm:$0xff]
      %v1326 = vld [vmem:[%s1322 + $0x18] sm:$0xff]
      %v1327 = vld [vmem:[%s1322 + $0x20] sm:$0xff]
      %v1328 = vld [vmem:[%s1322 + $0x28] sm:$0xff]
      %v1329 = vld [vmem:[%s1322 + $0x30] sm:$0xff]
      %v1330 = vld [vmem:[%s1322 + $0x38] sm:$0xff]
      %v1331 = vld [vmem:[%s1322 + $0x40] sm:$0xff]
      %v1332 = vld [vmem:[%s1322 + $0x48] sm:$0xff]
      %v1333 = vld [vmem:[%s1322 + $0x50] sm:$0xff]
      %v1334 = vld [vmem:[%s1322 + $0x58] sm:$0xff]
      %v1335 = vld [vmem:[%s1322 + $0x60] sm:$0xff]
      %v1336 = vld [vmem:[%s1322 + $0x68] sm:$0xff]
      %v1337 = vld [vmem:[%s1322 + $0x70] sm:$0xff]
      %v1338 = vld [vmem:[%s1322 + $0x78] sm:$0xff]
      %v1340 = vlaneseq
      %v1341 = vshrl.u32 %v1340, 7
      %v1342 = vsub.s32 0, %v1341
      %v1343 = vrot.slane %v1321, %v1342
      %v1344 = vlaneseq
      %v1345 = vshrl.u32 %v1344, 7
      %v1346 = vsub.s32 1, %v1345
      %v1347 = vrot.slane %v1321, %v1346
      %v1350 = vmul.f32 %v1323, %v1343
      %v1351 = vmul.f32 %v1324, %v1347
      %v1352 = vmul.f32 %v1325, %v1343
      %v1353 = vmul.f32 %v1326, %v1347
      %v1354 = vmul.f32 %v1327, %v1343
      %v1355 = vmul.f32 %v1328, %v1347
      %v1356 = vmul.f32 %v1329, %v1343
      %v1357 = vmul.f32 %v1330, %v1347
      %v1358 = vmul.f32 %v1331, %v1343
      %v1359 = vmul.f32 %v1332, %v1347
      %v1360 = vmul.f32 %v1333, %v1343
      %v1361 = vmul.f32 %v1334, %v1347
      %v1362 = vmul.f32 %v1335, %v1343
      %v1363 = vmul.f32 %v1336, %v1347
      %v1364 = vmul.f32 %v1337, %v1343
      %v1365 = vmul.f32 %v1338, %v1347
      %v1366 = vadd.f32 %v1304, %v1350
      %v1367 = vadd.f32 %v1305, %v1351
      %v1368 = vadd.f32 %v1306, %v1352
      %v1369 = vadd.f32 %v1307, %v1353
      %v1370 = vadd.f32 %v1308, %v1354
      %v1371 = vadd.f32 %v1309, %v1355
      %v1372 = vadd.f32 %v1310, %v1356
      %v1373 = vadd.f32 %v1311, %v1357
      %v1374 = vadd.f32 %v1312, %v1358
      %v1375 = vadd.f32 %v1313, %v1359
      %v1376 = vadd.f32 %v1314, %v1360
      %v1377 = vadd.f32 %v1315, %v1361
      %v1378 = vadd.f32 %v1316, %v1362
      %v1379 = vadd.f32 %v1317, %v1363
      %v1380 = vadd.f32 %v1318, %v1364
      %v1381 = vadd.f32 %v1319, %v1365
      %s1382 = scalar_lea.vmem %s138, 36
      %v1383 = vld [vmem:[%s1382] ss:$8 sm:$0x3]
      %s1384 = scalar_lea.vmem %s1, 2560
      %v1385 = vld [vmem:[%s1384] sm:$0xff]
      %v1386 = vld [vmem:[%s1384 + $0x8] sm:$0xff]
      %v1387 = vld [vmem:[%s1384 + $0x10] sm:$0xff]
      %v1388 = vld [vmem:[%s1384 + $0x18] sm:$0xff]
      %v1389 = vld [vmem:[%s1384 + $0x20] sm:$0xff]
      %v1390 = vld [vmem:[%s1384 + $0x28] sm:$0xff]
      %v1391 = vld [vmem:[%s1384 + $0x30] sm:$0xff]
      %v1392 = vld [vmem:[%s1384 + $0x38] sm:$0xff]
      %v1393 = vld [vmem:[%s1384 + $0x40] sm:$0xff]
      %v1394 = vld [vmem:[%s1384 + $0x48] sm:$0xff]
      %v1395 = vld [vmem:[%s1384 + $0x50] sm:$0xff]
      %v1396 = vld [vmem:[%s1384 + $0x58] sm:$0xff]
      %v1397 = vld [vmem:[%s1384 + $0x60] sm:$0xff]
      %v1398 = vld [vmem:[%s1384 + $0x68] sm:$0xff]
      %v1399 = vld [vmem:[%s1384 + $0x70] sm:$0xff]
      %v1400 = vld [vmem:[%s1384 + $0x78] sm:$0xff]
      %v1402 = vlaneseq
      %v1403 = vshrl.u32 %v1402, 7
      %v1404 = vsub.s32 0, %v1403
      %v1405 = vrot.slane %v1383, %v1404
      %v1406 = vlaneseq
      %v1407 = vshrl.u32 %v1406, 7
      %v1408 = vsub.s32 1, %v1407
      %v1409 = vrot.slane %v1383, %v1408
      %v1412 = vmul.f32 %v1385, %v1405
      %v1413 = vmul.f32 %v1386, %v1409
      %v1414 = vmul.f32 %v1387, %v1405
      %v1415 = vmul.f32 %v1388, %v1409
      %v1416 = vmul.f32 %v1389, %v1405
      %v1417 = vmul.f32 %v1390, %v1409
      %v1418 = vmul.f32 %v1391, %v1405
      %v1419 = vmul.f32 %v1392, %v1409
      %v1420 = vmul.f32 %v1393, %v1405
      %v1421 = vmul.f32 %v1394, %v1409
      %v1422 = vmul.f32 %v1395, %v1405
      %v1423 = vmul.f32 %v1396, %v1409
      %v1424 = vmul.f32 %v1397, %v1405
      %v1425 = vmul.f32 %v1398, %v1409
      %v1426 = vmul.f32 %v1399, %v1405
      %v1427 = vmul.f32 %v1400, %v1409
      %v1428 = vadd.f32 %v1366, %v1412
      %v1429 = vadd.f32 %v1367, %v1413
      %v1430 = vadd.f32 %v1368, %v1414
      %v1431 = vadd.f32 %v1369, %v1415
      %v1432 = vadd.f32 %v1370, %v1416
      %v1433 = vadd.f32 %v1371, %v1417
      %v1434 = vadd.f32 %v1372, %v1418
      %v1435 = vadd.f32 %v1373, %v1419
      %v1436 = vadd.f32 %v1374, %v1420
      %v1437 = vadd.f32 %v1375, %v1421
      %v1438 = vadd.f32 %v1376, %v1422
      %v1439 = vadd.f32 %v1377, %v1423
      %v1440 = vadd.f32 %v1378, %v1424
      %v1441 = vadd.f32 %v1379, %v1425
      %v1442 = vadd.f32 %v1380, %v1426
      %v1443 = vadd.f32 %v1381, %v1427
      %s1444 = scalar_lea.vmem %s138, 37
      %v1445 = vld [vmem:[%s1444] ss:$8 sm:$0x3]
      %s1446 = scalar_lea.vmem %s1, 2688
      %v1447 = vld [vmem:[%s1446] sm:$0xff]
      %v1448 = vld [vmem:[%s1446 + $0x8] sm:$0xff]
      %v1449 = vld [vmem:[%s1446 + $0x10] sm:$0xff]
      %v1450 = vld [vmem:[%s1446 + $0x18] sm:$0xff]
      %v1451 = vld [vmem:[%s1446 + $0x20] sm:$0xff]
      %v1452 = vld [vmem:[%s1446 + $0x28] sm:$0xff]
      %v1453 = vld [vmem:[%s1446 + $0x30] sm:$0xff]
      %v1454 = vld [vmem:[%s1446 + $0x38] sm:$0xff]
      %v1455 = vld [vmem:[%s1446 + $0x40] sm:$0xff]
      %v1456 = vld [vmem:[%s1446 + $0x48] sm:$0xff]
      %v1457 = vld [vmem:[%s1446 + $0x50] sm:$0xff]
      %v1458 = vld [vmem:[%s1446 + $0x58] sm:$0xff]
      %v1459 = vld [vmem:[%s1446 + $0x60] sm:$0xff]
      %v1460 = vld [vmem:[%s1446 + $0x68] sm:$0xff]
      %v1461 = vld [vmem:[%s1446 + $0x70] sm:$0xff]
      %v1462 = vld [vmem:[%s1446 + $0x78] sm:$0xff]
      %v1464 = vlaneseq
      %v1465 = vshrl.u32 %v1464, 7
      %v1466 = vsub.s32 0, %v1465
      %v1467 = vrot.slane %v1445, %v1466
      %v1468 = vlaneseq
      %v1469 = vshrl.u32 %v1468, 7
      %v1470 = vsub.s32 1, %v1469
      %v1471 = vrot.slane %v1445, %v1470
      %v1474 = vmul.f32 %v1447, %v1467
      %v1475 = vmul.f32 %v1448, %v1471
      %v1476 = vmul.f32 %v1449, %v1467
      %v1477 = vmul.f32 %v1450, %v1471
      %v1478 = vmul.f32 %v1451, %v1467
      %v1479 = vmul.f32 %v1452, %v1471
      %v1480 = vmul.f32 %v1453, %v1467
      %v1481 = vmul.f32 %v1454, %v1471
      %v1482 = vmul.f32 %v1455, %v1467
      %v1483 = vmul.f32 %v1456, %v1471
      %v1484 = vmul.f32 %v1457, %v1467
      %v1485 = vmul.f32 %v1458, %v1471
      %v1486 = vmul.f32 %v1459, %v1467
      %v1487 = vmul.f32 %v1460, %v1471
      %v1488 = vmul.f32 %v1461, %v1467
      %v1489 = vmul.f32 %v1462, %v1471
      %v1490 = vadd.f32 %v1428, %v1474
      %v1491 = vadd.f32 %v1429, %v1475
      %v1492 = vadd.f32 %v1430, %v1476
      %v1493 = vadd.f32 %v1431, %v1477
      %v1494 = vadd.f32 %v1432, %v1478
      %v1495 = vadd.f32 %v1433, %v1479
      %v1496 = vadd.f32 %v1434, %v1480
      %v1497 = vadd.f32 %v1435, %v1481
      %v1498 = vadd.f32 %v1436, %v1482
      %v1499 = vadd.f32 %v1437, %v1483
      %v1500 = vadd.f32 %v1438, %v1484
      %v1501 = vadd.f32 %v1439, %v1485
      %v1502 = vadd.f32 %v1440, %v1486
      %v1503 = vadd.f32 %v1441, %v1487
      %v1504 = vadd.f32 %v1442, %v1488
      %v1505 = vadd.f32 %v1443, %v1489
      %s1506 = scalar_lea.vmem %s138, 38
      %v1507 = vld [vmem:[%s1506] ss:$8 sm:$0x3]
      %s1508 = scalar_lea.vmem %s1, 2816
      %v1509 = vld [vmem:[%s1508] sm:$0xff]
      %v1510 = vld [vmem:[%s1508 + $0x8] sm:$0xff]
      %v1511 = vld [vmem:[%s1508 + $0x10] sm:$0xff]
      %v1512 = vld [vmem:[%s1508 + $0x18] sm:$0xff]
      %v1513 = vld [vmem:[%s1508 + $0x20] sm:$0xff]
      %v1514 = vld [vmem:[%s1508 + $0x28] sm:$0xff]
      %v1515 = vld [vmem:[%s1508 + $0x30] sm:$0xff]
      %v1516 = vld [vmem:[%s1508 + $0x38] sm:$0xff]
      %v1517 = vld [vmem:[%s1508 + $0x40] sm:$0xff]
      %v1518 = vld [vmem:[%s1508 + $0x48] sm:$0xff]
      %v1519 = vld [vmem:[%s1508 + $0x50] sm:$0xff]
      %v1520 = vld [vmem:[%s1508 + $0x58] sm:$0xff]
      %v1521 = vld [vmem:[%s1508 + $0x60] sm:$0xff]
      %v1522 = vld [vmem:[%s1508 + $0x68] sm:$0xff]
      %v1523 = vld [vmem:[%s1508 + $0x70] sm:$0xff]
      %v1524 = vld [vmem:[%s1508 + $0x78] sm:$0xff]
      %v1526 = vlaneseq
      %v1527 = vshrl.u32 %v1526, 7
      %v1528 = vsub.s32 0, %v1527
      %v1529 = vrot.slane %v1507, %v1528
      %v1530 = vlaneseq
      %v1531 = vshrl.u32 %v1530, 7
      %v1532 = vsub.s32 1, %v1531
      %v1533 = vrot.slane %v1507, %v1532
      %v1536 = vmul.f32 %v1509, %v1529
      %v1537 = vmul.f32 %v1510, %v1533
      %v1538 = vmul.f32 %v1511, %v1529
      %v1539 = vmul.f32 %v1512, %v1533
      %v1540 = vmul.f32 %v1513, %v1529
      %v1541 = vmul.f32 %v1514, %v1533
      %v1542 = vmul.f32 %v1515, %v1529
      %v1543 = vmul.f32 %v1516, %v1533
      %v1544 = vmul.f32 %v1517, %v1529
      %v1545 = vmul.f32 %v1518, %v1533
      %v1546 = vmul.f32 %v1519, %v1529
      %v1547 = vmul.f32 %v1520, %v1533
      %v1548 = vmul.f32 %v1521, %v1529
      %v1549 = vmul.f32 %v1522, %v1533
      %v1550 = vmul.f32 %v1523, %v1529
      %v1551 = vmul.f32 %v1524, %v1533
      %v1552 = vadd.f32 %v1490, %v1536
      %v1553 = vadd.f32 %v1491, %v1537
      %v1554 = vadd.f32 %v1492, %v1538
      %v1555 = vadd.f32 %v1493, %v1539
      %v1556 = vadd.f32 %v1494, %v1540
      %v1557 = vadd.f32 %v1495, %v1541
      %v1558 = vadd.f32 %v1496, %v1542
      %v1559 = vadd.f32 %v1497, %v1543
      %v1560 = vadd.f32 %v1498, %v1544
      %v1561 = vadd.f32 %v1499, %v1545
      %v1562 = vadd.f32 %v1500, %v1546
      %v1563 = vadd.f32 %v1501, %v1547
      %v1564 = vadd.f32 %v1502, %v1548
      %v1565 = vadd.f32 %v1503, %v1549
      %v1566 = vadd.f32 %v1504, %v1550
      %v1567 = vadd.f32 %v1505, %v1551
      %s1568 = scalar_lea.vmem %s138, 39
      %v1569 = vld [vmem:[%s1568] ss:$8 sm:$0x3]
      %s1570 = scalar_lea.vmem %s1, 2944
      %v1571 = vld [vmem:[%s1570] sm:$0xff]
      %v1572 = vld [vmem:[%s1570 + $0x8] sm:$0xff]
      %v1573 = vld [vmem:[%s1570 + $0x10] sm:$0xff]
      %v1574 = vld [vmem:[%s1570 + $0x18] sm:$0xff]
      %v1575 = vld [vmem:[%s1570 + $0x20] sm:$0xff]
      %v1576 = vld [vmem:[%s1570 + $0x28] sm:$0xff]
      %v1577 = vld [vmem:[%s1570 + $0x30] sm:$0xff]
      %v1578 = vld [vmem:[%s1570 + $0x38] sm:$0xff]
      %v1579 = vld [vmem:[%s1570 + $0x40] sm:$0xff]
      %v1580 = vld [vmem:[%s1570 + $0x48] sm:$0xff]
      %v1581 = vld [vmem:[%s1570 + $0x50] sm:$0xff]
      %v1582 = vld [vmem:[%s1570 + $0x58] sm:$0xff]
      %v1583 = vld [vmem:[%s1570 + $0x60] sm:$0xff]
      %v1584 = vld [vmem:[%s1570 + $0x68] sm:$0xff]
      %v1585 = vld [vmem:[%s1570 + $0x70] sm:$0xff]
      %v1586 = vld [vmem:[%s1570 + $0x78] sm:$0xff]
      %v1588 = vlaneseq
      %v1589 = vshrl.u32 %v1588, 7
      %v1590 = vsub.s32 0, %v1589
      %v1591 = vrot.slane %v1569, %v1590
      %v1592 = vlaneseq
      %v1593 = vshrl.u32 %v1592, 7
      %v1594 = vsub.s32 1, %v1593
      %v1595 = vrot.slane %v1569, %v1594
      %v1598 = vmul.f32 %v1571, %v1591
      %v1599 = vmul.f32 %v1572, %v1595
      %v1600 = vmul.f32 %v1573, %v1591
      %v1601 = vmul.f32 %v1574, %v1595
      %v1602 = vmul.f32 %v1575, %v1591
      %v1603 = vmul.f32 %v1576, %v1595
      %v1604 = vmul.f32 %v1577, %v1591
      %v1605 = vmul.f32 %v1578, %v1595
      %v1606 = vmul.f32 %v1579, %v1591
      %v1607 = vmul.f32 %v1580, %v1595
      %v1608 = vmul.f32 %v1581, %v1591
      %v1609 = vmul.f32 %v1582, %v1595
      %v1610 = vmul.f32 %v1583, %v1591
      %v1611 = vmul.f32 %v1584, %v1595
      %v1612 = vmul.f32 %v1585, %v1591
      %v1613 = vmul.f32 %v1586, %v1595
      %v1614 = vadd.f32 %v1552, %v1598
      %v1615 = vadd.f32 %v1553, %v1599
      %v1616 = vadd.f32 %v1554, %v1600
      %v1617 = vadd.f32 %v1555, %v1601
      %v1618 = vadd.f32 %v1556, %v1602
      %v1619 = vadd.f32 %v1557, %v1603
      %v1620 = vadd.f32 %v1558, %v1604
      %v1621 = vadd.f32 %v1559, %v1605
      %v1622 = vadd.f32 %v1560, %v1606
      %v1623 = vadd.f32 %v1561, %v1607
      %v1624 = vadd.f32 %v1562, %v1608
      %v1625 = vadd.f32 %v1563, %v1609
      %v1626 = vadd.f32 %v1564, %v1610
      %v1627 = vadd.f32 %v1565, %v1611
      %v1628 = vadd.f32 %v1566, %v1612
      %v1629 = vadd.f32 %v1567, %v1613
      %s1630 = scalar_lea.vmem %s138, 48
      %v1631 = vld [vmem:[%s1630] ss:$8 sm:$0x3]
      %s1632 = scalar_lea.vmem %s1, 3072
      %v1633 = vld [vmem:[%s1632] sm:$0xff]
      %v1634 = vld [vmem:[%s1632 + $0x8] sm:$0xff]
      %v1635 = vld [vmem:[%s1632 + $0x10] sm:$0xff]
      %v1636 = vld [vmem:[%s1632 + $0x18] sm:$0xff]
      %v1637 = vld [vmem:[%s1632 + $0x20] sm:$0xff]
      %v1638 = vld [vmem:[%s1632 + $0x28] sm:$0xff]
      %v1639 = vld [vmem:[%s1632 + $0x30] sm:$0xff]
      %v1640 = vld [vmem:[%s1632 + $0x38] sm:$0xff]
      %v1641 = vld [vmem:[%s1632 + $0x40] sm:$0xff]
      %v1642 = vld [vmem:[%s1632 + $0x48] sm:$0xff]
      %v1643 = vld [vmem:[%s1632 + $0x50] sm:$0xff]
      %v1644 = vld [vmem:[%s1632 + $0x58] sm:$0xff]
      %v1645 = vld [vmem:[%s1632 + $0x60] sm:$0xff]
      %v1646 = vld [vmem:[%s1632 + $0x68] sm:$0xff]
      %v1647 = vld [vmem:[%s1632 + $0x70] sm:$0xff]
      %v1648 = vld [vmem:[%s1632 + $0x78] sm:$0xff]
      %v1650 = vlaneseq
      %v1651 = vshrl.u32 %v1650, 7
      %v1652 = vsub.s32 0, %v1651
      %v1653 = vrot.slane %v1631, %v1652
      %v1654 = vlaneseq
      %v1655 = vshrl.u32 %v1654, 7
      %v1656 = vsub.s32 1, %v1655
      %v1657 = vrot.slane %v1631, %v1656
      %v1660 = vmul.f32 %v1633, %v1653
      %v1661 = vmul.f32 %v1634, %v1657
      %v1662 = vmul.f32 %v1635, %v1653
      %v1663 = vmul.f32 %v1636, %v1657
      %v1664 = vmul.f32 %v1637, %v1653
      %v1665 = vmul.f32 %v1638, %v1657
      %v1666 = vmul.f32 %v1639, %v1653
      %v1667 = vmul.f32 %v1640, %v1657
      %v1668 = vmul.f32 %v1641, %v1653
      %v1669 = vmul.f32 %v1642, %v1657
      %v1670 = vmul.f32 %v1643, %v1653
      %v1671 = vmul.f32 %v1644, %v1657
      %v1672 = vmul.f32 %v1645, %v1653
      %v1673 = vmul.f32 %v1646, %v1657
      %v1674 = vmul.f32 %v1647, %v1653
      %v1675 = vmul.f32 %v1648, %v1657
      %v1676 = vadd.f32 %v1614, %v1660
      %v1677 = vadd.f32 %v1615, %v1661
      %v1678 = vadd.f32 %v1616, %v1662
      %v1679 = vadd.f32 %v1617, %v1663
      %v1680 = vadd.f32 %v1618, %v1664
      %v1681 = vadd.f32 %v1619, %v1665
      %v1682 = vadd.f32 %v1620, %v1666
      %v1683 = vadd.f32 %v1621, %v1667
      %v1684 = vadd.f32 %v1622, %v1668
      %v1685 = vadd.f32 %v1623, %v1669
      %v1686 = vadd.f32 %v1624, %v1670
      %v1687 = vadd.f32 %v1625, %v1671
      %v1688 = vadd.f32 %v1626, %v1672
      %v1689 = vadd.f32 %v1627, %v1673
      %v1690 = vadd.f32 %v1628, %v1674
      %v1691 = vadd.f32 %v1629, %v1675
      %s1692 = scalar_lea.vmem %s138, 49
      %v1693 = vld [vmem:[%s1692] ss:$8 sm:$0x3]
      %s1694 = scalar_lea.vmem %s1, 3200
      %v1695 = vld [vmem:[%s1694] sm:$0xff]
      %v1696 = vld [vmem:[%s1694 + $0x8] sm:$0xff]
      %v1697 = vld [vmem:[%s1694 + $0x10] sm:$0xff]
      %v1698 = vld [vmem:[%s1694 + $0x18] sm:$0xff]
      %v1699 = vld [vmem:[%s1694 + $0x20] sm:$0xff]
      %v1700 = vld [vmem:[%s1694 + $0x28] sm:$0xff]
      %v1701 = vld [vmem:[%s1694 + $0x30] sm:$0xff]
      %v1702 = vld [vmem:[%s1694 + $0x38] sm:$0xff]
      %v1703 = vld [vmem:[%s1694 + $0x40] sm:$0xff]
      %v1704 = vld [vmem:[%s1694 + $0x48] sm:$0xff]
      %v1705 = vld [vmem:[%s1694 + $0x50] sm:$0xff]
      %v1706 = vld [vmem:[%s1694 + $0x58] sm:$0xff]
      %v1707 = vld [vmem:[%s1694 + $0x60] sm:$0xff]
      %v1708 = vld [vmem:[%s1694 + $0x68] sm:$0xff]
      %v1709 = vld [vmem:[%s1694 + $0x70] sm:$0xff]
      %v1710 = vld [vmem:[%s1694 + $0x78] sm:$0xff]
      %v1712 = vlaneseq
      %v1713 = vshrl.u32 %v1712, 7
      %v1714 = vsub.s32 0, %v1713
      %v1715 = vrot.slane %v1693, %v1714
      %v1716 = vlaneseq
      %v1717 = vshrl.u32 %v1716, 7
      %v1718 = vsub.s32 1, %v1717
      %v1719 = vrot.slane %v1693, %v1718
      %v1722 = vmul.f32 %v1695, %v1715
      %v1723 = vmul.f32 %v1696, %v1719
      %v1724 = vmul.f32 %v1697, %v1715
      %v1725 = vmul.f32 %v1698, %v1719
      %v1726 = vmul.f32 %v1699, %v1715
      %v1727 = vmul.f32 %v1700, %v1719
      %v1728 = vmul.f32 %v1701, %v1715
      %v1729 = vmul.f32 %v1702, %v1719
      %v1730 = vmul.f32 %v1703, %v1715
      %v1731 = vmul.f32 %v1704, %v1719
      %v1732 = vmul.f32 %v1705, %v1715
      %v1733 = vmul.f32 %v1706, %v1719
      %v1734 = vmul.f32 %v1707, %v1715
      %v1735 = vmul.f32 %v1708, %v1719
      %v1736 = vmul.f32 %v1709, %v1715
      %v1737 = vmul.f32 %v1710, %v1719
      %v1738 = vadd.f32 %v1676, %v1722
      %v1739 = vadd.f32 %v1677, %v1723
      %v1740 = vadd.f32 %v1678, %v1724
      %v1741 = vadd.f32 %v1679, %v1725
      %v1742 = vadd.f32 %v1680, %v1726
      %v1743 = vadd.f32 %v1681, %v1727
      %v1744 = vadd.f32 %v1682, %v1728
      %v1745 = vadd.f32 %v1683, %v1729
      %v1746 = vadd.f32 %v1684, %v1730
      %v1747 = vadd.f32 %v1685, %v1731
      %v1748 = vadd.f32 %v1686, %v1732
      %v1749 = vadd.f32 %v1687, %v1733
      %v1750 = vadd.f32 %v1688, %v1734
      %v1751 = vadd.f32 %v1689, %v1735
      %v1752 = vadd.f32 %v1690, %v1736
      %v1753 = vadd.f32 %v1691, %v1737
      %s1754 = scalar_lea.vmem %s138, 50
      %v1755 = vld [vmem:[%s1754] ss:$8 sm:$0x3]
      %s1756 = scalar_lea.vmem %s1, 3328
      %v1757 = vld [vmem:[%s1756] sm:$0xff]
      %v1758 = vld [vmem:[%s1756 + $0x8] sm:$0xff]
      %v1759 = vld [vmem:[%s1756 + $0x10] sm:$0xff]
      %v1760 = vld [vmem:[%s1756 + $0x18] sm:$0xff]
      %v1761 = vld [vmem:[%s1756 + $0x20] sm:$0xff]
      %v1762 = vld [vmem:[%s1756 + $0x28] sm:$0xff]
      %v1763 = vld [vmem:[%s1756 + $0x30] sm:$0xff]
      %v1764 = vld [vmem:[%s1756 + $0x38] sm:$0xff]
      %v1765 = vld [vmem:[%s1756 + $0x40] sm:$0xff]
      %v1766 = vld [vmem:[%s1756 + $0x48] sm:$0xff]
      %v1767 = vld [vmem:[%s1756 + $0x50] sm:$0xff]
      %v1768 = vld [vmem:[%s1756 + $0x58] sm:$0xff]
      %v1769 = vld [vmem:[%s1756 + $0x60] sm:$0xff]
      %v1770 = vld [vmem:[%s1756 + $0x68] sm:$0xff]
      %v1771 = vld [vmem:[%s1756 + $0x70] sm:$0xff]
      %v1772 = vld [vmem:[%s1756 + $0x78] sm:$0xff]
      %v1774 = vlaneseq
      %v1775 = vshrl.u32 %v1774, 7
      %v1776 = vsub.s32 0, %v1775
      %v1777 = vrot.slane %v1755, %v1776
      %v1778 = vlaneseq
      %v1779 = vshrl.u32 %v1778, 7
      %v1780 = vsub.s32 1, %v1779
      %v1781 = vrot.slane %v1755, %v1780
      %v1784 = vmul.f32 %v1757, %v1777
      %v1785 = vmul.f32 %v1758, %v1781
      %v1786 = vmul.f32 %v1759, %v1777
      %v1787 = vmul.f32 %v1760, %v1781
      %v1788 = vmul.f32 %v1761, %v1777
      %v1789 = vmul.f32 %v1762, %v1781
      %v1790 = vmul.f32 %v1763, %v1777
      %v1791 = vmul.f32 %v1764, %v1781
      %v1792 = vmul.f32 %v1765, %v1777
      %v1793 = vmul.f32 %v1766, %v1781
      %v1794 = vmul.f32 %v1767, %v1777
      %v1795 = vmul.f32 %v1768, %v1781
      %v1796 = vmul.f32 %v1769, %v1777
      %v1797 = vmul.f32 %v1770, %v1781
      %v1798 = vmul.f32 %v1771, %v1777
      %v1799 = vmul.f32 %v1772, %v1781
      %v1800 = vadd.f32 %v1738, %v1784
      %v1801 = vadd.f32 %v1739, %v1785
      %v1802 = vadd.f32 %v1740, %v1786
      %v1803 = vadd.f32 %v1741, %v1787
      %v1804 = vadd.f32 %v1742, %v1788
      %v1805 = vadd.f32 %v1743, %v1789
      %v1806 = vadd.f32 %v1744, %v1790
      %v1807 = vadd.f32 %v1745, %v1791
      %v1808 = vadd.f32 %v1746, %v1792
      %v1809 = vadd.f32 %v1747, %v1793
      %v1810 = vadd.f32 %v1748, %v1794
      %v1811 = vadd.f32 %v1749, %v1795
      %v1812 = vadd.f32 %v1750, %v1796
      %v1813 = vadd.f32 %v1751, %v1797
      %v1814 = vadd.f32 %v1752, %v1798
      %v1815 = vadd.f32 %v1753, %v1799
      %s1816 = scalar_lea.vmem %s138, 51
      %v1817 = vld [vmem:[%s1816] ss:$8 sm:$0x3]
      %s1818 = scalar_lea.vmem %s1, 3456
      %v1819 = vld [vmem:[%s1818] sm:$0xff]
      %v1820 = vld [vmem:[%s1818 + $0x8] sm:$0xff]
      %v1821 = vld [vmem:[%s1818 + $0x10] sm:$0xff]
      %v1822 = vld [vmem:[%s1818 + $0x18] sm:$0xff]
      %v1823 = vld [vmem:[%s1818 + $0x20] sm:$0xff]
      %v1824 = vld [vmem:[%s1818 + $0x28] sm:$0xff]
      %v1825 = vld [vmem:[%s1818 + $0x30] sm:$0xff]
      %v1826 = vld [vmem:[%s1818 + $0x38] sm:$0xff]
      %v1827 = vld [vmem:[%s1818 + $0x40] sm:$0xff]
      %v1828 = vld [vmem:[%s1818 + $0x48] sm:$0xff]
      %v1829 = vld [vmem:[%s1818 + $0x50] sm:$0xff]
      %v1830 = vld [vmem:[%s1818 + $0x58] sm:$0xff]
      %v1831 = vld [vmem:[%s1818 + $0x60] sm:$0xff]
      %v1832 = vld [vmem:[%s1818 + $0x68] sm:$0xff]
      %v1833 = vld [vmem:[%s1818 + $0x70] sm:$0xff]
      %v1834 = vld [vmem:[%s1818 + $0x78] sm:$0xff]
      %v1836 = vlaneseq
      %v1837 = vshrl.u32 %v1836, 7
      %v1838 = vsub.s32 0, %v1837
      %v1839 = vrot.slane %v1817, %v1838
      %v1840 = vlaneseq
      %v1841 = vshrl.u32 %v1840, 7
      %v1842 = vsub.s32 1, %v1841
      %v1843 = vrot.slane %v1817, %v1842
      %v1846 = vmul.f32 %v1819, %v1839
      %v1847 = vmul.f32 %v1820, %v1843
      %v1848 = vmul.f32 %v1821, %v1839
      %v1849 = vmul.f32 %v1822, %v1843
      %v1850 = vmul.f32 %v1823, %v1839
      %v1851 = vmul.f32 %v1824, %v1843
      %v1852 = vmul.f32 %v1825, %v1839
      %v1853 = vmul.f32 %v1826, %v1843
      %v1854 = vmul.f32 %v1827, %v1839
      %v1855 = vmul.f32 %v1828, %v1843
      %v1856 = vmul.f32 %v1829, %v1839
      %v1857 = vmul.f32 %v1830, %v1843
      %v1858 = vmul.f32 %v1831, %v1839
      %v1859 = vmul.f32 %v1832, %v1843
      %v1860 = vmul.f32 %v1833, %v1839
      %v1861 = vmul.f32 %v1834, %v1843
      %v1862 = vadd.f32 %v1800, %v1846
      %v1863 = vadd.f32 %v1801, %v1847
      %v1864 = vadd.f32 %v1802, %v1848
      %v1865 = vadd.f32 %v1803, %v1849
      %v1866 = vadd.f32 %v1804, %v1850
      %v1867 = vadd.f32 %v1805, %v1851
      %v1868 = vadd.f32 %v1806, %v1852
      %v1869 = vadd.f32 %v1807, %v1853
      %v1870 = vadd.f32 %v1808, %v1854
      %v1871 = vadd.f32 %v1809, %v1855
      %v1872 = vadd.f32 %v1810, %v1856
      %v1873 = vadd.f32 %v1811, %v1857
      %v1874 = vadd.f32 %v1812, %v1858
      %v1875 = vadd.f32 %v1813, %v1859
      %v1876 = vadd.f32 %v1814, %v1860
      %v1877 = vadd.f32 %v1815, %v1861
      %s1878 = scalar_lea.vmem %s138, 52
      %v1879 = vld [vmem:[%s1878] ss:$8 sm:$0x3]
      %s1880 = scalar_lea.vmem %s1, 3584
      %v1881 = vld [vmem:[%s1880] sm:$0xff]
      %v1882 = vld [vmem:[%s1880 + $0x8] sm:$0xff]
      %v1883 = vld [vmem:[%s1880 + $0x10] sm:$0xff]
      %v1884 = vld [vmem:[%s1880 + $0x18] sm:$0xff]
      %v1885 = vld [vmem:[%s1880 + $0x20] sm:$0xff]
      %v1886 = vld [vmem:[%s1880 + $0x28] sm:$0xff]
      %v1887 = vld [vmem:[%s1880 + $0x30] sm:$0xff]
      %v1888 = vld [vmem:[%s1880 + $0x38] sm:$0xff]
      %v1889 = vld [vmem:[%s1880 + $0x40] sm:$0xff]
      %v1890 = vld [vmem:[%s1880 + $0x48] sm:$0xff]
      %v1891 = vld [vmem:[%s1880 + $0x50] sm:$0xff]
      %v1892 = vld [vmem:[%s1880 + $0x58] sm:$0xff]
      %v1893 = vld [vmem:[%s1880 + $0x60] sm:$0xff]
      %v1894 = vld [vmem:[%s1880 + $0x68] sm:$0xff]
      %v1895 = vld [vmem:[%s1880 + $0x70] sm:$0xff]
      %v1896 = vld [vmem:[%s1880 + $0x78] sm:$0xff]
      %v1898 = vlaneseq
      %v1899 = vshrl.u32 %v1898, 7
      %v1900 = vsub.s32 0, %v1899
      %v1901 = vrot.slane %v1879, %v1900
      %v1902 = vlaneseq
      %v1903 = vshrl.u32 %v1902, 7
      %v1904 = vsub.s32 1, %v1903
      %v1905 = vrot.slane %v1879, %v1904
      %v1908 = vmul.f32 %v1881, %v1901
      %v1909 = vmul.f32 %v1882, %v1905
      %v1910 = vmul.f32 %v1883, %v1901
      %v1911 = vmul.f32 %v1884, %v1905
      %v1912 = vmul.f32 %v1885, %v1901
      %v1913 = vmul.f32 %v1886, %v1905
      %v1914 = vmul.f32 %v1887, %v1901
      %v1915 = vmul.f32 %v1888, %v1905
      %v1916 = vmul.f32 %v1889, %v1901
      %v1917 = vmul.f32 %v1890, %v1905
      %v1918 = vmul.f32 %v1891, %v1901
      %v1919 = vmul.f32 %v1892, %v1905
      %v1920 = vmul.f32 %v1893, %v1901
      %v1921 = vmul.f32 %v1894, %v1905
      %v1922 = vmul.f32 %v1895, %v1901
      %v1923 = vmul.f32 %v1896, %v1905
      %v1924 = vadd.f32 %v1862, %v1908
      %v1925 = vadd.f32 %v1863, %v1909
      %v1926 = vadd.f32 %v1864, %v1910
      %v1927 = vadd.f32 %v1865, %v1911
      %v1928 = vadd.f32 %v1866, %v1912
      %v1929 = vadd.f32 %v1867, %v1913
      %v1930 = vadd.f32 %v1868, %v1914
      %v1931 = vadd.f32 %v1869, %v1915
      %v1932 = vadd.f32 %v1870, %v1916
      %v1933 = vadd.f32 %v1871, %v1917
      %v1934 = vadd.f32 %v1872, %v1918
      %v1935 = vadd.f32 %v1873, %v1919
      %v1936 = vadd.f32 %v1874, %v1920
      %v1937 = vadd.f32 %v1875, %v1921
      %v1938 = vadd.f32 %v1876, %v1922
      %v1939 = vadd.f32 %v1877, %v1923
      %s1940 = scalar_lea.vmem %s138, 53
      %v1941 = vld [vmem:[%s1940] ss:$8 sm:$0x3]
      %s1942 = scalar_lea.vmem %s1, 3712
      %v1943 = vld [vmem:[%s1942] sm:$0xff]
      %v1944 = vld [vmem:[%s1942 + $0x8] sm:$0xff]
      %v1945 = vld [vmem:[%s1942 + $0x10] sm:$0xff]
      %v1946 = vld [vmem:[%s1942 + $0x18] sm:$0xff]
      %v1947 = vld [vmem:[%s1942 + $0x20] sm:$0xff]
      %v1948 = vld [vmem:[%s1942 + $0x28] sm:$0xff]
      %v1949 = vld [vmem:[%s1942 + $0x30] sm:$0xff]
      %v1950 = vld [vmem:[%s1942 + $0x38] sm:$0xff]
      %v1951 = vld [vmem:[%s1942 + $0x40] sm:$0xff]
      %v1952 = vld [vmem:[%s1942 + $0x48] sm:$0xff]
      %v1953 = vld [vmem:[%s1942 + $0x50] sm:$0xff]
      %v1954 = vld [vmem:[%s1942 + $0x58] sm:$0xff]
      %v1955 = vld [vmem:[%s1942 + $0x60] sm:$0xff]
      %v1956 = vld [vmem:[%s1942 + $0x68] sm:$0xff]
      %v1957 = vld [vmem:[%s1942 + $0x70] sm:$0xff]
      %v1958 = vld [vmem:[%s1942 + $0x78] sm:$0xff]
      %v1960 = vlaneseq
      %v1961 = vshrl.u32 %v1960, 7
      %v1962 = vsub.s32 0, %v1961
      %v1963 = vrot.slane %v1941, %v1962
      %v1964 = vlaneseq
      %v1965 = vshrl.u32 %v1964, 7
      %v1966 = vsub.s32 1, %v1965
      %v1967 = vrot.slane %v1941, %v1966
      %v1970 = vmul.f32 %v1943, %v1963
      %v1971 = vmul.f32 %v1944, %v1967
      %v1972 = vmul.f32 %v1945, %v1963
      %v1973 = vmul.f32 %v1946, %v1967
      %v1974 = vmul.f32 %v1947, %v1963
      %v1975 = vmul.f32 %v1948, %v1967
      %v1976 = vmul.f32 %v1949, %v1963
      %v1977 = vmul.f32 %v1950, %v1967
      %v1978 = vmul.f32 %v1951, %v1963
      %v1979 = vmul.f32 %v1952, %v1967
      %v1980 = vmul.f32 %v1953, %v1963
      %v1981 = vmul.f32 %v1954, %v1967
      %v1982 = vmul.f32 %v1955, %v1963
      %v1983 = vmul.f32 %v1956, %v1967
      %v1984 = vmul.f32 %v1957, %v1963
      %v1985 = vmul.f32 %v1958, %v1967
      %v1986 = vadd.f32 %v1924, %v1970
      %v1987 = vadd.f32 %v1925, %v1971
      %v1988 = vadd.f32 %v1926, %v1972
      %v1989 = vadd.f32 %v1927, %v1973
      %v1990 = vadd.f32 %v1928, %v1974
      %v1991 = vadd.f32 %v1929, %v1975
      %v1992 = vadd.f32 %v1930, %v1976
      %v1993 = vadd.f32 %v1931, %v1977
      %v1994 = vadd.f32 %v1932, %v1978
      %v1995 = vadd.f32 %v1933, %v1979
      %v1996 = vadd.f32 %v1934, %v1980
      %v1997 = vadd.f32 %v1935, %v1981
      %v1998 = vadd.f32 %v1936, %v1982
      %v1999 = vadd.f32 %v1937, %v1983
      %v2000 = vadd.f32 %v1938, %v1984
      %v2001 = vadd.f32 %v1939, %v1985
      %s2002 = scalar_lea.vmem %s138, 54
      %v2003 = vld [vmem:[%s2002] ss:$8 sm:$0x3]
      %s2004 = scalar_lea.vmem %s1, 3840
      %v2005 = vld [vmem:[%s2004] sm:$0xff]
      %v2006 = vld [vmem:[%s2004 + $0x8] sm:$0xff]
      %v2007 = vld [vmem:[%s2004 + $0x10] sm:$0xff]
      %v2008 = vld [vmem:[%s2004 + $0x18] sm:$0xff]
      %v2009 = vld [vmem:[%s2004 + $0x20] sm:$0xff]
      %v2010 = vld [vmem:[%s2004 + $0x28] sm:$0xff]
      %v2011 = vld [vmem:[%s2004 + $0x30] sm:$0xff]
      %v2012 = vld [vmem:[%s2004 + $0x38] sm:$0xff]
      %v2013 = vld [vmem:[%s2004 + $0x40] sm:$0xff]
      %v2014 = vld [vmem:[%s2004 + $0x48] sm:$0xff]
      %v2015 = vld [vmem:[%s2004 + $0x50] sm:$0xff]
      %v2016 = vld [vmem:[%s2004 + $0x58] sm:$0xff]
      %v2017 = vld [vmem:[%s2004 + $0x60] sm:$0xff]
      %v2018 = vld [vmem:[%s2004 + $0x68] sm:$0xff]
      %v2019 = vld [vmem:[%s2004 + $0x70] sm:$0xff]
      %v2020 = vld [vmem:[%s2004 + $0x78] sm:$0xff]
      %v2022 = vlaneseq
      %v2023 = vshrl.u32 %v2022, 7
      %v2024 = vsub.s32 0, %v2023
      %v2025 = vrot.slane %v2003, %v2024
      %v2026 = vlaneseq
      %v2027 = vshrl.u32 %v2026, 7
      %v2028 = vsub.s32 1, %v2027
      %v2029 = vrot.slane %v2003, %v2028
      %v2032 = vmul.f32 %v2005, %v2025
      %v2033 = vmul.f32 %v2006, %v2029
      %v2034 = vmul.f32 %v2007, %v2025
      %v2035 = vmul.f32 %v2008, %v2029
      %v2036 = vmul.f32 %v2009, %v2025
      %v2037 = vmul.f32 %v2010, %v2029
      %v2038 = vmul.f32 %v2011, %v2025
      %v2039 = vmul.f32 %v2012, %v2029
      %v2040 = vmul.f32 %v2013, %v2025
      %v2041 = vmul.f32 %v2014, %v2029
      %v2042 = vmul.f32 %v2015, %v2025
      %v2043 = vmul.f32 %v2016, %v2029
      %v2044 = vmul.f32 %v2017, %v2025
      %v2045 = vmul.f32 %v2018, %v2029
      %v2046 = vmul.f32 %v2019, %v2025
      %v2047 = vmul.f32 %v2020, %v2029
      %v2048 = vadd.f32 %v1986, %v2032
      %v2049 = vadd.f32 %v1987, %v2033
      %v2050 = vadd.f32 %v1988, %v2034
      %v2051 = vadd.f32 %v1989, %v2035
      %v2052 = vadd.f32 %v1990, %v2036
      %v2053 = vadd.f32 %v1991, %v2037
      %v2054 = vadd.f32 %v1992, %v2038
      %v2055 = vadd.f32 %v1993, %v2039
      %v2056 = vadd.f32 %v1994, %v2040
      %v2057 = vadd.f32 %v1995, %v2041
      %v2058 = vadd.f32 %v1996, %v2042
      %v2059 = vadd.f32 %v1997, %v2043
      %v2060 = vadd.f32 %v1998, %v2044
      %v2061 = vadd.f32 %v1999, %v2045
      %v2062 = vadd.f32 %v2000, %v2046
      %v2063 = vadd.f32 %v2001, %v2047
      %s2064 = scalar_lea.vmem %s138, 55
      %v2065 = vld [vmem:[%s2064] ss:$8 sm:$0x3]
      %s2066 = scalar_lea.vmem %s1, 3968
      %v2067 = vld [vmem:[%s2066] sm:$0xff]
      %v2068 = vld [vmem:[%s2066 + $0x8] sm:$0xff]
      %v2069 = vld [vmem:[%s2066 + $0x10] sm:$0xff]
      %v2070 = vld [vmem:[%s2066 + $0x18] sm:$0xff]
      %v2071 = vld [vmem:[%s2066 + $0x20] sm:$0xff]
      %v2072 = vld [vmem:[%s2066 + $0x28] sm:$0xff]
      %v2073 = vld [vmem:[%s2066 + $0x30] sm:$0xff]
      %v2074 = vld [vmem:[%s2066 + $0x38] sm:$0xff]
      %v2075 = vld [vmem:[%s2066 + $0x40] sm:$0xff]
      %v2076 = vld [vmem:[%s2066 + $0x48] sm:$0xff]
      %v2077 = vld [vmem:[%s2066 + $0x50] sm:$0xff]
      %v2078 = vld [vmem:[%s2066 + $0x58] sm:$0xff]
      %v2079 = vld [vmem:[%s2066 + $0x60] sm:$0xff]
      %v2080 = vld [vmem:[%s2066 + $0x68] sm:$0xff]
      %v2081 = vld [vmem:[%s2066 + $0x70] sm:$0xff]
      %v2082 = vld [vmem:[%s2066 + $0x78] sm:$0xff]
      %v2084 = vlaneseq
      %v2085 = vshrl.u32 %v2084, 7
      %v2086 = vsub.s32 0, %v2085
      %v2087 = vrot.slane %v2065, %v2086
      %v2088 = vlaneseq
      %v2089 = vshrl.u32 %v2088, 7
      %v2090 = vsub.s32 1, %v2089
      %v2091 = vrot.slane %v2065, %v2090
      %v2094 = vmul.f32 %v2067, %v2087
      %v2095 = vmul.f32 %v2068, %v2091
      %v2096 = vmul.f32 %v2069, %v2087
      %v2097 = vmul.f32 %v2070, %v2091
      %v2098 = vmul.f32 %v2071, %v2087
      %v2099 = vmul.f32 %v2072, %v2091
      %v2100 = vmul.f32 %v2073, %v2087
      %v2101 = vmul.f32 %v2074, %v2091
      %v2102 = vmul.f32 %v2075, %v2087
      %v2103 = vmul.f32 %v2076, %v2091
      %v2104 = vmul.f32 %v2077, %v2087
      %v2105 = vmul.f32 %v2078, %v2091
      %v2106 = vmul.f32 %v2079, %v2087
      %v2107 = vmul.f32 %v2080, %v2091
      %v2108 = vmul.f32 %v2081, %v2087
      %v2109 = vmul.f32 %v2082, %v2091
      %v2110 = vadd.f32 %v2048, %v2094
      %v2111 = vadd.f32 %v2049, %v2095
      %v2112 = vadd.f32 %v2050, %v2096
      %v2113 = vadd.f32 %v2051, %v2097
      %v2114 = vadd.f32 %v2052, %v2098
      %v2115 = vadd.f32 %v2053, %v2099
      %v2116 = vadd.f32 %v2054, %v2100
      %v2117 = vadd.f32 %v2055, %v2101
      %v2118 = vadd.f32 %v2056, %v2102
      %v2119 = vadd.f32 %v2057, %v2103
      %v2120 = vadd.f32 %v2058, %v2104
      %v2121 = vadd.f32 %v2059, %v2105
      %v2122 = vadd.f32 %v2060, %v2106
      %v2123 = vadd.f32 %v2061, %v2107
      %v2124 = vadd.f32 %v2062, %v2108
      %v2125 = vadd.f32 %v2063, %v2109
      %s2126 = scalar_lea.vmem %s138, 64
      %v2127 = vld [vmem:[%s2126] ss:$8 sm:$0x3]
      %s2128 = scalar_lea.vmem %s1, 4096
      %v2129 = vld [vmem:[%s2128] sm:$0xff]
      %v2130 = vld [vmem:[%s2128 + $0x8] sm:$0xff]
      %v2131 = vld [vmem:[%s2128 + $0x10] sm:$0xff]
      %v2132 = vld [vmem:[%s2128 + $0x18] sm:$0xff]
      %v2133 = vld [vmem:[%s2128 + $0x20] sm:$0xff]
      %v2134 = vld [vmem:[%s2128 + $0x28] sm:$0xff]
      %v2135 = vld [vmem:[%s2128 + $0x30] sm:$0xff]
      %v2136 = vld [vmem:[%s2128 + $0x38] sm:$0xff]
      %v2137 = vld [vmem:[%s2128 + $0x40] sm:$0xff]
      %v2138 = vld [vmem:[%s2128 + $0x48] sm:$0xff]
      %v2139 = vld [vmem:[%s2128 + $0x50] sm:$0xff]
      %v2140 = vld [vmem:[%s2128 + $0x58] sm:$0xff]
      %v2141 = vld [vmem:[%s2128 + $0x60] sm:$0xff]
      %v2142 = vld [vmem:[%s2128 + $0x68] sm:$0xff]
      %v2143 = vld [vmem:[%s2128 + $0x70] sm:$0xff]
      %v2144 = vld [vmem:[%s2128 + $0x78] sm:$0xff]
      %v2146 = vlaneseq
      %v2147 = vshrl.u32 %v2146, 7
      %v2148 = vsub.s32 0, %v2147
      %v2149 = vrot.slane %v2127, %v2148
      %v2150 = vlaneseq
      %v2151 = vshrl.u32 %v2150, 7
      %v2152 = vsub.s32 1, %v2151
      %v2153 = vrot.slane %v2127, %v2152
      %v2156 = vmul.f32 %v2129, %v2149
      %v2157 = vmul.f32 %v2130, %v2153
      %v2158 = vmul.f32 %v2131, %v2149
      %v2159 = vmul.f32 %v2132, %v2153
      %v2160 = vmul.f32 %v2133, %v2149
      %v2161 = vmul.f32 %v2134, %v2153
      %v2162 = vmul.f32 %v2135, %v2149
      %v2163 = vmul.f32 %v2136, %v2153
      %v2164 = vmul.f32 %v2137, %v2149
      %v2165 = vmul.f32 %v2138, %v2153
      %v2166 = vmul.f32 %v2139, %v2149
      %v2167 = vmul.f32 %v2140, %v2153
      %v2168 = vmul.f32 %v2141, %v2149
      %v2169 = vmul.f32 %v2142, %v2153
      %v2170 = vmul.f32 %v2143, %v2149
      %v2171 = vmul.f32 %v2144, %v2153
      %v2172 = vadd.f32 %v2110, %v2156
      %v2173 = vadd.f32 %v2111, %v2157
      %v2174 = vadd.f32 %v2112, %v2158
      %v2175 = vadd.f32 %v2113, %v2159
      %v2176 = vadd.f32 %v2114, %v2160
      %v2177 = vadd.f32 %v2115, %v2161
      %v2178 = vadd.f32 %v2116, %v2162
      %v2179 = vadd.f32 %v2117, %v2163
      %v2180 = vadd.f32 %v2118, %v2164
      %v2181 = vadd.f32 %v2119, %v2165
      %v2182 = vadd.f32 %v2120, %v2166
      %v2183 = vadd.f32 %v2121, %v2167
      %v2184 = vadd.f32 %v2122, %v2168
      %v2185 = vadd.f32 %v2123, %v2169
      %v2186 = vadd.f32 %v2124, %v2170
      %v2187 = vadd.f32 %v2125, %v2171
      %s2188 = scalar_lea.vmem %s138, 65
      %v2189 = vld [vmem:[%s2188] ss:$8 sm:$0x3]
      %s2190 = scalar_lea.vmem %s1, 4224
      %v2191 = vld [vmem:[%s2190] sm:$0xff]
      %v2192 = vld [vmem:[%s2190 + $0x8] sm:$0xff]
      %v2193 = vld [vmem:[%s2190 + $0x10] sm:$0xff]
      %v2194 = vld [vmem:[%s2190 + $0x18] sm:$0xff]
      %v2195 = vld [vmem:[%s2190 + $0x20] sm:$0xff]
      %v2196 = vld [vmem:[%s2190 + $0x28] sm:$0xff]
      %v2197 = vld [vmem:[%s2190 + $0x30] sm:$0xff]
      %v2198 = vld [vmem:[%s2190 + $0x38] sm:$0xff]
      %v2199 = vld [vmem:[%s2190 + $0x40] sm:$0xff]
      %v2200 = vld [vmem:[%s2190 + $0x48] sm:$0xff]
      %v2201 = vld [vmem:[%s2190 + $0x50] sm:$0xff]
      %v2202 = vld [vmem:[%s2190 + $0x58] sm:$0xff]
      %v2203 = vld [vmem:[%s2190 + $0x60] sm:$0xff]
      %v2204 = vld [vmem:[%s2190 + $0x68] sm:$0xff]
      %v2205 = vld [vmem:[%s2190 + $0x70] sm:$0xff]
      %v2206 = vld [vmem:[%s2190 + $0x78] sm:$0xff]
      %v2208 = vlaneseq
      %v2209 = vshrl.u32 %v2208, 7
      %v2210 = vsub.s32 0, %v2209
      %v2211 = vrot.slane %v2189, %v2210
      %v2212 = vlaneseq
      %v2213 = vshrl.u32 %v2212, 7
      %v2214 = vsub.s32 1, %v2213
      %v2215 = vrot.slane %v2189, %v2214
      %v2218 = vmul.f32 %v2191, %v2211
      %v2219 = vmul.f32 %v2192, %v2215
      %v2220 = vmul.f32 %v2193, %v2211
      %v2221 = vmul.f32 %v2194, %v2215
      %v2222 = vmul.f32 %v2195, %v2211
      %v2223 = vmul.f32 %v2196, %v2215
      %v2224 = vmul.f32 %v2197, %v2211
      %v2225 = vmul.f32 %v2198, %v2215
      %v2226 = vmul.f32 %v2199, %v2211
      %v2227 = vmul.f32 %v2200, %v2215
      %v2228 = vmul.f32 %v2201, %v2211
      %v2229 = vmul.f32 %v2202, %v2215
      %v2230 = vmul.f32 %v2203, %v2211
      %v2231 = vmul.f32 %v2204, %v2215
      %v2232 = vmul.f32 %v2205, %v2211
      %v2233 = vmul.f32 %v2206, %v2215
      %v2234 = vadd.f32 %v2172, %v2218
      %v2235 = vadd.f32 %v2173, %v2219
      %v2236 = vadd.f32 %v2174, %v2220
      %v2237 = vadd.f32 %v2175, %v2221
      %v2238 = vadd.f32 %v2176, %v2222
      %v2239 = vadd.f32 %v2177, %v2223
      %v2240 = vadd.f32 %v2178, %v2224
      %v2241 = vadd.f32 %v2179, %v2225
      %v2242 = vadd.f32 %v2180, %v2226
      %v2243 = vadd.f32 %v2181, %v2227
      %v2244 = vadd.f32 %v2182, %v2228
      %v2245 = vadd.f32 %v2183, %v2229
      %v2246 = vadd.f32 %v2184, %v2230
      %v2247 = vadd.f32 %v2185, %v2231
      %v2248 = vadd.f32 %v2186, %v2232
      %v2249 = vadd.f32 %v2187, %v2233
      %s2250 = scalar_lea.vmem %s138, 66
      %v2251 = vld [vmem:[%s2250] ss:$8 sm:$0x3]
      %s2252 = scalar_lea.vmem %s1, 4352
      %v2253 = vld [vmem:[%s2252] sm:$0xff]
      %v2254 = vld [vmem:[%s2252 + $0x8] sm:$0xff]
      %v2255 = vld [vmem:[%s2252 + $0x10] sm:$0xff]
      %v2256 = vld [vmem:[%s2252 + $0x18] sm:$0xff]
      %v2257 = vld [vmem:[%s2252 + $0x20] sm:$0xff]
      %v2258 = vld [vmem:[%s2252 + $0x28] sm:$0xff]
      %v2259 = vld [vmem:[%s2252 + $0x30] sm:$0xff]
      %v2260 = vld [vmem:[%s2252 + $0x38] sm:$0xff]
      %v2261 = vld [vmem:[%s2252 + $0x40] sm:$0xff]
      %v2262 = vld [vmem:[%s2252 + $0x48] sm:$0xff]
      %v2263 = vld [vmem:[%s2252 + $0x50] sm:$0xff]
      %v2264 = vld [vmem:[%s2252 + $0x58] sm:$0xff]
      %v2265 = vld [vmem:[%s2252 + $0x60] sm:$0xff]
      %v2266 = vld [vmem:[%s2252 + $0x68] sm:$0xff]
      %v2267 = vld [vmem:[%s2252 + $0x70] sm:$0xff]
      %v2268 = vld [vmem:[%s2252 + $0x78] sm:$0xff]
      %v2270 = vlaneseq
      %v2271 = vshrl.u32 %v2270, 7
      %v2272 = vsub.s32 0, %v2271
      %v2273 = vrot.slane %v2251, %v2272
      %v2274 = vlaneseq
      %v2275 = vshrl.u32 %v2274, 7
      %v2276 = vsub.s32 1, %v2275
      %v2277 = vrot.slane %v2251, %v2276
      %v2280 = vmul.f32 %v2253, %v2273
      %v2281 = vmul.f32 %v2254, %v2277
      %v2282 = vmul.f32 %v2255, %v2273
      %v2283 = vmul.f32 %v2256, %v2277
      %v2284 = vmul.f32 %v2257, %v2273
      %v2285 = vmul.f32 %v2258, %v2277
      %v2286 = vmul.f32 %v2259, %v2273
      %v2287 = vmul.f32 %v2260, %v2277
      %v2288 = vmul.f32 %v2261, %v2273
      %v2289 = vmul.f32 %v2262, %v2277
      %v2290 = vmul.f32 %v2263, %v2273
      %v2291 = vmul.f32 %v2264, %v2277
      %v2292 = vmul.f32 %v2265, %v2273
      %v2293 = vmul.f32 %v2266, %v2277
      %v2294 = vmul.f32 %v2267, %v2273
      %v2295 = vmul.f32 %v2268, %v2277
      %v2296 = vadd.f32 %v2234, %v2280
      %v2297 = vadd.f32 %v2235, %v2281
      %v2298 = vadd.f32 %v2236, %v2282
      %v2299 = vadd.f32 %v2237, %v2283
      %v2300 = vadd.f32 %v2238, %v2284
      %v2301 = vadd.f32 %v2239, %v2285
      %v2302 = vadd.f32 %v2240, %v2286
      %v2303 = vadd.f32 %v2241, %v2287
      %v2304 = vadd.f32 %v2242, %v2288
      %v2305 = vadd.f32 %v2243, %v2289
      %v2306 = vadd.f32 %v2244, %v2290
      %v2307 = vadd.f32 %v2245, %v2291
      %v2308 = vadd.f32 %v2246, %v2292
      %v2309 = vadd.f32 %v2247, %v2293
      %v2310 = vadd.f32 %v2248, %v2294
      %v2311 = vadd.f32 %v2249, %v2295
      %s2312 = scalar_lea.vmem %s138, 67
      %v2313 = vld [vmem:[%s2312] ss:$8 sm:$0x3]
      %s2314 = scalar_lea.vmem %s1, 4480
      %v2315 = vld [vmem:[%s2314] sm:$0xff]
      %v2316 = vld [vmem:[%s2314 + $0x8] sm:$0xff]
      %v2317 = vld [vmem:[%s2314 + $0x10] sm:$0xff]
      %v2318 = vld [vmem:[%s2314 + $0x18] sm:$0xff]
      %v2319 = vld [vmem:[%s2314 + $0x20] sm:$0xff]
      %v2320 = vld [vmem:[%s2314 + $0x28] sm:$0xff]
      %v2321 = vld [vmem:[%s2314 + $0x30] sm:$0xff]
      %v2322 = vld [vmem:[%s2314 + $0x38] sm:$0xff]
      %v2323 = vld [vmem:[%s2314 + $0x40] sm:$0xff]
      %v2324 = vld [vmem:[%s2314 + $0x48] sm:$0xff]
      %v2325 = vld [vmem:[%s2314 + $0x50] sm:$0xff]
      %v2326 = vld [vmem:[%s2314 + $0x58] sm:$0xff]
      %v2327 = vld [vmem:[%s2314 + $0x60] sm:$0xff]
      %v2328 = vld [vmem:[%s2314 + $0x68] sm:$0xff]
      %v2329 = vld [vmem:[%s2314 + $0x70] sm:$0xff]
      %v2330 = vld [vmem:[%s2314 + $0x78] sm:$0xff]
      %v2332 = vlaneseq
      %v2333 = vshrl.u32 %v2332, 7
      %v2334 = vsub.s32 0, %v2333
      %v2335 = vrot.slane %v2313, %v2334
      %v2336 = vlaneseq
      %v2337 = vshrl.u32 %v2336, 7
      %v2338 = vsub.s32 1, %v2337
      %v2339 = vrot.slane %v2313, %v2338
      %v2342 = vmul.f32 %v2315, %v2335
      %v2343 = vmul.f32 %v2316, %v2339
      %v2344 = vmul.f32 %v2317, %v2335
      %v2345 = vmul.f32 %v2318, %v2339
      %v2346 = vmul.f32 %v2319, %v2335
      %v2347 = vmul.f32 %v2320, %v2339
      %v2348 = vmul.f32 %v2321, %v2335
      %v2349 = vmul.f32 %v2322, %v2339
      %v2350 = vmul.f32 %v2323, %v2335
      %v2351 = vmul.f32 %v2324, %v2339
      %v2352 = vmul.f32 %v2325, %v2335
      %v2353 = vmul.f32 %v2326, %v2339
      %v2354 = vmul.f32 %v2327, %v2335
      %v2355 = vmul.f32 %v2328, %v2339
      %v2356 = vmul.f32 %v2329, %v2335
      %v2357 = vmul.f32 %v2330, %v2339
      %v2358 = vadd.f32 %v2296, %v2342
      %v2359 = vadd.f32 %v2297, %v2343
      %v2360 = vadd.f32 %v2298, %v2344
      %v2361 = vadd.f32 %v2299, %v2345
      %v2362 = vadd.f32 %v2300, %v2346
      %v2363 = vadd.f32 %v2301, %v2347
      %v2364 = vadd.f32 %v2302, %v2348
      %v2365 = vadd.f32 %v2303, %v2349
      %v2366 = vadd.f32 %v2304, %v2350
      %v2367 = vadd.f32 %v2305, %v2351
      %v2368 = vadd.f32 %v2306, %v2352
      %v2369 = vadd.f32 %v2307, %v2353
      %v2370 = vadd.f32 %v2308, %v2354
      %v2371 = vadd.f32 %v2309, %v2355
      %v2372 = vadd.f32 %v2310, %v2356
      %v2373 = vadd.f32 %v2311, %v2357
      %s2374 = scalar_lea.vmem %s138, 68
      %v2375 = vld [vmem:[%s2374] ss:$8 sm:$0x3]
      %s2376 = scalar_lea.vmem %s1, 4608
      %v2377 = vld [vmem:[%s2376] sm:$0xff]
      %v2378 = vld [vmem:[%s2376 + $0x8] sm:$0xff]
      %v2379 = vld [vmem:[%s2376 + $0x10] sm:$0xff]
      %v2380 = vld [vmem:[%s2376 + $0x18] sm:$0xff]
      %v2381 = vld [vmem:[%s2376 + $0x20] sm:$0xff]
      %v2382 = vld [vmem:[%s2376 + $0x28] sm:$0xff]
      %v2383 = vld [vmem:[%s2376 + $0x30] sm:$0xff]
      %v2384 = vld [vmem:[%s2376 + $0x38] sm:$0xff]
      %v2385 = vld [vmem:[%s2376 + $0x40] sm:$0xff]
      %v2386 = vld [vmem:[%s2376 + $0x48] sm:$0xff]
      %v2387 = vld [vmem:[%s2376 + $0x50] sm:$0xff]
      %v2388 = vld [vmem:[%s2376 + $0x58] sm:$0xff]
      %v2389 = vld [vmem:[%s2376 + $0x60] sm:$0xff]
      %v2390 = vld [vmem:[%s2376 + $0x68] sm:$0xff]
      %v2391 = vld [vmem:[%s2376 + $0x70] sm:$0xff]
      %v2392 = vld [vmem:[%s2376 + $0x78] sm:$0xff]
      %v2394 = vlaneseq
      %v2395 = vshrl.u32 %v2394, 7
      %v2396 = vsub.s32 0, %v2395
      %v2397 = vrot.slane %v2375, %v2396
      %v2398 = vlaneseq
      %v2399 = vshrl.u32 %v2398, 7
      %v2400 = vsub.s32 1, %v2399
      %v2401 = vrot.slane %v2375, %v2400
      %v2404 = vmul.f32 %v2377, %v2397
      %v2405 = vmul.f32 %v2378, %v2401
      %v2406 = vmul.f32 %v2379, %v2397
      %v2407 = vmul.f32 %v2380, %v2401
      %v2408 = vmul.f32 %v2381, %v2397
      %v2409 = vmul.f32 %v2382, %v2401
      %v2410 = vmul.f32 %v2383, %v2397
      %v2411 = vmul.f32 %v2384, %v2401
      %v2412 = vmul.f32 %v2385, %v2397
      %v2413 = vmul.f32 %v2386, %v2401
      %v2414 = vmul.f32 %v2387, %v2397
      %v2415 = vmul.f32 %v2388, %v2401
      %v2416 = vmul.f32 %v2389, %v2397
      %v2417 = vmul.f32 %v2390, %v2401
      %v2418 = vmul.f32 %v2391, %v2397
      %v2419 = vmul.f32 %v2392, %v2401
      %v2420 = vadd.f32 %v2358, %v2404
      %v2421 = vadd.f32 %v2359, %v2405
      %v2422 = vadd.f32 %v2360, %v2406
      %v2423 = vadd.f32 %v2361, %v2407
      %v2424 = vadd.f32 %v2362, %v2408
      %v2425 = vadd.f32 %v2363, %v2409
      %v2426 = vadd.f32 %v2364, %v2410
      %v2427 = vadd.f32 %v2365, %v2411
      %v2428 = vadd.f32 %v2366, %v2412
      %v2429 = vadd.f32 %v2367, %v2413
      %v2430 = vadd.f32 %v2368, %v2414
      %v2431 = vadd.f32 %v2369, %v2415
      %v2432 = vadd.f32 %v2370, %v2416
      %v2433 = vadd.f32 %v2371, %v2417
      %v2434 = vadd.f32 %v2372, %v2418
      %v2435 = vadd.f32 %v2373, %v2419
      %s2436 = scalar_lea.vmem %s138, 69
      %v2437 = vld [vmem:[%s2436] ss:$8 sm:$0x3]
      %s2438 = scalar_lea.vmem %s1, 4736
      %v2439 = vld [vmem:[%s2438] sm:$0xff]
      %v2440 = vld [vmem:[%s2438 + $0x8] sm:$0xff]
      %v2441 = vld [vmem:[%s2438 + $0x10] sm:$0xff]
      %v2442 = vld [vmem:[%s2438 + $0x18] sm:$0xff]
      %v2443 = vld [vmem:[%s2438 + $0x20] sm:$0xff]
      %v2444 = vld [vmem:[%s2438 + $0x28] sm:$0xff]
      %v2445 = vld [vmem:[%s2438 + $0x30] sm:$0xff]
      %v2446 = vld [vmem:[%s2438 + $0x38] sm:$0xff]
      %v2447 = vld [vmem:[%s2438 + $0x40] sm:$0xff]
      %v2448 = vld [vmem:[%s2438 + $0x48] sm:$0xff]
      %v2449 = vld [vmem:[%s2438 + $0x50] sm:$0xff]
      %v2450 = vld [vmem:[%s2438 + $0x58] sm:$0xff]
      %v2451 = vld [vmem:[%s2438 + $0x60] sm:$0xff]
      %v2452 = vld [vmem:[%s2438 + $0x68] sm:$0xff]
      %v2453 = vld [vmem:[%s2438 + $0x70] sm:$0xff]
      %v2454 = vld [vmem:[%s2438 + $0x78] sm:$0xff]
      %v2456 = vlaneseq
      %v2457 = vshrl.u32 %v2456, 7
      %v2458 = vsub.s32 0, %v2457
      %v2459 = vrot.slane %v2437, %v2458
      %v2460 = vlaneseq
      %v2461 = vshrl.u32 %v2460, 7
      %v2462 = vsub.s32 1, %v2461
      %v2463 = vrot.slane %v2437, %v2462
      %v2466 = vmul.f32 %v2439, %v2459
      %v2467 = vmul.f32 %v2440, %v2463
      %v2468 = vmul.f32 %v2441, %v2459
      %v2469 = vmul.f32 %v2442, %v2463
      %v2470 = vmul.f32 %v2443, %v2459
      %v2471 = vmul.f32 %v2444, %v2463
      %v2472 = vmul.f32 %v2445, %v2459
      %v2473 = vmul.f32 %v2446, %v2463
      %v2474 = vmul.f32 %v2447, %v2459
      %v2475 = vmul.f32 %v2448, %v2463
      %v2476 = vmul.f32 %v2449, %v2459
      %v2477 = vmul.f32 %v2450, %v2463
      %v2478 = vmul.f32 %v2451, %v2459
      %v2479 = vmul.f32 %v2452, %v2463
      %v2480 = vmul.f32 %v2453, %v2459
      %v2481 = vmul.f32 %v2454, %v2463
      %v2482 = vadd.f32 %v2420, %v2466
      %v2483 = vadd.f32 %v2421, %v2467
      %v2484 = vadd.f32 %v2422, %v2468
      %v2485 = vadd.f32 %v2423, %v2469
      %v2486 = vadd.f32 %v2424, %v2470
      %v2487 = vadd.f32 %v2425, %v2471
      %v2488 = vadd.f32 %v2426, %v2472
      %v2489 = vadd.f32 %v2427, %v2473
      %v2490 = vadd.f32 %v2428, %v2474
      %v2491 = vadd.f32 %v2429, %v2475
      %v2492 = vadd.f32 %v2430, %v2476
      %v2493 = vadd.f32 %v2431, %v2477
      %v2494 = vadd.f32 %v2432, %v2478
      %v2495 = vadd.f32 %v2433, %v2479
      %v2496 = vadd.f32 %v2434, %v2480
      %v2497 = vadd.f32 %v2435, %v2481
      %s2498 = scalar_lea.vmem %s138, 70
      %v2499 = vld [vmem:[%s2498] ss:$8 sm:$0x3]
      %s2500 = scalar_lea.vmem %s1, 4864
      %v2501 = vld [vmem:[%s2500] sm:$0xff]
      %v2502 = vld [vmem:[%s2500 + $0x8] sm:$0xff]
      %v2503 = vld [vmem:[%s2500 + $0x10] sm:$0xff]
      %v2504 = vld [vmem:[%s2500 + $0x18] sm:$0xff]
      %v2505 = vld [vmem:[%s2500 + $0x20] sm:$0xff]
      %v2506 = vld [vmem:[%s2500 + $0x28] sm:$0xff]
      %v2507 = vld [vmem:[%s2500 + $0x30] sm:$0xff]
      %v2508 = vld [vmem:[%s2500 + $0x38] sm:$0xff]
      %v2509 = vld [vmem:[%s2500 + $0x40] sm:$0xff]
      %v2510 = vld [vmem:[%s2500 + $0x48] sm:$0xff]
      %v2511 = vld [vmem:[%s2500 + $0x50] sm:$0xff]
      %v2512 = vld [vmem:[%s2500 + $0x58] sm:$0xff]
      %v2513 = vld [vmem:[%s2500 + $0x60] sm:$0xff]
      %v2514 = vld [vmem:[%s2500 + $0x68] sm:$0xff]
      %v2515 = vld [vmem:[%s2500 + $0x70] sm:$0xff]
      %v2516 = vld [vmem:[%s2500 + $0x78] sm:$0xff]
      %v2518 = vlaneseq
      %v2519 = vshrl.u32 %v2518, 7
      %v2520 = vsub.s32 0, %v2519
      %v2521 = vrot.slane %v2499, %v2520
      %v2522 = vlaneseq
      %v2523 = vshrl.u32 %v2522, 7
      %v2524 = vsub.s32 1, %v2523
      %v2525 = vrot.slane %v2499, %v2524
      %v2528 = vmul.f32 %v2501, %v2521
      %v2529 = vmul.f32 %v2502, %v2525
      %v2530 = vmul.f32 %v2503, %v2521
      %v2531 = vmul.f32 %v2504, %v2525
      %v2532 = vmul.f32 %v2505, %v2521
      %v2533 = vmul.f32 %v2506, %v2525
      %v2534 = vmul.f32 %v2507, %v2521
      %v2535 = vmul.f32 %v2508, %v2525
      %v2536 = vmul.f32 %v2509, %v2521
      %v2537 = vmul.f32 %v2510, %v2525
      %v2538 = vmul.f32 %v2511, %v2521
      %v2539 = vmul.f32 %v2512, %v2525
      %v2540 = vmul.f32 %v2513, %v2521
      %v2541 = vmul.f32 %v2514, %v2525
      %v2542 = vmul.f32 %v2515, %v2521
      %v2543 = vmul.f32 %v2516, %v2525
      %v2544 = vadd.f32 %v2482, %v2528
      %v2545 = vadd.f32 %v2483, %v2529
      %v2546 = vadd.f32 %v2484, %v2530
      %v2547 = vadd.f32 %v2485, %v2531
      %v2548 = vadd.f32 %v2486, %v2532
      %v2549 = vadd.f32 %v2487, %v2533
      %v2550 = vadd.f32 %v2488, %v2534
      %v2551 = vadd.f32 %v2489, %v2535
      %v2552 = vadd.f32 %v2490, %v2536
      %v2553 = vadd.f32 %v2491, %v2537
      %v2554 = vadd.f32 %v2492, %v2538
      %v2555 = vadd.f32 %v2493, %v2539
      %v2556 = vadd.f32 %v2494, %v2540
      %v2557 = vadd.f32 %v2495, %v2541
      %v2558 = vadd.f32 %v2496, %v2542
      %v2559 = vadd.f32 %v2497, %v2543
      %s2560 = scalar_lea.vmem %s138, 71
      %v2561 = vld [vmem:[%s2560] ss:$8 sm:$0x3]
      %s2562 = scalar_lea.vmem %s1, 4992
      %v2563 = vld [vmem:[%s2562] sm:$0xff]
      %v2564 = vld [vmem:[%s2562 + $0x8] sm:$0xff]
      %v2565 = vld [vmem:[%s2562 + $0x10] sm:$0xff]
      %v2566 = vld [vmem:[%s2562 + $0x18] sm:$0xff]
      %v2567 = vld [vmem:[%s2562 + $0x20] sm:$0xff]
      %v2568 = vld [vmem:[%s2562 + $0x28] sm:$0xff]
      %v2569 = vld [vmem:[%s2562 + $0x30] sm:$0xff]
      %v2570 = vld [vmem:[%s2562 + $0x38] sm:$0xff]
      %v2571 = vld [vmem:[%s2562 + $0x40] sm:$0xff]
      %v2572 = vld [vmem:[%s2562 + $0x48] sm:$0xff]
      %v2573 = vld [vmem:[%s2562 + $0x50] sm:$0xff]
      %v2574 = vld [vmem:[%s2562 + $0x58] sm:$0xff]
      %v2575 = vld [vmem:[%s2562 + $0x60] sm:$0xff]
      %v2576 = vld [vmem:[%s2562 + $0x68] sm:$0xff]
      %v2577 = vld [vmem:[%s2562 + $0x70] sm:$0xff]
      %v2578 = vld [vmem:[%s2562 + $0x78] sm:$0xff]
      %v2580 = vlaneseq
      %v2581 = vshrl.u32 %v2580, 7
      %v2582 = vsub.s32 0, %v2581
      %v2583 = vrot.slane %v2561, %v2582
      %v2584 = vlaneseq
      %v2585 = vshrl.u32 %v2584, 7
      %v2586 = vsub.s32 1, %v2585
      %v2587 = vrot.slane %v2561, %v2586
      %v2590 = vmul.f32 %v2563, %v2583
      %v2591 = vmul.f32 %v2564, %v2587
      %v2592 = vmul.f32 %v2565, %v2583
      %v2593 = vmul.f32 %v2566, %v2587
      %v2594 = vmul.f32 %v2567, %v2583
      %v2595 = vmul.f32 %v2568, %v2587
      %v2596 = vmul.f32 %v2569, %v2583
      %v2597 = vmul.f32 %v2570, %v2587
      %v2598 = vmul.f32 %v2571, %v2583
      %v2599 = vmul.f32 %v2572, %v2587
      %v2600 = vmul.f32 %v2573, %v2583
      %v2601 = vmul.f32 %v2574, %v2587
      %v2602 = vmul.f32 %v2575, %v2583
      %v2603 = vmul.f32 %v2576, %v2587
      %v2604 = vmul.f32 %v2577, %v2583
      %v2605 = vmul.f32 %v2578, %v2587
      %v2606 = vadd.f32 %v2544, %v2590
      %v2607 = vadd.f32 %v2545, %v2591
      %v2608 = vadd.f32 %v2546, %v2592
      %v2609 = vadd.f32 %v2547, %v2593
      %v2610 = vadd.f32 %v2548, %v2594
      %v2611 = vadd.f32 %v2549, %v2595
      %v2612 = vadd.f32 %v2550, %v2596
      %v2613 = vadd.f32 %v2551, %v2597
      %v2614 = vadd.f32 %v2552, %v2598
      %v2615 = vadd.f32 %v2553, %v2599
      %v2616 = vadd.f32 %v2554, %v2600
      %v2617 = vadd.f32 %v2555, %v2601
      %v2618 = vadd.f32 %v2556, %v2602
      %v2619 = vadd.f32 %v2557, %v2603
      %v2620 = vadd.f32 %v2558, %v2604
      %v2621 = vadd.f32 %v2559, %v2605
      %s2622 = scalar_lea.vmem %s138, 80
      %v2623 = vld [vmem:[%s2622] ss:$8 sm:$0x3]
      %s2624 = scalar_lea.vmem %s1, 5120
      %v2625 = vld [vmem:[%s2624] sm:$0xff]
      %v2626 = vld [vmem:[%s2624 + $0x8] sm:$0xff]
      %v2627 = vld [vmem:[%s2624 + $0x10] sm:$0xff]
      %v2628 = vld [vmem:[%s2624 + $0x18] sm:$0xff]
      %v2629 = vld [vmem:[%s2624 + $0x20] sm:$0xff]
      %v2630 = vld [vmem:[%s2624 + $0x28] sm:$0xff]
      %v2631 = vld [vmem:[%s2624 + $0x30] sm:$0xff]
      %v2632 = vld [vmem:[%s2624 + $0x38] sm:$0xff]
      %v2633 = vld [vmem:[%s2624 + $0x40] sm:$0xff]
      %v2634 = vld [vmem:[%s2624 + $0x48] sm:$0xff]
      %v2635 = vld [vmem:[%s2624 + $0x50] sm:$0xff]
      %v2636 = vld [vmem:[%s2624 + $0x58] sm:$0xff]
      %v2637 = vld [vmem:[%s2624 + $0x60] sm:$0xff]
      %v2638 = vld [vmem:[%s2624 + $0x68] sm:$0xff]
      %v2639 = vld [vmem:[%s2624 + $0x70] sm:$0xff]
      %v2640 = vld [vmem:[%s2624 + $0x78] sm:$0xff]
      %v2642 = vlaneseq
      %v2643 = vshrl.u32 %v2642, 7
      %v2644 = vsub.s32 0, %v2643
      %v2645 = vrot.slane %v2623, %v2644
      %v2646 = vlaneseq
      %v2647 = vshrl.u32 %v2646, 7
      %v2648 = vsub.s32 1, %v2647
      %v2649 = vrot.slane %v2623, %v2648
      %v2652 = vmul.f32 %v2625, %v2645
      %v2653 = vmul.f32 %v2626, %v2649
      %v2654 = vmul.f32 %v2627, %v2645
      %v2655 = vmul.f32 %v2628, %v2649
      %v2656 = vmul.f32 %v2629, %v2645
      %v2657 = vmul.f32 %v2630, %v2649
      %v2658 = vmul.f32 %v2631, %v2645
      %v2659 = vmul.f32 %v2632, %v2649
      %v2660 = vmul.f32 %v2633, %v2645
      %v2661 = vmul.f32 %v2634, %v2649
      %v2662 = vmul.f32 %v2635, %v2645
      %v2663 = vmul.f32 %v2636, %v2649
      %v2664 = vmul.f32 %v2637, %v2645
      %v2665 = vmul.f32 %v2638, %v2649
      %v2666 = vmul.f32 %v2639, %v2645
      %v2667 = vmul.f32 %v2640, %v2649
      %v2668 = vadd.f32 %v2606, %v2652
      %v2669 = vadd.f32 %v2607, %v2653
      %v2670 = vadd.f32 %v2608, %v2654
      %v2671 = vadd.f32 %v2609, %v2655
      %v2672 = vadd.f32 %v2610, %v2656
      %v2673 = vadd.f32 %v2611, %v2657
      %v2674 = vadd.f32 %v2612, %v2658
      %v2675 = vadd.f32 %v2613, %v2659
      %v2676 = vadd.f32 %v2614, %v2660
      %v2677 = vadd.f32 %v2615, %v2661
      %v2678 = vadd.f32 %v2616, %v2662
      %v2679 = vadd.f32 %v2617, %v2663
      %v2680 = vadd.f32 %v2618, %v2664
      %v2681 = vadd.f32 %v2619, %v2665
      %v2682 = vadd.f32 %v2620, %v2666
      %v2683 = vadd.f32 %v2621, %v2667
      %s2684 = scalar_lea.vmem %s138, 81
      %v2685 = vld [vmem:[%s2684] ss:$8 sm:$0x3]
      %s2686 = scalar_lea.vmem %s1, 5248
      %v2687 = vld [vmem:[%s2686] sm:$0xff]
      %v2688 = vld [vmem:[%s2686 + $0x8] sm:$0xff]
      %v2689 = vld [vmem:[%s2686 + $0x10] sm:$0xff]
      %v2690 = vld [vmem:[%s2686 + $0x18] sm:$0xff]
      %v2691 = vld [vmem:[%s2686 + $0x20] sm:$0xff]
      %v2692 = vld [vmem:[%s2686 + $0x28] sm:$0xff]
      %v2693 = vld [vmem:[%s2686 + $0x30] sm:$0xff]
      %v2694 = vld [vmem:[%s2686 + $0x38] sm:$0xff]
      %v2695 = vld [vmem:[%s2686 + $0x40] sm:$0xff]
      %v2696 = vld [vmem:[%s2686 + $0x48] sm:$0xff]
      %v2697 = vld [vmem:[%s2686 + $0x50] sm:$0xff]
      %v2698 = vld [vmem:[%s2686 + $0x58] sm:$0xff]
      %v2699 = vld [vmem:[%s2686 + $0x60] sm:$0xff]
      %v2700 = vld [vmem:[%s2686 + $0x68] sm:$0xff]
      %v2701 = vld [vmem:[%s2686 + $0x70] sm:$0xff]
      %v2702 = vld [vmem:[%s2686 + $0x78] sm:$0xff]
      %v2704 = vlaneseq
      %v2705 = vshrl.u32 %v2704, 7
      %v2706 = vsub.s32 0, %v2705
      %v2707 = vrot.slane %v2685, %v2706
      %v2708 = vlaneseq
      %v2709 = vshrl.u32 %v2708, 7
      %v2710 = vsub.s32 1, %v2709
      %v2711 = vrot.slane %v2685, %v2710
      %v2714 = vmul.f32 %v2687, %v2707
      %v2715 = vmul.f32 %v2688, %v2711
      %v2716 = vmul.f32 %v2689, %v2707
      %v2717 = vmul.f32 %v2690, %v2711
      %v2718 = vmul.f32 %v2691, %v2707
      %v2719 = vmul.f32 %v2692, %v2711
      %v2720 = vmul.f32 %v2693, %v2707
      %v2721 = vmul.f32 %v2694, %v2711
      %v2722 = vmul.f32 %v2695, %v2707
      %v2723 = vmul.f32 %v2696, %v2711
      %v2724 = vmul.f32 %v2697, %v2707
      %v2725 = vmul.f32 %v2698, %v2711
      %v2726 = vmul.f32 %v2699, %v2707
      %v2727 = vmul.f32 %v2700, %v2711
      %v2728 = vmul.f32 %v2701, %v2707
      %v2729 = vmul.f32 %v2702, %v2711
      %v2730 = vadd.f32 %v2668, %v2714
      %v2731 = vadd.f32 %v2669, %v2715
      %v2732 = vadd.f32 %v2670, %v2716
      %v2733 = vadd.f32 %v2671, %v2717
      %v2734 = vadd.f32 %v2672, %v2718
      %v2735 = vadd.f32 %v2673, %v2719
      %v2736 = vadd.f32 %v2674, %v2720
      %v2737 = vadd.f32 %v2675, %v2721
      %v2738 = vadd.f32 %v2676, %v2722
      %v2739 = vadd.f32 %v2677, %v2723
      %v2740 = vadd.f32 %v2678, %v2724
      %v2741 = vadd.f32 %v2679, %v2725
      %v2742 = vadd.f32 %v2680, %v2726
      %v2743 = vadd.f32 %v2681, %v2727
      %v2744 = vadd.f32 %v2682, %v2728
      %v2745 = vadd.f32 %v2683, %v2729
      %s2746 = scalar_lea.vmem %s138, 82
      %v2747 = vld [vmem:[%s2746] ss:$8 sm:$0x3]
      %s2748 = scalar_lea.vmem %s1, 5376
      %v2749 = vld [vmem:[%s2748] sm:$0xff]
      %v2750 = vld [vmem:[%s2748 + $0x8] sm:$0xff]
      %v2751 = vld [vmem:[%s2748 + $0x10] sm:$0xff]
      %v2752 = vld [vmem:[%s2748 + $0x18] sm:$0xff]
      %v2753 = vld [vmem:[%s2748 + $0x20] sm:$0xff]
      %v2754 = vld [vmem:[%s2748 + $0x28] sm:$0xff]
      %v2755 = vld [vmem:[%s2748 + $0x30] sm:$0xff]
      %v2756 = vld [vmem:[%s2748 + $0x38] sm:$0xff]
      %v2757 = vld [vmem:[%s2748 + $0x40] sm:$0xff]
      %v2758 = vld [vmem:[%s2748 + $0x48] sm:$0xff]
      %v2759 = vld [vmem:[%s2748 + $0x50] sm:$0xff]
      %v2760 = vld [vmem:[%s2748 + $0x58] sm:$0xff]
      %v2761 = vld [vmem:[%s2748 + $0x60] sm:$0xff]
      %v2762 = vld [vmem:[%s2748 + $0x68] sm:$0xff]
      %v2763 = vld [vmem:[%s2748 + $0x70] sm:$0xff]
      %v2764 = vld [vmem:[%s2748 + $0x78] sm:$0xff]
      %v2766 = vlaneseq
      %v2767 = vshrl.u32 %v2766, 7
      %v2768 = vsub.s32 0, %v2767
      %v2769 = vrot.slane %v2747, %v2768
      %v2770 = vlaneseq
      %v2771 = vshrl.u32 %v2770, 7
      %v2772 = vsub.s32 1, %v2771
      %v2773 = vrot.slane %v2747, %v2772
      %v2776 = vmul.f32 %v2749, %v2769
      %v2777 = vmul.f32 %v2750, %v2773
      %v2778 = vmul.f32 %v2751, %v2769
      %v2779 = vmul.f32 %v2752, %v2773
      %v2780 = vmul.f32 %v2753, %v2769
      %v2781 = vmul.f32 %v2754, %v2773
      %v2782 = vmul.f32 %v2755, %v2769
      %v2783 = vmul.f32 %v2756, %v2773
      %v2784 = vmul.f32 %v2757, %v2769
      %v2785 = vmul.f32 %v2758, %v2773
      %v2786 = vmul.f32 %v2759, %v2769
      %v2787 = vmul.f32 %v2760, %v2773
      %v2788 = vmul.f32 %v2761, %v2769
      %v2789 = vmul.f32 %v2762, %v2773
      %v2790 = vmul.f32 %v2763, %v2769
      %v2791 = vmul.f32 %v2764, %v2773
      %v2792 = vadd.f32 %v2730, %v2776
      %v2793 = vadd.f32 %v2731, %v2777
      %v2794 = vadd.f32 %v2732, %v2778
      %v2795 = vadd.f32 %v2733, %v2779
      %v2796 = vadd.f32 %v2734, %v2780
      %v2797 = vadd.f32 %v2735, %v2781
      %v2798 = vadd.f32 %v2736, %v2782
      %v2799 = vadd.f32 %v2737, %v2783
      %v2800 = vadd.f32 %v2738, %v2784
      %v2801 = vadd.f32 %v2739, %v2785
      %v2802 = vadd.f32 %v2740, %v2786
      %v2803 = vadd.f32 %v2741, %v2787
      %v2804 = vadd.f32 %v2742, %v2788
      %v2805 = vadd.f32 %v2743, %v2789
      %v2806 = vadd.f32 %v2744, %v2790
      %v2807 = vadd.f32 %v2745, %v2791
      %s2808 = scalar_lea.vmem %s138, 83
      %v2809 = vld [vmem:[%s2808] ss:$8 sm:$0x3]
      %s2810 = scalar_lea.vmem %s1, 5504
      %v2811 = vld [vmem:[%s2810] sm:$0xff]
      %v2812 = vld [vmem:[%s2810 + $0x8] sm:$0xff]
      %v2813 = vld [vmem:[%s2810 + $0x10] sm:$0xff]
      %v2814 = vld [vmem:[%s2810 + $0x18] sm:$0xff]
      %v2815 = vld [vmem:[%s2810 + $0x20] sm:$0xff]
      %v2816 = vld [vmem:[%s2810 + $0x28] sm:$0xff]
      %v2817 = vld [vmem:[%s2810 + $0x30] sm:$0xff]
      %v2818 = vld [vmem:[%s2810 + $0x38] sm:$0xff]
      %v2819 = vld [vmem:[%s2810 + $0x40] sm:$0xff]
      %v2820 = vld [vmem:[%s2810 + $0x48] sm:$0xff]
      %v2821 = vld [vmem:[%s2810 + $0x50] sm:$0xff]
      %v2822 = vld [vmem:[%s2810 + $0x58] sm:$0xff]
      %v2823 = vld [vmem:[%s2810 + $0x60] sm:$0xff]
      %v2824 = vld [vmem:[%s2810 + $0x68] sm:$0xff]
      %v2825 = vld [vmem:[%s2810 + $0x70] sm:$0xff]
      %v2826 = vld [vmem:[%s2810 + $0x78] sm:$0xff]
      %v2828 = vlaneseq
      %v2829 = vshrl.u32 %v2828, 7
      %v2830 = vsub.s32 0, %v2829
      %v2831 = vrot.slane %v2809, %v2830
      %v2832 = vlaneseq
      %v2833 = vshrl.u32 %v2832, 7
      %v2834 = vsub.s32 1, %v2833
      %v2835 = vrot.slane %v2809, %v2834
      %v2838 = vmul.f32 %v2811, %v2831
      %v2839 = vmul.f32 %v2812, %v2835
      %v2840 = vmul.f32 %v2813, %v2831
      %v2841 = vmul.f32 %v2814, %v2835
      %v2842 = vmul.f32 %v2815, %v2831
      %v2843 = vmul.f32 %v2816, %v2835
      %v2844 = vmul.f32 %v2817, %v2831
      %v2845 = vmul.f32 %v2818, %v2835
      %v2846 = vmul.f32 %v2819, %v2831
      %v2847 = vmul.f32 %v2820, %v2835
      %v2848 = vmul.f32 %v2821, %v2831
      %v2849 = vmul.f32 %v2822, %v2835
      %v2850 = vmul.f32 %v2823, %v2831
      %v2851 = vmul.f32 %v2824, %v2835
      %v2852 = vmul.f32 %v2825, %v2831
      %v2853 = vmul.f32 %v2826, %v2835
      %v2854 = vadd.f32 %v2792, %v2838
      %v2855 = vadd.f32 %v2793, %v2839
      %v2856 = vadd.f32 %v2794, %v2840
      %v2857 = vadd.f32 %v2795, %v2841
      %v2858 = vadd.f32 %v2796, %v2842
      %v2859 = vadd.f32 %v2797, %v2843
      %v2860 = vadd.f32 %v2798, %v2844
      %v2861 = vadd.f32 %v2799, %v2845
      %v2862 = vadd.f32 %v2800, %v2846
      %v2863 = vadd.f32 %v2801, %v2847
      %v2864 = vadd.f32 %v2802, %v2848
      %v2865 = vadd.f32 %v2803, %v2849
      %v2866 = vadd.f32 %v2804, %v2850
      %v2867 = vadd.f32 %v2805, %v2851
      %v2868 = vadd.f32 %v2806, %v2852
      %v2869 = vadd.f32 %v2807, %v2853
      %s2870 = scalar_lea.vmem %s138, 84
      %v2871 = vld [vmem:[%s2870] ss:$8 sm:$0x3]
      %s2872 = scalar_lea.vmem %s1, 5632
      %v2873 = vld [vmem:[%s2872] sm:$0xff]
      %v2874 = vld [vmem:[%s2872 + $0x8] sm:$0xff]
      %v2875 = vld [vmem:[%s2872 + $0x10] sm:$0xff]
      %v2876 = vld [vmem:[%s2872 + $0x18] sm:$0xff]
      %v2877 = vld [vmem:[%s2872 + $0x20] sm:$0xff]
      %v2878 = vld [vmem:[%s2872 + $0x28] sm:$0xff]
      %v2879 = vld [vmem:[%s2872 + $0x30] sm:$0xff]
      %v2880 = vld [vmem:[%s2872 + $0x38] sm:$0xff]
      %v2881 = vld [vmem:[%s2872 + $0x40] sm:$0xff]
      %v2882 = vld [vmem:[%s2872 + $0x48] sm:$0xff]
      %v2883 = vld [vmem:[%s2872 + $0x50] sm:$0xff]
      %v2884 = vld [vmem:[%s2872 + $0x58] sm:$0xff]
      %v2885 = vld [vmem:[%s2872 + $0x60] sm:$0xff]
      %v2886 = vld [vmem:[%s2872 + $0x68] sm:$0xff]
      %v2887 = vld [vmem:[%s2872 + $0x70] sm:$0xff]
      %v2888 = vld [vmem:[%s2872 + $0x78] sm:$0xff]
      %v2890 = vlaneseq
      %v2891 = vshrl.u32 %v2890, 7
      %v2892 = vsub.s32 0, %v2891
      %v2893 = vrot.slane %v2871, %v2892
      %v2894 = vlaneseq
      %v2895 = vshrl.u32 %v2894, 7
      %v2896 = vsub.s32 1, %v2895
      %v2897 = vrot.slane %v2871, %v2896
      %v2900 = vmul.f32 %v2873, %v2893
      %v2901 = vmul.f32 %v2874, %v2897
      %v2902 = vmul.f32 %v2875, %v2893
      %v2903 = vmul.f32 %v2876, %v2897
      %v2904 = vmul.f32 %v2877, %v2893
      %v2905 = vmul.f32 %v2878, %v2897
      %v2906 = vmul.f32 %v2879, %v2893
      %v2907 = vmul.f32 %v2880, %v2897
      %v2908 = vmul.f32 %v2881, %v2893
      %v2909 = vmul.f32 %v2882, %v2897
      %v2910 = vmul.f32 %v2883, %v2893
      %v2911 = vmul.f32 %v2884, %v2897
      %v2912 = vmul.f32 %v2885, %v2893
      %v2913 = vmul.f32 %v2886, %v2897
      %v2914 = vmul.f32 %v2887, %v2893
      %v2915 = vmul.f32 %v2888, %v2897
      %v2916 = vadd.f32 %v2854, %v2900
      %v2917 = vadd.f32 %v2855, %v2901
      %v2918 = vadd.f32 %v2856, %v2902
      %v2919 = vadd.f32 %v2857, %v2903
      %v2920 = vadd.f32 %v2858, %v2904
      %v2921 = vadd.f32 %v2859, %v2905
      %v2922 = vadd.f32 %v2860, %v2906
      %v2923 = vadd.f32 %v2861, %v2907
      %v2924 = vadd.f32 %v2862, %v2908
      %v2925 = vadd.f32 %v2863, %v2909
      %v2926 = vadd.f32 %v2864, %v2910
      %v2927 = vadd.f32 %v2865, %v2911
      %v2928 = vadd.f32 %v2866, %v2912
      %v2929 = vadd.f32 %v2867, %v2913
      %v2930 = vadd.f32 %v2868, %v2914
      %v2931 = vadd.f32 %v2869, %v2915
      %s2932 = scalar_lea.vmem %s138, 85
      %v2933 = vld [vmem:[%s2932] ss:$8 sm:$0x3]
      %s2934 = scalar_lea.vmem %s1, 5760
      %v2935 = vld [vmem:[%s2934] sm:$0xff]
      %v2936 = vld [vmem:[%s2934 + $0x8] sm:$0xff]
      %v2937 = vld [vmem:[%s2934 + $0x10] sm:$0xff]
      %v2938 = vld [vmem:[%s2934 + $0x18] sm:$0xff]
      %v2939 = vld [vmem:[%s2934 + $0x20] sm:$0xff]
      %v2940 = vld [vmem:[%s2934 + $0x28] sm:$0xff]
      %v2941 = vld [vmem:[%s2934 + $0x30] sm:$0xff]
      %v2942 = vld [vmem:[%s2934 + $0x38] sm:$0xff]
      %v2943 = vld [vmem:[%s2934 + $0x40] sm:$0xff]
      %v2944 = vld [vmem:[%s2934 + $0x48] sm:$0xff]
      %v2945 = vld [vmem:[%s2934 + $0x50] sm:$0xff]
      %v2946 = vld [vmem:[%s2934 + $0x58] sm:$0xff]
      %v2947 = vld [vmem:[%s2934 + $0x60] sm:$0xff]
      %v2948 = vld [vmem:[%s2934 + $0x68] sm:$0xff]
      %v2949 = vld [vmem:[%s2934 + $0x70] sm:$0xff]
      %v2950 = vld [vmem:[%s2934 + $0x78] sm:$0xff]
      %v2952 = vlaneseq
      %v2953 = vshrl.u32 %v2952, 7
      %v2954 = vsub.s32 0, %v2953
      %v2955 = vrot.slane %v2933, %v2954
      %v2956 = vlaneseq
      %v2957 = vshrl.u32 %v2956, 7
      %v2958 = vsub.s32 1, %v2957
      %v2959 = vrot.slane %v2933, %v2958
      %v2962 = vmul.f32 %v2935, %v2955
      %v2963 = vmul.f32 %v2936, %v2959
      %v2964 = vmul.f32 %v2937, %v2955
      %v2965 = vmul.f32 %v2938, %v2959
      %v2966 = vmul.f32 %v2939, %v2955
      %v2967 = vmul.f32 %v2940, %v2959
      %v2968 = vmul.f32 %v2941, %v2955
      %v2969 = vmul.f32 %v2942, %v2959
      %v2970 = vmul.f32 %v2943, %v2955
      %v2971 = vmul.f32 %v2944, %v2959
      %v2972 = vmul.f32 %v2945, %v2955
      %v2973 = vmul.f32 %v2946, %v2959
      %v2974 = vmul.f32 %v2947, %v2955
      %v2975 = vmul.f32 %v2948, %v2959
      %v2976 = vmul.f32 %v2949, %v2955
      %v2977 = vmul.f32 %v2950, %v2959
      %v2978 = vadd.f32 %v2916, %v2962
      %v2979 = vadd.f32 %v2917, %v2963
      %v2980 = vadd.f32 %v2918, %v2964
      %v2981 = vadd.f32 %v2919, %v2965
      %v2982 = vadd.f32 %v2920, %v2966
      %v2983 = vadd.f32 %v2921, %v2967
      %v2984 = vadd.f32 %v2922, %v2968
      %v2985 = vadd.f32 %v2923, %v2969
      %v2986 = vadd.f32 %v2924, %v2970
      %v2987 = vadd.f32 %v2925, %v2971
      %v2988 = vadd.f32 %v2926, %v2972
      %v2989 = vadd.f32 %v2927, %v2973
      %v2990 = vadd.f32 %v2928, %v2974
      %v2991 = vadd.f32 %v2929, %v2975
      %v2992 = vadd.f32 %v2930, %v2976
      %v2993 = vadd.f32 %v2931, %v2977
      %s2994 = scalar_lea.vmem %s138, 86
      %v2995 = vld [vmem:[%s2994] ss:$8 sm:$0x3]
      %s2996 = scalar_lea.vmem %s1, 5888
      %v2997 = vld [vmem:[%s2996] sm:$0xff]
      %v2998 = vld [vmem:[%s2996 + $0x8] sm:$0xff]
      %v2999 = vld [vmem:[%s2996 + $0x10] sm:$0xff]
      %v3000 = vld [vmem:[%s2996 + $0x18] sm:$0xff]
      %v3001 = vld [vmem:[%s2996 + $0x20] sm:$0xff]
      %v3002 = vld [vmem:[%s2996 + $0x28] sm:$0xff]
      %v3003 = vld [vmem:[%s2996 + $0x30] sm:$0xff]
      %v3004 = vld [vmem:[%s2996 + $0x38] sm:$0xff]
      %v3005 = vld [vmem:[%s2996 + $0x40] sm:$0xff]
      %v3006 = vld [vmem:[%s2996 + $0x48] sm:$0xff]
      %v3007 = vld [vmem:[%s2996 + $0x50] sm:$0xff]
      %v3008 = vld [vmem:[%s2996 + $0x58] sm:$0xff]
      %v3009 = vld [vmem:[%s2996 + $0x60] sm:$0xff]
      %v3010 = vld [vmem:[%s2996 + $0x68] sm:$0xff]
      %v3011 = vld [vmem:[%s2996 + $0x70] sm:$0xff]
      %v3012 = vld [vmem:[%s2996 + $0x78] sm:$0xff]
      %v3014 = vlaneseq
      %v3015 = vshrl.u32 %v3014, 7
      %v3016 = vsub.s32 0, %v3015
      %v3017 = vrot.slane %v2995, %v3016
      %v3018 = vlaneseq
      %v3019 = vshrl.u32 %v3018, 7
      %v3020 = vsub.s32 1, %v3019
      %v3021 = vrot.slane %v2995, %v3020
      %v3024 = vmul.f32 %v2997, %v3017
      %v3025 = vmul.f32 %v2998, %v3021
      %v3026 = vmul.f32 %v2999, %v3017
      %v3027 = vmul.f32 %v3000, %v3021
      %v3028 = vmul.f32 %v3001, %v3017
      %v3029 = vmul.f32 %v3002, %v3021
      %v3030 = vmul.f32 %v3003, %v3017
      %v3031 = vmul.f32 %v3004, %v3021
      %v3032 = vmul.f32 %v3005, %v3017
      %v3033 = vmul.f32 %v3006, %v3021
      %v3034 = vmul.f32 %v3007, %v3017
      %v3035 = vmul.f32 %v3008, %v3021
      %v3036 = vmul.f32 %v3009, %v3017
      %v3037 = vmul.f32 %v3010, %v3021
      %v3038 = vmul.f32 %v3011, %v3017
      %v3039 = vmul.f32 %v3012, %v3021
      %v3040 = vadd.f32 %v2978, %v3024
      %v3041 = vadd.f32 %v2979, %v3025
      %v3042 = vadd.f32 %v2980, %v3026
      %v3043 = vadd.f32 %v2981, %v3027
      %v3044 = vadd.f32 %v2982, %v3028
      %v3045 = vadd.f32 %v2983, %v3029
      %v3046 = vadd.f32 %v2984, %v3030
      %v3047 = vadd.f32 %v2985, %v3031
      %v3048 = vadd.f32 %v2986, %v3032
      %v3049 = vadd.f32 %v2987, %v3033
      %v3050 = vadd.f32 %v2988, %v3034
      %v3051 = vadd.f32 %v2989, %v3035
      %v3052 = vadd.f32 %v2990, %v3036
      %v3053 = vadd.f32 %v2991, %v3037
      %v3054 = vadd.f32 %v2992, %v3038
      %v3055 = vadd.f32 %v2993, %v3039
      %s3056 = scalar_lea.vmem %s138, 87
      %v3057 = vld [vmem:[%s3056] ss:$8 sm:$0x3]
      %s3058 = scalar_lea.vmem %s1, 6016
      %v3059 = vld [vmem:[%s3058] sm:$0xff]
      %v3060 = vld [vmem:[%s3058 + $0x8] sm:$0xff]
      %v3061 = vld [vmem:[%s3058 + $0x10] sm:$0xff]
      %v3062 = vld [vmem:[%s3058 + $0x18] sm:$0xff]
      %v3063 = vld [vmem:[%s3058 + $0x20] sm:$0xff]
      %v3064 = vld [vmem:[%s3058 + $0x28] sm:$0xff]
      %v3065 = vld [vmem:[%s3058 + $0x30] sm:$0xff]
      %v3066 = vld [vmem:[%s3058 + $0x38] sm:$0xff]
      %v3067 = vld [vmem:[%s3058 + $0x40] sm:$0xff]
      %v3068 = vld [vmem:[%s3058 + $0x48] sm:$0xff]
      %v3069 = vld [vmem:[%s3058 + $0x50] sm:$0xff]
      %v3070 = vld [vmem:[%s3058 + $0x58] sm:$0xff]
      %v3071 = vld [vmem:[%s3058 + $0x60] sm:$0xff]
      %v3072 = vld [vmem:[%s3058 + $0x68] sm:$0xff]
      %v3073 = vld [vmem:[%s3058 + $0x70] sm:$0xff]
      %v3074 = vld [vmem:[%s3058 + $0x78] sm:$0xff]
      %v3076 = vlaneseq
      %v3077 = vshrl.u32 %v3076, 7
      %v3078 = vsub.s32 0, %v3077
      %v3079 = vrot.slane %v3057, %v3078
      %v3080 = vlaneseq
      %v3081 = vshrl.u32 %v3080, 7
      %v3082 = vsub.s32 1, %v3081
      %v3083 = vrot.slane %v3057, %v3082
      %v3086 = vmul.f32 %v3059, %v3079
      %v3087 = vmul.f32 %v3060, %v3083
      %v3088 = vmul.f32 %v3061, %v3079
      %v3089 = vmul.f32 %v3062, %v3083
      %v3090 = vmul.f32 %v3063, %v3079
      %v3091 = vmul.f32 %v3064, %v3083
      %v3092 = vmul.f32 %v3065, %v3079
      %v3093 = vmul.f32 %v3066, %v3083
      %v3094 = vmul.f32 %v3067, %v3079
      %v3095 = vmul.f32 %v3068, %v3083
      %v3096 = vmul.f32 %v3069, %v3079
      %v3097 = vmul.f32 %v3070, %v3083
      %v3098 = vmul.f32 %v3071, %v3079
      %v3099 = vmul.f32 %v3072, %v3083
      %v3100 = vmul.f32 %v3073, %v3079
      %v3101 = vmul.f32 %v3074, %v3083
      %v3102 = vadd.f32 %v3040, %v3086
      %v3103 = vadd.f32 %v3041, %v3087
      %v3104 = vadd.f32 %v3042, %v3088
      %v3105 = vadd.f32 %v3043, %v3089
      %v3106 = vadd.f32 %v3044, %v3090
      %v3107 = vadd.f32 %v3045, %v3091
      %v3108 = vadd.f32 %v3046, %v3092
      %v3109 = vadd.f32 %v3047, %v3093
      %v3110 = vadd.f32 %v3048, %v3094
      %v3111 = vadd.f32 %v3049, %v3095
      %v3112 = vadd.f32 %v3050, %v3096
      %v3113 = vadd.f32 %v3051, %v3097
      %v3114 = vadd.f32 %v3052, %v3098
      %v3115 = vadd.f32 %v3053, %v3099
      %v3116 = vadd.f32 %v3054, %v3100
      %v3117 = vadd.f32 %v3055, %v3101
      %s3118 = scalar_lea.vmem %s138, 96
      %v3119 = vld [vmem:[%s3118] ss:$8 sm:$0x3]
      %s3120 = scalar_lea.vmem %s1, 6144
      %v3121 = vld [vmem:[%s3120] sm:$0xff]
      %v3122 = vld [vmem:[%s3120 + $0x8] sm:$0xff]
      %v3123 = vld [vmem:[%s3120 + $0x10] sm:$0xff]
      %v3124 = vld [vmem:[%s3120 + $0x18] sm:$0xff]
      %v3125 = vld [vmem:[%s3120 + $0x20] sm:$0xff]
      %v3126 = vld [vmem:[%s3120 + $0x28] sm:$0xff]
      %v3127 = vld [vmem:[%s3120 + $0x30] sm:$0xff]
      %v3128 = vld [vmem:[%s3120 + $0x38] sm:$0xff]
      %v3129 = vld [vmem:[%s3120 + $0x40] sm:$0xff]
      %v3130 = vld [vmem:[%s3120 + $0x48] sm:$0xff]
      %v3131 = vld [vmem:[%s3120 + $0x50] sm:$0xff]
      %v3132 = vld [vmem:[%s3120 + $0x58] sm:$0xff]
      %v3133 = vld [vmem:[%s3120 + $0x60] sm:$0xff]
      %v3134 = vld [vmem:[%s3120 + $0x68] sm:$0xff]
      %v3135 = vld [vmem:[%s3120 + $0x70] sm:$0xff]
      %v3136 = vld [vmem:[%s3120 + $0x78] sm:$0xff]
      %v3138 = vlaneseq
      %v3139 = vshrl.u32 %v3138, 7
      %v3140 = vsub.s32 0, %v3139
      %v3141 = vrot.slane %v3119, %v3140
      %v3142 = vlaneseq
      %v3143 = vshrl.u32 %v3142, 7
      %v3144 = vsub.s32 1, %v3143
      %v3145 = vrot.slane %v3119, %v3144
      %v3148 = vmul.f32 %v3121, %v3141
      %v3149 = vmul.f32 %v3122, %v3145
      %v3150 = vmul.f32 %v3123, %v3141
      %v3151 = vmul.f32 %v3124, %v3145
      %v3152 = vmul.f32 %v3125, %v3141
      %v3153 = vmul.f32 %v3126, %v3145
      %v3154 = vmul.f32 %v3127, %v3141
      %v3155 = vmul.f32 %v3128, %v3145
      %v3156 = vmul.f32 %v3129, %v3141
      %v3157 = vmul.f32 %v3130, %v3145
      %v3158 = vmul.f32 %v3131, %v3141
      %v3159 = vmul.f32 %v3132, %v3145
      %v3160 = vmul.f32 %v3133, %v3141
      %v3161 = vmul.f32 %v3134, %v3145
      %v3162 = vmul.f32 %v3135, %v3141
      %v3163 = vmul.f32 %v3136, %v3145
      %v3164 = vadd.f32 %v3102, %v3148
      %v3165 = vadd.f32 %v3103, %v3149
      %v3166 = vadd.f32 %v3104, %v3150
      %v3167 = vadd.f32 %v3105, %v3151
      %v3168 = vadd.f32 %v3106, %v3152
      %v3169 = vadd.f32 %v3107, %v3153
      %v3170 = vadd.f32 %v3108, %v3154
      %v3171 = vadd.f32 %v3109, %v3155
      %v3172 = vadd.f32 %v3110, %v3156
      %v3173 = vadd.f32 %v3111, %v3157
      %v3174 = vadd.f32 %v3112, %v3158
      %v3175 = vadd.f32 %v3113, %v3159
      %v3176 = vadd.f32 %v3114, %v3160
      %v3177 = vadd.f32 %v3115, %v3161
      %v3178 = vadd.f32 %v3116, %v3162
      %v3179 = vadd.f32 %v3117, %v3163
      %s3180 = scalar_lea.vmem %s138, 97
      %v3181 = vld [vmem:[%s3180] ss:$8 sm:$0x3]
      %s3182 = scalar_lea.vmem %s1, 6272
      %v3183 = vld [vmem:[%s3182] sm:$0xff]
      %v3184 = vld [vmem:[%s3182 + $0x8] sm:$0xff]
      %v3185 = vld [vmem:[%s3182 + $0x10] sm:$0xff]
      %v3186 = vld [vmem:[%s3182 + $0x18] sm:$0xff]
      %v3187 = vld [vmem:[%s3182 + $0x20] sm:$0xff]
      %v3188 = vld [vmem:[%s3182 + $0x28] sm:$0xff]
      %v3189 = vld [vmem:[%s3182 + $0x30] sm:$0xff]
      %v3190 = vld [vmem:[%s3182 + $0x38] sm:$0xff]
      %v3191 = vld [vmem:[%s3182 + $0x40] sm:$0xff]
      %v3192 = vld [vmem:[%s3182 + $0x48] sm:$0xff]
      %v3193 = vld [vmem:[%s3182 + $0x50] sm:$0xff]
      %v3194 = vld [vmem:[%s3182 + $0x58] sm:$0xff]
      %v3195 = vld [vmem:[%s3182 + $0x60] sm:$0xff]
      %v3196 = vld [vmem:[%s3182 + $0x68] sm:$0xff]
      %v3197 = vld [vmem:[%s3182 + $0x70] sm:$0xff]
      %v3198 = vld [vmem:[%s3182 + $0x78] sm:$0xff]
      %v3200 = vlaneseq
      %v3201 = vshrl.u32 %v3200, 7
      %v3202 = vsub.s32 0, %v3201
      %v3203 = vrot.slane %v3181, %v3202
      %v3204 = vlaneseq
      %v3205 = vshrl.u32 %v3204, 7
      %v3206 = vsub.s32 1, %v3205
      %v3207 = vrot.slane %v3181, %v3206
      %v3210 = vmul.f32 %v3183, %v3203
      %v3211 = vmul.f32 %v3184, %v3207
      %v3212 = vmul.f32 %v3185, %v3203
      %v3213 = vmul.f32 %v3186, %v3207
      %v3214 = vmul.f32 %v3187, %v3203
      %v3215 = vmul.f32 %v3188, %v3207
      %v3216 = vmul.f32 %v3189, %v3203
      %v3217 = vmul.f32 %v3190, %v3207
      %v3218 = vmul.f32 %v3191, %v3203
      %v3219 = vmul.f32 %v3192, %v3207
      %v3220 = vmul.f32 %v3193, %v3203
      %v3221 = vmul.f32 %v3194, %v3207
      %v3222 = vmul.f32 %v3195, %v3203
      %v3223 = vmul.f32 %v3196, %v3207
      %v3224 = vmul.f32 %v3197, %v3203
      %v3225 = vmul.f32 %v3198, %v3207
      %v3226 = vadd.f32 %v3164, %v3210
      %v3227 = vadd.f32 %v3165, %v3211
      %v3228 = vadd.f32 %v3166, %v3212
      %v3229 = vadd.f32 %v3167, %v3213
      %v3230 = vadd.f32 %v3168, %v3214
      %v3231 = vadd.f32 %v3169, %v3215
      %v3232 = vadd.f32 %v3170, %v3216
      %v3233 = vadd.f32 %v3171, %v3217
      %v3234 = vadd.f32 %v3172, %v3218
      %v3235 = vadd.f32 %v3173, %v3219
      %v3236 = vadd.f32 %v3174, %v3220
      %v3237 = vadd.f32 %v3175, %v3221
      %v3238 = vadd.f32 %v3176, %v3222
      %v3239 = vadd.f32 %v3177, %v3223
      %v3240 = vadd.f32 %v3178, %v3224
      %v3241 = vadd.f32 %v3179, %v3225
      %s3242 = scalar_lea.vmem %s138, 98
      %v3243 = vld [vmem:[%s3242] ss:$8 sm:$0x3]
      %s3244 = scalar_lea.vmem %s1, 6400
      %v3245 = vld [vmem:[%s3244] sm:$0xff]
      %v3246 = vld [vmem:[%s3244 + $0x8] sm:$0xff]
      %v3247 = vld [vmem:[%s3244 + $0x10] sm:$0xff]
      %v3248 = vld [vmem:[%s3244 + $0x18] sm:$0xff]
      %v3249 = vld [vmem:[%s3244 + $0x20] sm:$0xff]
      %v3250 = vld [vmem:[%s3244 + $0x28] sm:$0xff]
      %v3251 = vld [vmem:[%s3244 + $0x30] sm:$0xff]
      %v3252 = vld [vmem:[%s3244 + $0x38] sm:$0xff]
      %v3253 = vld [vmem:[%s3244 + $0x40] sm:$0xff]
      %v3254 = vld [vmem:[%s3244 + $0x48] sm:$0xff]
      %v3255 = vld [vmem:[%s3244 + $0x50] sm:$0xff]
      %v3256 = vld [vmem:[%s3244 + $0x58] sm:$0xff]
      %v3257 = vld [vmem:[%s3244 + $0x60] sm:$0xff]
      %v3258 = vld [vmem:[%s3244 + $0x68] sm:$0xff]
      %v3259 = vld [vmem:[%s3244 + $0x70] sm:$0xff]
      %v3260 = vld [vmem:[%s3244 + $0x78] sm:$0xff]
      %v3262 = vlaneseq
      %v3263 = vshrl.u32 %v3262, 7
      %v3264 = vsub.s32 0, %v3263
      %v3265 = vrot.slane %v3243, %v3264
      %v3266 = vlaneseq
      %v3267 = vshrl.u32 %v3266, 7
      %v3268 = vsub.s32 1, %v3267
      %v3269 = vrot.slane %v3243, %v3268
      %v3272 = vmul.f32 %v3245, %v3265
      %v3273 = vmul.f32 %v3246, %v3269
      %v3274 = vmul.f32 %v3247, %v3265
      %v3275 = vmul.f32 %v3248, %v3269
      %v3276 = vmul.f32 %v3249, %v3265
      %v3277 = vmul.f32 %v3250, %v3269
      %v3278 = vmul.f32 %v3251, %v3265
      %v3279 = vmul.f32 %v3252, %v3269
      %v3280 = vmul.f32 %v3253, %v3265
      %v3281 = vmul.f32 %v3254, %v3269
      %v3282 = vmul.f32 %v3255, %v3265
      %v3283 = vmul.f32 %v3256, %v3269
      %v3284 = vmul.f32 %v3257, %v3265
      %v3285 = vmul.f32 %v3258, %v3269
      %v3286 = vmul.f32 %v3259, %v3265
      %v3287 = vmul.f32 %v3260, %v3269
      %v3288 = vadd.f32 %v3226, %v3272
      %v3289 = vadd.f32 %v3227, %v3273
      %v3290 = vadd.f32 %v3228, %v3274
      %v3291 = vadd.f32 %v3229, %v3275
      %v3292 = vadd.f32 %v3230, %v3276
      %v3293 = vadd.f32 %v3231, %v3277
      %v3294 = vadd.f32 %v3232, %v3278
      %v3295 = vadd.f32 %v3233, %v3279
      %v3296 = vadd.f32 %v3234, %v3280
      %v3297 = vadd.f32 %v3235, %v3281
      %v3298 = vadd.f32 %v3236, %v3282
      %v3299 = vadd.f32 %v3237, %v3283
      %v3300 = vadd.f32 %v3238, %v3284
      %v3301 = vadd.f32 %v3239, %v3285
      %v3302 = vadd.f32 %v3240, %v3286
      %v3303 = vadd.f32 %v3241, %v3287
      %s3304 = scalar_lea.vmem %s138, 99
      %v3305 = vld [vmem:[%s3304] ss:$8 sm:$0x3]
      %s3306 = scalar_lea.vmem %s1, 6528
      %v3307 = vld [vmem:[%s3306] sm:$0xff]
      %v3308 = vld [vmem:[%s3306 + $0x8] sm:$0xff]
      %v3309 = vld [vmem:[%s3306 + $0x10] sm:$0xff]
      %v3310 = vld [vmem:[%s3306 + $0x18] sm:$0xff]
      %v3311 = vld [vmem:[%s3306 + $0x20] sm:$0xff]
      %v3312 = vld [vmem:[%s3306 + $0x28] sm:$0xff]
      %v3313 = vld [vmem:[%s3306 + $0x30] sm:$0xff]
      %v3314 = vld [vmem:[%s3306 + $0x38] sm:$0xff]
      %v3315 = vld [vmem:[%s3306 + $0x40] sm:$0xff]
      %v3316 = vld [vmem:[%s3306 + $0x48] sm:$0xff]
      %v3317 = vld [vmem:[%s3306 + $0x50] sm:$0xff]
      %v3318 = vld [vmem:[%s3306 + $0x58] sm:$0xff]
      %v3319 = vld [vmem:[%s3306 + $0x60] sm:$0xff]
      %v3320 = vld [vmem:[%s3306 + $0x68] sm:$0xff]
      %v3321 = vld [vmem:[%s3306 + $0x70] sm:$0xff]
      %v3322 = vld [vmem:[%s3306 + $0x78] sm:$0xff]
      %v3324 = vlaneseq
      %v3325 = vshrl.u32 %v3324, 7
      %v3326 = vsub.s32 0, %v3325
      %v3327 = vrot.slane %v3305, %v3326
      %v3328 = vlaneseq
      %v3329 = vshrl.u32 %v3328, 7
      %v3330 = vsub.s32 1, %v3329
      %v3331 = vrot.slane %v3305, %v3330
      %v3334 = vmul.f32 %v3307, %v3327
      %v3335 = vmul.f32 %v3308, %v3331
      %v3336 = vmul.f32 %v3309, %v3327
      %v3337 = vmul.f32 %v3310, %v3331
      %v3338 = vmul.f32 %v3311, %v3327
      %v3339 = vmul.f32 %v3312, %v3331
      %v3340 = vmul.f32 %v3313, %v3327
      %v3341 = vmul.f32 %v3314, %v3331
      %v3342 = vmul.f32 %v3315, %v3327
      %v3343 = vmul.f32 %v3316, %v3331
      %v3344 = vmul.f32 %v3317, %v3327
      %v3345 = vmul.f32 %v3318, %v3331
      %v3346 = vmul.f32 %v3319, %v3327
      %v3347 = vmul.f32 %v3320, %v3331
      %v3348 = vmul.f32 %v3321, %v3327
      %v3349 = vmul.f32 %v3322, %v3331
      %v3350 = vadd.f32 %v3288, %v3334
      %v3351 = vadd.f32 %v3289, %v3335
      %v3352 = vadd.f32 %v3290, %v3336
      %v3353 = vadd.f32 %v3291, %v3337
      %v3354 = vadd.f32 %v3292, %v3338
      %v3355 = vadd.f32 %v3293, %v3339
      %v3356 = vadd.f32 %v3294, %v3340
      %v3357 = vadd.f32 %v3295, %v3341
      %v3358 = vadd.f32 %v3296, %v3342
      %v3359 = vadd.f32 %v3297, %v3343
      %v3360 = vadd.f32 %v3298, %v3344
      %v3361 = vadd.f32 %v3299, %v3345
      %v3362 = vadd.f32 %v3300, %v3346
      %v3363 = vadd.f32 %v3301, %v3347
      %v3364 = vadd.f32 %v3302, %v3348
      %v3365 = vadd.f32 %v3303, %v3349
      %s3366 = scalar_lea.vmem %s138, 100
      %v3367 = vld [vmem:[%s3366] ss:$8 sm:$0x3]
      %s3368 = scalar_lea.vmem %s1, 6656
      %v3369 = vld [vmem:[%s3368] sm:$0xff]
      %v3370 = vld [vmem:[%s3368 + $0x8] sm:$0xff]
      %v3371 = vld [vmem:[%s3368 + $0x10] sm:$0xff]
      %v3372 = vld [vmem:[%s3368 + $0x18] sm:$0xff]
      %v3373 = vld [vmem:[%s3368 + $0x20] sm:$0xff]
      %v3374 = vld [vmem:[%s3368 + $0x28] sm:$0xff]
      %v3375 = vld [vmem:[%s3368 + $0x30] sm:$0xff]
      %v3376 = vld [vmem:[%s3368 + $0x38] sm:$0xff]
      %v3377 = vld [vmem:[%s3368 + $0x40] sm:$0xff]
      %v3378 = vld [vmem:[%s3368 + $0x48] sm:$0xff]
      %v3379 = vld [vmem:[%s3368 + $0x50] sm:$0xff]
      %v3380 = vld [vmem:[%s3368 + $0x58] sm:$0xff]
      %v3381 = vld [vmem:[%s3368 + $0x60] sm:$0xff]
      %v3382 = vld [vmem:[%s3368 + $0x68] sm:$0xff]
      %v3383 = vld [vmem:[%s3368 + $0x70] sm:$0xff]
      %v3384 = vld [vmem:[%s3368 + $0x78] sm:$0xff]
      %v3386 = vlaneseq
      %v3387 = vshrl.u32 %v3386, 7
      %v3388 = vsub.s32 0, %v3387
      %v3389 = vrot.slane %v3367, %v3388
      %v3390 = vlaneseq
      %v3391 = vshrl.u32 %v3390, 7
      %v3392 = vsub.s32 1, %v3391
      %v3393 = vrot.slane %v3367, %v3392
      %v3396 = vmul.f32 %v3369, %v3389
      %v3397 = vmul.f32 %v3370, %v3393
      %v3398 = vmul.f32 %v3371, %v3389
      %v3399 = vmul.f32 %v3372, %v3393
      %v3400 = vmul.f32 %v3373, %v3389
      %v3401 = vmul.f32 %v3374, %v3393
      %v3402 = vmul.f32 %v3375, %v3389
      %v3403 = vmul.f32 %v3376, %v3393
      %v3404 = vmul.f32 %v3377, %v3389
      %v3405 = vmul.f32 %v3378, %v3393
      %v3406 = vmul.f32 %v3379, %v3389
      %v3407 = vmul.f32 %v3380, %v3393
      %v3408 = vmul.f32 %v3381, %v3389
      %v3409 = vmul.f32 %v3382, %v3393
      %v3410 = vmul.f32 %v3383, %v3389
      %v3411 = vmul.f32 %v3384, %v3393
      %v3412 = vadd.f32 %v3350, %v3396
      %v3413 = vadd.f32 %v3351, %v3397
      %v3414 = vadd.f32 %v3352, %v3398
      %v3415 = vadd.f32 %v3353, %v3399
      %v3416 = vadd.f32 %v3354, %v3400
      %v3417 = vadd.f32 %v3355, %v3401
      %v3418 = vadd.f32 %v3356, %v3402
      %v3419 = vadd.f32 %v3357, %v3403
      %v3420 = vadd.f32 %v3358, %v3404
      %v3421 = vadd.f32 %v3359, %v3405
      %v3422 = vadd.f32 %v3360, %v3406
      %v3423 = vadd.f32 %v3361, %v3407
      %v3424 = vadd.f32 %v3362, %v3408
      %v3425 = vadd.f32 %v3363, %v3409
      %v3426 = vadd.f32 %v3364, %v3410
      %v3427 = vadd.f32 %v3365, %v3411
      %s3428 = scalar_lea.vmem %s138, 101
      %v3429 = vld [vmem:[%s3428] ss:$8 sm:$0x3]
      %s3430 = scalar_lea.vmem %s1, 6784
      %v3431 = vld [vmem:[%s3430] sm:$0xff]
      %v3432 = vld [vmem:[%s3430 + $0x8] sm:$0xff]
      %v3433 = vld [vmem:[%s3430 + $0x10] sm:$0xff]
      %v3434 = vld [vmem:[%s3430 + $0x18] sm:$0xff]
      %v3435 = vld [vmem:[%s3430 + $0x20] sm:$0xff]
      %v3436 = vld [vmem:[%s3430 + $0x28] sm:$0xff]
      %v3437 = vld [vmem:[%s3430 + $0x30] sm:$0xff]
      %v3438 = vld [vmem:[%s3430 + $0x38] sm:$0xff]
      %v3439 = vld [vmem:[%s3430 + $0x40] sm:$0xff]
      %v3440 = vld [vmem:[%s3430 + $0x48] sm:$0xff]
      %v3441 = vld [vmem:[%s3430 + $0x50] sm:$0xff]
      %v3442 = vld [vmem:[%s3430 + $0x58] sm:$0xff]
      %v3443 = vld [vmem:[%s3430 + $0x60] sm:$0xff]
      %v3444 = vld [vmem:[%s3430 + $0x68] sm:$0xff]
      %v3445 = vld [vmem:[%s3430 + $0x70] sm:$0xff]
      %v3446 = vld [vmem:[%s3430 + $0x78] sm:$0xff]
      %v3448 = vlaneseq
      %v3449 = vshrl.u32 %v3448, 7
      %v3450 = vsub.s32 0, %v3449
      %v3451 = vrot.slane %v3429, %v3450
      %v3452 = vlaneseq
      %v3453 = vshrl.u32 %v3452, 7
      %v3454 = vsub.s32 1, %v3453
      %v3455 = vrot.slane %v3429, %v3454
      %v3458 = vmul.f32 %v3431, %v3451
      %v3459 = vmul.f32 %v3432, %v3455
      %v3460 = vmul.f32 %v3433, %v3451
      %v3461 = vmul.f32 %v3434, %v3455
      %v3462 = vmul.f32 %v3435, %v3451
      %v3463 = vmul.f32 %v3436, %v3455
      %v3464 = vmul.f32 %v3437, %v3451
      %v3465 = vmul.f32 %v3438, %v3455
      %v3466 = vmul.f32 %v3439, %v3451
      %v3467 = vmul.f32 %v3440, %v3455
      %v3468 = vmul.f32 %v3441, %v3451
      %v3469 = vmul.f32 %v3442, %v3455
      %v3470 = vmul.f32 %v3443, %v3451
      %v3471 = vmul.f32 %v3444, %v3455
      %v3472 = vmul.f32 %v3445, %v3451
      %v3473 = vmul.f32 %v3446, %v3455
      %v3474 = vadd.f32 %v3412, %v3458
      %v3475 = vadd.f32 %v3413, %v3459
      %v3476 = vadd.f32 %v3414, %v3460
      %v3477 = vadd.f32 %v3415, %v3461
      %v3478 = vadd.f32 %v3416, %v3462
      %v3479 = vadd.f32 %v3417, %v3463
      %v3480 = vadd.f32 %v3418, %v3464
      %v3481 = vadd.f32 %v3419, %v3465
      %v3482 = vadd.f32 %v3420, %v3466
      %v3483 = vadd.f32 %v3421, %v3467
      %v3484 = vadd.f32 %v3422, %v3468
      %v3485 = vadd.f32 %v3423, %v3469
      %v3486 = vadd.f32 %v3424, %v3470
      %v3487 = vadd.f32 %v3425, %v3471
      %v3488 = vadd.f32 %v3426, %v3472
      %v3489 = vadd.f32 %v3427, %v3473
      %s3490 = scalar_lea.vmem %s138, 102
      %v3491 = vld [vmem:[%s3490] ss:$8 sm:$0x3]
      %s3492 = scalar_lea.vmem %s1, 6912
      %v3493 = vld [vmem:[%s3492] sm:$0xff]
      %v3494 = vld [vmem:[%s3492 + $0x8] sm:$0xff]
      %v3495 = vld [vmem:[%s3492 + $0x10] sm:$0xff]
      %v3496 = vld [vmem:[%s3492 + $0x18] sm:$0xff]
      %v3497 = vld [vmem:[%s3492 + $0x20] sm:$0xff]
      %v3498 = vld [vmem:[%s3492 + $0x28] sm:$0xff]
      %v3499 = vld [vmem:[%s3492 + $0x30] sm:$0xff]
      %v3500 = vld [vmem:[%s3492 + $0x38] sm:$0xff]
      %v3501 = vld [vmem:[%s3492 + $0x40] sm:$0xff]
      %v3502 = vld [vmem:[%s3492 + $0x48] sm:$0xff]
      %v3503 = vld [vmem:[%s3492 + $0x50] sm:$0xff]
      %v3504 = vld [vmem:[%s3492 + $0x58] sm:$0xff]
      %v3505 = vld [vmem:[%s3492 + $0x60] sm:$0xff]
      %v3506 = vld [vmem:[%s3492 + $0x68] sm:$0xff]
      %v3507 = vld [vmem:[%s3492 + $0x70] sm:$0xff]
      %v3508 = vld [vmem:[%s3492 + $0x78] sm:$0xff]
      %v3510 = vlaneseq
      %v3511 = vshrl.u32 %v3510, 7
      %v3512 = vsub.s32 0, %v3511
      %v3513 = vrot.slane %v3491, %v3512
      %v3514 = vlaneseq
      %v3515 = vshrl.u32 %v3514, 7
      %v3516 = vsub.s32 1, %v3515
      %v3517 = vrot.slane %v3491, %v3516
      %v3520 = vmul.f32 %v3493, %v3513
      %v3521 = vmul.f32 %v3494, %v3517
      %v3522 = vmul.f32 %v3495, %v3513
      %v3523 = vmul.f32 %v3496, %v3517
      %v3524 = vmul.f32 %v3497, %v3513
      %v3525 = vmul.f32 %v3498, %v3517
      %v3526 = vmul.f32 %v3499, %v3513
      %v3527 = vmul.f32 %v3500, %v3517
      %v3528 = vmul.f32 %v3501, %v3513
      %v3529 = vmul.f32 %v3502, %v3517
      %v3530 = vmul.f32 %v3503, %v3513
      %v3531 = vmul.f32 %v3504, %v3517
      %v3532 = vmul.f32 %v3505, %v3513
      %v3533 = vmul.f32 %v3506, %v3517
      %v3534 = vmul.f32 %v3507, %v3513
      %v3535 = vmul.f32 %v3508, %v3517
      %v3536 = vadd.f32 %v3474, %v3520
      %v3537 = vadd.f32 %v3475, %v3521
      %v3538 = vadd.f32 %v3476, %v3522
      %v3539 = vadd.f32 %v3477, %v3523
      %v3540 = vadd.f32 %v3478, %v3524
      %v3541 = vadd.f32 %v3479, %v3525
      %v3542 = vadd.f32 %v3480, %v3526
      %v3543 = vadd.f32 %v3481, %v3527
      %v3544 = vadd.f32 %v3482, %v3528
      %v3545 = vadd.f32 %v3483, %v3529
      %v3546 = vadd.f32 %v3484, %v3530
      %v3547 = vadd.f32 %v3485, %v3531
      %v3548 = vadd.f32 %v3486, %v3532
      %v3549 = vadd.f32 %v3487, %v3533
      %v3550 = vadd.f32 %v3488, %v3534
      %v3551 = vadd.f32 %v3489, %v3535
      %s3552 = scalar_lea.vmem %s138, 103
      %v3553 = vld [vmem:[%s3552] ss:$8 sm:$0x3]
      %s3554 = scalar_lea.vmem %s1, 7040
      %v3555 = vld [vmem:[%s3554] sm:$0xff]
      %v3556 = vld [vmem:[%s3554 + $0x8] sm:$0xff]
      %v3557 = vld [vmem:[%s3554 + $0x10] sm:$0xff]
      %v3558 = vld [vmem:[%s3554 + $0x18] sm:$0xff]
      %v3559 = vld [vmem:[%s3554 + $0x20] sm:$0xff]
      %v3560 = vld [vmem:[%s3554 + $0x28] sm:$0xff]
      %v3561 = vld [vmem:[%s3554 + $0x30] sm:$0xff]
      %v3562 = vld [vmem:[%s3554 + $0x38] sm:$0xff]
      %v3563 = vld [vmem:[%s3554 + $0x40] sm:$0xff]
      %v3564 = vld [vmem:[%s3554 + $0x48] sm:$0xff]
      %v3565 = vld [vmem:[%s3554 + $0x50] sm:$0xff]
      %v3566 = vld [vmem:[%s3554 + $0x58] sm:$0xff]
      %v3567 = vld [vmem:[%s3554 + $0x60] sm:$0xff]
      %v3568 = vld [vmem:[%s3554 + $0x68] sm:$0xff]
      %v3569 = vld [vmem:[%s3554 + $0x70] sm:$0xff]
      %v3570 = vld [vmem:[%s3554 + $0x78] sm:$0xff]
      %v3572 = vlaneseq
      %v3573 = vshrl.u32 %v3572, 7
      %v3574 = vsub.s32 0, %v3573
      %v3575 = vrot.slane %v3553, %v3574
      %v3576 = vlaneseq
      %v3577 = vshrl.u32 %v3576, 7
      %v3578 = vsub.s32 1, %v3577
      %v3579 = vrot.slane %v3553, %v3578
      %v3582 = vmul.f32 %v3555, %v3575
      %v3583 = vmul.f32 %v3556, %v3579
      %v3584 = vmul.f32 %v3557, %v3575
      %v3585 = vmul.f32 %v3558, %v3579
      %v3586 = vmul.f32 %v3559, %v3575
      %v3587 = vmul.f32 %v3560, %v3579
      %v3588 = vmul.f32 %v3561, %v3575
      %v3589 = vmul.f32 %v3562, %v3579
      %v3590 = vmul.f32 %v3563, %v3575
      %v3591 = vmul.f32 %v3564, %v3579
      %v3592 = vmul.f32 %v3565, %v3575
      %v3593 = vmul.f32 %v3566, %v3579
      %v3594 = vmul.f32 %v3567, %v3575
      %v3595 = vmul.f32 %v3568, %v3579
      %v3596 = vmul.f32 %v3569, %v3575
      %v3597 = vmul.f32 %v3570, %v3579
      %v3598 = vadd.f32 %v3536, %v3582
      %v3599 = vadd.f32 %v3537, %v3583
      %v3600 = vadd.f32 %v3538, %v3584
      %v3601 = vadd.f32 %v3539, %v3585
      %v3602 = vadd.f32 %v3540, %v3586
      %v3603 = vadd.f32 %v3541, %v3587
      %v3604 = vadd.f32 %v3542, %v3588
      %v3605 = vadd.f32 %v3543, %v3589
      %v3606 = vadd.f32 %v3544, %v3590
      %v3607 = vadd.f32 %v3545, %v3591
      %v3608 = vadd.f32 %v3546, %v3592
      %v3609 = vadd.f32 %v3547, %v3593
      %v3610 = vadd.f32 %v3548, %v3594
      %v3611 = vadd.f32 %v3549, %v3595
      %v3612 = vadd.f32 %v3550, %v3596
      %v3613 = vadd.f32 %v3551, %v3597
      %s3614 = scalar_lea.vmem %s138, 112
      %v3615 = vld [vmem:[%s3614] ss:$8 sm:$0x3]
      %s3616 = scalar_lea.vmem %s1, 7168
      %v3617 = vld [vmem:[%s3616] sm:$0xff]
      %v3618 = vld [vmem:[%s3616 + $0x8] sm:$0xff]
      %v3619 = vld [vmem:[%s3616 + $0x10] sm:$0xff]
      %v3620 = vld [vmem:[%s3616 + $0x18] sm:$0xff]
      %v3621 = vld [vmem:[%s3616 + $0x20] sm:$0xff]
      %v3622 = vld [vmem:[%s3616 + $0x28] sm:$0xff]
      %v3623 = vld [vmem:[%s3616 + $0x30] sm:$0xff]
      %v3624 = vld [vmem:[%s3616 + $0x38] sm:$0xff]
      %v3625 = vld [vmem:[%s3616 + $0x40] sm:$0xff]
      %v3626 = vld [vmem:[%s3616 + $0x48] sm:$0xff]
      %v3627 = vld [vmem:[%s3616 + $0x50] sm:$0xff]
      %v3628 = vld [vmem:[%s3616 + $0x58] sm:$0xff]
      %v3629 = vld [vmem:[%s3616 + $0x60] sm:$0xff]
      %v3630 = vld [vmem:[%s3616 + $0x68] sm:$0xff]
      %v3631 = vld [vmem:[%s3616 + $0x70] sm:$0xff]
      %v3632 = vld [vmem:[%s3616 + $0x78] sm:$0xff]
      %v3634 = vlaneseq
      %v3635 = vshrl.u32 %v3634, 7
      %v3636 = vsub.s32 0, %v3635
      %v3637 = vrot.slane %v3615, %v3636
      %v3638 = vlaneseq
      %v3639 = vshrl.u32 %v3638, 7
      %v3640 = vsub.s32 1, %v3639
      %v3641 = vrot.slane %v3615, %v3640
      %v3644 = vmul.f32 %v3617, %v3637
      %v3645 = vmul.f32 %v3618, %v3641
      %v3646 = vmul.f32 %v3619, %v3637
      %v3647 = vmul.f32 %v3620, %v3641
      %v3648 = vmul.f32 %v3621, %v3637
      %v3649 = vmul.f32 %v3622, %v3641
      %v3650 = vmul.f32 %v3623, %v3637
      %v3651 = vmul.f32 %v3624, %v3641
      %v3652 = vmul.f32 %v3625, %v3637
      %v3653 = vmul.f32 %v3626, %v3641
      %v3654 = vmul.f32 %v3627, %v3637
      %v3655 = vmul.f32 %v3628, %v3641
      %v3656 = vmul.f32 %v3629, %v3637
      %v3657 = vmul.f32 %v3630, %v3641
      %v3658 = vmul.f32 %v3631, %v3637
      %v3659 = vmul.f32 %v3632, %v3641
      %v3660 = vadd.f32 %v3598, %v3644
      %v3661 = vadd.f32 %v3599, %v3645
      %v3662 = vadd.f32 %v3600, %v3646
      %v3663 = vadd.f32 %v3601, %v3647
      %v3664 = vadd.f32 %v3602, %v3648
      %v3665 = vadd.f32 %v3603, %v3649
      %v3666 = vadd.f32 %v3604, %v3650
      %v3667 = vadd.f32 %v3605, %v3651
      %v3668 = vadd.f32 %v3606, %v3652
      %v3669 = vadd.f32 %v3607, %v3653
      %v3670 = vadd.f32 %v3608, %v3654
      %v3671 = vadd.f32 %v3609, %v3655
      %v3672 = vadd.f32 %v3610, %v3656
      %v3673 = vadd.f32 %v3611, %v3657
      %v3674 = vadd.f32 %v3612, %v3658
      %v3675 = vadd.f32 %v3613, %v3659
      %s3676 = scalar_lea.vmem %s138, 113
      %v3677 = vld [vmem:[%s3676] ss:$8 sm:$0x3]
      %s3678 = scalar_lea.vmem %s1, 7296
      %v3679 = vld [vmem:[%s3678] sm:$0xff]
      %v3680 = vld [vmem:[%s3678 + $0x8] sm:$0xff]
      %v3681 = vld [vmem:[%s3678 + $0x10] sm:$0xff]
      %v3682 = vld [vmem:[%s3678 + $0x18] sm:$0xff]
      %v3683 = vld [vmem:[%s3678 + $0x20] sm:$0xff]
      %v3684 = vld [vmem:[%s3678 + $0x28] sm:$0xff]
      %v3685 = vld [vmem:[%s3678 + $0x30] sm:$0xff]
      %v3686 = vld [vmem:[%s3678 + $0x38] sm:$0xff]
      %v3687 = vld [vmem:[%s3678 + $0x40] sm:$0xff]
      %v3688 = vld [vmem:[%s3678 + $0x48] sm:$0xff]
      %v3689 = vld [vmem:[%s3678 + $0x50] sm:$0xff]
      %v3690 = vld [vmem:[%s3678 + $0x58] sm:$0xff]
      %v3691 = vld [vmem:[%s3678 + $0x60] sm:$0xff]
      %v3692 = vld [vmem:[%s3678 + $0x68] sm:$0xff]
      %v3693 = vld [vmem:[%s3678 + $0x70] sm:$0xff]
      %v3694 = vld [vmem:[%s3678 + $0x78] sm:$0xff]
      %v3696 = vlaneseq
      %v3697 = vshrl.u32 %v3696, 7
      %v3698 = vsub.s32 0, %v3697
      %v3699 = vrot.slane %v3677, %v3698
      %v3700 = vlaneseq
      %v3701 = vshrl.u32 %v3700, 7
      %v3702 = vsub.s32 1, %v3701
      %v3703 = vrot.slane %v3677, %v3702
      %v3706 = vmul.f32 %v3679, %v3699
      %v3707 = vmul.f32 %v3680, %v3703
      %v3708 = vmul.f32 %v3681, %v3699
      %v3709 = vmul.f32 %v3682, %v3703
      %v3710 = vmul.f32 %v3683, %v3699
      %v3711 = vmul.f32 %v3684, %v3703
      %v3712 = vmul.f32 %v3685, %v3699
      %v3713 = vmul.f32 %v3686, %v3703
      %v3714 = vmul.f32 %v3687, %v3699
      %v3715 = vmul.f32 %v3688, %v3703
      %v3716 = vmul.f32 %v3689, %v3699
      %v3717 = vmul.f32 %v3690, %v3703
      %v3718 = vmul.f32 %v3691, %v3699
      %v3719 = vmul.f32 %v3692, %v3703
      %v3720 = vmul.f32 %v3693, %v3699
      %v3721 = vmul.f32 %v3694, %v3703
      %v3722 = vadd.f32 %v3660, %v3706
      %v3723 = vadd.f32 %v3661, %v3707
      %v3724 = vadd.f32 %v3662, %v3708
      %v3725 = vadd.f32 %v3663, %v3709
      %v3726 = vadd.f32 %v3664, %v3710
      %v3727 = vadd.f32 %v3665, %v3711
      %v3728 = vadd.f32 %v3666, %v3712
      %v3729 = vadd.f32 %v3667, %v3713
      %v3730 = vadd.f32 %v3668, %v3714
      %v3731 = vadd.f32 %v3669, %v3715
      %v3732 = vadd.f32 %v3670, %v3716
      %v3733 = vadd.f32 %v3671, %v3717
      %v3734 = vadd.f32 %v3672, %v3718
      %v3735 = vadd.f32 %v3673, %v3719
      %v3736 = vadd.f32 %v3674, %v3720
      %v3737 = vadd.f32 %v3675, %v3721
      %s3738 = scalar_lea.vmem %s138, 114
      %v3739 = vld [vmem:[%s3738] ss:$8 sm:$0x3]
      %s3740 = scalar_lea.vmem %s1, 7424
      %v3741 = vld [vmem:[%s3740] sm:$0xff]
      %v3742 = vld [vmem:[%s3740 + $0x8] sm:$0xff]
      %v3743 = vld [vmem:[%s3740 + $0x10] sm:$0xff]
      %v3744 = vld [vmem:[%s3740 + $0x18] sm:$0xff]
      %v3745 = vld [vmem:[%s3740 + $0x20] sm:$0xff]
      %v3746 = vld [vmem:[%s3740 + $0x28] sm:$0xff]
      %v3747 = vld [vmem:[%s3740 + $0x30] sm:$0xff]
      %v3748 = vld [vmem:[%s3740 + $0x38] sm:$0xff]
      %v3749 = vld [vmem:[%s3740 + $0x40] sm:$0xff]
      %v3750 = vld [vmem:[%s3740 + $0x48] sm:$0xff]
      %v3751 = vld [vmem:[%s3740 + $0x50] sm:$0xff]
      %v3752 = vld [vmem:[%s3740 + $0x58] sm:$0xff]
      %v3753 = vld [vmem:[%s3740 + $0x60] sm:$0xff]
      %v3754 = vld [vmem:[%s3740 + $0x68] sm:$0xff]
      %v3755 = vld [vmem:[%s3740 + $0x70] sm:$0xff]
      %v3756 = vld [vmem:[%s3740 + $0x78] sm:$0xff]
      %v3758 = vlaneseq
      %v3759 = vshrl.u32 %v3758, 7
      %v3760 = vsub.s32 0, %v3759
      %v3761 = vrot.slane %v3739, %v3760
      %v3762 = vlaneseq
      %v3763 = vshrl.u32 %v3762, 7
      %v3764 = vsub.s32 1, %v3763
      %v3765 = vrot.slane %v3739, %v3764
      %v3768 = vmul.f32 %v3741, %v3761
      %v3769 = vmul.f32 %v3742, %v3765
      %v3770 = vmul.f32 %v3743, %v3761
      %v3771 = vmul.f32 %v3744, %v3765
      %v3772 = vmul.f32 %v3745, %v3761
      %v3773 = vmul.f32 %v3746, %v3765
      %v3774 = vmul.f32 %v3747, %v3761
      %v3775 = vmul.f32 %v3748, %v3765
      %v3776 = vmul.f32 %v3749, %v3761
      %v3777 = vmul.f32 %v3750, %v3765
      %v3778 = vmul.f32 %v3751, %v3761
      %v3779 = vmul.f32 %v3752, %v3765
      %v3780 = vmul.f32 %v3753, %v3761
      %v3781 = vmul.f32 %v3754, %v3765
      %v3782 = vmul.f32 %v3755, %v3761
      %v3783 = vmul.f32 %v3756, %v3765
      %v3784 = vadd.f32 %v3722, %v3768
      %v3785 = vadd.f32 %v3723, %v3769
      %v3786 = vadd.f32 %v3724, %v3770
      %v3787 = vadd.f32 %v3725, %v3771
      %v3788 = vadd.f32 %v3726, %v3772
      %v3789 = vadd.f32 %v3727, %v3773
      %v3790 = vadd.f32 %v3728, %v3774
      %v3791 = vadd.f32 %v3729, %v3775
      %v3792 = vadd.f32 %v3730, %v3776
      %v3793 = vadd.f32 %v3731, %v3777
      %v3794 = vadd.f32 %v3732, %v3778
      %v3795 = vadd.f32 %v3733, %v3779
      %v3796 = vadd.f32 %v3734, %v3780
      %v3797 = vadd.f32 %v3735, %v3781
      %v3798 = vadd.f32 %v3736, %v3782
      %v3799 = vadd.f32 %v3737, %v3783
      %s3800 = scalar_lea.vmem %s138, 115
      %v3801 = vld [vmem:[%s3800] ss:$8 sm:$0x3]
      %s3802 = scalar_lea.vmem %s1, 7552
      %v3803 = vld [vmem:[%s3802] sm:$0xff]
      %v3804 = vld [vmem:[%s3802 + $0x8] sm:$0xff]
      %v3805 = vld [vmem:[%s3802 + $0x10] sm:$0xff]
      %v3806 = vld [vmem:[%s3802 + $0x18] sm:$0xff]
      %v3807 = vld [vmem:[%s3802 + $0x20] sm:$0xff]
      %v3808 = vld [vmem:[%s3802 + $0x28] sm:$0xff]
      %v3809 = vld [vmem:[%s3802 + $0x30] sm:$0xff]
      %v3810 = vld [vmem:[%s3802 + $0x38] sm:$0xff]
      %v3811 = vld [vmem:[%s3802 + $0x40] sm:$0xff]
      %v3812 = vld [vmem:[%s3802 + $0x48] sm:$0xff]
      %v3813 = vld [vmem:[%s3802 + $0x50] sm:$0xff]
      %v3814 = vld [vmem:[%s3802 + $0x58] sm:$0xff]
      %v3815 = vld [vmem:[%s3802 + $0x60] sm:$0xff]
      %v3816 = vld [vmem:[%s3802 + $0x68] sm:$0xff]
      %v3817 = vld [vmem:[%s3802 + $0x70] sm:$0xff]
      %v3818 = vld [vmem:[%s3802 + $0x78] sm:$0xff]
      %v3820 = vlaneseq
      %v3821 = vshrl.u32 %v3820, 7
      %v3822 = vsub.s32 0, %v3821
      %v3823 = vrot.slane %v3801, %v3822
      %v3824 = vlaneseq
      %v3825 = vshrl.u32 %v3824, 7
      %v3826 = vsub.s32 1, %v3825
      %v3827 = vrot.slane %v3801, %v3826
      %v3830 = vmul.f32 %v3803, %v3823
      %v3831 = vmul.f32 %v3804, %v3827
      %v3832 = vmul.f32 %v3805, %v3823
      %v3833 = vmul.f32 %v3806, %v3827
      %v3834 = vmul.f32 %v3807, %v3823
      %v3835 = vmul.f32 %v3808, %v3827
      %v3836 = vmul.f32 %v3809, %v3823
      %v3837 = vmul.f32 %v3810, %v3827
      %v3838 = vmul.f32 %v3811, %v3823
      %v3839 = vmul.f32 %v3812, %v3827
      %v3840 = vmul.f32 %v3813, %v3823
      %v3841 = vmul.f32 %v3814, %v3827
      %v3842 = vmul.f32 %v3815, %v3823
      %v3843 = vmul.f32 %v3816, %v3827
      %v3844 = vmul.f32 %v3817, %v3823
      %v3845 = vmul.f32 %v3818, %v3827
      %v3846 = vadd.f32 %v3784, %v3830
      %v3847 = vadd.f32 %v3785, %v3831
      %v3848 = vadd.f32 %v3786, %v3832
      %v3849 = vadd.f32 %v3787, %v3833
      %v3850 = vadd.f32 %v3788, %v3834
      %v3851 = vadd.f32 %v3789, %v3835
      %v3852 = vadd.f32 %v3790, %v3836
      %v3853 = vadd.f32 %v3791, %v3837
      %v3854 = vadd.f32 %v3792, %v3838
      %v3855 = vadd.f32 %v3793, %v3839
      %v3856 = vadd.f32 %v3794, %v3840
      %v3857 = vadd.f32 %v3795, %v3841
      %v3858 = vadd.f32 %v3796, %v3842
      %v3859 = vadd.f32 %v3797, %v3843
      %v3860 = vadd.f32 %v3798, %v3844
      %v3861 = vadd.f32 %v3799, %v3845
      %s3862 = scalar_lea.vmem %s138, 116
      %v3863 = vld [vmem:[%s3862] ss:$8 sm:$0x3]
      %s3864 = scalar_lea.vmem %s1, 7680
      %v3865 = vld [vmem:[%s3864] sm:$0xff]
      %v3866 = vld [vmem:[%s3864 + $0x8] sm:$0xff]
      %v3867 = vld [vmem:[%s3864 + $0x10] sm:$0xff]
      %v3868 = vld [vmem:[%s3864 + $0x18] sm:$0xff]
      %v3869 = vld [vmem:[%s3864 + $0x20] sm:$0xff]
      %v3870 = vld [vmem:[%s3864 + $0x28] sm:$0xff]
      %v3871 = vld [vmem:[%s3864 + $0x30] sm:$0xff]
      %v3872 = vld [vmem:[%s3864 + $0x38] sm:$0xff]
      %v3873 = vld [vmem:[%s3864 + $0x40] sm:$0xff]
      %v3874 = vld [vmem:[%s3864 + $0x48] sm:$0xff]
      %v3875 = vld [vmem:[%s3864 + $0x50] sm:$0xff]
      %v3876 = vld [vmem:[%s3864 + $0x58] sm:$0xff]
      %v3877 = vld [vmem:[%s3864 + $0x60] sm:$0xff]
      %v3878 = vld [vmem:[%s3864 + $0x68] sm:$0xff]
      %v3879 = vld [vmem:[%s3864 + $0x70] sm:$0xff]
      %v3880 = vld [vmem:[%s3864 + $0x78] sm:$0xff]
      %v3882 = vlaneseq
      %v3883 = vshrl.u32 %v3882, 7
      %v3884 = vsub.s32 0, %v3883
      %v3885 = vrot.slane %v3863, %v3884
      %v3886 = vlaneseq
      %v3887 = vshrl.u32 %v3886, 7
      %v3888 = vsub.s32 1, %v3887
      %v3889 = vrot.slane %v3863, %v3888
      %v3892 = vmul.f32 %v3865, %v3885
      %v3893 = vmul.f32 %v3866, %v3889
      %v3894 = vmul.f32 %v3867, %v3885
      %v3895 = vmul.f32 %v3868, %v3889
      %v3896 = vmul.f32 %v3869, %v3885
      %v3897 = vmul.f32 %v3870, %v3889
      %v3898 = vmul.f32 %v3871, %v3885
      %v3899 = vmul.f32 %v3872, %v3889
      %v3900 = vmul.f32 %v3873, %v3885
      %v3901 = vmul.f32 %v3874, %v3889
      %v3902 = vmul.f32 %v3875, %v3885
      %v3903 = vmul.f32 %v3876, %v3889
      %v3904 = vmul.f32 %v3877, %v3885
      %v3905 = vmul.f32 %v3878, %v3889
      %v3906 = vmul.f32 %v3879, %v3885
      %v3907 = vmul.f32 %v3880, %v3889
      %v3908 = vadd.f32 %v3846, %v3892
      %v3909 = vadd.f32 %v3847, %v3893
      %v3910 = vadd.f32 %v3848, %v3894
      %v3911 = vadd.f32 %v3849, %v3895
      %v3912 = vadd.f32 %v3850, %v3896
      %v3913 = vadd.f32 %v3851, %v3897
      %v3914 = vadd.f32 %v3852, %v3898
      %v3915 = vadd.f32 %v3853, %v3899
      %v3916 = vadd.f32 %v3854, %v3900
      %v3917 = vadd.f32 %v3855, %v3901
      %v3918 = vadd.f32 %v3856, %v3902
      %v3919 = vadd.f32 %v3857, %v3903
      %v3920 = vadd.f32 %v3858, %v3904
      %v3921 = vadd.f32 %v3859, %v3905
      %v3922 = vadd.f32 %v3860, %v3906
      %v3923 = vadd.f32 %v3861, %v3907
      %s3924 = scalar_lea.vmem %s138, 117
      %v3925 = vld [vmem:[%s3924] ss:$8 sm:$0x3]
      %s3926 = scalar_lea.vmem %s1, 7808
      %v3927 = vld [vmem:[%s3926] sm:$0xff]
      %v3928 = vld [vmem:[%s3926 + $0x8] sm:$0xff]
      %v3929 = vld [vmem:[%s3926 + $0x10] sm:$0xff]
      %v3930 = vld [vmem:[%s3926 + $0x18] sm:$0xff]
      %v3931 = vld [vmem:[%s3926 + $0x20] sm:$0xff]
      %v3932 = vld [vmem:[%s3926 + $0x28] sm:$0xff]
      %v3933 = vld [vmem:[%s3926 + $0x30] sm:$0xff]
      %v3934 = vld [vmem:[%s3926 + $0x38] sm:$0xff]
      %v3935 = vld [vmem:[%s3926 + $0x40] sm:$0xff]
      %v3936 = vld [vmem:[%s3926 + $0x48] sm:$0xff]
      %v3937 = vld [vmem:[%s3926 + $0x50] sm:$0xff]
      %v3938 = vld [vmem:[%s3926 + $0x58] sm:$0xff]
      %v3939 = vld [vmem:[%s3926 + $0x60] sm:$0xff]
      %v3940 = vld [vmem:[%s3926 + $0x68] sm:$0xff]
      %v3941 = vld [vmem:[%s3926 + $0x70] sm:$0xff]
      %v3942 = vld [vmem:[%s3926 + $0x78] sm:$0xff]
      %v3944 = vlaneseq
      %v3945 = vshrl.u32 %v3944, 7
      %v3946 = vsub.s32 0, %v3945
      %v3947 = vrot.slane %v3925, %v3946
      %v3948 = vlaneseq
      %v3949 = vshrl.u32 %v3948, 7
      %v3950 = vsub.s32 1, %v3949
      %v3951 = vrot.slane %v3925, %v3950
      %v3954 = vmul.f32 %v3927, %v3947
      %v3955 = vmul.f32 %v3928, %v3951
      %v3956 = vmul.f32 %v3929, %v3947
      %v3957 = vmul.f32 %v3930, %v3951
      %v3958 = vmul.f32 %v3931, %v3947
      %v3959 = vmul.f32 %v3932, %v3951
      %v3960 = vmul.f32 %v3933, %v3947
      %v3961 = vmul.f32 %v3934, %v3951
      %v3962 = vmul.f32 %v3935, %v3947
      %v3963 = vmul.f32 %v3936, %v3951
      %v3964 = vmul.f32 %v3937, %v3947
      %v3965 = vmul.f32 %v3938, %v3951
      %v3966 = vmul.f32 %v3939, %v3947
      %v3967 = vmul.f32 %v3940, %v3951
      %v3968 = vmul.f32 %v3941, %v3947
      %v3969 = vmul.f32 %v3942, %v3951
      %v3970 = vadd.f32 %v3908, %v3954
      %v3971 = vadd.f32 %v3909, %v3955
      %v3972 = vadd.f32 %v3910, %v3956
      %v3973 = vadd.f32 %v3911, %v3957
      %v3974 = vadd.f32 %v3912, %v3958
      %v3975 = vadd.f32 %v3913, %v3959
      %v3976 = vadd.f32 %v3914, %v3960
      %v3977 = vadd.f32 %v3915, %v3961
      %v3978 = vadd.f32 %v3916, %v3962
      %v3979 = vadd.f32 %v3917, %v3963
      %v3980 = vadd.f32 %v3918, %v3964
      %v3981 = vadd.f32 %v3919, %v3965
      %v3982 = vadd.f32 %v3920, %v3966
      %v3983 = vadd.f32 %v3921, %v3967
      %v3984 = vadd.f32 %v3922, %v3968
      %v3985 = vadd.f32 %v3923, %v3969
      %s3986 = scalar_lea.vmem %s138, 118
      %v3987 = vld [vmem:[%s3986] ss:$8 sm:$0x3]
      %s3988 = scalar_lea.vmem %s1, 7936
      %v3989 = vld [vmem:[%s3988] sm:$0xff]
      %v3990 = vld [vmem:[%s3988 + $0x8] sm:$0xff]
      %v3991 = vld [vmem:[%s3988 + $0x10] sm:$0xff]
      %v3992 = vld [vmem:[%s3988 + $0x18] sm:$0xff]
      %v3993 = vld [vmem:[%s3988 + $0x20] sm:$0xff]
      %v3994 = vld [vmem:[%s3988 + $0x28] sm:$0xff]
      %v3995 = vld [vmem:[%s3988 + $0x30] sm:$0xff]
      %v3996 = vld [vmem:[%s3988 + $0x38] sm:$0xff]
      %v3997 = vld [vmem:[%s3988 + $0x40] sm:$0xff]
      %v3998 = vld [vmem:[%s3988 + $0x48] sm:$0xff]
      %v3999 = vld [vmem:[%s3988 + $0x50] sm:$0xff]
      %v4000 = vld [vmem:[%s3988 + $0x58] sm:$0xff]
      %v4001 = vld [vmem:[%s3988 + $0x60] sm:$0xff]
      %v4002 = vld [vmem:[%s3988 + $0x68] sm:$0xff]
      %v4003 = vld [vmem:[%s3988 + $0x70] sm:$0xff]
      %v4004 = vld [vmem:[%s3988 + $0x78] sm:$0xff]
      %v4006 = vlaneseq
      %v4007 = vshrl.u32 %v4006, 7
      %v4008 = vsub.s32 0, %v4007
      %v4009 = vrot.slane %v3987, %v4008
      %v4010 = vlaneseq
      %v4011 = vshrl.u32 %v4010, 7
      %v4012 = vsub.s32 1, %v4011
      %v4013 = vrot.slane %v3987, %v4012
      %v4016 = vmul.f32 %v3989, %v4009
      %v4017 = vmul.f32 %v3990, %v4013
      %v4018 = vmul.f32 %v3991, %v4009
      %v4019 = vmul.f32 %v3992, %v4013
      %v4020 = vmul.f32 %v3993, %v4009
      %v4021 = vmul.f32 %v3994, %v4013
      %v4022 = vmul.f32 %v3995, %v4009
      %v4023 = vmul.f32 %v3996, %v4013
      %v4024 = vmul.f32 %v3997, %v4009
      %v4025 = vmul.f32 %v3998, %v4013
      %v4026 = vmul.f32 %v3999, %v4009
      %v4027 = vmul.f32 %v4000, %v4013
      %v4028 = vmul.f32 %v4001, %v4009
      %v4029 = vmul.f32 %v4002, %v4013
      %v4030 = vmul.f32 %v4003, %v4009
      %v4031 = vmul.f32 %v4004, %v4013
      %v4032 = vadd.f32 %v3970, %v4016
      %v4033 = vadd.f32 %v3971, %v4017
      %v4034 = vadd.f32 %v3972, %v4018
      %v4035 = vadd.f32 %v3973, %v4019
      %v4036 = vadd.f32 %v3974, %v4020
      %v4037 = vadd.f32 %v3975, %v4021
      %v4038 = vadd.f32 %v3976, %v4022
      %v4039 = vadd.f32 %v3977, %v4023
      %v4040 = vadd.f32 %v3978, %v4024
      %v4041 = vadd.f32 %v3979, %v4025
      %v4042 = vadd.f32 %v3980, %v4026
      %v4043 = vadd.f32 %v3981, %v4027
      %v4044 = vadd.f32 %v3982, %v4028
      %v4045 = vadd.f32 %v3983, %v4029
      %v4046 = vadd.f32 %v3984, %v4030
      %v4047 = vadd.f32 %v3985, %v4031
      %s4048 = scalar_lea.vmem %s138, 119
      %v4049 = vld [vmem:[%s4048] ss:$8 sm:$0x3]
      %s4050 = scalar_lea.vmem %s1, 8064
      %v4051 = vld [vmem:[%s4050] sm:$0xff]
      %v4052 = vld [vmem:[%s4050 + $0x8] sm:$0xff]
      %v4053 = vld [vmem:[%s4050 + $0x10] sm:$0xff]
      %v4054 = vld [vmem:[%s4050 + $0x18] sm:$0xff]
      %v4055 = vld [vmem:[%s4050 + $0x20] sm:$0xff]
      %v4056 = vld [vmem:[%s4050 + $0x28] sm:$0xff]
      %v4057 = vld [vmem:[%s4050 + $0x30] sm:$0xff]
      %v4058 = vld [vmem:[%s4050 + $0x38] sm:$0xff]
      %v4059 = vld [vmem:[%s4050 + $0x40] sm:$0xff]
      %v4060 = vld [vmem:[%s4050 + $0x48] sm:$0xff]
      %v4061 = vld [vmem:[%s4050 + $0x50] sm:$0xff]
      %v4062 = vld [vmem:[%s4050 + $0x58] sm:$0xff]
      %v4063 = vld [vmem:[%s4050 + $0x60] sm:$0xff]
      %v4064 = vld [vmem:[%s4050 + $0x68] sm:$0xff]
      %v4065 = vld [vmem:[%s4050 + $0x70] sm:$0xff]
      %v4066 = vld [vmem:[%s4050 + $0x78] sm:$0xff]
      %v4068 = vlaneseq
      %v4069 = vshrl.u32 %v4068, 7
      %v4070 = vsub.s32 0, %v4069
      %v4071 = vrot.slane %v4049, %v4070
      %v4072 = vlaneseq
      %v4073 = vshrl.u32 %v4072, 7
      %v4074 = vsub.s32 1, %v4073
      %v4075 = vrot.slane %v4049, %v4074
      %v4078 = vmul.f32 %v4051, %v4071
      %v4079 = vmul.f32 %v4052, %v4075
      %v4080 = vmul.f32 %v4053, %v4071
      %v4081 = vmul.f32 %v4054, %v4075
      %v4082 = vmul.f32 %v4055, %v4071
      %v4083 = vmul.f32 %v4056, %v4075
      %v4084 = vmul.f32 %v4057, %v4071
      %v4085 = vmul.f32 %v4058, %v4075
      %v4086 = vmul.f32 %v4059, %v4071
      %v4087 = vmul.f32 %v4060, %v4075
      %v4088 = vmul.f32 %v4061, %v4071
      %v4089 = vmul.f32 %v4062, %v4075
      %v4090 = vmul.f32 %v4063, %v4071
      %v4091 = vmul.f32 %v4064, %v4075
      %v4092 = vmul.f32 %v4065, %v4071
      %v4093 = vmul.f32 %v4066, %v4075
      %v4094 = vadd.f32 %v4032, %v4078
      %v4095 = vadd.f32 %v4033, %v4079
      %v4096 = vadd.f32 %v4034, %v4080
      %v4097 = vadd.f32 %v4035, %v4081
      %v4098 = vadd.f32 %v4036, %v4082
      %v4099 = vadd.f32 %v4037, %v4083
      %v4100 = vadd.f32 %v4038, %v4084
      %v4101 = vadd.f32 %v4039, %v4085
      %v4102 = vadd.f32 %v4040, %v4086
      %v4103 = vadd.f32 %v4041, %v4087
      %v4104 = vadd.f32 %v4042, %v4088
      %v4105 = vadd.f32 %v4043, %v4089
      %v4106 = vadd.f32 %v4044, %v4090
      %v4107 = vadd.f32 %v4045, %v4091
      %v4108 = vadd.f32 %v4046, %v4092
      %v4109 = vadd.f32 %v4047, %v4093
      %4110 = vst [vmem:[%s143] sm:$0xff] %v4094
      %vm4111 = vcmask 523264
      %4112 = vst.msk [vmem:[%s143 + $0x8] sm:$0xff] %vm4111, %v4095
      %4113 = vst [vmem:[%s143 + $0x10] sm:$0xff] %v4096
      %4114 = vst.msk [vmem:[%s143 + $0x18] sm:$0xff] %vm4111, %v4097
      %4115 = vst [vmem:[%s143 + $0x20] sm:$0xff] %v4098
      %4116 = vst.msk [vmem:[%s143 + $0x28] sm:$0xff] %vm4111, %v4099
      %4117 = vst [vmem:[%s143 + $0x30] sm:$0xff] %v4100
      %4118 = vst.msk [vmem:[%s143 + $0x38] sm:$0xff] %vm4111, %v4101
      %4119 = vst [vmem:[%s143 + $0x40] sm:$0xff] %v4102
      %4120 = vst.msk [vmem:[%s143 + $0x48] sm:$0xff] %vm4111, %v4103
      %4121 = vst [vmem:[%s143 + $0x50] sm:$0xff] %v4104
      %4122 = vst.msk [vmem:[%s143 + $0x58] sm:$0xff] %vm4111, %v4105
      %4123 = vst [vmem:[%s143 + $0x60] sm:$0xff] %v4106
      %4124 = vst.msk [vmem:[%s143 + $0x68] sm:$0xff] %vm4111, %v4107
      %4125 = vst [vmem:[%s143 + $0x70] sm:$0xff] %v4108
      %4126 = vst.msk [vmem:[%s143 + $0x78] sm:$0xff] %vm4111, %v4109
      %p4127 = scmp.lt.s32.totalorder %s13, 1
      %s4128 = scalar_select %p4127, %s13, 1
      %s4129 = smul.addr %s4128, 16
      %s4130 = smul.addr %s4129, 8
      %s4131 = scalar_lea.vmem %s2, %s4130
      // Predicated region
      $region29: #{fno3d_forward.11} parent=27 // pred_check
        %p4132 = pneg %p78
      $region30: #{fno3d_forward.11} parent=27 // pred_check_branch
        %4134 = sbr.rel (%p4132) target = $region32
      $region31: #{fno3d_forward.11} parent=27 // pred_region
        _
      $region32: #{fno3d_forward.11} parent=27 // pred_fallthru
        _
    $region28: #{fno3d_forward.11} parent=5 // pred_fallthru
      _
    %p4135 = scmp.le.s32.totalorder 2, %s8
    // Predicated region
    $region33: #{fno3d_forward.11} parent=5 // pred_check
      %p4136 = pneg %p4135
    $region34: #{fno3d_forward.11} parent=5 // pred_check_branch
      %4138 = sbr.rel (%p4136) target = $region36
    $region35: #{fno3d_forward.11} parent=5 // pred_region
      %s4139 = ssub.s32 %s8, 2
      // Predicated region
      $region37: #{fno3d_forward.11} parent=35 // pred_check
        %p4140 = pneg %p84
      $region38: #{fno3d_forward.11} parent=35 // pred_check_branch
        %4142 = sbr.rel (%p4140) target = $region40
      $region39: #{fno3d_forward.11} parent=35 // pred_region
        %p4143 = scmp.lt.s32.totalorder %s14, 1
        %s4144 = scalar_select %p4143, %s14, 1
        %s4145 = smul.addr %s4144, 16
        %s4146 = smul.addr %s4145, 8
        %s4147 = scalar_lea.vmem %s2, %s4146
      $region40: #{fno3d_forward.11} parent=35 // pred_fallthru
        _
    $region36: #{fno3d_forward.11} parent=5 // pred_fallthru
      _
  $region6: #{fno3d_forward.11} parent=0 // loop_footer
    %s12 = sadd.s32 1, %s8
  $region7: #{fno3d_forward.11} parent=0 // loop_footer_branch
    %7 = sbr.rel target = $region3
  $region8: #{fno3d_forward.11} parent=0 // loop_exit
    _

// kernel: reverse.8
$region0: #{reverse.8}
  #allocation0 [shape = 's32[1]{0}', space=sflag, size = 0x4, scoped, tag = 'scoped memory for reverse.8']
  %s0 = inlined_call_operand.vmem [shape: f32[32,2,9,9,4], index: 0, kind: input, shape index: {}]
  %s1 = inlined_call_operand.vmem [shape: f32[32,2,9,9,4], index: 1, kind: output, shape index: {}]
  %s2 = scalar_lea.vmem %s0, 432
  %v3 = vld [vmem:[%s2] sm:$0xff]
  %4 = vst [vmem:[%s1] sm:$0xff] %v3
  %s5 = scalar_lea.vmem %s0, 1008
  %v6 = vld [vmem:[%s5] sm:$0xff]
  %s7 = scalar_lea.vmem %s1, 576
  %8 = vst [vmem:[%s7] sm:$0xff] %v6
  %s9 = scalar_lea.vmem %s0, 288
  %v10 = vld [vmem:[%s9] sm:$0xff]
  %s11 = scalar_lea.vmem %s1, 144
  %12 = vst [vmem:[%s11] sm:$0xff] %v10
  %s13 = scalar_lea.vmem %s0, 864
  %v14 = vld [vmem:[%s13] sm:$0xff]
  %s15 = scalar_lea.vmem %s1, 720
  %16 = vst [vmem:[%s15] sm:$0xff] %v14
  %s17 = scalar_lea.vmem %s0, 144
  %v18 = vld [vmem:[%s17] sm:$0xff]
  %s19 = scalar_lea.vmem %s1, 288
  %20 = vst [vmem:[%s19] sm:$0xff] %v18
  %s21 = scalar_lea.vmem %s0, 720
  %v22 = vld [vmem:[%s21] sm:$0xff]
  %s23 = scalar_lea.vmem %s1, 864
  %24 = vst [vmem:[%s23] sm:$0xff] %v22
  %v25 = vld [vmem:[%s0] sm:$0xff]
  %s26 = scalar_lea.vmem %s1, 432
  %27 = vst [vmem:[%s26] sm:$0xff] %v25
  %s28 = scalar_lea.vmem %s0, 576
  %v29 = vld [vmem:[%s28] sm:$0xff]
  %s30 = scalar_lea.vmem %s1, 1008
  %31 = vst [vmem:[%s30] sm:$0xff] %v29
  %s32 = scalar_lea.vmem %s0, 448
  %v33 = vld [vmem:[%s32] sm:$0xff]
  %s34 = scalar_lea.vmem %s1, 16
  %35 = vst [vmem:[%s34] sm:$0xff] %v33
  %s36 = scalar_lea.vmem %s0, 1024
  %v37 = vld [vmem:[%s36] sm:$0xff]
  %s38 = scalar_lea.vmem %s1, 592
  %39 = vst [vmem:[%s38] sm:$0xff] %v37
  %s40 = scalar_lea.vmem %s0, 304
  %v41 = vld [vmem:[%s40] sm:$0xff]
  %s42 = scalar_lea.vmem %s1, 160
  %43 = vst [vmem:[%s42] sm:$0xff] %v41
  %s44 = scalar_lea.vmem %s0, 880
  %v45 = vld [vmem:[%s44] sm:$0xff]
  %s46 = scalar_lea.vmem %s1, 736
  %47 = vst [vmem:[%s46] sm:$0xff] %v45
  %s48 = scalar_lea.vmem %s0, 160
  %v49 = vld [vmem:[%s48] sm:$0xff]
  %s50 = scalar_lea.vmem %s1, 304
  %51 = vst [vmem:[%s50] sm:$0xff] %v49
  %s52 = scalar_lea.vmem %s0, 736
  %v53 = vld [vmem:[%s52] sm:$0xff]
  %s54 = scalar_lea.vmem %s1, 880
  %55 = vst [vmem:[%s54] sm:$0xff] %v53
  %s56 = scalar_lea.vmem %s0, 16
  %v57 = vld [vmem:[%s56] sm:$0xff]
  %s58 = scalar_lea.vmem %s1, 448
  %59 = vst [vmem:[%s58] sm:$0xff] %v57
  %s60 = scalar_lea.vmem %s0, 592
  %v61 = vld [vmem:[%s60] sm:$0xff]
  %s62 = scalar_lea.vmem %s1, 1024
  %63 = vst [vmem:[%s62] sm:$0xff] %v61
  %s64 = scalar_lea.vmem %s0, 464
  %v65 = vld [vmem:[%s64] sm:$0xff]
  %s66 = scalar_lea.vmem %s1, 32
  %67 = vst [vmem:[%s66] sm:$0xff] %v65
  %s68 = scalar_lea.vmem %s0, 1040
  %v69 = vld [vmem:[%s68] sm:$0xff]
  %s70 = scalar_lea.vmem %s1, 608
  %71 = vst [vmem:[%s70] sm:$0xff] %v69
  %s72 = scalar_lea.vmem %s0, 320
  %v73 = vld [vmem:[%s72] sm:$0xff]
  %s74 = scalar_lea.vmem %s1, 176
  %75 = vst [vmem:[%s74] sm:$0xff] %v73
  %s76 = scalar_lea.vmem %s0, 896
  %v77 = vld [vmem:[%s76] sm:$0xff]
  %s78 = scalar_lea.vmem %s1, 752
  %79 = vst [vmem:[%s78] sm:$0xff] %v77
  %s80 = scalar_lea.vmem %s0, 176
  %v81 = vld [vmem:[%s80] sm:$0xff]
  %s82 = scalar_lea.vmem %s1, 320
  %83 = vst [vmem:[%s82] sm:$0xff] %v81
  %s84 = scalar_lea.vmem %s0, 752
  %v85 = vld [vmem:[%s84] sm:$0xff]
  %s86 = scalar_lea.vmem %s1, 896
  %87 = vst [vmem:[%s86] sm:$0xff] %v85
  %s88 = scalar_lea.vmem %s0, 32
  %v89 = vld [vmem:[%s88] sm:$0xff]
  %s90 = scalar_lea.vmem %s1, 464
  %91 = vst [vmem:[%s90] sm:$0xff] %v89
  %s92 = scalar_lea.vmem %s0, 608
  %v93 = vld [vmem:[%s92] sm:$0xff]
  %s94 = scalar_lea.vmem %s1, 1040
  %95 = vst [vmem:[%s94] sm:$0xff] %v93
  %s96 = scalar_lea.vmem %s0, 480
  %v97 = vld [vmem:[%s96] sm:$0xff]
  %s98 = scalar_lea.vmem %s1, 48
  %99 = vst [vmem:[%s98] sm:$0xff] %v97
  %s100 = scalar_lea.vmem %s0, 1056
  %v101 = vld [vmem:[%s100] sm:$0xff]
  %s102 = scalar_lea.vmem %s1, 624
  %103 = vst [vmem:[%s102] sm:$0xff] %v101
  %s104 = scalar_lea.vmem %s0, 336
  %v105 = vld [vmem:[%s104] sm:$0xff]
  %s106 = scalar_lea.vmem %s1, 192
  %107 = vst [vmem:[%s106] sm:$0xff] %v105
  %s108 = scalar_lea.vmem %s0, 912
  %v109 = vld [vmem:[%s108] sm:$0xff]
  %s110 = scalar_lea.vmem %s1, 768
  %111 = vst [vmem:[%s110] sm:$0xff] %v109
  %s112 = scalar_lea.vmem %s0, 192
  %v113 = vld [vmem:[%s112] sm:$0xff]
  %s114 = scalar_lea.vmem %s1, 336
  %115 = vst [vmem:[%s114] sm:$0xff] %v113
  %s116 = scalar_lea.vmem %s0, 768
  %v117 = vld [vmem:[%s116] sm:$0xff]
  %s118 = scalar_lea.vmem %s1, 912
  %119 = vst [vmem:[%s118] sm:$0xff] %v117
  %s120 = scalar_lea.vmem %s0, 48
  %v121 = vld [vmem:[%s120] sm:$0xff]
  %s122 = scalar_lea.vmem %s1, 480
  %123 = vst [vmem:[%s122] sm:$0xff] %v121
  %s124 = scalar_lea.vmem %s0, 624
  %v125 = vld [vmem:[%s124] sm:$0xff]
  %s126 = scalar_lea.vmem %s1, 1056
  %127 = vst [vmem:[%s126] sm:$0xff] %v125
  %s128 = scalar_lea.vmem %s0, 496
  %v129 = vld [vmem:[%s128] sm:$0xff]
  %s130 = scalar_lea.vmem %s1, 64
  %131 = vst [vmem:[%s130] sm:$0xff] %v129
  %s132 = scalar_lea.vmem %s0, 1072
  %v133 = vld [vmem:[%s132] sm:$0xff]
  %s134 = scalar_lea.vmem %s1, 640
  %135 = vst [vmem:[%s134] sm:$0xff] %v133
  %s136 = scalar_lea.vmem %s0, 352
  %v137 = vld [vmem:[%s136] sm:$0xff]
  %s138 = scalar_lea.vmem %s1, 208
  %139 = vst [vmem:[%s138] sm:$0xff] %v137
  %s140 = scalar_lea.vmem %s0, 928
  %v141 = vld [vmem:[%s140] sm:$0xff]
  %s142 = scalar_lea.vmem %s1, 784
  %143 = vst [vmem:[%s142] sm:$0xff] %v141
  %s144 = scalar_lea.vmem %s0, 208
  %v145 = vld [vmem:[%s144] sm:$0xff]
  %s146 = scalar_lea.vmem %s1, 352
  %147 = vst [vmem:[%s146] sm:$0xff] %v145
  %s148 = scalar_lea.vmem %s0, 784
  %v149 = vld [vmem:[%s148] sm:$0xff]
  %s150 = scalar_lea.vmem %s1, 928
  %151 = vst [vmem:[%s150] sm:$0xff] %v149
  %s152 = scalar_lea.vmem %s0, 64
  %v153 = vld [vmem:[%s152] sm:$0xff]
  %s154 = scalar_lea.vmem %s1, 496
  %155 = vst [vmem:[%s154] sm:$0xff] %v153
  %s156 = scalar_lea.vmem %s0, 640
  %v157 = vld [vmem:[%s156] sm:$0xff]
  %s158 = scalar_lea.vmem %s1, 1072
  %159 = vst [vmem:[%s158] sm:$0xff] %v157
  %s160 = scalar_lea.vmem %s0, 512
  %v161 = vld [vmem:[%s160] sm:$0xff]
  %s162 = scalar_lea.vmem %s1, 80
  %163 = vst [vmem:[%s162] sm:$0xff] %v161
  %s164 = scalar_lea.vmem %s0, 1088
  %v165 = vld [vmem:[%s164] sm:$0xff]
  %s166 = scalar_lea.vmem %s1, 656
  %167 = vst [vmem:[%s166] sm:$0xff] %v165
  %s168 = scalar_lea.vmem %s0, 368
  %v169 = vld [vmem:[%s168] sm:$0xff]
  %s170 = scalar_lea.vmem %s1, 224
  %171 = vst [vmem:[%s170] sm:$0xff] %v169
  %s172 = scalar_lea.vmem %s0, 944
  %v173 = vld [vmem:[%s172] sm:$0xff]
  %s174 = scalar_lea.vmem %s1, 800
  %175 = vst [vmem:[%s174] sm:$0xff] %v173
  %s176 = scalar_lea.vmem %s0, 224
  %v177 = vld [vmem:[%s176] sm:$0xff]
  %s178 = scalar_lea.vmem %s1, 368
  %179 = vst [vmem:[%s178] sm:$0xff] %v177
  %s180 = scalar_lea.vmem %s0, 800
  %v181 = vld [vmem:[%s180] sm:$0xff]
  %s182 = scalar_lea.vmem %s1, 944
  %183 = vst [vmem:[%s182] sm:$0xff] %v181
  %s184 = scalar_lea.vmem %s0, 80
  %v185 = vld [vmem:[%s184] sm:$0xff]
  %s186 = scalar_lea.vmem %s1, 512
  %187 = vst [vmem:[%s186] sm:$0xff] %v185
  %s188 = scalar_lea.vmem %s0, 656
  %v189 = vld [vmem:[%s188] sm:$0xff]
  %s190 = scalar_lea.vmem %s1, 1088
  %191 = vst [vmem:[%s190] sm:$0xff] %v189
  %s192 = scalar_lea.vmem %s0, 528
  %v193 = vld [vmem:[%s192] sm:$0xff]
  %s194 = scalar_lea.vmem %s1, 96
  %195 = vst [vmem:[%s194] sm:$0xff] %v193
  %s196 = scalar_lea.vmem %s0, 1104
  %v197 = vld [vmem:[%s196] sm:$0xff]
  %s198 = scalar_lea.vmem %s1, 672
  %199 = vst [vmem:[%s198] sm:$0xff] %v197
  %s200 = scalar_lea.vmem %s0, 384
  %v201 = vld [vmem:[%s200] sm:$0xff]
  %s202 = scalar_lea.vmem %s1, 240
  %203 = vst [vmem:[%s202] sm:$0xff] %v201
  %s204 = scalar_lea.vmem %s0, 960
  %v205 = vld [vmem:[%s204] sm:$0xff]
  %s206 = scalar_lea.vmem %s1, 816
  %207 = vst [vmem:[%s206] sm:$0xff] %v205
  %s208 = scalar_lea.vmem %s0, 240
  %v209 = vld [vmem:[%s208] sm:$0xff]
  %s210 = scalar_lea.vmem %s1, 384
  %211 = vst [vmem:[%s210] sm:$0xff] %v209
  %s212 = scalar_lea.vmem %s0, 816
  %v213 = vld [vmem:[%s212] sm:$0xff]
  %s214 = scalar_lea.vmem %s1, 960
  %215 = vst [vmem:[%s214] sm:$0xff] %v213
  %s216 = scalar_lea.vmem %s0, 96
  %v217 = vld [vmem:[%s216] sm:$0xff]
  %s218 = scalar_lea.vmem %s1, 528
  %219 = vst [vmem:[%s218] sm:$0xff] %v217
  %s220 = scalar_lea.vmem %s0, 672
  %v221 = vld [vmem:[%s220] sm:$0xff]
  %s222 = scalar_lea.vmem %s1, 1104
  %223 = vst [vmem:[%s222] sm:$0xff] %v221
  %s224 = scalar_lea.vmem %s0, 544
  %v225 = vld [vmem:[%s224] sm:$0xff]
  %s226 = scalar_lea.vmem %s1, 112
  %227 = vst [vmem:[%s226] sm:$0xff] %v225
  %s228 = scalar_lea.vmem %s0, 1120
  %v229 = vld [vmem:[%s228] sm:$0xff]
  %s230 = scalar_lea.vmem %s1, 688
  %231 = vst [vmem:[%s230] sm:$0xff] %v229
  %s232 = scalar_lea.vmem %s0, 400
  %v233 = vld [vmem:[%s232] sm:$0xff]
  %s234 = scalar_lea.vmem %s1, 256
  %235 = vst [vmem:[%s234] sm:$0xff] %v233
  %s236 = scalar_lea.vmem %s0, 976
  %v237 = vld [vmem:[%s236] sm:$0xff]
  %s238 = scalar_lea.vmem %s1, 832
  %239 = vst [vmem:[%s238] sm:$0xff] %v237
  %s240 = scalar_lea.vmem %s0, 256
  %v241 = vld [vmem:[%s240] sm:$0xff]
  %s242 = scalar_lea.vmem %s1, 400
  %243 = vst [vmem:[%s242] sm:$0xff] %v241
  %s244 = scalar_lea.vmem %s0, 832
  %v245 = vld [vmem:[%s244] sm:$0xff]
  %s246 = scalar_lea.vmem %s1, 976
  %247 = vst [vmem:[%s246] sm:$0xff] %v245
  %s248 = scalar_lea.vmem %s0, 112
  %v249 = vld [vmem:[%s248] sm:$0xff]
  %s250 = scalar_lea.vmem %s1, 544
  %251 = vst [vmem:[%s250] sm:$0xff] %v249
  %s252 = scalar_lea.vmem %s0, 688
  %v253 = vld [vmem:[%s252] sm:$0xff]
  %s254 = scalar_lea.vmem %s1, 1120
  %255 = vst [vmem:[%s254] sm:$0xff] %v253
  %s256 = scalar_lea.vmem %s0, 560
  %v257 = vld [vmem:[%s256] sm:$0xff]
  %s258 = scalar_lea.vmem %s1, 128
  %259 = vst [vmem:[%s258] sm:$0xff] %v257
  %s260 = scalar_lea.vmem %s0, 1136
  %v261 = vld [vmem:[%s260] sm:$0xff]
  %s262 = scalar_lea.vmem %s1, 704
  %263 = vst [vmem:[%s262] sm:$0xff] %v261
  %s264 = scalar_lea.vmem %s0, 416
  %v265 = vld [vmem:[%s264] sm:$0xff]
  %s266 = scalar_lea.vmem %s1, 272
  %267 = vst [vmem:[%s266] sm:$0xff] %v265
  %s268 = scalar_lea.vmem %s0, 992
  %v269 = vld [vmem:[%s268] sm:$0xff]
  %s270 = scalar_lea.vmem %s1, 848
  %271 = vst [vmem:[%s270] sm:$0xff] %v269
  %s272 = scalar_lea.vmem %s0, 272
  %v273 = vld [vmem:[%s272] sm:$0xff]
  %s274 = scalar_lea.vmem %s1, 416
  %275 = vst [vmem:[%s274] sm:$0xff] %v273
  %s276 = scalar_lea.vmem %s0, 848
  %v277 = vld [vmem:[%s276] sm:$0xff]
  %s278 = scalar_lea.vmem %s1, 992
  %279 = vst [vmem:[%s278] sm:$0xff] %v277
  %s280 = scalar_lea.vmem %s0, 128
  %v281 = vld [vmem:[%s280] sm:$0xff]
  %s282 = scalar_lea.vmem %s1, 560
  %283 = vst [vmem:[%s282] sm:$0xff] %v281
  %s284 = scalar_lea.vmem %s0, 704
  %v285 = vld [vmem:[%s284] sm:$0xff]
  %s286 = scalar_lea.vmem %s1, 1136
  %287 = vst [vmem:[%s286] sm:$0xff] %v285
  %s288 = scalar_lea.vmem %s0, 440
  %v289 = vld [vmem:[%s288] sm:$0xff]
  %s290 = scalar_lea.vmem %s1, 8
  %291 = vst [vmem:[%s290] sm:$0xff] %v289
  %s292 = scalar_lea.vmem %s0, 1016
  %v293 = vld [vmem:[%s292] sm:$0xff]
  %s294 = scalar_lea.vmem %s1, 584
  %295 = vst [vmem:[%s294] sm:$0xff] %v293
  %s296 = scalar_lea.vmem %s0, 296
  %v297 = vld [vmem:[%s296] sm:$0xff]
  %s298 = scalar_lea.vmem %s1, 152
  %299 = vst [vmem:[%s298] sm:$0xff] %v297
  %s300 = scalar_lea.vmem %s0, 872
  %v301 = vld [vmem:[%s300] sm:$0xff]
  %s302 = scalar_lea.vmem %s1, 728
  %303 = vst [vmem:[%s302] sm:$0xff] %v301
  %s304 = scalar_lea.vmem %s0, 152
  %v305 = vld [vmem:[%s304] sm:$0xff]
  %s306 = scalar_lea.vmem %s1, 296
  %307 = vst [vmem:[%s306] sm:$0xff] %v305
  %s308 = scalar_lea.vmem %s0, 728
  %v309 = vld [vmem:[%s308] sm:$0xff]
  %s310 = scalar_lea.vmem %s1, 872
  %311 = vst [vmem:[%s310] sm:$0xff] %v309
  %s312 = scalar_lea.vmem %s0, 8
  %v313 = vld [vmem:[%s312] sm:$0xff]
  %s314 = scalar_lea.vmem %s1, 440
  %315 = vst [vmem:[%s314] sm:$0xff] %v313
  %s316 = scalar_lea.vmem %s0, 584
  %v317 = vld [vmem:[%s316] sm:$0xff]
  %s318 = scalar_lea.vmem %s1, 1016
  %319 = vst [vmem:[%s318] sm:$0xff] %v317
  %s320 = scalar_lea.vmem %s0, 456
  %v321 = vld [vmem:[%s320] sm:$0xff]
  %s322 = scalar_lea.vmem %s1, 24
  %323 = vst [vmem:[%s322] sm:$0xff] %v321
  %s324 = scalar_lea.vmem %s0, 1032
  %v325 = vld [vmem:[%s324] sm:$0xff]
  %s326 = scalar_lea.vmem %s1, 600
  %327 = vst [vmem:[%s326] sm:$0xff] %v325
  %s328 = scalar_lea.vmem %s0, 312
  %v329 = vld [vmem:[%s328] sm:$0xff]
  %s330 = scalar_lea.vmem %s1, 168
  %331 = vst [vmem:[%s330] sm:$0xff] %v329
  %s332 = scalar_lea.vmem %s0, 888
  %v333 = vld [vmem:[%s332] sm:$0xff]
  %s334 = scalar_lea.vmem %s1, 744
  %335 = vst [vmem:[%s334] sm:$0xff] %v333
  %s336 = scalar_lea.vmem %s0, 168
  %v337 = vld [vmem:[%s336] sm:$0xff]
  %s338 = scalar_lea.vmem %s1, 312
  %339 = vst [vmem:[%s338] sm:$0xff] %v337
  %s340 = scalar_lea.vmem %s0, 744
  %v341 = vld [vmem:[%s340] sm:$0xff]
  %s342 = scalar_lea.vmem %s1, 888
  %343 = vst [vmem:[%s342] sm:$0xff] %v341
  %s344 = scalar_lea.vmem %s0, 24
  %v345 = vld [vmem:[%s344] sm:$0xff]
  %s346 = scalar_lea.vmem %s1, 456
  %347 = vst [vmem:[%s346] sm:$0xff] %v345
  %s348 = scalar_lea.vmem %s0, 600
  %v349 = vld [vmem:[%s348] sm:$0xff]
  %s350 = scalar_lea.vmem %s1, 1032
  %351 = vst [vmem:[%s350] sm:$0xff] %v349
  %s352 = scalar_lea.vmem %s0, 472
  %v353 = vld [vmem:[%s352] sm:$0xff]
  %s354 = scalar_lea.vmem %s1, 40
  %355 = vst [vmem:[%s354] sm:$0xff] %v353
  %s356 = scalar_lea.vmem %s0, 1048
  %v357 = vld [vmem:[%s356] sm:$0xff]
  %s358 = scalar_lea.vmem %s1, 616
  %359 = vst [vmem:[%s358] sm:$0xff] %v357
  %s360 = scalar_lea.vmem %s0, 328
  %v361 = vld [vmem:[%s360] sm:$0xff]
  %s362 = scalar_lea.vmem %s1, 184
  %363 = vst [vmem:[%s362] sm:$0xff] %v361
  %s364 = scalar_lea.vmem %s0, 904
  %v365 = vld [vmem:[%s364] sm:$0xff]
  %s366 = scalar_lea.vmem %s1, 760
  %367 = vst [vmem:[%s366] sm:$0xff] %v365
  %s368 = scalar_lea.vmem %s0, 184
  %v369 = vld [vmem:[%s368] sm:$0xff]
  %s370 = scalar_lea.vmem %s1, 328
  %371 = vst [vmem:[%s370] sm:$0xff] %v369
  %s372 = scalar_lea.vmem %s0, 760
  %v373 = vld [vmem:[%s372] sm:$0xff]
  %s374 = scalar_lea.vmem %s1, 904
  %375 = vst [vmem:[%s374] sm:$0xff] %v373
  %s376 = scalar_lea.vmem %s0, 40
  %v377 = vld [vmem:[%s376] sm:$0xff]
  %s378 = scalar_lea.vmem %s1, 472
  %379 = vst [vmem:[%s378] sm:$0xff] %v377
  %s380 = scalar_lea.vmem %s0, 616
  %v381 = vld [vmem:[%s380] sm:$0xff]
  %s382 = scalar_lea.vmem %s1, 1048
  %383 = vst [vmem:[%s382] sm:$0xff] %v381
  %s384 = scalar_lea.vmem %s0, 488
  %v385 = vld [vmem:[%s384] sm:$0xff]
  %s386 = scalar_lea.vmem %s1, 56
  %387 = vst [vmem:[%s386] sm:$0xff] %v385
  %s388 = scalar_lea.vmem %s0, 1064
  %v389 = vld [vmem:[%s388] sm:$0xff]
  %s390 = scalar_lea.vmem %s1, 632
  %391 = vst [vmem:[%s390] sm:$0xff] %v389
  %s392 = scalar_lea.vmem %s0, 344
  %v393 = vld [vmem:[%s392] sm:$0xff]
  %s394 = scalar_lea.vmem %s1, 200
  %395 = vst [vmem:[%s394] sm:$0xff] %v393
  %s396 = scalar_lea.vmem %s0, 920
  %v397 = vld [vmem:[%s396] sm:$0xff]
  %s398 = scalar_lea.vmem %s1, 776
  %399 = vst [vmem:[%s398] sm:$0xff] %v397
  %s400 = scalar_lea.vmem %s0, 200
  %v401 = vld [vmem:[%s400] sm:$0xff]
  %s402 = scalar_lea.vmem %s1, 344
  %403 = vst [vmem:[%s402] sm:$0xff] %v401
  %s404 = scalar_lea.vmem %s0, 776
  %v405 = vld [vmem:[%s404] sm:$0xff]
  %s406 = scalar_lea.vmem %s1, 920
  %407 = vst [vmem:[%s406] sm:$0xff] %v405
  %s408 = scalar_lea.vmem %s0, 56
  %v409 = vld [vmem:[%s408] sm:$0xff]
  %s410 = scalar_lea.vmem %s1, 488
  %411 = vst [vmem:[%s410] sm:$0xff] %v409
  %s412 = scalar_lea.vmem %s0, 632
  %v413 = vld [vmem:[%s412] sm:$0xff]
  %s414 = scalar_lea.vmem %s1, 1064
  %415 = vst [vmem:[%s414] sm:$0xff] %v413
  %s416 = scalar_lea.vmem %s0, 504
  %v417 = vld [vmem:[%s416] sm:$0xff]
  %s418 = scalar_lea.vmem %s1, 72
  %419 = vst [vmem:[%s418] sm:$0xff] %v417
  %s420 = scalar_lea.vmem %s0, 1080
  %v421 = vld [vmem:[%s420] sm:$0xff]
  %s422 = scalar_lea.vmem %s1, 648
  %423 = vst [vmem:[%s422] sm:$0xff] %v421
  %s424 = scalar_lea.vmem %s0, 360
  %v425 = vld [vmem:[%s424] sm:$0xff]
  %s426 = scalar_lea.vmem %s1, 216
  %427 = vst [vmem:[%s426] sm:$0xff] %v425
  %s428 = scalar_lea.vmem %s0, 936
  %v429 = vld [vmem:[%s428] sm:$0xff]
  %s430 = scalar_lea.vmem %s1, 792
  %431 = vst [vmem:[%s430] sm:$0xff] %v429
  %s432 = scalar_lea.vmem %s0, 216
  %v433 = vld [vmem:[%s432] sm:$0xff]
  %s434 = scalar_lea.vmem %s1, 360
  %435 = vst [vmem:[%s434] sm:$0xff] %v433
  %s436 = scalar_lea.vmem %s0, 792
  %v437 = vld [vmem:[%s436] sm:$0xff]
  %s438 = scalar_lea.vmem %s1, 936
  %439 = vst [vmem:[%s438] sm:$0xff] %v437
  %s440 = scalar_lea.vmem %s0, 72
  %v441 = vld [vmem:[%s440] sm:$0xff]
  %s442 = scalar_lea.vmem %s1, 504
  %443 = vst [vmem:[%s442] sm:$0xff] %v441
  %s444 = scalar_lea.vmem %s0, 648
  %v445 = vld [vmem:[%s444] sm:$0xff]
  %s446 = scalar_lea.vmem %s1, 1080
  %447 = vst [vmem:[%s446] sm:$0xff] %v445
  %s448 = scalar_lea.vmem %s0, 520
  %v449 = vld [vmem:[%s448] sm:$0xff]
  %s450 = scalar_lea.vmem %s1, 88
  %451 = vst [vmem:[%s450] sm:$0xff] %v449
  %s452 = scalar_lea.vmem %s0, 1096
  %v453 = vld [vmem:[%s452] sm:$0xff]
  %s454 = scalar_lea.vmem %s1, 664
  %455 = vst [vmem:[%s454] sm:$0xff] %v453
  %s456 = scalar_lea.vmem %s0, 376
  %v457 = vld [vmem:[%s456] sm:$0xff]
  %s458 = scalar_lea.vmem %s1, 232
  %459 = vst [vmem:[%s458] sm:$0xff] %v457
  %s460 = scalar_lea.vmem %s0, 952
  %v461 = vld [vmem:[%s460] sm:$0xff]
  %s462 = scalar_lea.vmem %s1, 808
  %463 = vst [vmem:[%s462] sm:$0xff] %v461
  %s464 = scalar_lea.vmem %s0, 232
  %v465 = vld [vmem:[%s464] sm:$0xff]
  %s466 = scalar_lea.vmem %s1, 376
  %467 = vst [vmem:[%s466] sm:$0xff] %v465
  %s468 = scalar_lea.vmem %s0, 808
  %v469 = vld [vmem:[%s468] sm:$0xff]
  %s470 = scalar_lea.vmem %s1, 952
  %471 = vst [vmem:[%s470] sm:$0xff] %v469
  %s472 = scalar_lea.vmem %s0, 88
  %v473 = vld [vmem:[%s472] sm:$0xff]
  %s474 = scalar_lea.vmem %s1, 520
  %475 = vst [vmem:[%s474] sm:$0xff] %v473
  %s476 = scalar_lea.vmem %s0, 664
  %v477 = vld [vmem:[%s476] sm:$0xff]
  %s478 = scalar_lea.vmem %s1, 1096
  %479 = vst [vmem:[%s478] sm:$0xff] %v477
  %s480 = scalar_lea.vmem %s0, 536
  %v481 = vld [vmem:[%s480] sm:$0xff]
  %s482 = scalar_lea.vmem %s1, 104
  %483 = vst [vmem:[%s482] sm:$0xff] %v481
  %s484 = scalar_lea.vmem %s0, 1112
  %v485 = vld [vmem:[%s484] sm:$0xff]
  %s486 = scalar_lea.vmem %s1, 680
  %487 = vst [vmem:[%s486] sm:$0xff] %v485
  %s488 = scalar_lea.vmem %s0, 392
  %v489 = vld [vmem:[%s488] sm:$0xff]
  %s490 = scalar_lea.vmem %s1, 248
  %491 = vst [vmem:[%s490] sm:$0xff] %v489
  %s492 = scalar_lea.vmem %s0, 968
  %v493 = vld [vmem:[%s492] sm:$0xff]
  %s494 = scalar_lea.vmem %s1, 824
  %495 = vst [vmem:[%s494] sm:$0xff] %v493
  %s496 = scalar_lea.vmem %s0, 248
  %v497 = vld [vmem:[%s496] sm:$0xff]
  %s498 = scalar_lea.vmem %s1, 392
  %499 = vst [vmem:[%s498] sm:$0xff] %v497
  %s500 = scalar_lea.vmem %s0, 824
  %v501 = vld [vmem:[%s500] sm:$0xff]
  %s502 = scalar_lea.vmem %s1, 968
  %503 = vst [vmem:[%s502] sm:$0xff] %v501
  %s504 = scalar_lea.vmem %s0, 104
  %v505 = vld [vmem:[%s504] sm:$0xff]
  %s506 = scalar_lea.vmem %s1, 536
  %507 = vst [vmem:[%s506] sm:$0xff] %v505
  %s508 = scalar_lea.vmem %s0, 680
  %v509 = vld [vmem:[%s508] sm:$0xff]
  %s510 = scalar_lea.vmem %s1, 1112
  %511 = vst [vmem:[%s510] sm:$0xff] %v509
  %s512 = scalar_lea.vmem %s0, 552
  %v513 = vld [vmem:[%s512] sm:$0xff]
  %s514 = scalar_lea.vmem %s1, 120
  %515 = vst [vmem:[%s514] sm:$0xff] %v513
  %s516 = scalar_lea.vmem %s0, 1128
  %v517 = vld [vmem:[%s516] sm:$0xff]
  %s518 = scalar_lea.vmem %s1, 696
  %519 = vst [vmem:[%s518] sm:$0xff] %v517
  %s520 = scalar_lea.vmem %s0, 408
  %v521 = vld [vmem:[%s520] sm:$0xff]
  %s522 = scalar_lea.vmem %s1, 264
  %523 = vst [vmem:[%s522] sm:$0xff] %v521
  %s524 = scalar_lea.vmem %s0, 984
  %v525 = vld [vmem:[%s524] sm:$0xff]
  %s526 = scalar_lea.vmem %s1, 840
  %527 = vst [vmem:[%s526] sm:$0xff] %v525
  %s528 = scalar_lea.vmem %s0, 264
  %v529 = vld [vmem:[%s528] sm:$0xff]
  %s530 = scalar_lea.vmem %s1, 408
  %531 = vst [vmem:[%s530] sm:$0xff] %v529
  %s532 = scalar_lea.vmem %s0, 840
  %v533 = vld [vmem:[%s532] sm:$0xff]
  %s534 = scalar_lea.vmem %s1, 984
  %535 = vst [vmem:[%s534] sm:$0xff] %v533
  %s536 = scalar_lea.vmem %s0, 120
  %v537 = vld [vmem:[%s536] sm:$0xff]
  %s538 = scalar_lea.vmem %s1, 552
  %539 = vst [vmem:[%s538] sm:$0xff] %v537
  %s540 = scalar_lea.vmem %s0, 696
  %v541 = vld [vmem:[%s540] sm:$0xff]
  %s542 = scalar_lea.vmem %s1, 1128
  %543 = vst [vmem:[%s542] sm:$0xff] %v541
  %s544 = scalar_lea.vmem %s0, 568
  %v545 = vld [vmem:[%s544] sm:$0xff]
  %s546 = scalar_lea.vmem %s1, 136
  %547 = vst [vmem:[%s546] sm:$0xff] %v545
  %s548 = scalar_lea.vmem %s0, 1144
  %v549 = vld [vmem:[%s548] sm:$0xff]
  %s550 = scalar_lea.vmem %s1, 712
  %551 = vst [vmem:[%s550] sm:$0xff] %v549
  %s552 = scalar_lea.vmem %s0, 424
  %v553 = vld [vmem:[%s552] sm:$0xff]
  %s554 = scalar_lea.vmem %s1, 280
  %555 = vst [vmem:[%s554] sm:$0xff] %v553
  %s556 = scalar_lea.vmem %s0, 1000
  %v557 = vld [vmem:[%s556] sm:$0xff]
  %s558 = scalar_lea.vmem %s1, 856
  %559 = vst [vmem:[%s558] sm:$0xff] %v557
  %s560 = scalar_lea.vmem %s0, 280
  %v561 = vld [vmem:[%s560] sm:$0xff]
  %s562 = scalar_lea.vmem %s1, 424
  %563 = vst [vmem:[%s562] sm:$0xff] %v561
  %s564 = scalar_lea.vmem %s0, 856
  %v565 = vld [vmem:[%s564] sm:$0xff]
  %s566 = scalar_lea.vmem %s1, 1000
  %567 = vst [vmem:[%s566] sm:$0xff] %v565
  %s568 = scalar_lea.vmem %s0, 136
  %v569 = vld [vmem:[%s568] sm:$0xff]
  %s570 = scalar_lea.vmem %s1, 568
  %571 = vst [vmem:[%s570] sm:$0xff] %v569
  %s572 = scalar_lea.vmem %s0, 712
  %v573 = vld [vmem:[%s572] sm:$0xff]
  %s574 = scalar_lea.vmem %s1, 1144
  %575 = vst [vmem:[%s574] sm:$0xff] %v573

// kernel: fno3d_forward.12
$region0: #{fno3d_forward.12}
  #allocation0 [shape = 'u32[]', space=smem, size = 0x4, offset = 0x4, fixed_abs, tag = 'smem constant byte address 0x4 - core index']
  #allocation1 [shape = 'u32[144,128]{1,0:T(1,128)}', space=vmem, size = 0x12000, scoped, tag = 'internal scratch']
  %s0 = inlined_call_operand.vmem [shape: f32[32,1458], index: 0, kind: input, shape index: {}]
  %s1 = inlined_call_operand.vmem [shape: f32[32,1458], index: 1, kind: input, shape index: {}]
  %s2 = inlined_call_operand.vmem [shape: f32[32,32], index: 2, kind: input, shape index: {}]
  %s3 = inlined_call_operand.vmem [shape: f32[32,1], index: 3, kind: input, shape index: {}]
  %s4 = inlined_call_operand.vmem [shape: f32[32,1458], index: 4, kind: output, shape index: {}]
  %s5 = sld [smem:[#allocation0]]
  $region26: #{fno3d_forward.12} parent=0
    _
  %s7 = ssub.s32 1, %s5
  %s8 = scalar_select 0, %s7, %s5
  // Predicated region
  $region2: #{fno3d_forward.12} parent=0 // pred_check
    _
  $region3: #{fno3d_forward.12} parent=0 // pred_check_branch
    %10 = sbr.rel (0) target = $region5
  $region4: #{fno3d_forward.12} parent=0 // pred_region
    _
  $region5: #{fno3d_forward.12} parent=0 // pred_fallthru
    _
  // Predicated region
  $region6: #{fno3d_forward.12} parent=0 // pred_check
    _
  $region7: #{fno3d_forward.12} parent=0 // pred_check_branch
    %12 = sbr.rel (0) target = $region9
  $region8: #{fno3d_forward.12} parent=0 // pred_region
    _
  $region9: #{fno3d_forward.12} parent=0 // pred_fallthru
    _
  // Predicated region
  $region10: #{fno3d_forward.12} parent=0 // pred_check
    _
  $region11: #{fno3d_forward.12} parent=0 // pred_check_branch
    %14 = sbr.rel (0) target = $region13
  $region12: #{fno3d_forward.12} parent=0 // pred_region
    _
  $region13: #{fno3d_forward.12} parent=0 // pred_fallthru
    _
  // Predicated region
  $region14: #{fno3d_forward.12} parent=0 // pred_check
    _
  $region15: #{fno3d_forward.12} parent=0 // pred_check_branch
    %16 = sbr.rel (0) target = $region17
  $region16: #{fno3d_forward.12} parent=0 // pred_region
    _
  $region17: #{fno3d_forward.12} parent=0 // pred_fallthru
    _
  %v17 = vld [vmem:[%s2] sm:$0xff]
  %v18 = vld [vmem:[%s2 + $0x8] sm:$0xff]
  %v19 = vld [vmem:[%s2 + $0x10] sm:$0xff]
  %v20 = vld [vmem:[%s2 + $0x18] sm:$0xff]
  %v21 = vld [vmem:[%s0] sm:$0xff]
  %v22 = vld [vmem:[%s0 + $0x8] sm:$0xff]
  %v23 = vld [vmem:[%s0 + $0x10] sm:$0xff]
  %v24 = vld [vmem:[%s0 + $0x18] sm:$0xff]
  %v25 = vld [vmem:[%s0 + $0x20] sm:$0xff]
  %v26 = vld [vmem:[%s0 + $0x28] sm:$0xff]
  %v27 = vld [vmem:[%s0 + $0x30] sm:$0xff]
  %v28 = vld [vmem:[%s0 + $0x38] sm:$0xff]
  %v29 = vld [vmem:[%s0 + $0x40] sm:$0xff]
  %v30 = vld [vmem:[%s0 + $0x48] sm:$0xff]
  %v31 = vld [vmem:[%s0 + $0x50] sm:$0xff]
  %v32 = vld [vmem:[%s0 + $0x58] sm:$0xff]
  %v33 = vld [vmem:[%s0 + $0x60] sm:$0xff]
  %v34 = vld [vmem:[%s0 + $0x68] sm:$0xff]
  %v35 = vld [vmem:[%s0 + $0x70] sm:$0xff]
  %v36 = vld [vmem:[%s0 + $0x78] sm:$0xff]
  %v37 = vld [vmem:[%s0 + $0x80] sm:$0xff]
  %v38 = vld [vmem:[%s0 + $0x88] sm:$0xff]
  %v39 = vld [vmem:[%s0 + $0x90] sm:$0xff]
  %v40 = vld [vmem:[%s0 + $0x98] sm:$0xff]
  %v41 = vld [vmem:[%s0 + $0xa0] sm:$0xff]
  %v42 = vld [vmem:[%s0 + $0xa8] sm:$0xff]
  %v43 = vld [vmem:[%s0 + $0xb0] sm:$0xff]
  %v44 = vld [vmem:[%s0 + $0xb8] sm:$0xff]
  %v45 = vld [vmem:[%s0 + $0xc0] sm:$0xff]
  %v46 = vld [vmem:[%s0 + $0xc8] sm:$0xff]
  %v47 = vld [vmem:[%s0 + $0xd0] sm:$0xff]
  %v48 = vld [vmem:[%s0 + $0xd8] sm:$0xff]
  %v49 = vld [vmem:[%s0 + $0xe0] sm:$0xff]
  %v50 = vld [vmem:[%s0 + $0xe8] sm:$0xff]
  %v51 = vld [vmem:[%s0 + $0xf0] sm:$0xff]
  %v52 = vld [vmem:[%s0 + $0xf8] sm:$0xff]
  %v53 = vld [vmem:[%s0 + $0x100] sm:$0xff]
  %v54 = vld [vmem:[%s0 + $0x108] sm:$0xff]
  %v55 = vld [vmem:[%s0 + $0x110] sm:$0xff]
  %v56 = vld [vmem:[%s0 + $0x118] sm:$0xff]
  %v57 = vld [vmem:[%s0 + $0x120] sm:$0xff]
  %v58 = vld [vmem:[%s0 + $0x128] sm:$0xff]
  %v59 = vld [vmem:[%s0 + $0x130] sm:$0xff]
  %v60 = vld [vmem:[%s0 + $0x138] sm:$0xff]
  %v61 = vld [vmem:[%s0 + $0x140] sm:$0xff]
  %v62 = vld [vmem:[%s0 + $0x148] sm:$0xff]
  %v63 = vld [vmem:[%s0 + $0x150] sm:$0xff]
  %v64 = vld [vmem:[%s0 + $0x158] sm:$0xff]
  %v65 = vld [vmem:[%s0 + $0x160] sm:$0xff]
  %v66 = vld [vmem:[%s0 + $0x168] sm:$0xff]
  %v67 = vld [vmem:[%s0 + $0x170] sm:$0xff]
  %v68 = vld [vmem:[%s0 + $0x178] sm:$0xff]
  %v69 = vld [vmem:[%s3] sm:$0xff]
  %v70 = vld [vmem:[%s3 + $0x8] sm:$0xff]
  %v71 = vld [vmem:[%s3 + $0x10] sm:$0xff]
  %v72 = vld [vmem:[%s3 + $0x18] sm:$0xff]
  %74 = vset.pattern.permute.xlu0 0
  %75 = vperm.xlu0 %74, %v69
  %v76 = vpop.permute.xlu0 %75
  %79 = vset.pattern.permute.xlu0 0
  %80 = vperm.xlu0 %79, %v70
  %v81 = vpop.permute.xlu0 %80
  %84 = vset.pattern.permute.xlu0 0
  %85 = vperm.xlu0 %84, %v71
  %v86 = vpop.permute.xlu0 %85
  %89 = vset.pattern.permute.xlu0 0
  %90 = vperm.xlu0 %89, %v72
  %v91 = vpop.permute.xlu0 %90
  %vm93 = vcmask 261120
  %v95 = vsel %vm93, %v17, 0
  %v98 = vsel %vm93, %v18, 0
  %v101 = vsel %vm93, %v19, 0
  %v104 = vsel %vm93, %v20, 0
  %106 = vmatprep.subr.mxu0 %v22
  %107 = vmatpush1.msra.mxu0 %v21
  %108 = vmatprep.subr.mxu0 %v34
  %109 = vmatpush1.msra.mxu0 %v33
  %110 = vmatprep.subr.mxu0 %v46
  %111 = vmatpush1.msra.mxu0 %v45
  %112 = vmatprep.subr.mxu0 %v58
  %113 = vmatpush1.msra.mxu0 %v57
  %114 = vmatprep.subr.mxu0 0.0
  %115 = vmatpush1.msra.mxu0 0.0
  %116 = vmatprep.subr.mxu0 0.0
  %117 = vmatpush1.msra.mxu0 0.0
  %118 = vmatprep.subr.mxu0 0.0
  %119 = vmatpush1.msra.mxu0 0.0
  %120 = vmatprep.subr.mxu0 0.0
  %121 = vmatpush1.msra.mxu0 0.0
  %122 = vmatprep.subr.mxu0 0.0
  %123 = vmatpush1.msra.mxu0 0.0
  %124 = vmatprep.subr.mxu0 0.0
  %125 = vmatpush1.msra.mxu0 0.0
  %126 = vmatprep.subr.mxu0 0.0
  %127 = vmatpush1.msra.mxu0 0.0
  %128 = vmatprep.subr.mxu0 0.0
  %129 = vmatpush1.msra.mxu0 0.0
  %130 = vmatprep.subr.mxu0 0.0
  %131 = vmatpush1.msra.mxu0 0.0
  %132 = vmatprep.subr.mxu0 0.0
  %133 = vmatpush1.msra.mxu0 0.0
  %134 = vmatprep.subr.mxu0 0.0
  %135 = vmatpush1.msra.mxu0 0.0
  %136 = vmatprep.subr.mxu0 0.0
  %137 = vmatpush1.msra.mxu0 0.0
  %138 = vmatprep.subr.mxu0 0.0
  %139 = vmatpush1.msra.mxu0 0.0
  %140 = vmatprep.subr.mxu0 0.0
  %141 = vmatpush1.msra.mxu0 0.0
  %142 = vmatprep.subr.mxu0 0.0
  %143 = vmatpush1.msra.mxu0 0.0
  %144 = vmatprep.subr.mxu0 0.0
  %145 = vmatpush1.msra.mxu0 0.0
  %146 = vmatprep.subr.mxu0 0.0
  %147 = vmatpush1.msra.mxu0 0.0
  %148 = vmatprep.subr.mxu0 0.0
  %149 = vmatpush1.msra.mxu0 0.0
  %150 = vmatprep.subr.mxu0 0.0
  %151 = vmatpush1.msra.mxu0 0.0
  %152 = vmatprep.subr.mxu0 0.0
  %153 = vmatpush1.msra.mxu0 0.0
  %154 = vmatprep.subr.mxu0 0.0
  %155 = vmatpush1.msra.mxu0 0.0
  %156 = vmatprep.subr.mxu0 0.0
  %157 = vmatpush1.msra.mxu0 0.0
  %158 = vmatprep.subr.mxu0 0.0
  %159 = vmatpush1.msra.mxu0 0.0
  %160 = vmatprep.subr.mxu0 0.0
  %161 = vmatpush1.msra.mxu0 0.0
  %162 = vmatprep.subr.mxu0 0.0
  %163 = vmatpush1.msra.mxu0 0.0
  %164 = vmatprep.subr.mxu0 0.0
  %165 = vmatpush1.msra.mxu0 0.0
  %166 = vmatprep.subr.mxu0 0.0
  %167 = vmatpush1.msra.mxu0 0.0
  %168 = vmatprep.subr.mxu0 0.0
  %169 = vmatpush1.msra.mxu0 0.0
  %170 = vmatprep.mubr.f32.mxu0 0.0
  %171 = vmatmul.mubr.f32.gmra.mrb[0].mxu0 %v95
  %v172 = vpop.f32.mrb[0].mxu0
  %v173 = vadd.f32 %v76, %v172
  %v174 = vpop.f32.mrb[0].mxu0
  %v175 = vadd.f32 %v76, %v174
  %176 = vmatprep.mubr.f32.mxu0 0.0
  %177 = vmatmul.mubr.f32.gmra.mrb[0].mxu0 %v98
  %v178 = vpop.f32.mrb[0].mxu0
  %v179 = vadd.f32 %v81, %v178
  %v180 = vpop.f32.mrb[0].mxu0
  %v181 = vadd.f32 %v81, %v180
  %182 = vmatprep.mubr.f32.mxu0 0.0
  %183 = vmatmul.mubr.f32.gmra.mrb[0].mxu0 %v101
  %v184 = vpop.f32.mrb[0].mxu0
  %v185 = vadd.f32 %v86, %v184
  %v186 = vpop.f32.mrb[0].mxu0
  %v187 = vadd.f32 %v86, %v186
  %188 = vmatprep.mubr.f32.mxu0 0.0
  %189 = vmatmul.mubr.f32.gmra.mrb[0].mxu0 %v104
  %v190 = vpop.f32.mrb[0].mxu0
  %v191 = vadd.f32 %v91, %v190
  %v192 = vpop.f32.mrb[0].mxu0
  %v193 = vadd.f32 %v91, %v192
  %194 = vdwg.mxu0
  %195 = vmatprep.subr.mxu0 %v24
  %196 = vmatpush1.msra.mxu0 %v23
  %197 = vmatprep.subr.mxu0 %v36
  %198 = vmatpush1.msra.mxu0 %v35
  %199 = vmatprep.subr.mxu0 %v48
  %200 = vmatpush1.msra.mxu0 %v47
  %201 = vmatprep.subr.mxu0 %v60
  %202 = vmatpush1.msra.mxu0 %v59
  %203 = vmatprep.subr.mxu0 0.0
  %204 = vmatpush1.msra.mxu0 0.0
  %205 = vmatprep.subr.mxu0 0.0
  %206 = vmatpush1.msra.mxu0 0.0
  %207 = vmatprep.subr.mxu0 0.0
  %208 = vmatpush1.msra.mxu0 0.0
  %209 = vmatprep.subr.mxu0 0.0
  %210 = vmatpush1.msra.mxu0 0.0
  %211 = vmatprep.subr.mxu0 0.0
  %212 = vmatpush1.msra.mxu0 0.0
  %213 = vmatprep.subr.mxu0 0.0
  %214 = vmatpush1.msra.mxu0 0.0
  %215 = vmatprep.subr.mxu0 0.0
  %216 = vmatpush1.msra.mxu0 0.0
  %217 = vmatprep.subr.mxu0 0.0
  %218 = vmatpush1.msra.mxu0 0.0
  %219 = vmatprep.subr.mxu0 0.0
  %220 = vmatpush1.msra.mxu0 0.0
  %221 = vmatprep.subr.mxu0 0.0
  %222 = vmatpush1.msra.mxu0 0.0
  %223 = vmatprep.subr.mxu0 0.0
  %224 = vmatpush1.msra.mxu0 0.0
  %225 = vmatprep.subr.mxu0 0.0
  %226 = vmatpush1.msra.mxu0 0.0
  %227 = vmatprep.subr.mxu0 0.0
  %228 = vmatpush1.msra.mxu0 0.0
  %229 = vmatprep.subr.mxu0 0.0
  %230 = vmatpush1.msra.mxu0 0.0
  %231 = vmatprep.subr.mxu0 0.0
  %232 = vmatpush1.msra.mxu0 0.0
  %233 = vmatprep.subr.mxu0 0.0
  %234 = vmatpush1.msra.mxu0 0.0
  %235 = vmatprep.subr.mxu0 0.0
  %236 = vmatpush1.msra.mxu0 0.0
  %237 = vmatprep.subr.mxu0 0.0
  %238 = vmatpush1.msra.mxu0 0.0
  %239 = vmatprep.subr.mxu0 0.0
  %240 = vmatpush1.msra.mxu0 0.0
  %241 = vmatprep.subr.mxu0 0.0
  %242 = vmatpush1.msra.mxu0 0.0
  %243 = vmatprep.subr.mxu0 0.0
  %244 = vmatpush1.msra.mxu0 0.0
  %245 = vmatprep.subr.mxu0 0.0
  %246 = vmatpush1.msra.mxu0 0.0
  %247 = vmatprep.subr.mxu0 0.0
  %248 = vmatpush1.msra.mxu0 0.0
  %249 = vmatprep.subr.mxu0 0.0
  %250 = vmatpush1.msra.mxu0 0.0
  %251 = vmatprep.subr.mxu0 0.0
  %252 = vmatpush1.msra.mxu0 0.0
  %253 = vmatprep.subr.mxu0 0.0
  %254 = vmatpush1.msra.mxu0 0.0
  %255 = vmatprep.subr.mxu0 0.0
  %256 = vmatpush1.msra.mxu0 0.0
  %257 = vmatprep.subr.mxu0 0.0
  %258 = vmatpush1.msra.mxu0 0.0
  %259 = vmatprep.mubr.f32.mxu0 0.0
  %260 = vmatmul.mubr.f32.gmra.mrb[0].mxu0 %v95
  %v261 = vpop.f32.mrb[0].mxu0
  %v262 = vadd.f32 %v76, %v261
  %v263 = vpop.f32.mrb[0].mxu0
  %v264 = vadd.f32 %v76, %v263
  %265 = vmatprep.mubr.f32.mxu0 0.0
  %266 = vmatmul.mubr.f32.gmra.mrb[0].mxu0 %v98
  %v267 = vpop.f32.mrb[0].mxu0
  %v268 = vadd.f32 %v81, %v267
  %v269 = vpop.f32.mrb[0].mxu0
  %v270 = vadd.f32 %v81, %v269
  %271 = vmatprep.mubr.f32.mxu0 0.0
  %272 = vmatmul.mubr.f32.gmra.mrb[0].mxu0 %v101
  %v273 = vpop.f32.mrb[0].mxu0
  %v274 = vadd.f32 %v86, %v273
  %v275 = vpop.f32.mrb[0].mxu0
  %v276 = vadd.f32 %v86, %v275
  %277 = vmatprep.mubr.f32.mxu0 0.0
  %278 = vmatmul.mubr.f32.gmra.mrb[0].mxu0 %v104
  %v279 = vpop.f32.mrb[0].mxu0
  %v280 = vadd.f32 %v91, %v279
  %v281 = vpop.f32.mrb[0].mxu0
  %v282 = vadd.f32 %v91, %v281
  %283 = vdwg.mxu0
  %284 = vmatprep.subr.mxu0 %v26
  %285 = vmatpush1.msra.mxu0 %v25
  %286 = vmatprep.subr.mxu0 %v38
  %287 = vmatpush1.msra.mxu0 %v37
  %288 = vmatprep.subr.mxu0 %v50
  %289 = vmatpush1.msra.mxu0 %v49
  %290 = vmatprep.subr.mxu0 %v62
  %291 = vmatpush1.msra.mxu0 %v61
  %292 = vmatprep.subr.mxu0 0.0
  %293 = vmatpush1.msra.mxu0 0.0
  %294 = vmatprep.subr.mxu0 0.0
  %295 = vmatpush1.msra.mxu0 0.0
  %296 = vmatprep.subr.mxu0 0.0
  %297 = vmatpush1.msra.mxu0 0.0
  %298 = vmatprep.subr.mxu0 0.0
  %299 = vmatpush1.msra.mxu0 0.0
  %300 = vmatprep.subr.mxu0 0.0
  %301 = vmatpush1.msra.mxu0 0.0
  %302 = vmatprep.subr.mxu0 0.0
  %303 = vmatpush1.msra.mxu0 0.0
  %304 = vmatprep.subr.mxu0 0.0
  %305 = vmatpush1.msra.mxu0 0.0
  %306 = vmatprep.subr.mxu0 0.0
  %307 = vmatpush1.msra.mxu0 0.0
  %308 = vmatprep.subr.mxu0 0.0
  %309 = vmatpush1.msra.mxu0 0.0
  %310 = vmatprep.subr.mxu0 0.0
  %311 = vmatpush1.msra.mxu0 0.0
  %312 = vmatprep.subr.mxu0 0.0
  %313 = vmatpush1.msra.mxu0 0.0
  %314 = vmatprep.subr.mxu0 0.0
  %315 = vmatpush1.msra.mxu0 0.0
  %316 = vmatprep.subr.mxu0 0.0
  %317 = vmatpush1.msra.mxu0 0.0
  %318 = vmatprep.subr.mxu0 0.0
  %319 = vmatpush1.msra.mxu0 0.0
  %320 = vmatprep.subr.mxu0 0.0
  %321 = vmatpush1.msra.mxu0 0.0
  %322 = vmatprep.subr.mxu0 0.0
  %323 = vmatpush1.msra.mxu0 0.0
  %324 = vmatprep.subr.mxu0 0.0
  %325 = vmatpush1.msra.mxu0 0.0
  %326 = vmatprep.subr.mxu0 0.0
  %327 = vmatpush1.msra.mxu0 0.0
  %328 = vmatprep.subr.mxu0 0.0
  %329 = vmatpush1.msra.mxu0 0.0
  %330 = vmatprep.subr.mxu0 0.0
  %331 = vmatpush1.msra.mxu0 0.0
  %332 = vmatprep.subr.mxu0 0.0
  %333 = vmatpush1.msra.mxu0 0.0
  %334 = vmatprep.subr.mxu0 0.0
  %335 = vmatpush1.msra.mxu0 0.0
  %336 = vmatprep.subr.mxu0 0.0
  %337 = vmatpush1.msra.mxu0 0.0
  %338 = vmatprep.subr.mxu0 0.0
  %339 = vmatpush1.msra.mxu0 0.0
  %340 = vmatprep.subr.mxu0 0.0
  %341 = vmatpush1.msra.mxu0 0.0
  %342 = vmatprep.subr.mxu0 0.0
  %343 = vmatpush1.msra.mxu0 0.0
  %344 = vmatprep.subr.mxu0 0.0
  %345 = vmatpush1.msra.mxu0 0.0
  %346 = vmatprep.subr.mxu0 0.0
  %347 = vmatpush1.msra.mxu0 0.0
  %348 = vmatprep.mubr.f32.mxu0 0.0
  %349 = vmatmul.mubr.f32.gmra.mrb[0].mxu0 %v95
  %v350 = vpop.f32.mrb[0].mxu0
  %v351 = vadd.f32 %v76, %v350
  %v352 = vpop.f32.mrb[0].mxu0
  %v353 = vadd.f32 %v76, %v352
  %354 = vmatprep.mubr.f32.mxu0 0.0
  %355 = vmatmul.mubr.f32.gmra.mrb[0].mxu0 %v98
  %v356 = vpop.f32.mrb[0].mxu0
  %v357 = vadd.f32 %v81, %v356
  %v358 = vpop.f32.mrb[0].mxu0
  %v359 = vadd.f32 %v81, %v358
  %360 = vmatprep.mubr.f32.mxu0 0.0
  %361 = vmatmul.mubr.f32.gmra.mrb[0].mxu0 %v101
  %v362 = vpop.f32.mrb[0].mxu0
  %v363 = vadd.f32 %v86, %v362
  %v364 = vpop.f32.mrb[0].mxu0
  %v365 = vadd.f32 %v86, %v364
  %366 = vmatprep.mubr.f32.mxu0 0.0
  %367 = vmatmul.mubr.f32.gmra.mrb[0].mxu0 %v104
  %v368 = vpop.f32.mrb[0].mxu0
  %v369 = vadd.f32 %v91, %v368
  %v370 = vpop.f32.mrb[0].mxu0
  %v371 = vadd.f32 %v91, %v370
  %372 = vdwg.mxu0
  %373 = vmatprep.subr.mxu0 %v28
  %374 = vmatpush1.msra.mxu0 %v27
  %375 = vmatprep.subr.mxu0 %v40
  %376 = vmatpush1.msra.mxu0 %v39
  %377 = vmatprep.subr.mxu0 %v52
  %378 = vmatpush1.msra.mxu0 %v51
  %379 = vmatprep.subr.mxu0 %v64
  %380 = vmatpush1.msra.mxu0 %v63
  %381 = vmatprep.subr.mxu0 0.0
  %382 = vmatpush1.msra.mxu0 0.0
  %383 = vmatprep.subr.mxu0 0.0
  %384 = vmatpush1.msra.mxu0 0.0
  %385 = vmatprep.subr.mxu0 0.0
  %386 = vmatpush1.msra.mxu0 0.0
  %387 = vmatprep.subr.mxu0 0.0
  %388 = vmatpush1.msra.mxu0 0.0
  %389 = vmatprep.subr.mxu0 0.0
  %390 = vmatpush1.msra.mxu0 0.0
  %391 = vmatprep.subr.mxu0 0.0
  %392 = vmatpush1.msra.mxu0 0.0
  %393 = vmatprep.subr.mxu0 0.0
  %394 = vmatpush1.msra.mxu0 0.0
  %395 = vmatprep.subr.mxu0 0.0
  %396 = vmatpush1.msra.mxu0 0.0
  %397 = vmatprep.subr.mxu0 0.0
  %398 = vmatpush1.msra.mxu0 0.0
  %399 = vmatprep.subr.mxu0 0.0
  %400 = vmatpush1.msra.mxu0 0.0
  %401 = vmatprep.subr.mxu0 0.0
  %402 = vmatpush1.msra.mxu0 0.0
  %403 = vmatprep.subr.mxu0 0.0
  %404 = vmatpush1.msra.mxu0 0.0
  %405 = vmatprep.subr.mxu0 0.0
  %406 = vmatpush1.msra.mxu0 0.0
  %407 = vmatprep.subr.mxu0 0.0
  %408 = vmatpush1.msra.mxu0 0.0
  %409 = vmatprep.subr.mxu0 0.0
  %410 = vmatpush1.msra.mxu0 0.0
  %411 = vmatprep.subr.mxu0 0.0
  %412 = vmatpush1.msra.mxu0 0.0
  %413 = vmatprep.subr.mxu0 0.0
  %414 = vmatpush1.msra.mxu0 0.0
  %415 = vmatprep.subr.mxu0 0.0
  %416 = vmatpush1.msra.mxu0 0.0
  %417 = vmatprep.subr.mxu0 0.0
  %418 = vmatpush1.msra.mxu0 0.0
  %419 = vmatprep.subr.mxu0 0.0
  %420 = vmatpush1.msra.mxu0 0.0
  %421 = vmatprep.subr.mxu0 0.0
  %422 = vmatpush1.msra.mxu0 0.0
  %423 = vmatprep.subr.mxu0 0.0
  %424 = vmatpush1.msra.mxu0 0.0
  %425 = vmatprep.subr.mxu0 0.0
  %426 = vmatpush1.msra.mxu0 0.0
  %427 = vmatprep.subr.mxu0 0.0
  %428 = vmatpush1.msra.mxu0 0.0
  %429 = vmatprep.subr.mxu0 0.0
  %430 = vmatpush1.msra.mxu0 0.0
  %431 = vmatprep.subr.mxu0 0.0
  %432 = vmatpush1.msra.mxu0 0.0
  %433 = vmatprep.subr.mxu0 0.0
  %434 = vmatpush1.msra.mxu0 0.0
  %435 = vmatprep.subr.mxu0 0.0
  %436 = vmatpush1.msra.mxu0 0.0
  %437 = vmatprep.mubr.f32.mxu0 0.0
  %438 = vmatmul.mubr.f32.gmra.mrb[0].mxu0 %v95
  %v439 = vpop.f32.mrb[0].mxu0
  %v440 = vadd.f32 %v76, %v439
  %v441 = vpop.f32.mrb[0].mxu0
  %v442 = vadd.f32 %v76, %v441
  %443 = vmatprep.mubr.f32.mxu0 0.0
  %444 = vmatmul.mubr.f32.gmra.mrb[0].mxu0 %v98
  %v445 = vpop.f32.mrb[0].mxu0
  %v446 = vadd.f32 %v81, %v445
  %v447 = vpop.f32.mrb[0].mxu0
  %v448 = vadd.f32 %v81, %v447
  %449 = vmatprep.mubr.f32.mxu0 0.0
  %450 = vmatmul.mubr.f32.gmra.mrb[0].mxu0 %v101
  %v451 = vpop.f32.mrb[0].mxu0
  %v452 = vadd.f32 %v86, %v451
  %v453 = vpop.f32.mrb[0].mxu0
  %v454 = vadd.f32 %v86, %v453
  %455 = vmatprep.mubr.f32.mxu0 0.0
  %456 = vmatmul.mubr.f32.gmra.mrb[0].mxu0 %v104
  %v457 = vpop.f32.mrb[0].mxu0
  %v458 = vadd.f32 %v91, %v457
  %v459 = vpop.f32.mrb[0].mxu0
  %v460 = vadd.f32 %v91, %v459
  %461 = vdwg.mxu0
  %462 = vmatprep.subr.mxu0 %v30
  %463 = vmatpush1.msra.mxu0 %v29
  %464 = vmatprep.subr.mxu0 %v42
  %465 = vmatpush1.msra.mxu0 %v41
  %466 = vmatprep.subr.mxu0 %v54
  %467 = vmatpush1.msra.mxu0 %v53
  %468 = vmatprep.subr.mxu0 %v66
  %469 = vmatpush1.msra.mxu0 %v65
  %470 = vmatprep.subr.mxu0 0.0
  %471 = vmatpush1.msra.mxu0 0.0
  %472 = vmatprep.subr.mxu0 0.0
  %473 = vmatpush1.msra.mxu0 0.0
  %474 = vmatprep.subr.mxu0 0.0
  %475 = vmatpush1.msra.mxu0 0.0
  %476 = vmatprep.subr.mxu0 0.0
  %477 = vmatpush1.msra.mxu0 0.0
  %478 = vmatprep.subr.mxu0 0.0
  %479 = vmatpush1.msra.mxu0 0.0
  %480 = vmatprep.subr.mxu0 0.0
  %481 = vmatpush1.msra.mxu0 0.0
  %482 = vmatprep.subr.mxu0 0.0
  %483 = vmatpush1.msra.mxu0 0.0
  %484 = vmatprep.subr.mxu0 0.0
  %485 = vmatpush1.msra.mxu0 0.0
  %486 = vmatprep.subr.mxu0 0.0
  %487 = vmatpush1.msra.mxu0 0.0
  %488 = vmatprep.subr.mxu0 0.0
  %489 = vmatpush1.msra.mxu0 0.0
  %490 = vmatprep.subr.mxu0 0.0
  %491 = vmatpush1.msra.mxu0 0.0
  %492 = vmatprep.subr.mxu0 0.0
  %493 = vmatpush1.msra.mxu0 0.0
  %494 = vmatprep.subr.mxu0 0.0
  %495 = vmatpush1.msra.mxu0 0.0
  %496 = vmatprep.subr.mxu0 0.0
  %497 = vmatpush1.msra.mxu0 0.0
  %498 = vmatprep.subr.mxu0 0.0
  %499 = vmatpush1.msra.mxu0 0.0
  %500 = vmatprep.subr.mxu0 0.0
  %501 = vmatpush1.msra.mxu0 0.0
  %502 = vmatprep.subr.mxu0 0.0
  %503 = vmatpush1.msra.mxu0 0.0
  %504 = vmatprep.subr.mxu0 0.0
  %505 = vmatpush1.msra.mxu0 0.0
  %506 = vmatprep.subr.mxu0 0.0
  %507 = vmatpush1.msra.mxu0 0.0
  %508 = vmatprep.subr.mxu0 0.0
  %509 = vmatpush1.msra.mxu0 0.0
  %510 = vmatprep.subr.mxu0 0.0
  %511 = vmatpush1.msra.mxu0 0.0
  %512 = vmatprep.subr.mxu0 0.0
  %513 = vmatpush1.msra.mxu0 0.0
  %514 = vmatprep.subr.mxu0 0.0
  %515 = vmatpush1.msra.mxu0 0.0
  %516 = vmatprep.subr.mxu0 0.0
  %517 = vmatpush1.msra.mxu0 0.0
  %518 = vmatprep.subr.mxu0 0.0
  %519 = vmatpush1.msra.mxu0 0.0
  %520 = vmatprep.subr.mxu0 0.0
  %521 = vmatpush1.msra.mxu0 0.0
  %522 = vmatprep.subr.mxu0 0.0
  %523 = vmatpush1.msra.mxu0 0.0
  %524 = vmatprep.subr.mxu0 0.0
  %525 = vmatpush1.msra.mxu0 0.0
  %526 = vmatprep.mubr.f32.mxu0 0.0
  %527 = vmatmul.mubr.f32.gmra.mrb[0].mxu0 %v95
  %v528 = vpop.f32.mrb[0].mxu0
  %v529 = vadd.f32 %v76, %v528
  %v530 = vpop.f32.mrb[0].mxu0
  %v531 = vadd.f32 %v76, %v530
  %532 = vmatprep.mubr.f32.mxu0 0.0
  %533 = vmatmul.mubr.f32.gmra.mrb[0].mxu0 %v98
  %v534 = vpop.f32.mrb[0].mxu0
  %v535 = vadd.f32 %v81, %v534
  %v536 = vpop.f32.mrb[0].mxu0
  %v537 = vadd.f32 %v81, %v536
  %538 = vmatprep.mubr.f32.mxu0 0.0
  %539 = vmatmul.mubr.f32.gmra.mrb[0].mxu0 %v101
  %v540 = vpop.f32.mrb[0].mxu0
  %v541 = vadd.f32 %v86, %v540
  %v542 = vpop.f32.mrb[0].mxu0
  %v543 = vadd.f32 %v86, %v542
  %544 = vmatprep.mubr.f32.mxu0 0.0
  %545 = vmatmul.mubr.f32.gmra.mrb[0].mxu0 %v104
  %v546 = vpop.f32.mrb[0].mxu0
  %v547 = vadd.f32 %v91, %v546
  %v548 = vpop.f32.mrb[0].mxu0
  %v549 = vadd.f32 %v91, %v548
  %550 = vdwg.mxu0
  %551 = vmatprep.subr.mxu0 %v32
  %552 = vmatpush1.msra.mxu0 %v31
  %553 = vmatprep.subr.mxu0 %v44
  %554 = vmatpush1.msra.mxu0 %v43
  %555 = vmatprep.subr.mxu0 %v56
  %556 = vmatpush1.msra.mxu0 %v55
  %557 = vmatprep.subr.mxu0 %v68
  %558 = vmatpush1.msra.mxu0 %v67
  %559 = vmatprep.subr.mxu0 0.0
  %560 = vmatpush1.msra.mxu0 0.0
  %561 = vmatprep.subr.mxu0 0.0
  %562 = vmatpush1.msra.mxu0 0.0
  %563 = vmatprep.subr.mxu0 0.0
  %564 = vmatpush1.msra.mxu0 0.0
  %565 = vmatprep.subr.mxu0 0.0
  %566 = vmatpush1.msra.mxu0 0.0
  %567 = vmatprep.subr.mxu0 0.0
  %568 = vmatpush1.msra.mxu0 0.0
  %569 = vmatprep.subr.mxu0 0.0
  %570 = vmatpush1.msra.mxu0 0.0
  %571 = vmatprep.subr.mxu0 0.0
  %572 = vmatpush1.msra.mxu0 0.0
  %573 = vmatprep.subr.mxu0 0.0
  %574 = vmatpush1.msra.mxu0 0.0
  %575 = vmatprep.subr.mxu0 0.0
  %576 = vmatpush1.msra.mxu0 0.0
  %577 = vmatprep.subr.mxu0 0.0
  %578 = vmatpush1.msra.mxu0 0.0
  %579 = vmatprep.subr.mxu0 0.0
  %580 = vmatpush1.msra.mxu0 0.0
  %581 = vmatprep.subr.mxu0 0.0
  %582 = vmatpush1.msra.mxu0 0.0
  %583 = vmatprep.subr.mxu0 0.0
  %584 = vmatpush1.msra.mxu0 0.0
  %585 = vmatprep.subr.mxu0 0.0
  %586 = vmatpush1.msra.mxu0 0.0
  %587 = vmatprep.subr.mxu0 0.0
  %588 = vmatpush1.msra.mxu0 0.0
  %589 = vmatprep.subr.mxu0 0.0
  %590 = vmatpush1.msra.mxu0 0.0
  %591 = vmatprep.subr.mxu0 0.0
  %592 = vmatpush1.msra.mxu0 0.0
  %593 = vmatprep.subr.mxu0 0.0
  %594 = vmatpush1.msra.mxu0 0.0
  %595 = vmatprep.subr.mxu0 0.0
  %596 = vmatpush1.msra.mxu0 0.0
  %597 = vmatprep.subr.mxu0 0.0
  %598 = vmatpush1.msra.mxu0 0.0
  %599 = vmatprep.subr.mxu0 0.0
  %600 = vmatpush1.msra.mxu0 0.0
  %601 = vmatprep.subr.mxu0 0.0
  %602 = vmatpush1.msra.mxu0 0.0
  %603 = vmatprep.subr.mxu0 0.0
  %604 = vmatpush1.msra.mxu0 0.0
  %605 = vmatprep.subr.mxu0 0.0
  %606 = vmatpush1.msra.mxu0 0.0
  %607 = vmatprep.subr.mxu0 0.0
  %608 = vmatpush1.msra.mxu0 0.0
  %609 = vmatprep.subr.mxu0 0.0
  %610 = vmatpush1.msra.mxu0 0.0
  %611 = vmatprep.subr.mxu0 0.0
  %612 = vmatpush1.msra.mxu0 0.0
  %613 = vmatprep.subr.mxu0 0.0
  %614 = vmatpush1.msra.mxu0 0.0
  %615 = vmatprep.mubr.f32.mxu0 0.0
  %616 = vmatmul.mubr.f32.gmra.mrb[0].mxu0 %v95
  %v617 = vpop.f32.mrb[0].mxu0
  %v618 = vadd.f32 %v76, %v617
  %v619 = vpop.f32.mrb[0].mxu0
  %v620 = vadd.f32 %v76, %v619
  %621 = vmatprep.mubr.f32.mxu0 0.0
  %622 = vmatmul.mubr.f32.gmra.mrb[0].mxu0 %v98
  %v623 = vpop.f32.mrb[0].mxu0
  %v624 = vadd.f32 %v81, %v623
  %v625 = vpop.f32.mrb[0].mxu0
  %v626 = vadd.f32 %v81, %v625
  %627 = vmatprep.mubr.f32.mxu0 0.0
  %628 = vmatmul.mubr.f32.gmra.mrb[0].mxu0 %v101
  %v629 = vpop.f32.mrb[0].mxu0
  %v630 = vadd.f32 %v86, %v629
  %v631 = vpop.f32.mrb[0].mxu0
  %v632 = vadd.f32 %v86, %v631
  %633 = vmatprep.mubr.f32.mxu0 0.0
  %634 = vmatmul.mubr.f32.gmra.mrb[0].mxu0 %v104
  %v635 = vpop.f32.mrb[0].mxu0
  %v636 = vadd.f32 %v91, %v635
  %v637 = vpop.f32.mrb[0].mxu0
  %v638 = vadd.f32 %v91, %v637
  %639 = vdwg.mxu0
  %v640 = vld [vmem:[%s1] sm:$0xff]
  %v641 = vld [vmem:[%s1 + $0x8] sm:$0xff]
  %v642 = vld [vmem:[%s1 + $0x10] sm:$0xff]
  %v643 = vld [vmem:[%s1 + $0x18] sm:$0xff]
  %v644 = vld [vmem:[%s1 + $0x20] sm:$0xff]
  %v645 = vld [vmem:[%s1 + $0x28] sm:$0xff]
  %v646 = vld [vmem:[%s1 + $0x30] sm:$0xff]
  %v647 = vld [vmem:[%s1 + $0x38] sm:$0xff]
  %v648 = vld [vmem:[%s1 + $0x40] sm:$0xff]
  %v649 = vld [vmem:[%s1 + $0x48] sm:$0xff]
  %v650 = vld [vmem:[%s1 + $0x50] sm:$0xff]
  %v651 = vld [vmem:[%s1 + $0x58] sm:$0xff]
  %v652 = vld [vmem:[%s1 + $0x60] sm:$0xff]
  %v653 = vld [vmem:[%s1 + $0x68] sm:$0xff]
  %v654 = vld [vmem:[%s1 + $0x70] sm:$0xff]
  %v655 = vld [vmem:[%s1 + $0x78] sm:$0xff]
  %v656 = vld [vmem:[%s1 + $0x80] sm:$0xff]
  %v657 = vld [vmem:[%s1 + $0x88] sm:$0xff]
  %v658 = vld [vmem:[%s1 + $0x90] sm:$0xff]
  %v659 = vld [vmem:[%s1 + $0x98] sm:$0xff]
  %v660 = vld [vmem:[%s1 + $0xa0] sm:$0xff]
  %v661 = vld [vmem:[%s1 + $0xa8] sm:$0xff]
  %v662 = vld [vmem:[%s1 + $0xb0] sm:$0xff]
  %v663 = vld [vmem:[%s1 + $0xb8] sm:$0xff]
  %v664 = vld [vmem:[%s1 + $0xc0] sm:$0xff]
  %v665 = vld [vmem:[%s1 + $0xc8] sm:$0xff]
  %v666 = vld [vmem:[%s1 + $0xd0] sm:$0xff]
  %v667 = vld [vmem:[%s1 + $0xd8] sm:$0xff]
  %v668 = vld [vmem:[%s1 + $0xe0] sm:$0xff]
  %v669 = vld [vmem:[%s1 + $0xe8] sm:$0xff]
  %v670 = vld [vmem:[%s1 + $0xf0] sm:$0xff]
  %v671 = vld [vmem:[%s1 + $0xf8] sm:$0xff]
  %v672 = vld [vmem:[%s1 + $0x100] sm:$0xff]
  %v673 = vld [vmem:[%s1 + $0x108] sm:$0xff]
  %v674 = vld [vmem:[%s1 + $0x110] sm:$0xff]
  %v675 = vld [vmem:[%s1 + $0x118] sm:$0xff]
  %v676 = vld [vmem:[%s1 + $0x120] sm:$0xff]
  %v677 = vld [vmem:[%s1 + $0x128] sm:$0xff]
  %v678 = vld [vmem:[%s1 + $0x130] sm:$0xff]
  %v679 = vld [vmem:[%s1 + $0x138] sm:$0xff]
  %v680 = vld [vmem:[%s1 + $0x140] sm:$0xff]
  %v681 = vld [vmem:[%s1 + $0x148] sm:$0xff]
  %v682 = vld [vmem:[%s1 + $0x150] sm:$0xff]
  %v683 = vld [vmem:[%s1 + $0x158] sm:$0xff]
  %v684 = vld [vmem:[%s1 + $0x160] sm:$0xff]
  %v685 = vld [vmem:[%s1 + $0x168] sm:$0xff]
  %v686 = vld [vmem:[%s1 + $0x170] sm:$0xff]
  %v687 = vld [vmem:[%s1 + $0x178] sm:$0xff]
  %v688 = vadd.f32 %v173, %v640
  %v689 = vadd.f32 %v175, %v641
  %v690 = vadd.f32 %v262, %v642
  %v691 = vadd.f32 %v264, %v643
  %v692 = vadd.f32 %v351, %v644
  %v693 = vadd.f32 %v353, %v645
  %v694 = vadd.f32 %v440, %v646
  %v695 = vadd.f32 %v442, %v647
  %v696 = vadd.f32 %v529, %v648
  %v697 = vadd.f32 %v531, %v649
  %v698 = vadd.f32 %v618, %v650
  %v699 = vadd.f32 %v620, %v651
  %v700 = vadd.f32 %v179, %v652
  %v701 = vadd.f32 %v181, %v653
  %v702 = vadd.f32 %v268, %v654
  %v703 = vadd.f32 %v270, %v655
  %v704 = vadd.f32 %v357, %v656
  %v705 = vadd.f32 %v359, %v657
  %v706 = vadd.f32 %v446, %v658
  %v707 = vadd.f32 %v448, %v659
  %v708 = vadd.f32 %v535, %v660
  %v709 = vadd.f32 %v537, %v661
  %v710 = vadd.f32 %v624, %v662
  %v711 = vadd.f32 %v626, %v663
  %v712 = vadd.f32 %v185, %v664
  %v713 = vadd.f32 %v187, %v665
  %v714 = vadd.f32 %v274, %v666
  %v715 = vadd.f32 %v276, %v667
  %v716 = vadd.f32 %v363, %v668
  %v717 = vadd.f32 %v365, %v669
  %v718 = vadd.f32 %v452, %v670
  %v719 = vadd.f32 %v454, %v671
  %v720 = vadd.f32 %v541, %v672
  %v721 = vadd.f32 %v543, %v673
  %v722 = vadd.f32 %v630, %v674
  %v723 = vadd.f32 %v632, %v675
  %v724 = vadd.f32 %v191, %v676
  %v725 = vadd.f32 %v193, %v677
  %v726 = vadd.f32 %v280, %v678
  %v727 = vadd.f32 %v282, %v679
  %v728 = vadd.f32 %v369, %v680
  %v729 = vadd.f32 %v371, %v681
  %v730 = vadd.f32 %v458, %v682
  %v731 = vadd.f32 %v460, %v683
  %v732 = vadd.f32 %v547, %v684
  %v733 = vadd.f32 %v549, %v685
  %v734 = vadd.f32 %v636, %v686
  %v735 = vadd.f32 %v638, %v687
  %v736 = vmul.f32 %v688, 0.5
  %v737 = vmul.f32 %v689, 0.5
  %v738 = vmul.f32 %v690, 0.5
  %v739 = vmul.f32 %v691, 0.5
  %v740 = vmul.f32 %v692, 0.5
  %v741 = vmul.f32 %v693, 0.5
  %v742 = vmul.f32 %v694, 0.5
  %v743 = vmul.f32 %v695, 0.5
  %v744 = vmul.f32 %v696, 0.5
  %v745 = vmul.f32 %v697, 0.5
  %v746 = vmul.f32 %v698, 0.5
  %v747 = vmul.f32 %v699, 0.5
  %v748 = vmul.f32 %v700, 0.5
  %v749 = vmul.f32 %v701, 0.5
  %v750 = vmul.f32 %v702, 0.5
  %v751 = vmul.f32 %v703, 0.5
  %v752 = vmul.f32 %v704, 0.5
  %v753 = vmul.f32 %v705, 0.5
  %v754 = vmul.f32 %v706, 0.5
  %v755 = vmul.f32 %v707, 0.5
  %v756 = vmul.f32 %v708, 0.5
  %v757 = vmul.f32 %v709, 0.5
  %v758 = vmul.f32 %v710, 0.5
  %v759 = vmul.f32 %v711, 0.5
  %v760 = vmul.f32 %v712, 0.5
  %v761 = vmul.f32 %v713, 0.5
  %v762 = vmul.f32 %v714, 0.5
  %v763 = vmul.f32 %v715, 0.5
  %v764 = vmul.f32 %v716, 0.5
  %v765 = vmul.f32 %v717, 0.5
  %v766 = vmul.f32 %v718, 0.5
  %v767 = vmul.f32 %v719, 0.5
  %v768 = vmul.f32 %v720, 0.5
  %v769 = vmul.f32 %v721, 0.5
  %v770 = vmul.f32 %v722, 0.5
  %v771 = vmul.f32 %v723, 0.5
  %v772 = vmul.f32 %v724, 0.5
  %v773 = vmul.f32 %v725, 0.5
  %v774 = vmul.f32 %v726, 0.5
  %v775 = vmul.f32 %v727, 0.5
  %v776 = vmul.f32 %v728, 0.5
  %v777 = vmul.f32 %v729, 0.5
  %v778 = vmul.f32 %v730, 0.5
  %v779 = vmul.f32 %v731, 0.5
  %v780 = vmul.f32 %v732, 0.5
  %v781 = vmul.f32 %v733, 0.5
  %v782 = vmul.f32 %v734, 0.5
  %v783 = vmul.f32 %v735, 0.5
  %v784 = vmul.f32 %v688, 0.70710677
  %v785 = vmul.f32 %v689, 0.70710677
  %v786 = vmul.f32 %v690, 0.70710677
  %v787 = vmul.f32 %v691, 0.70710677
  %v788 = vmul.f32 %v692, 0.70710677
  %v789 = vmul.f32 %v693, 0.70710677
  %v790 = vmul.f32 %v694, 0.70710677
  %v791 = vmul.f32 %v695, 0.70710677
  %v792 = vmul.f32 %v696, 0.70710677
  %v793 = vmul.f32 %v697, 0.70710677
  %v794 = vmul.f32 %v698, 0.70710677
  %v795 = vmul.f32 %v699, 0.70710677
  %v796 = vmul.f32 %v700, 0.70710677
  %v797 = vmul.f32 %v701, 0.70710677
  %v798 = vmul.f32 %v702, 0.70710677
  %v799 = vmul.f32 %v703, 0.70710677
  %v800 = vmul.f32 %v704, 0.70710677
  %v801 = vmul.f32 %v705, 0.70710677
  %v802 = vmul.f32 %v706, 0.70710677
  %v803 = vmul.f32 %v707, 0.70710677
  %v804 = vmul.f32 %v708, 0.70710677
  %v805 = vmul.f32 %v709, 0.70710677
  %v806 = vmul.f32 %v710, 0.70710677
  %v807 = vmul.f32 %v711, 0.70710677
  %v808 = vmul.f32 %v712, 0.70710677
  %v809 = vmul.f32 %v713, 0.70710677
  %v810 = vmul.f32 %v714, 0.70710677
  %v811 = vmul.f32 %v715, 0.70710677
  %v812 = vmul.f32 %v716, 0.70710677
  %v813 = vmul.f32 %v717, 0.70710677
  %v814 = vmul.f32 %v718, 0.70710677
  %v815 = vmul.f32 %v719, 0.70710677
  %v816 = vmul.f32 %v720, 0.70710677
  %v817 = vmul.f32 %v721, 0.70710677
  %v818 = vmul.f32 %v722, 0.70710677
  %v819 = vmul.f32 %v723, 0.70710677
  %v820 = vmul.f32 %v724, 0.70710677
  %v821 = vmul.f32 %v725, 0.70710677
  %v822 = vmul.f32 %v726, 0.70710677
  %v823 = vmul.f32 %v727, 0.70710677
  %v824 = vmul.f32 %v728, 0.70710677
  %v825 = vmul.f32 %v729, 0.70710677
  %v826 = vmul.f32 %v730, 0.70710677
  %v827 = vmul.f32 %v731, 0.70710677
  %v828 = vmul.f32 %v732, 0.70710677
  %v829 = vmul.f32 %v733, 0.70710677
  %v830 = vmul.f32 %v734, 0.70710677
  %v831 = vmul.f32 %v735, 0.70710677
  %v832 = verf.f32.pop %v784
  %v833 = verf.f32.pop %v785
  %v834 = verf.f32.pop %v786
  %v835 = verf.f32.pop %v787
  %v836 = verf.f32.pop %v788
  %v837 = verf.f32.pop %v789
  %v838 = verf.f32.pop %v790
  %v839 = verf.f32.pop %v791
  %v840 = verf.f32.pop %v792
  %v841 = verf.f32.pop %v793
  %v842 = verf.f32.pop %v794
  %v843 = verf.f32.pop %v795
  %v844 = verf.f32.pop %v796
  %v845 = verf.f32.pop %v797
  %v846 = verf.f32.pop %v798
  %v847 = verf.f32.pop %v799
  %v848 = verf.f32.pop %v800
  %v849 = verf.f32.pop %v801
  %v850 = verf.f32.pop %v802
  %v851 = verf.f32.pop %v803
  %v852 = verf.f32.pop %v804
  %v853 = verf.f32.pop %v805
  %v854 = verf.f32.pop %v806
  %v855 = verf.f32.pop %v807
  %v856 = verf.f32.pop %v808
  %v857 = verf.f32.pop %v809
  %v858 = verf.f32.pop %v810
  %v859 = verf.f32.pop %v811
  %v860 = verf.f32.pop %v812
  %v861 = verf.f32.pop %v813
  %v862 = verf.f32.pop %v814
  %v863 = verf.f32.pop %v815
  %v864 = verf.f32.pop %v816
  %v865 = verf.f32.pop %v817
  %v866 = verf.f32.pop %v818
  %v867 = verf.f32.pop %v819
  %v868 = verf.f32.pop %v820
  %v869 = verf.f32.pop %v821
  %v870 = verf.f32.pop %v822
  %v871 = verf.f32.pop %v823
  %v872 = verf.f32.pop %v824
  %v873 = verf.f32.pop %v825
  %v874 = verf.f32.pop %v826
  %v875 = verf.f32.pop %v827
  %v876 = verf.f32.pop %v828
  %v877 = verf.f32.pop %v829
  %v878 = verf.f32.pop %v830
  %v879 = verf.f32.pop %v831
  %v880 = vadd.f32 %v832, 1.0
  %v881 = vadd.f32 %v833, 1.0
  %v882 = vadd.f32 %v834, 1.0
  %v883 = vadd.f32 %v835, 1.0
  %v884 = vadd.f32 %v836, 1.0
  %v885 = vadd.f32 %v837, 1.0
  %v886 = vadd.f32 %v838, 1.0
  %v887 = vadd.f32 %v839, 1.0
  %v888 = vadd.f32 %v840, 1.0
  %v889 = vadd.f32 %v841, 1.0
  %v890 = vadd.f32 %v842, 1.0
  %v891 = vadd.f32 %v843, 1.0
  %v892 = vadd.f32 %v844, 1.0
  %v893 = vadd.f32 %v845, 1.0
  %v894 = vadd.f32 %v846, 1.0
  %v895 = vadd.f32 %v847, 1.0
  %v896 = vadd.f32 %v848, 1.0
  %v897 = vadd.f32 %v849, 1.0
  %v898 = vadd.f32 %v850, 1.0
  %v899 = vadd.f32 %v851, 1.0
  %v900 = vadd.f32 %v852, 1.0
  %v901 = vadd.f32 %v853, 1.0
  %v902 = vadd.f32 %v854, 1.0
  %v903 = vadd.f32 %v855, 1.0
  %v904 = vadd.f32 %v856, 1.0
  %v905 = vadd.f32 %v857, 1.0
  %v906 = vadd.f32 %v858, 1.0
  %v907 = vadd.f32 %v859, 1.0
  %v908 = vadd.f32 %v860, 1.0
  %v909 = vadd.f32 %v861, 1.0
  %v910 = vadd.f32 %v862, 1.0
  %v911 = vadd.f32 %v863, 1.0
  %v912 = vadd.f32 %v864, 1.0
  %v913 = vadd.f32 %v865, 1.0
  %v914 = vadd.f32 %v866, 1.0
  %v915 = vadd.f32 %v867, 1.0
  %v916 = vadd.f32 %v868, 1.0
  %v917 = vadd.f32 %v869, 1.0
  %v918 = vadd.f32 %v870, 1.0
  %v919 = vadd.f32 %v871, 1.0
  %v920 = vadd.f32 %v872, 1.0
  %v921 = vadd.f32 %v873, 1.0
  %v922 = vadd.f32 %v874, 1.0
  %v923 = vadd.f32 %v875, 1.0
  %v924 = vadd.f32 %v876, 1.0
  %v925 = vadd.f32 %v877, 1.0
  %v926 = vadd.f32 %v878, 1.0
  %v927 = vadd.f32 %v879, 1.0
  %v928 = vmul.f32 %v736, %v880
  %v929 = vmul.f32 %v737, %v881
  %v930 = vmul.f32 %v738, %v882
  %v931 = vmul.f32 %v739, %v883
  %v932 = vmul.f32 %v740, %v884
  %v933 = vmul.f32 %v741, %v885
  %v934 = vmul.f32 %v742, %v886
  %v935 = vmul.f32 %v743, %v887
  %v936 = vmul.f32 %v744, %v888
  %v937 = vmul.f32 %v745, %v889
  %v938 = vmul.f32 %v746, %v890
  %v939 = vmul.f32 %v747, %v891
  %v940 = vmul.f32 %v748, %v892
  %v941 = vmul.f32 %v749, %v893
  %v942 = vmul.f32 %v750, %v894
  %v943 = vmul.f32 %v751, %v895
  %v944 = vmul.f32 %v752, %v896
  %v945 = vmul.f32 %v753, %v897
  %v946 = vmul.f32 %v754, %v898
  %v947 = vmul.f32 %v755, %v899
  %v948 = vmul.f32 %v756, %v900
  %v949 = vmul.f32 %v757, %v901
  %v950 = vmul.f32 %v758, %v902
  %v951 = vmul.f32 %v759, %v903
  %v952 = vmul.f32 %v760, %v904
  %v953 = vmul.f32 %v761, %v905
  %v954 = vmul.f32 %v762, %v906
  %v955 = vmul.f32 %v763, %v907
  %v956 = vmul.f32 %v764, %v908
  %v957 = vmul.f32 %v765, %v909
  %v958 = vmul.f32 %v766, %v910
  %v959 = vmul.f32 %v767, %v911
  %v960 = vmul.f32 %v768, %v912
  %v961 = vmul.f32 %v769, %v913
  %v962 = vmul.f32 %v770, %v914
  %v963 = vmul.f32 %v771, %v915
  %v964 = vmul.f32 %v772, %v916
  %v965 = vmul.f32 %v773, %v917
  %v966 = vmul.f32 %v774, %v918
  %v967 = vmul.f32 %v775, %v919
  %v968 = vmul.f32 %v776, %v920
  %v969 = vmul.f32 %v777, %v921
  %v970 = vmul.f32 %v778, %v922
  %v971 = vmul.f32 %v779, %v923
  %v972 = vmul.f32 %v780, %v924
  %v973 = vmul.f32 %v781, %v925
  %v974 = vmul.f32 %v782, %v926
  %v975 = vmul.f32 %v783, %v927
  %976 = vst [vmem:[%s4] sm:$0xff] %v928
  %977 = vst [vmem:[%s4 + $0x8] sm:$0xff] %v929
  %978 = vst [vmem:[%s4 + $0x10] sm:$0xff] %v930
  %979 = vst [vmem:[%s4 + $0x18] sm:$0xff] %v931
  %980 = vst [vmem:[%s4 + $0x20] sm:$0xff] %v932
  %981 = vst [vmem:[%s4 + $0x28] sm:$0xff] %v933
  %982 = vst [vmem:[%s4 + $0x30] sm:$0xff] %v934
  %983 = vst [vmem:[%s4 + $0x38] sm:$0xff] %v935
  %984 = vst [vmem:[%s4 + $0x40] sm:$0xff] %v936
  %985 = vst [vmem:[%s4 + $0x48] sm:$0xff] %v937
  %986 = vst [vmem:[%s4 + $0x50] sm:$0xff] %v938
  %vm987 = vcmask 408576
  %988 = vst.msk [vmem:[%s4 + $0x58] sm:$0xff] %vm987, %v939
  %989 = vst [vmem:[%s4 + $0x60] sm:$0xff] %v940
  %990 = vst [vmem:[%s4 + $0x68] sm:$0xff] %v941
  %991 = vst [vmem:[%s4 + $0x70] sm:$0xff] %v942
  %992 = vst [vmem:[%s4 + $0x78] sm:$0xff] %v943
  %993 = vst [vmem:[%s4 + $0x80] sm:$0xff] %v944
  %994 = vst [vmem:[%s4 + $0x88] sm:$0xff] %v945
  %995 = vst [vmem:[%s4 + $0x90] sm:$0xff] %v946
  %996 = vst [vmem:[%s4 + $0x98] sm:$0xff] %v947
  %997 = vst [vmem:[%s4 + $0xa0] sm:$0xff] %v948
  %998 = vst [vmem:[%s4 + $0xa8] sm:$0xff] %v949
  %999 = vst [vmem:[%s4 + $0xb0] sm:$0xff] %v950
  %1000 = vst.msk [vmem:[%s4 + $0xb8] sm:$0xff] %vm987, %v951
  %1001 = vst [vmem:[%s4 + $0xc0] sm:$0xff] %v952
  %1002 = vst [vmem:[%s4 + $0xc8] sm:$0xff] %v953
  %1003 = vst [vmem:[%s4 + $0xd0] sm:$0xff] %v954
  %1004 = vst [vmem:[%s4 + $0xd8] sm:$0xff] %v955
  %1005 = vst [vmem:[%s4 + $0xe0] sm:$0xff] %v956
  %1006 = vst [vmem:[%s4 + $0xe8] sm:$0xff] %v957
  %1007 = vst [vmem:[%s4 + $0xf0] sm:$0xff] %v958
  %1008 = vst [vmem:[%s4 + $0xf8] sm:$0xff] %v959
  %1009 = vst [vmem:[%s4 + $0x100] sm:$0xff] %v960
  %1010 = vst [vmem:[%s4 + $0x108] sm:$0xff] %v961
  %1011 = vst [vmem:[%s4 + $0x110] sm:$0xff] %v962
  %1012 = vst.msk [vmem:[%s4 + $0x118] sm:$0xff] %vm987, %v963
  %1013 = vst [vmem:[%s4 + $0x120] sm:$0xff] %v964
  %1014 = vst [vmem:[%s4 + $0x128] sm:$0xff] %v965
  %1015 = vst [vmem:[%s4 + $0x130] sm:$0xff] %v966
  %1016 = vst [vmem:[%s4 + $0x138] sm:$0xff] %v967
  %1017 = vst [vmem:[%s4 + $0x140] sm:$0xff] %v968
  %1018 = vst [vmem:[%s4 + $0x148] sm:$0xff] %v969
  %1019 = vst [vmem:[%s4 + $0x150] sm:$0xff] %v970
  %1020 = vst [vmem:[%s4 + $0x158] sm:$0xff] %v971
  %1021 = vst [vmem:[%s4 + $0x160] sm:$0xff] %v972
  %1022 = vst [vmem:[%s4 + $0x168] sm:$0xff] %v973
  %1023 = vst [vmem:[%s4 + $0x170] sm:$0xff] %v974
  %1024 = vst.msk [vmem:[%s4 + $0x178] sm:$0xff] %vm987, %v975
  // Predicated region
  $region18: #{fno3d_forward.12} parent=0 // pred_check
    _
  $region19: #{fno3d_forward.12} parent=0 // pred_check_branch
    %1026 = sbr.rel (0) target = $region21
  $region20: #{fno3d_forward.12} parent=0 // pred_region
    _
  $region21: #{fno3d_forward.12} parent=0 // pred_fallthru
    _
  // Predicated region
  $region22: #{fno3d_forward.12} parent=0 // pred_check
    _
  $region23: #{fno3d_forward.12} parent=0 // pred_check_branch
    %1028 = sbr.rel (0) target = $region25
  $region24: #{fno3d_forward.12} parent=0 // pred_region
    _
  $region25: #{fno3d_forward.12} parent=0 // pred_fallthru
    _

// kernel: fno3d_forward.18
$region0: #{fno3d_forward.18}
  #allocation0 [shape = 'u32[]', space=smem, size = 0x4, offset = 0x4, fixed_abs, tag = 'smem constant byte address 0x4 - core index']
  #allocation1 [shape = 'u32[144,128]{1,0:T(1,128)}', space=vmem, size = 0x12000, scoped, tag = 'internal scratch']
  %s0 = inlined_call_operand.vmem [shape: f32[32,1458], index: 0, kind: input, shape index: {}]
  %s1 = inlined_call_operand.vmem [shape: f32[32,1458], index: 1, kind: input, shape index: {}]
  %s2 = inlined_call_operand.vmem [shape: f32[32,32], index: 2, kind: input, shape index: {}]
  %s3 = inlined_call_operand.vmem [shape: f32[32,1], index: 3, kind: input, shape index: {}]
  %s4 = inlined_call_operand.vmem [shape: f32[32,1458], index: 4, kind: output, shape index: {}]
  %s5 = sld [smem:[#allocation0]]
  $region26: #{fno3d_forward.18} parent=0
    _
  %s7 = ssub.s32 1, %s5
  %s8 = scalar_select 0, %s7, %s5
  // Predicated region
  $region2: #{fno3d_forward.18} parent=0 // pred_check
    _
  $region3: #{fno3d_forward.18} parent=0 // pred_check_branch
    %10 = sbr.rel (0) target = $region5
  $region4: #{fno3d_forward.18} parent=0 // pred_region
    _
  $region5: #{fno3d_forward.18} parent=0 // pred_fallthru
    _
  // Predicated region
  $region6: #{fno3d_forward.18} parent=0 // pred_check
    _
  $region7: #{fno3d_forward.18} parent=0 // pred_check_branch
    %12 = sbr.rel (0) target = $region9
  $region8: #{fno3d_forward.18} parent=0 // pred_region
    _
  $region9: #{fno3d_forward.18} parent=0 // pred_fallthru
    _
  // Predicated region
  $region10: #{fno3d_forward.18} parent=0 // pred_check
    _
  $region11: #{fno3d_forward.18} parent=0 // pred_check_branch
    %14 = sbr.rel (0) target = $region13
  $region12: #{fno3d_forward.18} parent=0 // pred_region
    _
  $region13: #{fno3d_forward.18} parent=0 // pred_fallthru
    _
  // Predicated region
  $region14: #{fno3d_forward.18} parent=0 // pred_check
    _
  $region15: #{fno3d_forward.18} parent=0 // pred_check_branch
    %16 = sbr.rel (0) target = $region17
  $region16: #{fno3d_forward.18} parent=0 // pred_region
    _
  $region17: #{fno3d_forward.18} parent=0 // pred_fallthru
    _
  %v17 = vld [vmem:[%s2] sm:$0xff]
  %v18 = vld [vmem:[%s2 + $0x8] sm:$0xff]
  %v19 = vld [vmem:[%s2 + $0x10] sm:$0xff]
  %v20 = vld [vmem:[%s2 + $0x18] sm:$0xff]
  %v21 = vld [vmem:[%s0] sm:$0xff]
  %v22 = vld [vmem:[%s0 + $0x8] sm:$0xff]
  %v23 = vld [vmem:[%s0 + $0x10] sm:$0xff]
  %v24 = vld [vmem:[%s0 + $0x18] sm:$0xff]
  %v25 = vld [vmem:[%s0 + $0x20] sm:$0xff]
  %v26 = vld [vmem:[%s0 + $0x28] sm:$0xff]
  %v27 = vld [vmem:[%s0 + $0x30] sm:$0xff]
  %v28 = vld [vmem:[%s0 + $0x38] sm:$0xff]
  %v29 = vld [vmem:[%s0 + $0x40] sm:$0xff]
  %v30 = vld [vmem:[%s0 + $0x48] sm:$0xff]
  %v31 = vld [vmem:[%s0 + $0x50] sm:$0xff]
  %v32 = vld [vmem:[%s0 + $0x58] sm:$0xff]
  %v33 = vld [vmem:[%s0 + $0x60] sm:$0xff]
  %v34 = vld [vmem:[%s0 + $0x68] sm:$0xff]
  %v35 = vld [vmem:[%s0 + $0x70] sm:$0xff]
  %v36 = vld [vmem:[%s0 + $0x78] sm:$0xff]
  %v37 = vld [vmem:[%s0 + $0x80] sm:$0xff]
  %v38 = vld [vmem:[%s0 + $0x88] sm:$0xff]
  %v39 = vld [vmem:[%s0 + $0x90] sm:$0xff]
  %v40 = vld [vmem:[%s0 + $0x98] sm:$0xff]
  %v41 = vld [vmem:[%s0 + $0xa0] sm:$0xff]
  %v42 = vld [vmem:[%s0 + $0xa8] sm:$0xff]
  %v43 = vld [vmem:[%s0 + $0xb0] sm:$0xff]
  %v44 = vld [vmem:[%s0 + $0xb8] sm:$0xff]
  %v45 = vld [vmem:[%s0 + $0xc0] sm:$0xff]
  %v46 = vld [vmem:[%s0 + $0xc8] sm:$0xff]
  %v47 = vld [vmem:[%s0 + $0xd0] sm:$0xff]
  %v48 = vld [vmem:[%s0 + $0xd8] sm:$0xff]
  %v49 = vld [vmem:[%s0 + $0xe0] sm:$0xff]
  %v50 = vld [vmem:[%s0 + $0xe8] sm:$0xff]
  %v51 = vld [vmem:[%s0 + $0xf0] sm:$0xff]
  %v52 = vld [vmem:[%s0 + $0xf8] sm:$0xff]
  %v53 = vld [vmem:[%s0 + $0x100] sm:$0xff]
  %v54 = vld [vmem:[%s0 + $0x108] sm:$0xff]
  %v55 = vld [vmem:[%s0 + $0x110] sm:$0xff]
  %v56 = vld [vmem:[%s0 + $0x118] sm:$0xff]
  %v57 = vld [vmem:[%s0 + $0x120] sm:$0xff]
  %v58 = vld [vmem:[%s0 + $0x128] sm:$0xff]
  %v59 = vld [vmem:[%s0 + $0x130] sm:$0xff]
  %v60 = vld [vmem:[%s0 + $0x138] sm:$0xff]
  %v61 = vld [vmem:[%s0 + $0x140] sm:$0xff]
  %v62 = vld [vmem:[%s0 + $0x148] sm:$0xff]
  %v63 = vld [vmem:[%s0 + $0x150] sm:$0xff]
  %v64 = vld [vmem:[%s0 + $0x158] sm:$0xff]
  %v65 = vld [vmem:[%s0 + $0x160] sm:$0xff]
  %v66 = vld [vmem:[%s0 + $0x168] sm:$0xff]
  %v67 = vld [vmem:[%s0 + $0x170] sm:$0xff]
  %v68 = vld [vmem:[%s0 + $0x178] sm:$0xff]
  %v69 = vld [vmem:[%s3] sm:$0xff]
  %v70 = vld [vmem:[%s3 + $0x8] sm:$0xff]
  %v71 = vld [vmem:[%s3 + $0x10] sm:$0xff]
  %v72 = vld [vmem:[%s3 + $0x18] sm:$0xff]
  %74 = vset.pattern.permute.xlu0 0
  %75 = vperm.xlu0 %74, %v69
  %v76 = vpop.permute.xlu0 %75
  %79 = vset.pattern.permute.xlu0 0
  %80 = vperm.xlu0 %79, %v70
  %v81 = vpop.permute.xlu0 %80
  %84 = vset.pattern.permute.xlu0 0
  %85 = vperm.xlu0 %84, %v71
  %v86 = vpop.permute.xlu0 %85
  %89 = vset.pattern.permute.xlu0 0
  %90 = vperm.xlu0 %89, %v72
  %v91 = vpop.permute.xlu0 %90
  %vm93 = vcmask 261120
  %v95 = vsel %vm93, %v17, 0
  %v98 = vsel %vm93, %v18, 0
  %v101 = vsel %vm93, %v19, 0
  %v104 = vsel %vm93, %v20, 0
  %106 = vmatprep.subr.mxu0 %v22
  %107 = vmatpush1.msra.mxu0 %v21
  %108 = vmatprep.subr.mxu0 %v34
  %109 = vmatpush1.msra.mxu0 %v33
  %110 = vmatprep.subr.mxu0 %v46
  %111 = vmatpush1.msra.mxu0 %v45
  %112 = vmatprep.subr.mxu0 %v58
  %113 = vmatpush1.msra.mxu0 %v57
  %114 = vmatprep.subr.mxu0 0.0
  %115 = vmatpush1.msra.mxu0 0.0
  %116 = vmatprep.subr.mxu0 0.0
  %117 = vmatpush1.msra.mxu0 0.0
  %118 = vmatprep.subr.mxu0 0.0
  %119 = vmatpush1.msra.mxu0 0.0
  %120 = vmatprep.subr.mxu0 0.0
  %121 = vmatpush1.msra.mxu0 0.0
  %122 = vmatprep.subr.mxu0 0.0
  %123 = vmatpush1.msra.mxu0 0.0
  %124 = vmatprep.subr.mxu0 0.0
  %125 = vmatpush1.msra.mxu0 0.0
  %126 = vmatprep.subr.mxu0 0.0
  %127 = vmatpush1.msra.mxu0 0.0
  %128 = vmatprep.subr.mxu0 0.0
  %129 = vmatpush1.msra.mxu0 0.0
  %130 = vmatprep.subr.mxu0 0.0
  %131 = vmatpush1.msra.mxu0 0.0
  %132 = vmatprep.subr.mxu0 0.0
  %133 = vmatpush1.msra.mxu0 0.0
  %134 = vmatprep.subr.mxu0 0.0
  %135 = vmatpush1.msra.mxu0 0.0
  %136 = vmatprep.subr.mxu0 0.0
  %137 = vmatpush1.msra.mxu0 0.0
  %138 = vmatprep.subr.mxu0 0.0
  %139 = vmatpush1.msra.mxu0 0.0
  %140 = vmatprep.subr.mxu0 0.0
  %141 = vmatpush1.msra.mxu0 0.0
  %142 = vmatprep.subr.mxu0 0.0
  %143 = vmatpush1.msra.mxu0 0.0
  %144 = vmatprep.subr.mxu0 0.0
  %145 = vmatpush1.msra.mxu0 0.0
  %146 = vmatprep.subr.mxu0 0.0
  %147 = vmatpush1.msra.mxu0 0.0
  %148 = vmatprep.subr.mxu0 0.0
  %149 = vmatpush1.msra.mxu0 0.0
  %150 = vmatprep.subr.mxu0 0.0
  %151 = vmatpush1.msra.mxu0 0.0
  %152 = vmatprep.subr.mxu0 0.0
  %153 = vmatpush1.msra.mxu0 0.0
  %154 = vmatprep.subr.mxu0 0.0
  %155 = vmatpush1.msra.mxu0 0.0
  %156 = vmatprep.subr.mxu0 0.0
  %157 = vmatpush1.msra.mxu0 0.0
  %158 = vmatprep.subr.mxu0 0.0
  %159 = vmatpush1.msra.mxu0 0.0
  %160 = vmatprep.subr.mxu0 0.0
  %161 = vmatpush1.msra.mxu0 0.0
  %162 = vmatprep.subr.mxu0 0.0
  %163 = vmatpush1.msra.mxu0 0.0
  %164 = vmatprep.subr.mxu0 0.0
  %165 = vmatpush1.msra.mxu0 0.0
  %166 = vmatprep.subr.mxu0 0.0
  %167 = vmatpush1.msra.mxu0 0.0
  %168 = vmatprep.subr.mxu0 0.0
  %169 = vmatpush1.msra.mxu0 0.0
  %170 = vmatprep.mubr.f32.mxu0 0.0
  %171 = vmatmul.mubr.f32.gmra.mrb[0].mxu0 %v95
  %v172 = vpop.f32.mrb[0].mxu0
  %v173 = vadd.f32 %v76, %v172
  %v174 = vpop.f32.mrb[0].mxu0
  %v175 = vadd.f32 %v76, %v174
  %176 = vmatprep.mubr.f32.mxu0 0.0
  %177 = vmatmul.mubr.f32.gmra.mrb[0].mxu0 %v98
  %v178 = vpop.f32.mrb[0].mxu0
  %v179 = vadd.f32 %v81, %v178
  %v180 = vpop.f32.mrb[0].mxu0
  %v181 = vadd.f32 %v81, %v180
  %182 = vmatprep.mubr.f32.mxu0 0.0
  %183 = vmatmul.mubr.f32.gmra.mrb[0].mxu0 %v101
  %v184 = vpop.f32.mrb[0].mxu0
  %v185 = vadd.f32 %v86, %v184
  %v186 = vpop.f32.mrb[0].mxu0
  %v187 = vadd.f32 %v86, %v186
  %188 = vmatprep.mubr.f32.mxu0 0.0
  %189 = vmatmul.mubr.f32.gmra.mrb[0].mxu0 %v104
  %v190 = vpop.f32.mrb[0].mxu0
  %v191 = vadd.f32 %v91, %v190
  %v192 = vpop.f32.mrb[0].mxu0
  %v193 = vadd.f32 %v91, %v192
  %194 = vdwg.mxu0
  %195 = vmatprep.subr.mxu0 %v24
  %196 = vmatpush1.msra.mxu0 %v23
  %197 = vmatprep.subr.mxu0 %v36
  %198 = vmatpush1.msra.mxu0 %v35
  %199 = vmatprep.subr.mxu0 %v48
  %200 = vmatpush1.msra.mxu0 %v47
  %201 = vmatprep.subr.mxu0 %v60
  %202 = vmatpush1.msra.mxu0 %v59
  %203 = vmatprep.subr.mxu0 0.0
  %204 = vmatpush1.msra.mxu0 0.0
  %205 = vmatprep.subr.mxu0 0.0
  %206 = vmatpush1.msra.mxu0 0.0
  %207 = vmatprep.subr.mxu0 0.0
  %208 = vmatpush1.msra.mxu0 0.0
  %209 = vmatprep.subr.mxu0 0.0
  %210 = vmatpush1.msra.mxu0 0.0
  %211 = vmatprep.subr.mxu0 0.0
  %212 = vmatpush1.msra.mxu0 0.0
  %213 = vmatprep.subr.mxu0 0.0
  %214 = vmatpush1.msra.mxu0 0.0
  %215 = vmatprep.subr.mxu0 0.0
  %216 = vmatpush1.msra.mxu0 0.0
  %217 = vmatprep.subr.mxu0 0.0
  %218 = vmatpush1.msra.mxu0 0.0
  %219 = vmatprep.subr.mxu0 0.0
  %220 = vmatpush1.msra.mxu0 0.0
  %221 = vmatprep.subr.mxu0 0.0
  %222 = vmatpush1.msra.mxu0 0.0
  %223 = vmatprep.subr.mxu0 0.0
  %224 = vmatpush1.msra.mxu0 0.0
  %225 = vmatprep.subr.mxu0 0.0
  %226 = vmatpush1.msra.mxu0 0.0
  %227 = vmatprep.subr.mxu0 0.0
  %228 = vmatpush1.msra.mxu0 0.0
  %229 = vmatprep.subr.mxu0 0.0
  %230 = vmatpush1.msra.mxu0 0.0
  %231 = vmatprep.subr.mxu0 0.0
  %232 = vmatpush1.msra.mxu0 0.0
  %233 = vmatprep.subr.mxu0 0.0
  %234 = vmatpush1.msra.mxu0 0.0
  %235 = vmatprep.subr.mxu0 0.0
  %236 = vmatpush1.msra.mxu0 0.0
  %237 = vmatprep.subr.mxu0 0.0
  %238 = vmatpush1.msra.mxu0 0.0
  %239 = vmatprep.subr.mxu0 0.0
  %240 = vmatpush1.msra.mxu0 0.0
  %241 = vmatprep.subr.mxu0 0.0
  %242 = vmatpush1.msra.mxu0 0.0
  %243 = vmatprep.subr.mxu0 0.0
  %244 = vmatpush1.msra.mxu0 0.0
  %245 = vmatprep.subr.mxu0 0.0
  %246 = vmatpush1.msra.mxu0 0.0
  %247 = vmatprep.subr.mxu0 0.0
  %248 = vmatpush1.msra.mxu0 0.0
  %249 = vmatprep.subr.mxu0 0.0
  %250 = vmatpush1.msra.mxu0 0.0
  %251 = vmatprep.subr.mxu0 0.0
  %252 = vmatpush1.msra.mxu0 0.0
  %253 = vmatprep.subr.mxu0 0.0
  %254 = vmatpush1.msra.mxu0 0.0
  %255 = vmatprep.subr.mxu0 0.0
  %256 = vmatpush1.msra.mxu0 0.0
  %257 = vmatprep.subr.mxu0 0.0
  %258 = vmatpush1.msra.mxu0 0.0
  %259 = vmatprep.mubr.f32.mxu0 0.0
  %260 = vmatmul.mubr.f32.gmra.mrb[0].mxu0 %v95
  %v261 = vpop.f32.mrb[0].mxu0
  %v262 = vadd.f32 %v76, %v261
  %v263 = vpop.f32.mrb[0].mxu0
  %v264 = vadd.f32 %v76, %v263
  %265 = vmatprep.mubr.f32.mxu0 0.0
  %266 = vmatmul.mubr.f32.gmra.mrb[0].mxu0 %v98
  %v267 = vpop.f32.mrb[0].mxu0
  %v268 = vadd.f32 %v81, %v267
  %v269 = vpop.f32.mrb[0].mxu0
  %v270 = vadd.f32 %v81, %v269
  %271 = vmatprep.mubr.f32.mxu0 0.0
  %272 = vmatmul.mubr.f32.gmra.mrb[0].mxu0 %v101
  %v273 = vpop.f32.mrb[0].mxu0
  %v274 = vadd.f32 %v86, %v273
  %v275 = vpop.f32.mrb[0].mxu0
  %v276 = vadd.f32 %v86, %v275
  %277 = vmatprep.mubr.f32.mxu0 0.0
  %278 = vmatmul.mubr.f32.gmra.mrb[0].mxu0 %v104
  %v279 = vpop.f32.mrb[0].mxu0
  %v280 = vadd.f32 %v91, %v279
  %v281 = vpop.f32.mrb[0].mxu0
  %v282 = vadd.f32 %v91, %v281
  %283 = vdwg.mxu0
  %284 = vmatprep.subr.mxu0 %v26
  %285 = vmatpush1.msra.mxu0 %v25
  %286 = vmatprep.subr.mxu0 %v38
  %287 = vmatpush1.msra.mxu0 %v37
  %288 = vmatprep.subr.mxu0 %v50
  %289 = vmatpush1.msra.mxu0 %v49
  %290 = vmatprep.subr.mxu0 %v62
  %291 = vmatpush1.msra.mxu0 %v61
  %292 = vmatprep.subr.mxu0 0.0
  %293 = vmatpush1.msra.mxu0 0.0
  %294 = vmatprep.subr.mxu0 0.0
  %295 = vmatpush1.msra.mxu0 0.0
  %296 = vmatprep.subr.mxu0 0.0
  %297 = vmatpush1.msra.mxu0 0.0
  %298 = vmatprep.subr.mxu0 0.0
  %299 = vmatpush1.msra.mxu0 0.0
  %300 = vmatprep.subr.mxu0 0.0
  %301 = vmatpush1.msra.mxu0 0.0
  %302 = vmatprep.subr.mxu0 0.0
  %303 = vmatpush1.msra.mxu0 0.0
  %304 = vmatprep.subr.mxu0 0.0
  %305 = vmatpush1.msra.mxu0 0.0
  %306 = vmatprep.subr.mxu0 0.0
  %307 = vmatpush1.msra.mxu0 0.0
  %308 = vmatprep.subr.mxu0 0.0
  %309 = vmatpush1.msra.mxu0 0.0
  %310 = vmatprep.subr.mxu0 0.0
  %311 = vmatpush1.msra.mxu0 0.0
  %312 = vmatprep.subr.mxu0 0.0
  %313 = vmatpush1.msra.mxu0 0.0
  %314 = vmatprep.subr.mxu0 0.0
  %315 = vmatpush1.msra.mxu0 0.0
  %316 = vmatprep.subr.mxu0 0.0
  %317 = vmatpush1.msra.mxu0 0.0
  %318 = vmatprep.subr.mxu0 0.0
  %319 = vmatpush1.msra.mxu0 0.0
  %320 = vmatprep.subr.mxu0 0.0
  %321 = vmatpush1.msra.mxu0 0.0
  %322 = vmatprep.subr.mxu0 0.0
  %323 = vmatpush1.msra.mxu0 0.0
  %324 = vmatprep.subr.mxu0 0.0
  %325 = vmatpush1.msra.mxu0 0.0
  %326 = vmatprep.subr.mxu0 0.0
  %327 = vmatpush1.msra.mxu0 0.0
  %328 = vmatprep.subr.mxu0 0.0
  %329 = vmatpush1.msra.mxu0 0.0
  %330 = vmatprep.subr.mxu0 0.0
  %331 = vmatpush1.msra.mxu0 0.0
  %332 = vmatprep.subr.mxu0 0.0
  %333 = vmatpush1.msra.mxu0 0.0
  %334 = vmatprep.subr.mxu0 0.0
  %335 = vmatpush1.msra.mxu0 0.0
  %336 = vmatprep.subr.mxu0 0.0
  %337 = vmatpush1.msra.mxu0 0.0
  %338 = vmatprep.subr.mxu0 0.0
  %339 = vmatpush1.msra.mxu0 0.0
  %340 = vmatprep.subr.mxu0 0.0
  %341 = vmatpush1.msra.mxu0 0.0
  %342 = vmatprep.subr.mxu0 0.0
  %343 = vmatpush1.msra.mxu0 0.0
  %344 = vmatprep.subr.mxu0 0.0
  %345 = vmatpush1.msra.mxu0 0.0
  %346 = vmatprep.subr.mxu0 0.0
  %347 = vmatpush1.msra.mxu0 0.0
  %348 = vmatprep.mubr.f32.mxu0 0.0
  %349 = vmatmul.mubr.f32.gmra.mrb[0].mxu0 %v95
  %v350 = vpop.f32.mrb[0].mxu0
  %v351 = vadd.f32 %v76, %v350
  %v352 = vpop.f32.mrb[0].mxu0
  %v353 = vadd.f32 %v76, %v352
  %354 = vmatprep.mubr.f32.mxu0 0.0
  %355 = vmatmul.mubr.f32.gmra.mrb[0].mxu0 %v98
  %v356 = vpop.f32.mrb[0].mxu0
  %v357 = vadd.f32 %v81, %v356
  %v358 = vpop.f32.mrb[0].mxu0
  %v359 = vadd.f32 %v81, %v358
  %360 = vmatprep.mubr.f32.mxu0 0.0
  %361 = vmatmul.mubr.f32.gmra.mrb[0].mxu0 %v101
  %v362 = vpop.f32.mrb[0].mxu0
  %v363 = vadd.f32 %v86, %v362
  %v364 = vpop.f32.mrb[0].mxu0
  %v365 = vadd.f32 %v86, %v364
  %366 = vmatprep.mubr.f32.mxu0 0.0
  %367 = vmatmul.mubr.f32.gmra.mrb[0].mxu0 %v104
  %v368 = vpop.f32.mrb[0].mxu0
  %v369 = vadd.f32 %v91, %v368
  %v370 = vpop.f32.mrb[0].mxu0
  %v371 = vadd.f32 %v91, %v370
  %372 = vdwg.mxu0
  %373 = vmatprep.subr.mxu0 %v28
  %374 = vmatpush1.msra.mxu0 %v27
  %375 = vmatprep.subr.mxu0 %v40
  %376 = vmatpush1.msra.mxu0 %v39
  %377 = vmatprep.subr.mxu0 %v52
  %378 = vmatpush1.msra.mxu0 %v51
  %379 = vmatprep.subr.mxu0 %v64
  %380 = vmatpush1.msra.mxu0 %v63
  %381 = vmatprep.subr.mxu0 0.0
  %382 = vmatpush1.msra.mxu0 0.0
  %383 = vmatprep.subr.mxu0 0.0
  %384 = vmatpush1.msra.mxu0 0.0
  %385 = vmatprep.subr.mxu0 0.0
  %386 = vmatpush1.msra.mxu0 0.0
  %387 = vmatprep.subr.mxu0 0.0
  %388 = vmatpush1.msra.mxu0 0.0
  %389 = vmatprep.subr.mxu0 0.0
  %390 = vmatpush1.msra.mxu0 0.0
  %391 = vmatprep.subr.mxu0 0.0
  %392 = vmatpush1.msra.mxu0 0.0
  %393 = vmatprep.subr.mxu0 0.0
  %394 = vmatpush1.msra.mxu0 0.0
  %395 = vmatprep.subr.mxu0 0.0
  %396 = vmatpush1.msra.mxu0 0.0
  %397 = vmatprep.subr.mxu0 0.0
  %398 = vmatpush1.msra.mxu0 0.0
  %399 = vmatprep.subr.mxu0 0.0
  %400 = vmatpush1.msra.mxu0 0.0
  %401 = vmatprep.subr.mxu0 0.0
  %402 = vmatpush1.msra.mxu0 0.0
  %403 = vmatprep.subr.mxu0 0.0
  %404 = vmatpush1.msra.mxu0 0.0
  %405 = vmatprep.subr.mxu0 0.0
  %406 = vmatpush1.msra.mxu0 0.0
  %407 = vmatprep.subr.mxu0 0.0
  %408 = vmatpush1.msra.mxu0 0.0
  %409 = vmatprep.subr.mxu0 0.0
  %410 = vmatpush1.msra.mxu0 0.0
  %411 = vmatprep.subr.mxu0 0.0
  %412 = vmatpush1.msra.mxu0 0.0
  %413 = vmatprep.subr.mxu0 0.0
  %414 = vmatpush1.msra.mxu0 0.0
  %415 = vmatprep.subr.mxu0 0.0
  %416 = vmatpush1.msra.mxu0 0.0
  %417 = vmatprep.subr.mxu0 0.0
  %418 = vmatpush1.msra.mxu0 0.0
  %419 = vmatprep.subr.mxu0 0.0
  %420 = vmatpush1.msra.mxu0 0.0
  %421 = vmatprep.subr.mxu0 0.0
  %422 = vmatpush1.msra.mxu0 0.0
  %423 = vmatprep.subr.mxu0 0.0
  %424 = vmatpush1.msra.mxu0 0.0
  %425 = vmatprep.subr.mxu0 0.0
  %426 = vmatpush1.msra.mxu0 0.0
  %427 = vmatprep.subr.mxu0 0.0
  %428 = vmatpush1.msra.mxu0 0.0
  %429 = vmatprep.subr.mxu0 0.0
  %430 = vmatpush1.msra.mxu0 0.0
  %431 = vmatprep.subr.mxu0 0.0
  %432 = vmatpush1.msra.mxu0 0.0
  %433 = vmatprep.subr.mxu0 0.0
  %434 = vmatpush1.msra.mxu0 0.0
  %435 = vmatprep.subr.mxu0 0.0
  %436 = vmatpush1.msra.mxu0 0.0
  %437 = vmatprep.mubr.f32.mxu0 0.0
  %438 = vmatmul.mubr.f32.gmra.mrb[0].mxu0 %v95
  %v439 = vpop.f32.mrb[0].mxu0
  %v440 = vadd.f32 %v76, %v439
  %v441 = vpop.f32.mrb[0].mxu0
  %v442 = vadd.f32 %v76, %v441
  %443 = vmatprep.mubr.f32.mxu0 0.0
  %444 = vmatmul.mubr.f32.gmra.mrb[0].mxu0 %v98
  %v445 = vpop.f32.mrb[0].mxu0
  %v446 = vadd.f32 %v81, %v445
  %v447 = vpop.f32.mrb[0].mxu0
  %v448 = vadd.f32 %v81, %v447
  %449 = vmatprep.mubr.f32.mxu0 0.0
  %450 = vmatmul.mubr.f32.gmra.mrb[0].mxu0 %v101
  %v451 = vpop.f32.mrb[0].mxu0
  %v452 = vadd.f32 %v86, %v451
  %v453 = vpop.f32.mrb[0].mxu0
  %v454 = vadd.f32 %v86, %v453
  %455 = vmatprep.mubr.f32.mxu0 0.0
  %456 = vmatmul.mubr.f32.gmra.mrb[0].mxu0 %v104
  %v457 = vpop.f32.mrb[0].mxu0
  %v458 = vadd.f32 %v91, %v457
  %v459 = vpop.f32.mrb[0].mxu0
  %v460 = vadd.f32 %v91, %v459
  %461 = vdwg.mxu0
  %462 = vmatprep.subr.mxu0 %v30
  %463 = vmatpush1.msra.mxu0 %v29
  %464 = vmatprep.subr.mxu0 %v42
  %465 = vmatpush1.msra.mxu0 %v41
  %466 = vmatprep.subr.mxu0 %v54
  %467 = vmatpush1.msra.mxu0 %v53
  %468 = vmatprep.subr.mxu0 %v66
  %469 = vmatpush1.msra.mxu0 %v65
  %470 = vmatprep.subr.mxu0 0.0
  %471 = vmatpush1.msra.mxu0 0.0
  %472 = vmatprep.subr.mxu0 0.0
  %473 = vmatpush1.msra.mxu0 0.0
  %474 = vmatprep.subr.mxu0 0.0
  %475 = vmatpush1.msra.mxu0 0.0
  %476 = vmatprep.subr.mxu0 0.0
  %477 = vmatpush1.msra.mxu0 0.0
  %478 = vmatprep.subr.mxu0 0.0
  %479 = vmatpush1.msra.mxu0 0.0
  %480 = vmatprep.subr.mxu0 0.0
  %481 = vmatpush1.msra.mxu0 0.0
  %482 = vmatprep.subr.mxu0 0.0
  %483 = vmatpush1.msra.mxu0 0.0
  %484 = vmatprep.subr.mxu0 0.0
  %485 = vmatpush1.msra.mxu0 0.0
  %486 = vmatprep.subr.mxu0 0.0
  %487 = vmatpush1.msra.mxu0 0.0
  %488 = vmatprep.subr.mxu0 0.0
  %489 = vmatpush1.msra.mxu0 0.0
  %490 = vmatprep.subr.mxu0 0.0
  %491 = vmatpush1.msra.mxu0 0.0
  %492 = vmatprep.subr.mxu0 0.0
  %493 = vmatpush1.msra.mxu0 0.0
  %494 = vmatprep.subr.mxu0 0.0
  %495 = vmatpush1.msra.mxu0 0.0
  %496 = vmatprep.subr.mxu0 0.0
  %497 = vmatpush1.msra.mxu0 0.0
  %498 = vmatprep.subr.mxu0 0.0
  %499 = vmatpush1.msra.mxu0 0.0
  %500 = vmatprep.subr.mxu0 0.0
  %501 = vmatpush1.msra.mxu0 0.0
  %502 = vmatprep.subr.mxu0 0.0
  %503 = vmatpush1.msra.mxu0 0.0
  %504 = vmatprep.subr.mxu0 0.0
  %505 = vmatpush1.msra.mxu0 0.0
  %506 = vmatprep.subr.mxu0 0.0
  %507 = vmatpush1.msra.mxu0 0.0
  %508 = vmatprep.subr.mxu0 0.0
  %509 = vmatpush1.msra.mxu0 0.0
  %510 = vmatprep.subr.mxu0 0.0
  %511 = vmatpush1.msra.mxu0 0.0
  %512 = vmatprep.subr.mxu0 0.0
  %513 = vmatpush1.msra.mxu0 0.0
  %514 = vmatprep.subr.mxu0 0.0
  %515 = vmatpush1.msra.mxu0 0.0
  %516 = vmatprep.subr.mxu0 0.0
  %517 = vmatpush1.msra.mxu0 0.0
  %518 = vmatprep.subr.mxu0 0.0
  %519 = vmatpush1.msra.mxu0 0.0
  %520 = vmatprep.subr.mxu0 0.0
  %521 = vmatpush1.msra.mxu0 0.0
  %522 = vmatprep.subr.mxu0 0.0
  %523 = vmatpush1.msra.mxu0 0.0
  %524 = vmatprep.subr.mxu0 0.0
  %525 = vmatpush1.msra.mxu0 0.0
  %526 = vmatprep.mubr.f32.mxu0 0.0
  %527 = vmatmul.mubr.f32.gmra.mrb[0].mxu0 %v95
  %v528 = vpop.f32.mrb[0].mxu0
  %v529 = vadd.f32 %v76, %v528
  %v530 = vpop.f32.mrb[0].mxu0
  %v531 = vadd.f32 %v76, %v530
  %532 = vmatprep.mubr.f32.mxu0 0.0
  %533 = vmatmul.mubr.f32.gmra.mrb[0].mxu0 %v98
  %v534 = vpop.f32.mrb[0].mxu0
  %v535 = vadd.f32 %v81, %v534
  %v536 = vpop.f32.mrb[0].mxu0
  %v537 = vadd.f32 %v81, %v536
  %538 = vmatprep.mubr.f32.mxu0 0.0
  %539 = vmatmul.mubr.f32.gmra.mrb[0].mxu0 %v101
  %v540 = vpop.f32.mrb[0].mxu0
  %v541 = vadd.f32 %v86, %v540
  %v542 = vpop.f32.mrb[0].mxu0
  %v543 = vadd.f32 %v86, %v542
  %544 = vmatprep.mubr.f32.mxu0 0.0
  %545 = vmatmul.mubr.f32.gmra.mrb[0].mxu0 %v104
  %v546 = vpop.f32.mrb[0].mxu0
  %v547 = vadd.f32 %v91, %v546
  %v548 = vpop.f32.mrb[0].mxu0
  %v549 = vadd.f32 %v91, %v548
  %550 = vdwg.mxu0
  %551 = vmatprep.subr.mxu0 %v32
  %552 = vmatpush1.msra.mxu0 %v31
  %553 = vmatprep.subr.mxu0 %v44
  %554 = vmatpush1.msra.mxu0 %v43
  %555 = vmatprep.subr.mxu0 %v56
  %556 = vmatpush1.msra.mxu0 %v55
  %557 = vmatprep.subr.mxu0 %v68
  %558 = vmatpush1.msra.mxu0 %v67
  %559 = vmatprep.subr.mxu0 0.0
  %560 = vmatpush1.msra.mxu0 0.0
  %561 = vmatprep.subr.mxu0 0.0
  %562 = vmatpush1.msra.mxu0 0.0
  %563 = vmatprep.subr.mxu0 0.0
  %564 = vmatpush1.msra.mxu0 0.0
  %565 = vmatprep.subr.mxu0 0.0
  %566 = vmatpush1.msra.mxu0 0.0
  %567 = vmatprep.subr.mxu0 0.0
  %568 = vmatpush1.msra.mxu0 0.0
  %569 = vmatprep.subr.mxu0 0.0
  %570 = vmatpush1.msra.mxu0 0.0
  %571 = vmatprep.subr.mxu0 0.0
  %572 = vmatpush1.msra.mxu0 0.0
  %573 = vmatprep.subr.mxu0 0.0
  %574 = vmatpush1.msra.mxu0 0.0
  %575 = vmatprep.subr.mxu0 0.0
  %576 = vmatpush1.msra.mxu0 0.0
  %577 = vmatprep.subr.mxu0 0.0
  %578 = vmatpush1.msra.mxu0 0.0
  %579 = vmatprep.subr.mxu0 0.0
  %580 = vmatpush1.msra.mxu0 0.0
  %581 = vmatprep.subr.mxu0 0.0
  %582 = vmatpush1.msra.mxu0 0.0
  %583 = vmatprep.subr.mxu0 0.0
  %584 = vmatpush1.msra.mxu0 0.0
  %585 = vmatprep.subr.mxu0 0.0
  %586 = vmatpush1.msra.mxu0 0.0
  %587 = vmatprep.subr.mxu0 0.0
  %588 = vmatpush1.msra.mxu0 0.0
  %589 = vmatprep.subr.mxu0 0.0
  %590 = vmatpush1.msra.mxu0 0.0
  %591 = vmatprep.subr.mxu0 0.0
  %592 = vmatpush1.msra.mxu0 0.0
  %593 = vmatprep.subr.mxu0 0.0
  %594 = vmatpush1.msra.mxu0 0.0
  %595 = vmatprep.subr.mxu0 0.0
  %596 = vmatpush1.msra.mxu0 0.0
  %597 = vmatprep.subr.mxu0 0.0
  %598 = vmatpush1.msra.mxu0 0.0
  %599 = vmatprep.subr.mxu0 0.0
  %600 = vmatpush1.msra.mxu0 0.0
  %601 = vmatprep.subr.mxu0 0.0
  %602 = vmatpush1.msra.mxu0 0.0
  %603 = vmatprep.subr.mxu0 0.0
  %604 = vmatpush1.msra.mxu0 0.0
  %605 = vmatprep.subr.mxu0 0.0
  %606 = vmatpush1.msra.mxu0 0.0
  %607 = vmatprep.subr.mxu0 0.0
  %608 = vmatpush1.msra.mxu0 0.0
  %609 = vmatprep.subr.mxu0 0.0
  %610 = vmatpush1.msra.mxu0 0.0
  %611 = vmatprep.subr.mxu0 0.0
  %612 = vmatpush1.msra.mxu0 0.0
  %613 = vmatprep.subr.mxu0 0.0
  %614 = vmatpush1.msra.mxu0 0.0
  %615 = vmatprep.mubr.f32.mxu0 0.0
  %616 = vmatmul.mubr.f32.gmra.mrb[0].mxu0 %v95
  %v617 = vpop.f32.mrb[0].mxu0
  %v618 = vadd.f32 %v76, %v617
  %v619 = vpop.f32.mrb[0].mxu0
  %v620 = vadd.f32 %v76, %v619
  %621 = vmatprep.mubr.f32.mxu0 0.0
  %622 = vmatmul.mubr.f32.gmra.mrb[0].mxu0 %v98
  %v623 = vpop.f32.mrb[0].mxu0
  %v624 = vadd.f32 %v81, %v623
  %v625 = vpop.f32.mrb[0].mxu0
  %v626 = vadd.f32 %v81, %v625
  %627 = vmatprep.mubr.f32.mxu0 0.0
  %628 = vmatmul.mubr.f32.gmra.mrb[0].mxu0 %v101
  %v629 = vpop.f32.mrb[0].mxu0
  %v630 = vadd.f32 %v86, %v629
  %v631 = vpop.f32.mrb[0].mxu0
  %v632 = vadd.f32 %v86, %v631
  %633 = vmatprep.mubr.f32.mxu0 0.0
  %634 = vmatmul.mubr.f32.gmra.mrb[0].mxu0 %v104
  %v635 = vpop.f32.mrb[0].mxu0
  %v636 = vadd.f32 %v91, %v635
  %v637 = vpop.f32.mrb[0].mxu0
  %v638 = vadd.f32 %v91, %v637
  %639 = vdwg.mxu0
  %v640 = vld [vmem:[%s1] sm:$0xff]
  %v641 = vld [vmem:[%s1 + $0x8] sm:$0xff]
  %v642 = vld [vmem:[%s1 + $0x10] sm:$0xff]
  %v643 = vld [vmem:[%s1 + $0x18] sm:$0xff]
  %v644 = vld [vmem:[%s1 + $0x20] sm:$0xff]
  %v645 = vld [vmem:[%s1 + $0x28] sm:$0xff]
  %v646 = vld [vmem:[%s1 + $0x30] sm:$0xff]
  %v647 = vld [vmem:[%s1 + $0x38] sm:$0xff]
  %v648 = vld [vmem:[%s1 + $0x40] sm:$0xff]
  %v649 = vld [vmem:[%s1 + $0x48] sm:$0xff]
  %v650 = vld [vmem:[%s1 + $0x50] sm:$0xff]
  %v651 = vld [vmem:[%s1 + $0x58] sm:$0xff]
  %v652 = vld [vmem:[%s1 + $0x60] sm:$0xff]
  %v653 = vld [vmem:[%s1 + $0x68] sm:$0xff]
  %v654 = vld [vmem:[%s1 + $0x70] sm:$0xff]
  %v655 = vld [vmem:[%s1 + $0x78] sm:$0xff]
  %v656 = vld [vmem:[%s1 + $0x80] sm:$0xff]
  %v657 = vld [vmem:[%s1 + $0x88] sm:$0xff]
  %v658 = vld [vmem:[%s1 + $0x90] sm:$0xff]
  %v659 = vld [vmem:[%s1 + $0x98] sm:$0xff]
  %v660 = vld [vmem:[%s1 + $0xa0] sm:$0xff]
  %v661 = vld [vmem:[%s1 + $0xa8] sm:$0xff]
  %v662 = vld [vmem:[%s1 + $0xb0] sm:$0xff]
  %v663 = vld [vmem:[%s1 + $0xb8] sm:$0xff]
  %v664 = vld [vmem:[%s1 + $0xc0] sm:$0xff]
  %v665 = vld [vmem:[%s1 + $0xc8] sm:$0xff]
  %v666 = vld [vmem:[%s1 + $0xd0] sm:$0xff]
  %v667 = vld [vmem:[%s1 + $0xd8] sm:$0xff]
  %v668 = vld [vmem:[%s1 + $0xe0] sm:$0xff]
  %v669 = vld [vmem:[%s1 + $0xe8] sm:$0xff]
  %v670 = vld [vmem:[%s1 + $0xf0] sm:$0xff]
  %v671 = vld [vmem:[%s1 + $0xf8] sm:$0xff]
  %v672 = vld [vmem:[%s1 + $0x100] sm:$0xff]
  %v673 = vld [vmem:[%s1 + $0x108] sm:$0xff]
  %v674 = vld [vmem:[%s1 + $0x110] sm:$0xff]
  %v675 = vld [vmem:[%s1 + $0x118] sm:$0xff]
  %v676 = vld [vmem:[%s1 + $0x120] sm:$0xff]
  %v677 = vld [vmem:[%s1 + $0x128] sm:$0xff]
  %v678 = vld [vmem:[%s1 + $0x130] sm:$0xff]
  %v679 = vld [vmem:[%s1 + $0x138] sm:$0xff]
  %v680 = vld [vmem:[%s1 + $0x140] sm:$0xff]
  %v681 = vld [vmem:[%s1 + $0x148] sm:$0xff]
  %v682 = vld [vmem:[%s1 + $0x150] sm:$0xff]
  %v683 = vld [vmem:[%s1 + $0x158] sm:$0xff]
  %v684 = vld [vmem:[%s1 + $0x160] sm:$0xff]
  %v685 = vld [vmem:[%s1 + $0x168] sm:$0xff]
  %v686 = vld [vmem:[%s1 + $0x170] sm:$0xff]
  %v687 = vld [vmem:[%s1 + $0x178] sm:$0xff]
  %v688 = vadd.f32 %v173, %v640
  %v689 = vadd.f32 %v175, %v641
  %v690 = vadd.f32 %v262, %v642
  %v691 = vadd.f32 %v264, %v643
  %v692 = vadd.f32 %v351, %v644
  %v693 = vadd.f32 %v353, %v645
  %v694 = vadd.f32 %v440, %v646
  %v695 = vadd.f32 %v442, %v647
  %v696 = vadd.f32 %v529, %v648
  %v697 = vadd.f32 %v531, %v649
  %v698 = vadd.f32 %v618, %v650
  %v699 = vadd.f32 %v620, %v651
  %v700 = vadd.f32 %v179, %v652
  %v701 = vadd.f32 %v181, %v653
  %v702 = vadd.f32 %v268, %v654
  %v703 = vadd.f32 %v270, %v655
  %v704 = vadd.f32 %v357, %v656
  %v705 = vadd.f32 %v359, %v657
  %v706 = vadd.f32 %v446, %v658
  %v707 = vadd.f32 %v448, %v659
  %v708 = vadd.f32 %v535, %v660
  %v709 = vadd.f32 %v537, %v661
  %v710 = vadd.f32 %v624, %v662
  %v711 = vadd.f32 %v626, %v663
  %v712 = vadd.f32 %v185, %v664
  %v713 = vadd.f32 %v187, %v665
  %v714 = vadd.f32 %v274, %v666
  %v715 = vadd.f32 %v276, %v667
  %v716 = vadd.f32 %v363, %v668
  %v717 = vadd.f32 %v365, %v669
  %v718 = vadd.f32 %v452, %v670
  %v719 = vadd.f32 %v454, %v671
  %v720 = vadd.f32 %v541, %v672
  %v721 = vadd.f32 %v543, %v673
  %v722 = vadd.f32 %v630, %v674
  %v723 = vadd.f32 %v632, %v675
  %v724 = vadd.f32 %v191, %v676
  %v725 = vadd.f32 %v193, %v677
  %v726 = vadd.f32 %v280, %v678
  %v727 = vadd.f32 %v282, %v679
  %v728 = vadd.f32 %v369, %v680
  %v729 = vadd.f32 %v371, %v681
  %v730 = vadd.f32 %v458, %v682
  %v731 = vadd.f32 %v460, %v683
  %v732 = vadd.f32 %v547, %v684
  %v733 = vadd.f32 %v549, %v685
  %v734 = vadd.f32 %v636, %v686
  %v735 = vadd.f32 %v638, %v687
  %736 = vst [vmem:[%s4] sm:$0xff] %v688
  %737 = vst [vmem:[%s4 + $0x8] sm:$0xff] %v689
  %738 = vst [vmem:[%s4 + $0x10] sm:$0xff] %v690
  %739 = vst [vmem:[%s4 + $0x18] sm:$0xff] %v691
  %740 = vst [vmem:[%s4 + $0x20] sm:$0xff] %v692
  %741 = vst [vmem:[%s4 + $0x28] sm:$0xff] %v693
  %742 = vst [vmem:[%s4 + $0x30] sm:$0xff] %v694
  %743 = vst [vmem:[%s4 + $0x38] sm:$0xff] %v695
  %744 = vst [vmem:[%s4 + $0x40] sm:$0xff] %v696
  %745 = vst [vmem:[%s4 + $0x48] sm:$0xff] %v697
  %746 = vst [vmem:[%s4 + $0x50] sm:$0xff] %v698
  %vm747 = vcmask 408576
  %748 = vst.msk [vmem:[%s4 + $0x58] sm:$0xff] %vm747, %v699
  %749 = vst [vmem:[%s4 + $0x60] sm:$0xff] %v700
  %750 = vst [vmem:[%s4 + $0x68] sm:$0xff] %v701
  %751 = vst [vmem:[%s4 + $0x70] sm:$0xff] %v702
  %752 = vst [vmem:[%s4 + $0x78] sm:$0xff] %v703
  %753 = vst [vmem:[%s4 + $0x80] sm:$0xff] %v704
  %754 = vst [vmem:[%s4 + $0x88] sm:$0xff] %v705
  %755 = vst [vmem:[%s4 + $0x90] sm:$0xff] %v706
  %756 = vst [vmem:[%s4 + $0x98] sm:$0xff] %v707
  %757 = vst [vmem:[%s4 + $0xa0] sm:$0xff] %v708
  %758 = vst [vmem:[%s4 + $0xa8] sm:$0xff] %v709
  %759 = vst [vmem:[%s4 + $0xb0] sm:$0xff] %v710
  %760 = vst.msk [vmem:[%s4 + $0xb8] sm:$0xff] %vm747, %v711
  %761 = vst [vmem:[%s4 + $0xc0] sm:$0xff] %v712
  %762 = vst [vmem:[%s4 + $0xc8] sm:$0xff] %v713
  %763 = vst [vmem:[%s4 + $0xd0] sm:$0xff] %v714
  %764 = vst [vmem:[%s4 + $0xd8] sm:$0xff] %v715
  %765 = vst [vmem:[%s4 + $0xe0] sm:$0xff] %v716
  %766 = vst [vmem:[%s4 + $0xe8] sm:$0xff] %v717
  %767 = vst [vmem:[%s4 + $0xf0] sm:$0xff] %v718
  %768 = vst [vmem:[%s4 + $0xf8] sm:$0xff] %v719
  %769 = vst [vmem:[%s4 + $0x100] sm:$0xff] %v720
  %770 = vst [vmem:[%s4 + $0x108] sm:$0xff] %v721
  %771 = vst [vmem:[%s4 + $0x110] sm:$0xff] %v722
  %772 = vst.msk [vmem:[%s4 + $0x118] sm:$0xff] %vm747, %v723
  %773 = vst [vmem:[%s4 + $0x120] sm:$0xff] %v724
  %774 = vst [vmem:[%s4 + $0x128] sm:$0xff] %v725
  %775 = vst [vmem:[%s4 + $0x130] sm:$0xff] %v726
  %776 = vst [vmem:[%s4 + $0x138] sm:$0xff] %v727
  %777 = vst [vmem:[%s4 + $0x140] sm:$0xff] %v728
  %778 = vst [vmem:[%s4 + $0x148] sm:$0xff] %v729
  %779 = vst [vmem:[%s4 + $0x150] sm:$0xff] %v730
  %780 = vst [vmem:[%s4 + $0x158] sm:$0xff] %v731
  %781 = vst [vmem:[%s4 + $0x160] sm:$0xff] %v732
  %782 = vst [vmem:[%s4 + $0x168] sm:$0xff] %v733
  %783 = vst [vmem:[%s4 + $0x170] sm:$0xff] %v734
  %784 = vst.msk [vmem:[%s4 + $0x178] sm:$0xff] %vm747, %v735
  // Predicated region
  $region18: #{fno3d_forward.18} parent=0 // pred_check
    _
  $region19: #{fno3d_forward.18} parent=0 // pred_check_branch
    %786 = sbr.rel (0) target = $region21
  $region20: #{fno3d_forward.18} parent=0 // pred_region
    _
  $region21: #{fno3d_forward.18} parent=0 // pred_fallthru
    _
  // Predicated region
  $region22: #{fno3d_forward.18} parent=0 // pred_check
    _
  $region23: #{fno3d_forward.18} parent=0 // pred_check_branch
    %788 = sbr.rel (0) target = $region25
  $region24: #{fno3d_forward.18} parent=0 // pred_region
    _
  $region25: #{fno3d_forward.18} parent=0 // pred_fallthru
    _

// kernel: fno3d_forward.19
$region0: #{fno3d_forward.19}
  #allocation0 [shape = 'u32[]', space=smem, size = 0x4, offset = 0x4, fixed_abs, tag = 'smem constant byte address 0x4 - core index']
  #allocation1 [shape = 'u32[144,128]{1,0:T(1,128)}', space=vmem, size = 0x12000, scoped, tag = 'internal scratch']
  %s0 = inlined_call_operand.vmem [shape: f32[32,1024], index: 0, kind: input, shape index: {}]
  %s1 = inlined_call_operand.vmem [shape: f32[32,32], index: 1, kind: input, shape index: {}]
  %s2 = inlined_call_operand.vmem [shape: f32[32,1], index: 2, kind: input, shape index: {}]
  %s3 = inlined_call_operand.vmem [shape: f32[32,32], index: 3, kind: input, shape index: {}]
  %s4 = inlined_call_operand.vmem [shape: f32[32,1], index: 4, kind: input, shape index: {}]
  %s5 = inlined_call_operand.vmem [shape: f32[32,1024], index: 5, kind: output, shape index: {}]
  %s6 = sld [smem:[#allocation0]]
  $region30: #{fno3d_forward.19} parent=0
    _
  %s8 = ssub.s32 1, %s6
  %s9 = scalar_select 0, %s8, %s6
  // Predicated region
  $region2: #{fno3d_forward.19} parent=0 // pred_check
    _
  $region3: #{fno3d_forward.19} parent=0 // pred_check_branch
    %11 = sbr.rel (0) target = $region5
  $region4: #{fno3d_forward.19} parent=0 // pred_region
    _
  $region5: #{fno3d_forward.19} parent=0 // pred_fallthru
    _
  // Predicated region
  $region6: #{fno3d_forward.19} parent=0 // pred_check
    _
  $region7: #{fno3d_forward.19} parent=0 // pred_check_branch
    %13 = sbr.rel (0) target = $region9
  $region8: #{fno3d_forward.19} parent=0 // pred_region
    _
  $region9: #{fno3d_forward.19} parent=0 // pred_fallthru
    _
  // Predicated region
  $region10: #{fno3d_forward.19} parent=0 // pred_check
    _
  $region11: #{fno3d_forward.19} parent=0 // pred_check_branch
    %15 = sbr.rel (0) target = $region13
  $region12: #{fno3d_forward.19} parent=0 // pred_region
    _
  $region13: #{fno3d_forward.19} parent=0 // pred_fallthru
    _
  // Predicated region
  $region14: #{fno3d_forward.19} parent=0 // pred_check
    _
  $region15: #{fno3d_forward.19} parent=0 // pred_check_branch
    %17 = sbr.rel (0) target = $region17
  $region16: #{fno3d_forward.19} parent=0 // pred_region
    _
  $region17: #{fno3d_forward.19} parent=0 // pred_fallthru
    _
  // Predicated region
  $region18: #{fno3d_forward.19} parent=0 // pred_check
    _
  $region19: #{fno3d_forward.19} parent=0 // pred_check_branch
    %19 = sbr.rel (0) target = $region21
  $region20: #{fno3d_forward.19} parent=0 // pred_region
    _
  $region21: #{fno3d_forward.19} parent=0 // pred_fallthru
    _
  %v20 = vld [vmem:[%s1] sm:$0xff]
  %v21 = vld [vmem:[%s1 + $0x8] sm:$0xff]
  %v22 = vld [vmem:[%s1 + $0x10] sm:$0xff]
  %v23 = vld [vmem:[%s1 + $0x18] sm:$0xff]
  %v24 = vld [vmem:[%s0] sm:$0xff]
  %v25 = vld [vmem:[%s0 + $0x8] sm:$0xff]
  %v26 = vld [vmem:[%s0 + $0x10] sm:$0xff]
  %v27 = vld [vmem:[%s0 + $0x18] sm:$0xff]
  %v28 = vld [vmem:[%s0 + $0x20] sm:$0xff]
  %v29 = vld [vmem:[%s0 + $0x28] sm:$0xff]
  %v30 = vld [vmem:[%s0 + $0x30] sm:$0xff]
  %v31 = vld [vmem:[%s0 + $0x38] sm:$0xff]
  %v32 = vld [vmem:[%s0 + $0x40] sm:$0xff]
  %v33 = vld [vmem:[%s0 + $0x48] sm:$0xff]
  %v34 = vld [vmem:[%s0 + $0x50] sm:$0xff]
  %v35 = vld [vmem:[%s0 + $0x58] sm:$0xff]
  %v36 = vld [vmem:[%s0 + $0x60] sm:$0xff]
  %v37 = vld [vmem:[%s0 + $0x68] sm:$0xff]
  %v38 = vld [vmem:[%s0 + $0x70] sm:$0xff]
  %v39 = vld [vmem:[%s0 + $0x78] sm:$0xff]
  %v40 = vld [vmem:[%s0 + $0x80] sm:$0xff]
  %v41 = vld [vmem:[%s0 + $0x88] sm:$0xff]
  %v42 = vld [vmem:[%s0 + $0x90] sm:$0xff]
  %v43 = vld [vmem:[%s0 + $0x98] sm:$0xff]
  %v44 = vld [vmem:[%s0 + $0xa0] sm:$0xff]
  %v45 = vld [vmem:[%s0 + $0xa8] sm:$0xff]
  %v46 = vld [vmem:[%s0 + $0xb0] sm:$0xff]
  %v47 = vld [vmem:[%s0 + $0xb8] sm:$0xff]
  %v48 = vld [vmem:[%s0 + $0xc0] sm:$0xff]
  %v49 = vld [vmem:[%s0 + $0xc8] sm:$0xff]
  %v50 = vld [vmem:[%s0 + $0xd0] sm:$0xff]
  %v51 = vld [vmem:[%s0 + $0xd8] sm:$0xff]
  %v52 = vld [vmem:[%s0 + $0xe0] sm:$0xff]
  %v53 = vld [vmem:[%s0 + $0xe8] sm:$0xff]
  %v54 = vld [vmem:[%s0 + $0xf0] sm:$0xff]
  %v55 = vld [vmem:[%s0 + $0xf8] sm:$0xff]
  %v56 = vld [vmem:[%s2] sm:$0xff]
  %v57 = vld [vmem:[%s2 + $0x8] sm:$0xff]
  %v58 = vld [vmem:[%s2 + $0x10] sm:$0xff]
  %v59 = vld [vmem:[%s2 + $0x18] sm:$0xff]
  %61 = vset.pattern.permute.xlu0 0
  %62 = vperm.xlu0 %61, %v56
  %v63 = vpop.permute.xlu0 %62
  %66 = vset.pattern.permute.xlu0 0
  %67 = vperm.xlu0 %66, %v57
  %v68 = vpop.permute.xlu0 %67
  %71 = vset.pattern.permute.xlu0 0
  %72 = vperm.xlu0 %71, %v58
  %v73 = vpop.permute.xlu0 %72
  %76 = vset.pattern.permute.xlu0 0
  %77 = vperm.xlu0 %76, %v59
  %v78 = vpop.permute.xlu0 %77
  %vm80 = vcmask 261120
  %v82 = vsel %vm80, %v20, 0
  %v85 = vsel %vm80, %v21, 0
  %v88 = vsel %vm80, %v22, 0
  %v91 = vsel %vm80, %v23, 0
  %93 = vmatprep.subr.mxu0 %v25
  %94 = vmatpush1.msra.mxu0 %v24
  %95 = vmatprep.subr.mxu0 %v33
  %96 = vmatpush1.msra.mxu0 %v32
  %97 = vmatprep.subr.mxu0 %v41
  %98 = vmatpush1.msra.mxu0 %v40
  %99 = vmatprep.subr.mxu0 %v49
  %100 = vmatpush1.msra.mxu0 %v48
  %101 = vmatprep.subr.mxu0 0.0
  %102 = vmatpush1.msra.mxu0 0.0
  %103 = vmatprep.subr.mxu0 0.0
  %104 = vmatpush1.msra.mxu0 0.0
  %105 = vmatprep.subr.mxu0 0.0
  %106 = vmatpush1.msra.mxu0 0.0
  %107 = vmatprep.subr.mxu0 0.0
  %108 = vmatpush1.msra.mxu0 0.0
  %109 = vmatprep.subr.mxu0 0.0
  %110 = vmatpush1.msra.mxu0 0.0
  %111 = vmatprep.subr.mxu0 0.0
  %112 = vmatpush1.msra.mxu0 0.0
  %113 = vmatprep.subr.mxu0 0.0
  %114 = vmatpush1.msra.mxu0 0.0
  %115 = vmatprep.subr.mxu0 0.0
  %116 = vmatpush1.msra.mxu0 0.0
  %117 = vmatprep.subr.mxu0 0.0
  %118 = vmatpush1.msra.mxu0 0.0
  %119 = vmatprep.subr.mxu0 0.0
  %120 = vmatpush1.msra.mxu0 0.0
  %121 = vmatprep.subr.mxu0 0.0
  %122 = vmatpush1.msra.mxu0 0.0
  %123 = vmatprep.subr.mxu0 0.0
  %124 = vmatpush1.msra.mxu0 0.0
  %125 = vmatprep.subr.mxu0 0.0
  %126 = vmatpush1.msra.mxu0 0.0
  %127 = vmatprep.subr.mxu0 0.0
  %128 = vmatpush1.msra.mxu0 0.0
  %129 = vmatprep.subr.mxu0 0.0
  %130 = vmatpush1.msra.mxu0 0.0
  %131 = vmatprep.subr.mxu0 0.0
  %132 = vmatpush1.msra.mxu0 0.0
  %133 = vmatprep.subr.mxu0 0.0
  %134 = vmatpush1.msra.mxu0 0.0
  %135 = vmatprep.subr.mxu0 0.0
  %136 = vmatpush1.msra.mxu0 0.0
  %137 = vmatprep.subr.mxu0 0.0
  %138 = vmatpush1.msra.mxu0 0.0
  %139 = vmatprep.subr.mxu0 0.0
  %140 = vmatpush1.msra.mxu0 0.0
  %141 = vmatprep.subr.mxu0 0.0
  %142 = vmatpush1.msra.mxu0 0.0
  %143 = vmatprep.subr.mxu0 0.0
  %144 = vmatpush1.msra.mxu0 0.0
  %145 = vmatprep.subr.mxu0 0.0
  %146 = vmatpush1.msra.mxu0 0.0
  %147 = vmatprep.subr.mxu0 0.0
  %148 = vmatpush1.msra.mxu0 0.0
  %149 = vmatprep.subr.mxu0 0.0
  %150 = vmatpush1.msra.mxu0 0.0
  %151 = vmatprep.subr.mxu0 0.0
  %152 = vmatpush1.msra.mxu0 0.0
  %153 = vmatprep.subr.mxu0 0.0
  %154 = vmatpush1.msra.mxu0 0.0
  %155 = vmatprep.subr.mxu0 0.0
  %156 = vmatpush1.msra.mxu0 0.0
  %157 = vmatprep.mubr.f32.mxu0 0.0
  %158 = vmatmul.mubr.f32.gmra.mrb[0].mxu0 %v82
  %v159 = vpop.f32.mrb[0].mxu0
  %v160 = vadd.f32 %v63, %v159
  %v161 = vpop.f32.mrb[0].mxu0
  %v162 = vadd.f32 %v63, %v161
  %163 = vmatprep.mubr.f32.mxu0 0.0
  %164 = vmatmul.mubr.f32.gmra.mrb[0].mxu0 %v85
  %v165 = vpop.f32.mrb[0].mxu0
  %v166 = vadd.f32 %v68, %v165
  %v167 = vpop.f32.mrb[0].mxu0
  %v168 = vadd.f32 %v68, %v167
  %169 = vmatprep.mubr.f32.mxu0 0.0
  %170 = vmatmul.mubr.f32.gmra.mrb[0].mxu0 %v88
  %v171 = vpop.f32.mrb[0].mxu0
  %v172 = vadd.f32 %v73, %v171
  %v173 = vpop.f32.mrb[0].mxu0
  %v174 = vadd.f32 %v73, %v173
  %175 = vmatprep.mubr.f32.mxu0 0.0
  %176 = vmatmul.mubr.f32.gmra.mrb[0].mxu0 %v91
  %v177 = vpop.f32.mrb[0].mxu0
  %v178 = vadd.f32 %v78, %v177
  %v179 = vpop.f32.mrb[0].mxu0
  %v180 = vadd.f32 %v78, %v179
  %181 = vdwg.mxu0
  %182 = vmatprep.subr.mxu0 %v27
  %183 = vmatpush1.msra.mxu0 %v26
  %184 = vmatprep.subr.mxu0 %v35
  %185 = vmatpush1.msra.mxu0 %v34
  %186 = vmatprep.subr.mxu0 %v43
  %187 = vmatpush1.msra.mxu0 %v42
  %188 = vmatprep.subr.mxu0 %v51
  %189 = vmatpush1.msra.mxu0 %v50
  %190 = vmatprep.subr.mxu0 0.0
  %191 = vmatpush1.msra.mxu0 0.0
  %192 = vmatprep.subr.mxu0 0.0
  %193 = vmatpush1.msra.mxu0 0.0
  %194 = vmatprep.subr.mxu0 0.0
  %195 = vmatpush1.msra.mxu0 0.0
  %196 = vmatprep.subr.mxu0 0.0
  %197 = vmatpush1.msra.mxu0 0.0
  %198 = vmatprep.subr.mxu0 0.0
  %199 = vmatpush1.msra.mxu0 0.0
  %200 = vmatprep.subr.mxu0 0.0
  %201 = vmatpush1.msra.mxu0 0.0
  %202 = vmatprep.subr.mxu0 0.0
  %203 = vmatpush1.msra.mxu0 0.0
  %204 = vmatprep.subr.mxu0 0.0
  %205 = vmatpush1.msra.mxu0 0.0
  %206 = vmatprep.subr.mxu0 0.0
  %207 = vmatpush1.msra.mxu0 0.0
  %208 = vmatprep.subr.mxu0 0.0
  %209 = vmatpush1.msra.mxu0 0.0
  %210 = vmatprep.subr.mxu0 0.0
  %211 = vmatpush1.msra.mxu0 0.0
  %212 = vmatprep.subr.mxu0 0.0
  %213 = vmatpush1.msra.mxu0 0.0
  %214 = vmatprep.subr.mxu0 0.0
  %215 = vmatpush1.msra.mxu0 0.0
  %216 = vmatprep.subr.mxu0 0.0
  %217 = vmatpush1.msra.mxu0 0.0
  %218 = vmatprep.subr.mxu0 0.0
  %219 = vmatpush1.msra.mxu0 0.0
  %220 = vmatprep.subr.mxu0 0.0
  %221 = vmatpush1.msra.mxu0 0.0
  %222 = vmatprep.subr.mxu0 0.0
  %223 = vmatpush1.msra.mxu0 0.0
  %224 = vmatprep.subr.mxu0 0.0
  %225 = vmatpush1.msra.mxu0 0.0
  %226 = vmatprep.subr.mxu0 0.0
  %227 = vmatpush1.msra.mxu0 0.0
  %228 = vmatprep.subr.mxu0 0.0
  %229 = vmatpush1.msra.mxu0 0.0
  %230 = vmatprep.subr.mxu0 0.0
  %231 = vmatpush1.msra.mxu0 0.0
  %232 = vmatprep.subr.mxu0 0.0
  %233 = vmatpush1.msra.mxu0 0.0
  %234 = vmatprep.subr.mxu0 0.0
  %235 = vmatpush1.msra.mxu0 0.0
  %236 = vmatprep.subr.mxu0 0.0
  %237 = vmatpush1.msra.mxu0 0.0
  %238 = vmatprep.subr.mxu0 0.0
  %239 = vmatpush1.msra.mxu0 0.0
  %240 = vmatprep.subr.mxu0 0.0
  %241 = vmatpush1.msra.mxu0 0.0
  %242 = vmatprep.subr.mxu0 0.0
  %243 = vmatpush1.msra.mxu0 0.0
  %244 = vmatprep.subr.mxu0 0.0
  %245 = vmatpush1.msra.mxu0 0.0
  %246 = vmatprep.mubr.f32.mxu0 0.0
  %247 = vmatmul.mubr.f32.gmra.mrb[0].mxu0 %v82
  %v248 = vpop.f32.mrb[0].mxu0
  %v249 = vadd.f32 %v63, %v248
  %v250 = vpop.f32.mrb[0].mxu0
  %v251 = vadd.f32 %v63, %v250
  %252 = vmatprep.mubr.f32.mxu0 0.0
  %253 = vmatmul.mubr.f32.gmra.mrb[0].mxu0 %v85
  %v254 = vpop.f32.mrb[0].mxu0
  %v255 = vadd.f32 %v68, %v254
  %v256 = vpop.f32.mrb[0].mxu0
  %v257 = vadd.f32 %v68, %v256
  %258 = vmatprep.mubr.f32.mxu0 0.0
  %259 = vmatmul.mubr.f32.gmra.mrb[0].mxu0 %v88
  %v260 = vpop.f32.mrb[0].mxu0
  %v261 = vadd.f32 %v73, %v260
  %v262 = vpop.f32.mrb[0].mxu0
  %v263 = vadd.f32 %v73, %v262
  %264 = vmatprep.mubr.f32.mxu0 0.0
  %265 = vmatmul.mubr.f32.gmra.mrb[0].mxu0 %v91
  %v266 = vpop.f32.mrb[0].mxu0
  %v267 = vadd.f32 %v78, %v266
  %v268 = vpop.f32.mrb[0].mxu0
  %v269 = vadd.f32 %v78, %v268
  %270 = vdwg.mxu0
  %271 = vmatprep.subr.mxu0 %v29
  %272 = vmatpush1.msra.mxu0 %v28
  %273 = vmatprep.subr.mxu0 %v37
  %274 = vmatpush1.msra.mxu0 %v36
  %275 = vmatprep.subr.mxu0 %v45
  %276 = vmatpush1.msra.mxu0 %v44
  %277 = vmatprep.subr.mxu0 %v53
  %278 = vmatpush1.msra.mxu0 %v52
  %279 = vmatprep.subr.mxu0 0.0
  %280 = vmatpush1.msra.mxu0 0.0
  %281 = vmatprep.subr.mxu0 0.0
  %282 = vmatpush1.msra.mxu0 0.0
  %283 = vmatprep.subr.mxu0 0.0
  %284 = vmatpush1.msra.mxu0 0.0
  %285 = vmatprep.subr.mxu0 0.0
  %286 = vmatpush1.msra.mxu0 0.0
  %287 = vmatprep.subr.mxu0 0.0
  %288 = vmatpush1.msra.mxu0 0.0
  %289 = vmatprep.subr.mxu0 0.0
  %290 = vmatpush1.msra.mxu0 0.0
  %291 = vmatprep.subr.mxu0 0.0
  %292 = vmatpush1.msra.mxu0 0.0
  %293 = vmatprep.subr.mxu0 0.0
  %294 = vmatpush1.msra.mxu0 0.0
  %295 = vmatprep.subr.mxu0 0.0
  %296 = vmatpush1.msra.mxu0 0.0
  %297 = vmatprep.subr.mxu0 0.0
  %298 = vmatpush1.msra.mxu0 0.0
  %299 = vmatprep.subr.mxu0 0.0
  %300 = vmatpush1.msra.mxu0 0.0
  %301 = vmatprep.subr.mxu0 0.0
  %302 = vmatpush1.msra.mxu0 0.0
  %303 = vmatprep.subr.mxu0 0.0
  %304 = vmatpush1.msra.mxu0 0.0
  %305 = vmatprep.subr.mxu0 0.0
  %306 = vmatpush1.msra.mxu0 0.0
  %307 = vmatprep.subr.mxu0 0.0
  %308 = vmatpush1.msra.mxu0 0.0
  %309 = vmatprep.subr.mxu0 0.0
  %310 = vmatpush1.msra.mxu0 0.0
  %311 = vmatprep.subr.mxu0 0.0
  %312 = vmatpush1.msra.mxu0 0.0
  %313 = vmatprep.subr.mxu0 0.0
  %314 = vmatpush1.msra.mxu0 0.0
  %315 = vmatprep.subr.mxu0 0.0
  %316 = vmatpush1.msra.mxu0 0.0
  %317 = vmatprep.subr.mxu0 0.0
  %318 = vmatpush1.msra.mxu0 0.0
  %319 = vmatprep.subr.mxu0 0.0
  %320 = vmatpush1.msra.mxu0 0.0
  %321 = vmatprep.subr.mxu0 0.0
  %322 = vmatpush1.msra.mxu0 0.0
  %323 = vmatprep.subr.mxu0 0.0
  %324 = vmatpush1.msra.mxu0 0.0
  %325 = vmatprep.subr.mxu0 0.0
  %326 = vmatpush1.msra.mxu0 0.0
  %327 = vmatprep.subr.mxu0 0.0
  %328 = vmatpush1.msra.mxu0 0.0
  %329 = vmatprep.subr.mxu0 0.0
  %330 = vmatpush1.msra.mxu0 0.0
  %331 = vmatprep.subr.mxu0 0.0
  %332 = vmatpush1.msra.mxu0 0.0
  %333 = vmatprep.subr.mxu0 0.0
  %334 = vmatpush1.msra.mxu0 0.0
  %335 = vmatprep.mubr.f32.mxu0 0.0
  %336 = vmatmul.mubr.f32.gmra.mrb[0].mxu0 %v82
  %v337 = vpop.f32.mrb[0].mxu0
  %v338 = vadd.f32 %v63, %v337
  %v339 = vpop.f32.mrb[0].mxu0
  %v340 = vadd.f32 %v63, %v339
  %341 = vmatprep.mubr.f32.mxu0 0.0
  %342 = vmatmul.mubr.f32.gmra.mrb[0].mxu0 %v85
  %v343 = vpop.f32.mrb[0].mxu0
  %v344 = vadd.f32 %v68, %v343
  %v345 = vpop.f32.mrb[0].mxu0
  %v346 = vadd.f32 %v68, %v345
  %347 = vmatprep.mubr.f32.mxu0 0.0
  %348 = vmatmul.mubr.f32.gmra.mrb[0].mxu0 %v88
  %v349 = vpop.f32.mrb[0].mxu0
  %v350 = vadd.f32 %v73, %v349
  %v351 = vpop.f32.mrb[0].mxu0
  %v352 = vadd.f32 %v73, %v351
  %353 = vmatprep.mubr.f32.mxu0 0.0
  %354 = vmatmul.mubr.f32.gmra.mrb[0].mxu0 %v91
  %v355 = vpop.f32.mrb[0].mxu0
  %v356 = vadd.f32 %v78, %v355
  %v357 = vpop.f32.mrb[0].mxu0
  %v358 = vadd.f32 %v78, %v357
  %359 = vdwg.mxu0
  %360 = vmatprep.subr.mxu0 %v31
  %361 = vmatpush1.msra.mxu0 %v30
  %362 = vmatprep.subr.mxu0 %v39
  %363 = vmatpush1.msra.mxu0 %v38
  %364 = vmatprep.subr.mxu0 %v47
  %365 = vmatpush1.msra.mxu0 %v46
  %366 = vmatprep.subr.mxu0 %v55
  %367 = vmatpush1.msra.mxu0 %v54
  %368 = vmatprep.subr.mxu0 0.0
  %369 = vmatpush1.msra.mxu0 0.0
  %370 = vmatprep.subr.mxu0 0.0
  %371 = vmatpush1.msra.mxu0 0.0
  %372 = vmatprep.subr.mxu0 0.0
  %373 = vmatpush1.msra.mxu0 0.0
  %374 = vmatprep.subr.mxu0 0.0
  %375 = vmatpush1.msra.mxu0 0.0
  %376 = vmatprep.subr.mxu0 0.0
  %377 = vmatpush1.msra.mxu0 0.0
  %378 = vmatprep.subr.mxu0 0.0
  %379 = vmatpush1.msra.mxu0 0.0
  %380 = vmatprep.subr.mxu0 0.0
  %381 = vmatpush1.msra.mxu0 0.0
  %382 = vmatprep.subr.mxu0 0.0
  %383 = vmatpush1.msra.mxu0 0.0
  %384 = vmatprep.subr.mxu0 0.0
  %385 = vmatpush1.msra.mxu0 0.0
  %386 = vmatprep.subr.mxu0 0.0
  %387 = vmatpush1.msra.mxu0 0.0
  %388 = vmatprep.subr.mxu0 0.0
  %389 = vmatpush1.msra.mxu0 0.0
  %390 = vmatprep.subr.mxu0 0.0
  %391 = vmatpush1.msra.mxu0 0.0
  %392 = vmatprep.subr.mxu0 0.0
  %393 = vmatpush1.msra.mxu0 0.0
  %394 = vmatprep.subr.mxu0 0.0
  %395 = vmatpush1.msra.mxu0 0.0
  %396 = vmatprep.subr.mxu0 0.0
  %397 = vmatpush1.msra.mxu0 0.0
  %398 = vmatprep.subr.mxu0 0.0
  %399 = vmatpush1.msra.mxu0 0.0
  %400 = vmatprep.subr.mxu0 0.0
  %401 = vmatpush1.msra.mxu0 0.0
  %402 = vmatprep.subr.mxu0 0.0
  %403 = vmatpush1.msra.mxu0 0.0
  %404 = vmatprep.subr.mxu0 0.0
  %405 = vmatpush1.msra.mxu0 0.0
  %406 = vmatprep.subr.mxu0 0.0
  %407 = vmatpush1.msra.mxu0 0.0
  %408 = vmatprep.subr.mxu0 0.0
  %409 = vmatpush1.msra.mxu0 0.0
  %410 = vmatprep.subr.mxu0 0.0
  %411 = vmatpush1.msra.mxu0 0.0
  %412 = vmatprep.subr.mxu0 0.0
  %413 = vmatpush1.msra.mxu0 0.0
  %414 = vmatprep.subr.mxu0 0.0
  %415 = vmatpush1.msra.mxu0 0.0
  %416 = vmatprep.subr.mxu0 0.0
  %417 = vmatpush1.msra.mxu0 0.0
  %418 = vmatprep.subr.mxu0 0.0
  %419 = vmatpush1.msra.mxu0 0.0
  %420 = vmatprep.subr.mxu0 0.0
  %421 = vmatpush1.msra.mxu0 0.0
  %422 = vmatprep.subr.mxu0 0.0
  %423 = vmatpush1.msra.mxu0 0.0
  %424 = vmatprep.mubr.f32.mxu0 0.0
  %425 = vmatmul.mubr.f32.gmra.mrb[0].mxu0 %v82
  %v426 = vpop.f32.mrb[0].mxu0
  %v427 = vadd.f32 %v63, %v426
  %v428 = vpop.f32.mrb[0].mxu0
  %v429 = vadd.f32 %v63, %v428
  %430 = vmatprep.mubr.f32.mxu0 0.0
  %431 = vmatmul.mubr.f32.gmra.mrb[0].mxu0 %v85
  %v432 = vpop.f32.mrb[0].mxu0
  %v433 = vadd.f32 %v68, %v432
  %v434 = vpop.f32.mrb[0].mxu0
  %v435 = vadd.f32 %v68, %v434
  %436 = vmatprep.mubr.f32.mxu0 0.0
  %437 = vmatmul.mubr.f32.gmra.mrb[0].mxu0 %v88
  %v438 = vpop.f32.mrb[0].mxu0
  %v439 = vadd.f32 %v73, %v438
  %v440 = vpop.f32.mrb[0].mxu0
  %v441 = vadd.f32 %v73, %v440
  %442 = vmatprep.mubr.f32.mxu0 0.0
  %443 = vmatmul.mubr.f32.gmra.mrb[0].mxu0 %v91
  %v444 = vpop.f32.mrb[0].mxu0
  %v445 = vadd.f32 %v78, %v444
  %v446 = vpop.f32.mrb[0].mxu0
  %v447 = vadd.f32 %v78, %v446
  %448 = vdwg.mxu0
  %v449 = vmul.f32 %v160, 0.5
  %v450 = vmul.f32 %v162, 0.5
  %v451 = vmul.f32 %v249, 0.5
  %v452 = vmul.f32 %v251, 0.5
  %v453 = vmul.f32 %v338, 0.5
  %v454 = vmul.f32 %v340, 0.5
  %v455 = vmul.f32 %v427, 0.5
  %v456 = vmul.f32 %v429, 0.5
  %v457 = vmul.f32 %v166, 0.5
  %v458 = vmul.f32 %v168, 0.5
  %v459 = vmul.f32 %v255, 0.5
  %v460 = vmul.f32 %v257, 0.5
  %v461 = vmul.f32 %v344, 0.5
  %v462 = vmul.f32 %v346, 0.5
  %v463 = vmul.f32 %v433, 0.5
  %v464 = vmul.f32 %v435, 0.5
  %v465 = vmul.f32 %v172, 0.5
  %v466 = vmul.f32 %v174, 0.5
  %v467 = vmul.f32 %v261, 0.5
  %v468 = vmul.f32 %v263, 0.5
  %v469 = vmul.f32 %v350, 0.5
  %v470 = vmul.f32 %v352, 0.5
  %v471 = vmul.f32 %v439, 0.5
  %v472 = vmul.f32 %v441, 0.5
  %v473 = vmul.f32 %v178, 0.5
  %v474 = vmul.f32 %v180, 0.5
  %v475 = vmul.f32 %v267, 0.5
  %v476 = vmul.f32 %v269, 0.5
  %v477 = vmul.f32 %v356, 0.5
  %v478 = vmul.f32 %v358, 0.5
  %v479 = vmul.f32 %v445, 0.5
  %v480 = vmul.f32 %v447, 0.5
  %v481 = vmul.f32 %v160, 0.70710677
  %v482 = vmul.f32 %v162, 0.70710677
  %v483 = vmul.f32 %v249, 0.70710677
  %v484 = vmul.f32 %v251, 0.70710677
  %v485 = vmul.f32 %v338, 0.70710677
  %v486 = vmul.f32 %v340, 0.70710677
  %v487 = vmul.f32 %v427, 0.70710677
  %v488 = vmul.f32 %v429, 0.70710677
  %v489 = vmul.f32 %v166, 0.70710677
  %v490 = vmul.f32 %v168, 0.70710677
  %v491 = vmul.f32 %v255, 0.70710677
  %v492 = vmul.f32 %v257, 0.70710677
  %v493 = vmul.f32 %v344, 0.70710677
  %v494 = vmul.f32 %v346, 0.70710677
  %v495 = vmul.f32 %v433, 0.70710677
  %v496 = vmul.f32 %v435, 0.70710677
  %v497 = vmul.f32 %v172, 0.70710677
  %v498 = vmul.f32 %v174, 0.70710677
  %v499 = vmul.f32 %v261, 0.70710677
  %v500 = vmul.f32 %v263, 0.70710677
  %v501 = vmul.f32 %v350, 0.70710677
  %v502 = vmul.f32 %v352, 0.70710677
  %v503 = vmul.f32 %v439, 0.70710677
  %v504 = vmul.f32 %v441, 0.70710677
  %v505 = vmul.f32 %v178, 0.70710677
  %v506 = vmul.f32 %v180, 0.70710677
  %v507 = vmul.f32 %v267, 0.70710677
  %v508 = vmul.f32 %v269, 0.70710677
  %v509 = vmul.f32 %v356, 0.70710677
  %v510 = vmul.f32 %v358, 0.70710677
  %v511 = vmul.f32 %v445, 0.70710677
  %v512 = vmul.f32 %v447, 0.70710677
  %v513 = verf.f32.pop %v481
  %v514 = verf.f32.pop %v482
  %v515 = verf.f32.pop %v483
  %v516 = verf.f32.pop %v484
  %v517 = verf.f32.pop %v485
  %v518 = verf.f32.pop %v486
  %v519 = verf.f32.pop %v487
  %v520 = verf.f32.pop %v488
  %v521 = verf.f32.pop %v489
  %v522 = verf.f32.pop %v490
  %v523 = verf.f32.pop %v491
  %v524 = verf.f32.pop %v492
  %v525 = verf.f32.pop %v493
  %v526 = verf.f32.pop %v494
  %v527 = verf.f32.pop %v495
  %v528 = verf.f32.pop %v496
  %v529 = verf.f32.pop %v497
  %v530 = verf.f32.pop %v498
  %v531 = verf.f32.pop %v499
  %v532 = verf.f32.pop %v500
  %v533 = verf.f32.pop %v501
  %v534 = verf.f32.pop %v502
  %v535 = verf.f32.pop %v503
  %v536 = verf.f32.pop %v504
  %v537 = verf.f32.pop %v505
  %v538 = verf.f32.pop %v506
  %v539 = verf.f32.pop %v507
  %v540 = verf.f32.pop %v508
  %v541 = verf.f32.pop %v509
  %v542 = verf.f32.pop %v510
  %v543 = verf.f32.pop %v511
  %v544 = verf.f32.pop %v512
  %v545 = vadd.f32 %v513, 1.0
  %v546 = vadd.f32 %v514, 1.0
  %v547 = vadd.f32 %v515, 1.0
  %v548 = vadd.f32 %v516, 1.0
  %v549 = vadd.f32 %v517, 1.0
  %v550 = vadd.f32 %v518, 1.0
  %v551 = vadd.f32 %v519, 1.0
  %v552 = vadd.f32 %v520, 1.0
  %v553 = vadd.f32 %v521, 1.0
  %v554 = vadd.f32 %v522, 1.0
  %v555 = vadd.f32 %v523, 1.0
  %v556 = vadd.f32 %v524, 1.0
  %v557 = vadd.f32 %v525, 1.0
  %v558 = vadd.f32 %v526, 1.0
  %v559 = vadd.f32 %v527, 1.0
  %v560 = vadd.f32 %v528, 1.0
  %v561 = vadd.f32 %v529, 1.0
  %v562 = vadd.f32 %v530, 1.0
  %v563 = vadd.f32 %v531, 1.0
  %v564 = vadd.f32 %v532, 1.0
  %v565 = vadd.f32 %v533, 1.0
  %v566 = vadd.f32 %v534, 1.0
  %v567 = vadd.f32 %v535, 1.0
  %v568 = vadd.f32 %v536, 1.0
  %v569 = vadd.f32 %v537, 1.0
  %v570 = vadd.f32 %v538, 1.0
  %v571 = vadd.f32 %v539, 1.0
  %v572 = vadd.f32 %v540, 1.0
  %v573 = vadd.f32 %v541, 1.0
  %v574 = vadd.f32 %v542, 1.0
  %v575 = vadd.f32 %v543, 1.0
  %v576 = vadd.f32 %v544, 1.0
  %v577 = vmul.f32 %v449, %v545
  %v578 = vmul.f32 %v450, %v546
  %v579 = vmul.f32 %v451, %v547
  %v580 = vmul.f32 %v452, %v548
  %v581 = vmul.f32 %v453, %v549
  %v582 = vmul.f32 %v454, %v550
  %v583 = vmul.f32 %v455, %v551
  %v584 = vmul.f32 %v456, %v552
  %v585 = vmul.f32 %v457, %v553
  %v586 = vmul.f32 %v458, %v554
  %v587 = vmul.f32 %v459, %v555
  %v588 = vmul.f32 %v460, %v556
  %v589 = vmul.f32 %v461, %v557
  %v590 = vmul.f32 %v462, %v558
  %v591 = vmul.f32 %v463, %v559
  %v592 = vmul.f32 %v464, %v560
  %v593 = vmul.f32 %v465, %v561
  %v594 = vmul.f32 %v466, %v562
  %v595 = vmul.f32 %v467, %v563
  %v596 = vmul.f32 %v468, %v564
  %v597 = vmul.f32 %v469, %v565
  %v598 = vmul.f32 %v470, %v566
  %v599 = vmul.f32 %v471, %v567
  %v600 = vmul.f32 %v472, %v568
  %v601 = vmul.f32 %v473, %v569
  %v602 = vmul.f32 %v474, %v570
  %v603 = vmul.f32 %v475, %v571
  %v604 = vmul.f32 %v476, %v572
  %v605 = vmul.f32 %v477, %v573
  %v606 = vmul.f32 %v478, %v574
  %v607 = vmul.f32 %v479, %v575
  %v608 = vmul.f32 %v480, %v576
  %v609 = vld [vmem:[%s3] sm:$0xff]
  %v610 = vld [vmem:[%s3 + $0x8] sm:$0xff]
  %v611 = vld [vmem:[%s3 + $0x10] sm:$0xff]
  %v612 = vld [vmem:[%s3 + $0x18] sm:$0xff]
  %v613 = vld [vmem:[%s4] sm:$0xff]
  %v614 = vld [vmem:[%s4 + $0x8] sm:$0xff]
  %v615 = vld [vmem:[%s4 + $0x10] sm:$0xff]
  %v616 = vld [vmem:[%s4 + $0x18] sm:$0xff]
  %618 = vset.pattern.permute.xlu0 0
  %619 = vperm.xlu0 %618, %v613
  %v620 = vpop.permute.xlu0 %619
  %623 = vset.pattern.permute.xlu0 0
  %624 = vperm.xlu0 %623, %v614
  %v625 = vpop.permute.xlu0 %624
  %628 = vset.pattern.permute.xlu0 0
  %629 = vperm.xlu0 %628, %v615
  %v630 = vpop.permute.xlu0 %629
  %633 = vset.pattern.permute.xlu0 0
  %634 = vperm.xlu0 %633, %v616
  %v635 = vpop.permute.xlu0 %634
  %v638 = vsel %vm80, %v609, 0
  %v641 = vsel %vm80, %v610, 0
  %v644 = vsel %vm80, %v611, 0
  %v647 = vsel %vm80, %v612, 0
  %649 = vmatprep.subr.mxu0 %v578
  %650 = vmatpush1.msra.mxu0 %v577
  %651 = vmatprep.subr.mxu0 %v586
  %652 = vmatpush1.msra.mxu0 %v585
  %653 = vmatprep.subr.mxu0 %v594
  %654 = vmatpush1.msra.mxu0 %v593
  %655 = vmatprep.subr.mxu0 %v602
  %656 = vmatpush1.msra.mxu0 %v601
  %657 = vmatprep.subr.mxu0 0.0
  %658 = vmatpush1.msra.mxu0 0.0
  %659 = vmatprep.subr.mxu0 0.0
  %660 = vmatpush1.msra.mxu0 0.0
  %661 = vmatprep.subr.mxu0 0.0
  %662 = vmatpush1.msra.mxu0 0.0
  %663 = vmatprep.subr.mxu0 0.0
  %664 = vmatpush1.msra.mxu0 0.0
  %665 = vmatprep.subr.mxu0 0.0
  %666 = vmatpush1.msra.mxu0 0.0
  %667 = vmatprep.subr.mxu0 0.0
  %668 = vmatpush1.msra.mxu0 0.0
  %669 = vmatprep.subr.mxu0 0.0
  %670 = vmatpush1.msra.mxu0 0.0
  %671 = vmatprep.subr.mxu0 0.0
  %672 = vmatpush1.msra.mxu0 0.0
  %673 = vmatprep.subr.mxu0 0.0
  %674 = vmatpush1.msra.mxu0 0.0
  %675 = vmatprep.subr.mxu0 0.0
  %676 = vmatpush1.msra.mxu0 0.0
  %677 = vmatprep.subr.mxu0 0.0
  %678 = vmatpush1.msra.mxu0 0.0
  %679 = vmatprep.subr.mxu0 0.0
  %680 = vmatpush1.msra.mxu0 0.0
  %681 = vmatprep.subr.mxu0 0.0
  %682 = vmatpush1.msra.mxu0 0.0
  %683 = vmatprep.subr.mxu0 0.0
  %684 = vmatpush1.msra.mxu0 0.0
  %685 = vmatprep.subr.mxu0 0.0
  %686 = vmatpush1.msra.mxu0 0.0
  %687 = vmatprep.subr.mxu0 0.0
  %688 = vmatpush1.msra.mxu0 0.0
  %689 = vmatprep.subr.mxu0 0.0
  %690 = vmatpush1.msra.mxu0 0.0
  %691 = vmatprep.subr.mxu0 0.0
  %692 = vmatpush1.msra.mxu0 0.0
  %693 = vmatprep.subr.mxu0 0.0
  %694 = vmatpush1.msra.mxu0 0.0
  %695 = vmatprep.subr.mxu0 0.0
  %696 = vmatpush1.msra.mxu0 0.0
  %697 = vmatprep.subr.mxu0 0.0
  %698 = vmatpush1.msra.mxu0 0.0
  %699 = vmatprep.subr.mxu0 0.0
  %700 = vmatpush1.msra.mxu0 0.0
  %701 = vmatprep.subr.mxu0 0.0
  %702 = vmatpush1.msra.mxu0 0.0
  %703 = vmatprep.subr.mxu0 0.0
  %704 = vmatpush1.msra.mxu0 0.0
  %705 = vmatprep.subr.mxu0 0.0
  %706 = vmatpush1.msra.mxu0 0.0
  %707 = vmatprep.subr.mxu0 0.0
  %708 = vmatpush1.msra.mxu0 0.0
  %709 = vmatprep.subr.mxu0 0.0
  %710 = vmatpush1.msra.mxu0 0.0
  %711 = vmatprep.subr.mxu0 0.0
  %712 = vmatpush1.msra.mxu0 0.0
  %713 = vmatprep.mubr.f32.mxu0 0.0
  %714 = vmatmul.mubr.f32.gmra.mrb[0].mxu0 %v638
  %v715 = vpop.f32.mrb[0].mxu0
  %v716 = vadd.f32 %v620, %v715
  %v717 = vpop.f32.mrb[0].mxu0
  %v718 = vadd.f32 %v620, %v717
  %719 = vmatprep.mubr.f32.mxu0 0.0
  %720 = vmatmul.mubr.f32.gmra.mrb[0].mxu0 %v641
  %v721 = vpop.f32.mrb[0].mxu0
  %v722 = vadd.f32 %v625, %v721
  %v723 = vpop.f32.mrb[0].mxu0
  %v724 = vadd.f32 %v625, %v723
  %725 = vmatprep.mubr.f32.mxu0 0.0
  %726 = vmatmul.mubr.f32.gmra.mrb[0].mxu0 %v644
  %v727 = vpop.f32.mrb[0].mxu0
  %v728 = vadd.f32 %v630, %v727
  %v729 = vpop.f32.mrb[0].mxu0
  %v730 = vadd.f32 %v630, %v729
  %731 = vmatprep.mubr.f32.mxu0 0.0
  %732 = vmatmul.mubr.f32.gmra.mrb[0].mxu0 %v647
  %v733 = vpop.f32.mrb[0].mxu0
  %v734 = vadd.f32 %v635, %v733
  %v735 = vpop.f32.mrb[0].mxu0
  %v736 = vadd.f32 %v635, %v735
  %737 = vdwg.mxu0
  %738 = vmatprep.subr.mxu0 %v580
  %739 = vmatpush1.msra.mxu0 %v579
  %740 = vmatprep.subr.mxu0 %v588
  %741 = vmatpush1.msra.mxu0 %v587
  %742 = vmatprep.subr.mxu0 %v596
  %743 = vmatpush1.msra.mxu0 %v595
  %744 = vmatprep.subr.mxu0 %v604
  %745 = vmatpush1.msra.mxu0 %v603
  %746 = vmatprep.subr.mxu0 0.0
  %747 = vmatpush1.msra.mxu0 0.0
  %748 = vmatprep.subr.mxu0 0.0
  %749 = vmatpush1.msra.mxu0 0.0
  %750 = vmatprep.subr.mxu0 0.0
  %751 = vmatpush1.msra.mxu0 0.0
  %752 = vmatprep.subr.mxu0 0.0
  %753 = vmatpush1.msra.mxu0 0.0
  %754 = vmatprep.subr.mxu0 0.0
  %755 = vmatpush1.msra.mxu0 0.0
  %756 = vmatprep.subr.mxu0 0.0
  %757 = vmatpush1.msra.mxu0 0.0
  %758 = vmatprep.subr.mxu0 0.0
  %759 = vmatpush1.msra.mxu0 0.0
  %760 = vmatprep.subr.mxu0 0.0
  %761 = vmatpush1.msra.mxu0 0.0
  %762 = vmatprep.subr.mxu0 0.0
  %763 = vmatpush1.msra.mxu0 0.0
  %764 = vmatprep.subr.mxu0 0.0
  %765 = vmatpush1.msra.mxu0 0.0
  %766 = vmatprep.subr.mxu0 0.0
  %767 = vmatpush1.msra.mxu0 0.0
  %768 = vmatprep.subr.mxu0 0.0
  %769 = vmatpush1.msra.mxu0 0.0
  %770 = vmatprep.subr.mxu0 0.0
  %771 = vmatpush1.msra.mxu0 0.0
  %772 = vmatprep.subr.mxu0 0.0
  %773 = vmatpush1.msra.mxu0 0.0
  %774 = vmatprep.subr.mxu0 0.0
  %775 = vmatpush1.msra.mxu0 0.0
  %776 = vmatprep.subr.mxu0 0.0
  %777 = vmatpush1.msra.mxu0 0.0
  %778 = vmatprep.subr.mxu0 0.0
  %779 = vmatpush1.msra.mxu0 0.0
  %780 = vmatprep.subr.mxu0 0.0
  %781 = vmatpush1.msra.mxu0 0.0
  %782 = vmatprep.subr.mxu0 0.0
  %783 = vmatpush1.msra.mxu0 0.0
  %784 = vmatprep.subr.mxu0 0.0
  %785 = vmatpush1.msra.mxu0 0.0
  %786 = vmatprep.subr.mxu0 0.0
  %787 = vmatpush1.msra.mxu0 0.0
  %788 = vmatprep.subr.mxu0 0.0
  %789 = vmatpush1.msra.mxu0 0.0
  %790 = vmatprep.subr.mxu0 0.0
  %791 = vmatpush1.msra.mxu0 0.0
  %792 = vmatprep.subr.mxu0 0.0
  %793 = vmatpush1.msra.mxu0 0.0
  %794 = vmatprep.subr.mxu0 0.0
  %795 = vmatpush1.msra.mxu0 0.0
  %796 = vmatprep.subr.mxu0 0.0
  %797 = vmatpush1.msra.mxu0 0.0
  %798 = vmatprep.subr.mxu0 0.0
  %799 = vmatpush1.msra.mxu0 0.0
  %800 = vmatprep.subr.mxu0 0.0
  %801 = vmatpush1.msra.mxu0 0.0
  %802 = vmatprep.mubr.f32.mxu0 0.0
  %803 = vmatmul.mubr.f32.gmra.mrb[0].mxu0 %v638
  %v804 = vpop.f32.mrb[0].mxu0
  %v805 = vadd.f32 %v620, %v804
  %v806 = vpop.f32.mrb[0].mxu0
  %v807 = vadd.f32 %v620, %v806
  %808 = vmatprep.mubr.f32.mxu0 0.0
  %809 = vmatmul.mubr.f32.gmra.mrb[0].mxu0 %v641
  %v810 = vpop.f32.mrb[0].mxu0
  %v811 = vadd.f32 %v625, %v810
  %v812 = vpop.f32.mrb[0].mxu0
  %v813 = vadd.f32 %v625, %v812
  %814 = vmatprep.mubr.f32.mxu0 0.0
  %815 = vmatmul.mubr.f32.gmra.mrb[0].mxu0 %v644
  %v816 = vpop.f32.mrb[0].mxu0
  %v817 = vadd.f32 %v630, %v816
  %v818 = vpop.f32.mrb[0].mxu0
  %v819 = vadd.f32 %v630, %v818
  %820 = vmatprep.mubr.f32.mxu0 0.0
  %821 = vmatmul.mubr.f32.gmra.mrb[0].mxu0 %v647
  %v822 = vpop.f32.mrb[0].mxu0
  %v823 = vadd.f32 %v635, %v822
  %v824 = vpop.f32.mrb[0].mxu0
  %v825 = vadd.f32 %v635, %v824
  %826 = vdwg.mxu0
  %827 = vmatprep.subr.mxu0 %v582
  %828 = vmatpush1.msra.mxu0 %v581
  %829 = vmatprep.subr.mxu0 %v590
  %830 = vmatpush1.msra.mxu0 %v589
  %831 = vmatprep.subr.mxu0 %v598
  %832 = vmatpush1.msra.mxu0 %v597
  %833 = vmatprep.subr.mxu0 %v606
  %834 = vmatpush1.msra.mxu0 %v605
  %835 = vmatprep.subr.mxu0 0.0
  %836 = vmatpush1.msra.mxu0 0.0
  %837 = vmatprep.subr.mxu0 0.0
  %838 = vmatpush1.msra.mxu0 0.0
  %839 = vmatprep.subr.mxu0 0.0
  %840 = vmatpush1.msra.mxu0 0.0
  %841 = vmatprep.subr.mxu0 0.0
  %842 = vmatpush1.msra.mxu0 0.0
  %843 = vmatprep.subr.mxu0 0.0
  %844 = vmatpush1.msra.mxu0 0.0
  %845 = vmatprep.subr.mxu0 0.0
  %846 = vmatpush1.msra.mxu0 0.0
  %847 = vmatprep.subr.mxu0 0.0
  %848 = vmatpush1.msra.mxu0 0.0
  %849 = vmatprep.subr.mxu0 0.0
  %850 = vmatpush1.msra.mxu0 0.0
  %851 = vmatprep.subr.mxu0 0.0
  %852 = vmatpush1.msra.mxu0 0.0
  %853 = vmatprep.subr.mxu0 0.0
  %854 = vmatpush1.msra.mxu0 0.0
  %855 = vmatprep.subr.mxu0 0.0
  %856 = vmatpush1.msra.mxu0 0.0
  %857 = vmatprep.subr.mxu0 0.0
  %858 = vmatpush1.msra.mxu0 0.0
  %859 = vmatprep.subr.mxu0 0.0
  %860 = vmatpush1.msra.mxu0 0.0
  %861 = vmatprep.subr.mxu0 0.0
  %862 = vmatpush1.msra.mxu0 0.0
  %863 = vmatprep.subr.mxu0 0.0
  %864 = vmatpush1.msra.mxu0 0.0
  %865 = vmatprep.subr.mxu0 0.0
  %866 = vmatpush1.msra.mxu0 0.0
  %867 = vmatprep.subr.mxu0 0.0
  %868 = vmatpush1.msra.mxu0 0.0
  %869 = vmatprep.subr.mxu0 0.0
  %870 = vmatpush1.msra.mxu0 0.0
  %871 = vmatprep.subr.mxu0 0.0
  %872 = vmatpush1.msra.mxu0 0.0
  %873 = vmatprep.subr.mxu0 0.0
  %874 = vmatpush1.msra.mxu0 0.0
  %875 = vmatprep.subr.mxu0 0.0
  %876 = vmatpush1.msra.mxu0 0.0
  %877 = vmatprep.subr.mxu0 0.0
  %878 = vmatpush1.msra.mxu0 0.0
  %879 = vmatprep.subr.mxu0 0.0
  %880 = vmatpush1.msra.mxu0 0.0
  %881 = vmatprep.subr.mxu0 0.0
  %882 = vmatpush1.msra.mxu0 0.0
  %883 = vmatprep.subr.mxu0 0.0
  %884 = vmatpush1.msra.mxu0 0.0
  %885 = vmatprep.subr.mxu0 0.0
  %886 = vmatpush1.msra.mxu0 0.0
  %887 = vmatprep.subr.mxu0 0.0
  %888 = vmatpush1.msra.mxu0 0.0
  %889 = vmatprep.subr.mxu0 0.0
  %890 = vmatpush1.msra.mxu0 0.0
  %891 = vmatprep.mubr.f32.mxu0 0.0
  %892 = vmatmul.mubr.f32.gmra.mrb[0].mxu0 %v638
  %v893 = vpop.f32.mrb[0].mxu0
  %v894 = vadd.f32 %v620, %v893
  %v895 = vpop.f32.mrb[0].mxu0
  %v896 = vadd.f32 %v620, %v895
  %897 = vmatprep.mubr.f32.mxu0 0.0
  %898 = vmatmul.mubr.f32.gmra.mrb[0].mxu0 %v641
  %v899 = vpop.f32.mrb[0].mxu0
  %v900 = vadd.f32 %v625, %v899
  %v901 = vpop.f32.mrb[0].mxu0
  %v902 = vadd.f32 %v625, %v901
  %903 = vmatprep.mubr.f32.mxu0 0.0
  %904 = vmatmul.mubr.f32.gmra.mrb[0].mxu0 %v644
  %v905 = vpop.f32.mrb[0].mxu0
  %v906 = vadd.f32 %v630, %v905
  %v907 = vpop.f32.mrb[0].mxu0
  %v908 = vadd.f32 %v630, %v907
  %909 = vmatprep.mubr.f32.mxu0 0.0
  %910 = vmatmul.mubr.f32.gmra.mrb[0].mxu0 %v647
  %v911 = vpop.f32.mrb[0].mxu0
  %v912 = vadd.f32 %v635, %v911
  %v913 = vpop.f32.mrb[0].mxu0
  %v914 = vadd.f32 %v635, %v913
  %915 = vdwg.mxu0
  %916 = vmatprep.subr.mxu0 %v584
  %917 = vmatpush1.msra.mxu0 %v583
  %918 = vmatprep.subr.mxu0 %v592
  %919 = vmatpush1.msra.mxu0 %v591
  %920 = vmatprep.subr.mxu0 %v600
  %921 = vmatpush1.msra.mxu0 %v599
  %922 = vmatprep.subr.mxu0 %v608
  %923 = vmatpush1.msra.mxu0 %v607
  %924 = vmatprep.subr.mxu0 0.0
  %925 = vmatpush1.msra.mxu0 0.0
  %926 = vmatprep.subr.mxu0 0.0
  %927 = vmatpush1.msra.mxu0 0.0
  %928 = vmatprep.subr.mxu0 0.0
  %929 = vmatpush1.msra.mxu0 0.0
  %930 = vmatprep.subr.mxu0 0.0
  %931 = vmatpush1.msra.mxu0 0.0
  %932 = vmatprep.subr.mxu0 0.0
  %933 = vmatpush1.msra.mxu0 0.0
  %934 = vmatprep.subr.mxu0 0.0
  %935 = vmatpush1.msra.mxu0 0.0
  %936 = vmatprep.subr.mxu0 0.0
  %937 = vmatpush1.msra.mxu0 0.0
  %938 = vmatprep.subr.mxu0 0.0
  %939 = vmatpush1.msra.mxu0 0.0
  %940 = vmatprep.subr.mxu0 0.0
  %941 = vmatpush1.msra.mxu0 0.0
  %942 = vmatprep.subr.mxu0 0.0
  %943 = vmatpush1.msra.mxu0 0.0
  %944 = vmatprep.subr.mxu0 0.0
  %945 = vmatpush1.msra.mxu0 0.0
  %946 = vmatprep.subr.mxu0 0.0
  %947 = vmatpush1.msra.mxu0 0.0
  %948 = vmatprep.subr.mxu0 0.0
  %949 = vmatpush1.msra.mxu0 0.0
  %950 = vmatprep.subr.mxu0 0.0
  %951 = vmatpush1.msra.mxu0 0.0
  %952 = vmatprep.subr.mxu0 0.0
  %953 = vmatpush1.msra.mxu0 0.0
  %954 = vmatprep.subr.mxu0 0.0
  %955 = vmatpush1.msra.mxu0 0.0
  %956 = vmatprep.subr.mxu0 0.0
  %957 = vmatpush1.msra.mxu0 0.0
  %958 = vmatprep.subr.mxu0 0.0
  %959 = vmatpush1.msra.mxu0 0.0
  %960 = vmatprep.subr.mxu0 0.0
  %961 = vmatpush1.msra.mxu0 0.0
  %962 = vmatprep.subr.mxu0 0.0
  %963 = vmatpush1.msra.mxu0 0.0
  %964 = vmatprep.subr.mxu0 0.0
  %965 = vmatpush1.msra.mxu0 0.0
  %966 = vmatprep.subr.mxu0 0.0
  %967 = vmatpush1.msra.mxu0 0.0
  %968 = vmatprep.subr.mxu0 0.0
  %969 = vmatpush1.msra.mxu0 0.0
  %970 = vmatprep.subr.mxu0 0.0
  %971 = vmatpush1.msra.mxu0 0.0
  %972 = vmatprep.subr.mxu0 0.0
  %973 = vmatpush1.msra.mxu0 0.0
  %974 = vmatprep.subr.mxu0 0.0
  %975 = vmatpush1.msra.mxu0 0.0
  %976 = vmatprep.subr.mxu0 0.0
  %977 = vmatpush1.msra.mxu0 0.0
  %978 = vmatprep.subr.mxu0 0.0
  %979 = vmatpush1.msra.mxu0 0.0
  %980 = vmatprep.mubr.f32.mxu0 0.0
  %981 = vmatmul.mubr.f32.gmra.mrb[0].mxu0 %v638
  %v982 = vpop.f32.mrb[0].mxu0
  %v983 = vadd.f32 %v620, %v982
  %v984 = vpop.f32.mrb[0].mxu0
  %v985 = vadd.f32 %v620, %v984
  %986 = vmatprep.mubr.f32.mxu0 0.0
  %987 = vmatmul.mubr.f32.gmra.mrb[0].mxu0 %v641
  %v988 = vpop.f32.mrb[0].mxu0
  %v989 = vadd.f32 %v625, %v988
  %v990 = vpop.f32.mrb[0].mxu0
  %v991 = vadd.f32 %v625, %v990
  %992 = vmatprep.mubr.f32.mxu0 0.0
  %993 = vmatmul.mubr.f32.gmra.mrb[0].mxu0 %v644
  %v994 = vpop.f32.mrb[0].mxu0
  %v995 = vadd.f32 %v630, %v994
  %v996 = vpop.f32.mrb[0].mxu0
  %v997 = vadd.f32 %v630, %v996
  %998 = vmatprep.mubr.f32.mxu0 0.0
  %999 = vmatmul.mubr.f32.gmra.mrb[0].mxu0 %v647
  %v1000 = vpop.f32.mrb[0].mxu0
  %v1001 = vadd.f32 %v635, %v1000
  %v1002 = vpop.f32.mrb[0].mxu0
  %v1003 = vadd.f32 %v635, %v1002
  %1004 = vdwg.mxu0
  %1005 = vst [vmem:[%s5] sm:$0xff] %v716
  %1006 = vst [vmem:[%s5 + $0x8] sm:$0xff] %v718
  %1007 = vst [vmem:[%s5 + $0x10] sm:$0xff] %v805
  %1008 = vst [vmem:[%s5 + $0x18] sm:$0xff] %v807
  %1009 = vst [vmem:[%s5 + $0x20] sm:$0xff] %v894
  %1010 = vst [vmem:[%s5 + $0x28] sm:$0xff] %v896
  %1011 = vst [vmem:[%s5 + $0x30] sm:$0xff] %v983
  %1012 = vst [vmem:[%s5 + $0x38] sm:$0xff] %v985
  %1013 = vst [vmem:[%s5 + $0x40] sm:$0xff] %v722
  %1014 = vst [vmem:[%s5 + $0x48] sm:$0xff] %v724
  %1015 = vst [vmem:[%s5 + $0x50] sm:$0xff] %v811
  %1016 = vst [vmem:[%s5 + $0x58] sm:$0xff] %v813
  %1017 = vst [vmem:[%s5 + $0x60] sm:$0xff] %v900
  %1018 = vst [vmem:[%s5 + $0x68] sm:$0xff] %v902
  %1019 = vst [vmem:[%s5 + $0x70] sm:$0xff] %v989
  %1020 = vst [vmem:[%s5 + $0x78] sm:$0xff] %v991
  %1021 = vst [vmem:[%s5 + $0x80] sm:$0xff] %v728
  %1022 = vst [vmem:[%s5 + $0x88] sm:$0xff] %v730
  %1023 = vst [vmem:[%s5 + $0x90] sm:$0xff] %v817
  %1024 = vst [vmem:[%s5 + $0x98] sm:$0xff] %v819
  %1025 = vst [vmem:[%s5 + $0xa0] sm:$0xff] %v906
  %1026 = vst [vmem:[%s5 + $0xa8] sm:$0xff] %v908
  %1027 = vst [vmem:[%s5 + $0xb0] sm:$0xff] %v995
  %1028 = vst [vmem:[%s5 + $0xb8] sm:$0xff] %v997
  %1029 = vst [vmem:[%s5 + $0xc0] sm:$0xff] %v734
  %1030 = vst [vmem:[%s5 + $0xc8] sm:$0xff] %v736
  %1031 = vst [vmem:[%s5 + $0xd0] sm:$0xff] %v823
  %1032 = vst [vmem:[%s5 + $0xd8] sm:$0xff] %v825
  %1033 = vst [vmem:[%s5 + $0xe0] sm:$0xff] %v912
  %1034 = vst [vmem:[%s5 + $0xe8] sm:$0xff] %v914
  %1035 = vst [vmem:[%s5 + $0xf0] sm:$0xff] %v1001
  %1036 = vst [vmem:[%s5 + $0xf8] sm:$0xff] %v1003
  // Predicated region
  $region22: #{fno3d_forward.19} parent=0 // pred_check
    _
  $region23: #{fno3d_forward.19} parent=0 // pred_check_branch
    %1038 = sbr.rel (0) target = $region25
  $region24: #{fno3d_forward.19} parent=0 // pred_region
    _
  $region25: #{fno3d_forward.19} parent=0 // pred_fallthru
    _
  // Predicated region
  $region26: #{fno3d_forward.19} parent=0 // pred_check
    _
  $region27: #{fno3d_forward.19} parent=0 // pred_check_branch
    %1040 = sbr.rel (0) target = $region29
  $region28: #{fno3d_forward.19} parent=0 // pred_region
    _
  $region29: #{fno3d_forward.19} parent=0 // pred_fallthru
    _

</llo_original>
